<compile_context>
chip_gen: v7x
topology: tpu7x:2x2x1
jax: 0.10.0
libtpu: 0.0.40
codegen_flags: <defaults>
</compile_context>

<pallas_src>
import functools

import jax
import jax.numpy as jnp
from jax.experimental import pallas as pl
from jax.experimental.pallas import tpu as pltpu


# ----------------------------- Pallas kernels ------------------------------

def _conv_kernel(x_ref, w_ref, b_ref, o_ref, *, KH, KW, TH, W_out):
    # x_ref: (1, H+2p, W+2p, C_in)   full padded image for this batch element
    # w_ref: (KH*KW, C_in, C_pad)    one (C_in, C_pad) matrix per filter tap
    # b_ref: (1, C_pad)
    # o_ref: (1, TH*W_out, C_pad)    TH output rows, channels-last, lane-dense
    t = pl.program_id(1)                         # which row tile of this image
    n_taps = KH * KW
    w_taps = [w_ref[i] for i in range(n_taps)]   # each (C_in, C_pad), held in vregs
    b = b_ref[...]                               # (1, C_pad)
    c_pad = b.shape[-1]

    for hh in range(TH):                         # static unroll over rows in tile
        h = t * TH + hh                          # global output row index
        acc = jnp.zeros((W_out, c_pad), jnp.float32)
        for kh in range(KH):
            for kw in range(KW):
                # (W_out, C_in) strip of the padded image for this tap
                seg = x_ref[0, h + kh, pl.ds(kw, W_out), :]
                acc = acc + jnp.dot(seg, w_taps[kh * KW + kw],
                                    preferred_element_type=jnp.float32)
        o_ref[0, pl.ds(hh * W_out, W_out), :] = (acc + b).astype(o_ref.dtype)


def _counters_kernel(y_ref, o_ref):
    # y_ref: (N, TS, C_pad)  chunk of channels-last conv output
    # o_ref: (1, C_pad)      resident running max; tanh applied at the last step
    s = pl.program_id(0)
    part = jnp.sum(y_ref[...].astype(jnp.float32), axis=0)   # sum over batch -> (TS, C_pad)
    m = jnp.max(part, axis=0, keepdims=True)                  # spatial max     -> (1, C_pad)

    @pl.when(s == 0)
    def _():
        o_ref[...] = m

    @pl.when(s > 0)
    def _():
        o_ref[...] = jnp.maximum(o_ref[...], m)

    @pl.when(s == pl.num_programs(0) - 1)
    def _():
        o_ref[...] = jnp.tanh(o_ref[...])        # tanh hoisted after the max (monotone)


# ------------------------------ JAX wrappers --------------------------------

def _pick_row_tile(H_out, W_out):
    """Largest row-tile TH (<=8) that divides H_out and keeps stores sublane-aligned."""
    for th in (8, 4, 2, 1):
        if H_out % th == 0 and (th * W_out) % 8 == 0:
            return th
    return H_out


@functools.partial(jax.jit, static_argnames=("padding",))
def conv2d_pallas(x, weight, bias, padding=1):
    """Conv2d (stride 1) as an implicit-GEMM Pallas kernel.

    Returns (y_nchw, y_channels_last_padded) where the second buffer is the
    (N, H_out*W_out, C_pad) kernel output reused by the counters kernel.
    """
    N, C_in, H, W = x.shape
    C_out, _, KH, KW = weight.shape
    H_out = H + 2 * padding - KH + 1
    W_out = W + 2 * padding - KW + 1
    Hp, Wp = H + 2 * padding, W + 2 * padding
    C_pad = ((C_out + 127) // 128) * 128
    TH = _pick_row_tile(H_out, W_out)

    # One NCHW -> NHWC pass + spatial zero-pad (no 9x im2col blow-up).
    x_nhwc = jnp.transpose(x, (0, 2, 3, 1))
    xp = jnp.pad(x_nhwc, ((0, 0), (padding, padding), (padding, padding), (0, 0)))

    # Weight as one (C_in, C_pad) matrix per filter tap; bias padded to C_pad.
    w_k = jnp.transpose(weight, (2, 3, 1, 0)).reshape(KH * KW, C_in, C_out)
    w_k = jnp.pad(w_k, ((0, 0), (0, 0), (0, C_pad - C_out)))
    b_k = jnp.pad(bias, (0, C_pad - C_out)).reshape(1, C_pad)

    kernel = functools.partial(_conv_kernel, KH=KH, KW=KW, TH=TH, W_out=W_out)

    y_cl = pl.pallas_call(
        kernel,
        out_shape=jax.ShapeDtypeStruct((N, H_out * W_out, C_pad), x.dtype),
        grid=(N, H_out // TH),
        in_specs=[
            pl.BlockSpec((1, Hp, Wp, C_in), lambda n, t: (n, 0, 0, 0)),
            pl.BlockSpec((KH * KW, C_in, C_pad), lambda n, t: (0, 0, 0)),
            pl.BlockSpec((1, C_pad), lambda n, t: (0, 0)),
        ],
        out_specs=pl.BlockSpec((1, TH * W_out, C_pad), lambda n, t: (n, t, 0)),
        compiler_params=pltpu.CompilerParams(
            dimension_semantics=("parallel", "parallel")),
    )(xp, w_k, b_k)

    # Single transpose back to the PyTorch NCHW API layout.
    y = y_cl[:, :, :C_out].reshape(N, H_out, W_out, C_out).transpose(0, 3, 1, 2)
    return y, y_cl


@jax.jit
def counters_increment_pallas(y_cl):
    """tanh(max_spatial(sum_batch(y))) per channel, from the channels-last buffer.

    Equivalent to max_pool2d(tanh(sum_over_batch(y)), (H, H)).squeeze() because
    tanh is monotone. Returns a (C_pad,) f32 vector (slice to C_out outside).
    """
    N, HW, C_pad = y_cl.shape
    TS = 128 if HW % 128 == 0 else HW
    out = pl.pallas_call(
        _counters_kernel,
        out_shape=jax.ShapeDtypeStruct((1, C_pad), jnp.float32),
        grid=(HW // TS,),
        in_specs=[pl.BlockSpec((N, TS, C_pad), lambda s: (0, s, 0))],
        out_specs=pl.BlockSpec((1, C_pad), lambda s: (0, 0)),
        compiler_params=pltpu.CompilerParams(dimension_semantics=("arbitrary",)),
    )(y_cl)
    return out[0]


class NeuronGliaUnitPallas:
    """JAX/Pallas port of NeuronGliaUnit wrapping an nn.Conv2d layer."""

    def __init__(self, weight, bias, fort=1, dim=0.7, NG_pc=4, AS=2, training=True):
        self.weight = weight            # (C_out, C_in, KH, KW) — PyTorch layout
        self.bias = bias                # (C_out,)
        self.fort = fort
        self.dim = dim
        self.NG_pc = NG_pc
        self.AS = AS
        self.training = training
        self.layer_type = 'Conv 2d'
        self.counters = jnp.zeros((weight.shape[0],), dtype=jnp.float32)
        self.Astro_count = 0

    def __call__(self, x):
        y, y_cl = conv2d_pallas(x, self.weight, self.bias, padding=1)
        if self.training:
            self.Astro_count += 1
            inc = counters_increment_pallas(y_cl)[: self.weight.shape[0]]
            self.counters = self.counters + inc
            if self.Astro_count >= self.NG_pc:
                # TODO(synk): in the original, `param = fort * param.clone()` only
                # rebinds a local name and never mutates the layer parameters, so
                # the faithful port is a no-op on the weights.
                self.Astro_count = 0
                self.counters = self.counters * 0
        return y


# ---------------------------------- main ------------------------------------

if __name__ == "__main__":
    key = jax.random.PRNGKey(0)
    k_x, k_w, k_b = jax.random.split(key, 3)

    N, C_in, H, W = 2, 4, 16, 16
    C_out, KH, KW = 8, 3, 3

    x = jax.random.normal(k_x, (N, C_in, H, W), dtype=jnp.float32)
    # Deterministic Conv2d-like init (uniform in +/- 1/sqrt(fan_in))
    fan_in = C_in * KH * KW
    bound = 1.0 / (fan_in ** 0.5)
    weight = jax.random.uniform(k_w, (C_out, C_in, KH, KW), jnp.float32, -bound, bound)
    bias = jax.random.uniform(k_b, (C_out,), jnp.float32, -bound, bound)

    unit = NeuronGliaUnitPallas(weight, bias, fort=1, dim=0.7, NG_pc=4, AS=2, training=True)
    y = unit(x)
    y = jax.block_until_ready(y)
    counters = jax.block_until_ready(unit.counters)

    # Reference check against XLA conv + plain jnp bookkeeping.
    y_ref = jax.lax.conv_general_dilated(
        x, weight, window_strides=(1, 1), padding=((1, 1), (1, 1)),
        dimension_numbers=("NCHW", "OIHW", "NCHW")) + bias.reshape(1, C_out, 1, 1)
    c_ref = jnp.max(jnp.tanh(jnp.sum(y_ref, axis=0)).reshape(C_out, -1), axis=1)

    assert y.shape == (N, C_out, H, W)
    assert jnp.allclose(y, y_ref, atol=1e-3, rtol=1e-3)
    assert jnp.allclose(counters, c_ref, atol=1e-3, rtol=1e-3)

    print("KERNEL_OK")
</pallas_src>

<mosaic_0001>
module attributes {stable_mosaic.version = 11 : i64} {
  func.func @_conv_kernel(%arg0: i32, %arg1: i32, %arg2: memref<1x18x18x4xf32, #tpu.memory_space<vmem>>, %arg3: memref<9x4x128xf32, #tpu.memory_space<vmem>>, %arg4: memref<1x128xf32, #tpu.memory_space<vmem>>, %arg5: memref<1x128x128xf32, #tpu.memory_space<vmem>>) attributes {dimension_semantics = [#tpu.dimension_semantics<parallel>, #tpu.dimension_semantics<parallel>], iteration_bounds = array<i64: 2, 2>, scalar_prefetch = 0 : i64, scratch_operands = 0 : i64, tpu.core_type = #tpu.core_type<tc>, window_params = [{transform_indices = @transform_0, window_bounds = array<i64: 1, 18, 18, 4>}, {pipeline_mode = #tpu.pipeline_mode<synchronous>, transform_indices = @transform_1, window_bounds = array<i64: 9, 4, 128>}, {pipeline_mode = #tpu.pipeline_mode<synchronous>, transform_indices = @transform_2, window_bounds = array<i64: 1, 128>}, {transform_indices = @transform_3, window_bounds = array<i64: 1, 128, 128>}]} {
    %c0 = arith.constant 0 : index
    %c0_0 = arith.constant 0 : index
    %c0_1 = arith.constant 0 : index
    %0 = vector.load %arg3[%c0, %c0_0, %c0_1] : memref<9x4x128xf32, #tpu.memory_space<vmem>>, vector<1x4x128xf32>
    %1 = vector.shape_cast %0 : vector<1x4x128xf32> to vector<4x128xf32>
    %c1 = arith.constant 1 : index
    %c0_2 = arith.constant 0 : index
    %c0_3 = arith.constant 0 : index
    %2 = vector.load %arg3[%c1, %c0_2, %c0_3] : memref<9x4x128xf32, #tpu.memory_space<vmem>>, vector<1x4x128xf32>
    %3 = vector.shape_cast %2 : vector<1x4x128xf32> to vector<4x128xf32>
    %c2 = arith.constant 2 : index
    %c0_4 = arith.constant 0 : index
    %c0_5 = arith.constant 0 : index
    %4 = vector.load %arg3[%c2, %c0_4, %c0_5] : memref<9x4x128xf32, #tpu.memory_space<vmem>>, vector<1x4x128xf32>
    %5 = vector.shape_cast %4 : vector<1x4x128xf32> to vector<4x128xf32>
    %c3 = arith.constant 3 : index
    %c0_6 = arith.constant 0 : index
    %c0_7 = arith.constant 0 : index
    %6 = vector.load %arg3[%c3, %c0_6, %c0_7] : memref<9x4x128xf32, #tpu.memory_space<vmem>>, vector<1x4x128xf32>
    %7 = vector.shape_cast %6 : vector<1x4x128xf32> to vector<4x128xf32>
    %c4 = arith.constant 4 : index
    %c0_8 = arith.constant 0 : index
    %c0_9 = arith.constant 0 : index
    %8 = vector.load %arg3[%c4, %c0_8, %c0_9] : memref<9x4x128xf32, #tpu.memory_space<vmem>>, vector<1x4x128xf32>
    %9 = vector.shape_cast %8 : vector<1x4x128xf32> to vector<4x128xf32>
    %c5 = arith.constant 5 : index
    %c0_10 = arith.constant 0 : index
    %c0_11 = arith.constant 0 : index
    %10 = vector.load %arg3[%c5, %c0_10, %c0_11] : memref<9x4x128xf32, #tpu.memory_space<vmem>>, vector<1x4x128xf32>
    %11 = vector.shape_cast %10 : vector<1x4x128xf32> to vector<4x128xf32>
    %c6 = arith.constant 6 : index
    %c0_12 = arith.constant 0 : index
    %c0_13 = arith.constant 0 : index
    %12 = vector.load %arg3[%c6, %c0_12, %c0_13] : memref<9x4x128xf32, #tpu.memory_space<vmem>>, vector<1x4x128xf32>
    %13 = vector.shape_cast %12 : vector<1x4x128xf32> to vector<4x128xf32>
    %c7 = arith.constant 7 : index
    %c0_14 = arith.constant 0 : index
    %c0_15 = arith.constant 0 : index
    %14 = vector.load %arg3[%c7, %c0_14, %c0_15] : memref<9x4x128xf32, #tpu.memory_space<vmem>>, vector<1x4x128xf32>
    %15 = vector.shape_cast %14 : vector<1x4x128xf32> to vector<4x128xf32>
    %c8 = arith.constant 8 : index
    %c0_16 = arith.constant 0 : index
    %c0_17 = arith.constant 0 : index
    %16 = vector.load %arg3[%c8, %c0_16, %c0_17] : memref<9x4x128xf32, #tpu.memory_space<vmem>>, vector<1x4x128xf32>
    %17 = vector.shape_cast %16 : vector<1x4x128xf32> to vector<4x128xf32>
    %c0_18 = arith.constant 0 : index
    %c0_19 = arith.constant 0 : index
    %18 = vector.load %arg4[%c0_18, %c0_19] : memref<1x128xf32, #tpu.memory_space<vmem>>, vector<1x128xf32>
    %c8_i32 = arith.constant 8 : i32
    %19 = arith.muli %arg1, %c8_i32 : i32
    %c0_i32 = arith.constant 0 : i32
    %20 = arith.addi %19, %c0_i32 : i32
    %cst = arith.constant 0.000000e+00 : f32
    %21 = vector.broadcast %cst : f32 to vector<16x128xf32>
    %c0_i32_20 = arith.constant 0 : i32
    %22 = arith.addi %20, %c0_i32_20 : i32
    %c0_21 = arith.constant 0 : index
    %23 = arith.index_cast %22 : i32 to index
    %c0_22 = arith.constant 0 : index
    %c0_23 = arith.constant 0 : index
    %24 = vector.load %arg2[%c0_21, %23, %c0_22, %c0_23] : memref<1x18x18x4xf32, #tpu.memory_space<vmem>>, vector<1x1x16x4xf32>
    %25 = vector.shape_cast %24 : vector<1x1x16x4xf32> to vector<16x4xf32>
    %cst_24 = arith.constant dense<0.000000e+00> : vector<16x128xf32>
    %26 = tpu.matmul %25, %1, %cst_24 {dimension_numbers = #tpu.dot_dimension_numbers<[1], [0], [0], [1], [0, 0, 1, 1], [], []>} : vector<16x4xf32>, vector<4x128xf32>, vector<16x128xf32> -> vector<16x128xf32>
    %27 = arith.addf %21, %26 : vector<16x128xf32>
    %c0_i32_25 = arith.constant 0 : i32
    %28 = arith.addi %20, %c0_i32_25 : i32
    %c0_26 = arith.constant 0 : index
    %29 = arith.index_cast %28 : i32 to index
    %c1_27 = arith.constant 1 : index
    %c0_28 = arith.constant 0 : index
    %30 = vector.load %arg2[%c0_26, %29, %c1_27, %c0_28] : memref<1x18x18x4xf32, #tpu.memory_space<vmem>>, vector<1x1x16x4xf32>
    %31 = vector.shape_cast %30 : vector<1x1x16x4xf32> to vector<16x4xf32>
    %cst_29 = arith.constant dense<0.000000e+00> : vector<16x128xf32>
    %32 = tpu.matmul %31, %3, %cst_29 {dimension_numbers = #tpu.dot_dimension_numbers<[1], [0], [0], [1], [0, 0, 1, 1], [], []>} : vector<16x4xf32>, vector<4x128xf32>, vector<16x128xf32> -> vector<16x128xf32>
    %33 = arith.addf %27, %32 : vector<16x128xf32>
    %c0_i32_30 = arith.constant 0 : i32
    %34 = arith.addi %20, %c0_i32_30 : i32
    %c0_31 = arith.constant 0 : index
    %35 = arith.index_cast %34 : i32 to index
    %c2_32 = arith.constant 2 : index
    %c0_33 = arith.constant 0 : index
    %36 = vector.load %arg2[%c0_31, %35, %c2_32, %c0_33] : memref<1x18x18x4xf32, #tpu.memory_space<vmem>>, vector<1x1x16x4xf32>
    %37 = vector.shape_cast %36 : vector<1x1x16x4xf32> to vector<16x4xf32>
    %cst_34 = arith.constant dense<0.000000e+00> : vector<16x128xf32>
    %38 = tpu.matmul %37, %5, %cst_34 {dimension_numbers = #tpu.dot_dimension_numbers<[1], [0], [0], [1], [0, 0, 1, 1], [], []>} : vector<16x4xf32>, vector<4x128xf32>, vector<16x128xf32> -> vector<16x128xf32>
    %39 = arith.addf %33, %38 : vector<16x128xf32>
    %c1_i32 = arith.constant 1 : i32
    %40 = arith.addi %20, %c1_i32 : i32
    %c0_35 = arith.constant 0 : index
    %41 = arith.index_cast %40 : i32 to index
    %c0_36 = arith.constant 0 : index
    %c0_37 = arith.constant 0 : index
    %42 = vector.load %arg2[%c0_35, %41, %c0_36, %c0_37] : memref<1x18x18x4xf32, #tpu.memory_space<vmem>>, vector<1x1x16x4xf32>
    %43 = vector.shape_cast %42 : vector<1x1x16x4xf32> to vector<16x4xf32>
    %cst_38 = arith.constant dense<0.000000e+00> : vector<16x128xf32>
    %44 = tpu.matmul %43, %7, %cst_38 {dimension_numbers = #tpu.dot_dimension_numbers<[1], [0], [0], [1], [0, 0, 1, 1], [], []>} : vector<16x4xf32>, vector<4x128xf32>, vector<16x128xf32> -> vector<16x128xf32>
    %45 = arith.addf %39, %44 : vector<16x128xf32>
    %c1_i32_39 = arith.constant 1 : i32
    %46 = arith.addi %20, %c1_i32_39 : i32
    %c0_40 = arith.constant 0 : index
    %47 = arith.index_cast %46 : i32 to index
    %c1_41 = arith.constant 1 : index
    %c0_42 = arith.constant 0 : index
    %48 = vector.load %arg2[%c0_40, %47, %c1_41, %c0_42] : memref<1x18x18x4xf32, #tpu.memory_space<vmem>>, vector<1x1x16x4xf32>
    %49 = vector.shape_cast %48 : vector<1x1x16x4xf32> to vector<16x4xf32>
    %cst_43 = arith.constant dense<0.000000e+00> : vector<16x128xf32>
    %50 = tpu.matmul %49, %9, %cst_43 {dimension_numbers = #tpu.dot_dimension_numbers<[1], [0], [0], [1], [0, 0, 1, 1], [], []>} : vector<16x4xf32>, vector<4x128xf32>, vector<16x128xf32> -> vector<16x128xf32>
    %51 = arith.addf %45, %50 : vector<16x128xf32>
    %c1_i32_44 = arith.constant 1 : i32
    %52 = arith.addi %20, %c1_i32_44 : i32
    %c0_45 = arith.constant 0 : index
    %53 = arith.index_cast %52 : i32 to index
    %c2_46 = arith.constant 2 : index
    %c0_47 = arith.constant 0 : index
    %54 = vector.load %arg2[%c0_45, %53, %c2_46, %c0_47] : memref<1x18x18x4xf32, #tpu.memory_space<vmem>>, vector<1x1x16x4xf32>
    %55 = vector.shape_cast %54 : vector<1x1x16x4xf32> to vector<16x4xf32>
    %cst_48 = arith.constant dense<0.000000e+00> : vector<16x128xf32>
    %56 = tpu.matmul %55, %11, %cst_48 {dimension_numbers = #tpu.dot_dimension_numbers<[1], [0], [0], [1], [0, 0, 1, 1], [], []>} : vector<16x4xf32>, vector<4x128xf32>, vector<16x128xf32> -> vector<16x128xf32>
    %57 = arith.addf %51, %56 : vector<16x128xf32>
    %c2_i32 = arith.constant 2 : i32
    %58 = arith.addi %20, %c2_i32 : i32
    %c0_49 = arith.constant 0 : index
    %59 = arith.index_cast %58 : i32 to index
    %c0_50 = arith.constant 0 : index
    %c0_51 = arith.constant 0 : index
    %60 = vector.load %arg2[%c0_49, %59, %c0_50, %c0_51] : memref<1x18x18x4xf32, #tpu.memory_space<vmem>>, vector<1x1x16x4xf32>
    %61 = vector.shape_cast %60 : vector<1x1x16x4xf32> to vector<16x4xf32>
    %cst_52 = arith.constant dense<0.000000e+00> : vector<16x128xf32>
    %62 = tpu.matmul %61, %13, %cst_52 {dimension_numbers = #tpu.dot_dimension_numbers<[1], [0], [0], [1], [0, 0, 1, 1], [], []>} : vector<16x4xf32>, vector<4x128xf32>, vector<16x128xf32> -> vector<16x128xf32>
    %63 = arith.addf %57, %62 : vector<16x128xf32>
    %c2_i32_53 = arith.constant 2 : i32
    %64 = arith.addi %20, %c2_i32_53 : i32
    %c0_54 = arith.constant 0 : index
    %65 = arith.index_cast %64 : i32 to index
    %c1_55 = arith.constant 1 : index
    %c0_56 = arith.constant 0 : index
    %66 = vector.load %arg2[%c0_54, %65, %c1_55, %c0_56] : memref<1x18x18x4xf32, #tpu.memory_space<vmem>>, vector<1x1x16x4xf32>
    %67 = vector.shape_cast %66 : vector<1x1x16x4xf32> to vector<16x4xf32>
    %cst_57 = arith.constant dense<0.000000e+00> : vector<16x128xf32>
    %68 = tpu.matmul %67, %15, %cst_57 {dimension_numbers = #tpu.dot_dimension_numbers<[1], [0], [0], [1], [0, 0, 1, 1], [], []>} : vector<16x4xf32>, vector<4x128xf32>, vector<16x128xf32> -> vector<16x128xf32>
    %69 = arith.addf %63, %68 : vector<16x128xf32>
    %c2_i32_58 = arith.constant 2 : i32
    %70 = arith.addi %20, %c2_i32_58 : i32
    %c0_59 = arith.constant 0 : index
    %71 = arith.index_cast %70 : i32 to index
    %c2_60 = arith.constant 2 : index
    %c0_61 = arith.constant 0 : index
    %72 = vector.load %arg2[%c0_59, %71, %c2_60, %c0_61] : memref<1x18x18x4xf32, #tpu.memory_space<vmem>>, vector<1x1x16x4xf32>
    %73 = vector.shape_cast %72 : vector<1x1x16x4xf32> to vector<16x4xf32>
    %cst_62 = arith.constant dense<0.000000e+00> : vector<16x128xf32>
    %74 = tpu.matmul %73, %17, %cst_62 {dimension_numbers = #tpu.dot_dimension_numbers<[1], [0], [0], [1], [0, 0, 1, 1], [], []>} : vector<16x4xf32>, vector<4x128xf32>, vector<16x128xf32> -> vector<16x128xf32>
    %75 = arith.addf %69, %74 : vector<16x128xf32>
    %76 = vector.broadcast %18 : vector<1x128xf32> to vector<16x128xf32>
    %77 = arith.addf %75, %76 : vector<16x128xf32>
    %c0_63 = arith.constant 0 : index
    %c0_64 = arith.constant 0 : index
    %c0_65 = arith.constant 0 : index
    %78 = vector.load %arg5[%c0_63, %c0_64, %c0_65] : memref<1x128x128xf32, #tpu.memory_space<vmem>>, vector<1x16x128xf32>
    %79 = vector.shape_cast %78 : vector<1x16x128xf32> to vector<16x128xf32>
    %80 = vector.shape_cast %77 : vector<16x128xf32> to vector<1x16x128xf32>
    tpu.vector_store %arg5[%c0_63, %c0_64, %c0_65], %80 {strides = array<i32>} : memref<1x128x128xf32, #tpu.memory_space<vmem>>, vector<1x16x128xf32>,
    %c8_i32_66 = arith.constant 8 : i32
    %81 = arith.muli %arg1, %c8_i32_66 : i32
    %c1_i32_67 = arith.constant 1 : i32
    %82 = arith.addi %81, %c1_i32_67 : i32
    %cst_68 = arith.constant 0.000000e+00 : f32
    %83 = vector.broadcast %cst_68 : f32 to vector<16x128xf32>
    %c0_i32_69 = arith.constant 0 : i32
    %84 = arith.addi %82, %c0_i32_69 : i32
    %c0_70 = arith.constant 0 : index
    %85 = arith.index_cast %84 : i32 to index
    %c0_71 = arith.constant 0 : index
    %c0_72 = arith.constant 0 : index
    %86 = vector.load %arg2[%c0_70, %85, %c0_71, %c0_72] : memref<1x18x18x4xf32, #tpu.memory_space<vmem>>, vector<1x1x16x4xf32>
    %87 = vector.shape_cast %86 : vector<1x1x16x4xf32> to vector<16x4xf32>
    %cst_73 = arith.constant dense<0.000000e+00> : vector<16x128xf32>
    %88 = tpu.matmul %87, %1, %cst_73 {dimension_numbers = #tpu.dot_dimension_numbers<[1], [0], [0], [1], [0, 0, 1, 1], [], []>} : vector<16x4xf32>, vector<4x128xf32>, vector<16x128xf32> -> vector<16x128xf32>
    %89 = arith.addf %83, %88 : vector<16x128xf32>
    %c0_i32_74 = arith.constant 0 : i32
    %90 = arith.addi %82, %c0_i32_74 : i32
    %c0_75 = arith.constant 0 : index
    %91 = arith.index_cast %90 : i32 to index
    %c1_76 = arith.constant 1 : index
    %c0_77 = arith.constant 0 : index
    %92 = vector.load %arg2[%c0_75, %91, %c1_76, %c0_77] : memref<1x18x18x4xf32, #tpu.memory_space<vmem>>, vector<1x1x16x4xf32>
    %93 = vector.shape_cast %92 : vector<1x1x16x4xf32> to vector<16x4xf32>
    %cst_78 = arith.constant dense<0.000000e+00> : vector<16x128xf32>
    %94 = tpu.matmul %93, %3, %cst_78 {dimension_numbers = #tpu.dot_dimension_numbers<[1], [0], [0], [1], [0, 0, 1, 1], [], []>} : vector<16x4xf32>, vector<4x128xf32>, vector<16x128xf32> -> vector<16x128xf32>
    %95 = arith.addf %89, %94 : vector<16x128xf32>
    %c0_i32_79 = arith.constant 0 : i32
    %96 = arith.addi %82, %c0_i32_79 : i32
    %c0_80 = arith.constant 0 : index
    %97 = arith.index_cast %96 : i32 to index
    %c2_81 = arith.constant 2 : index
    %c0_82 = arith.constant 0 : index
    %98 = vector.load %arg2[%c0_80, %97, %c2_81, %c0_82] : memref<1x18x18x4xf32, #tpu.memory_space<vmem>>, vector<1x1x16x4xf32>
    %99 = vector.shape_cast %98 : vector<1x1x16x4xf32> to vector<16x4xf32>
    %cst_83 = arith.constant dense<0.000000e+00> : vector<16x128xf32>
    %100 = tpu.matmul %99, %5, %cst_83 {dimension_numbers = #tpu.dot_dimension_numbers<[1], [0], [0], [1], [0, 0, 1, 1], [], []>} : vector<16x4xf32>, vector<4x128xf32>, vector<16x128xf32> -> vector<16x128xf32>
    %101 = arith.addf %95, %100 : vector<16x128xf32>
    %c1_i32_84 = arith.constant 1 : i32
    %102 = arith.addi %82, %c1_i32_84 : i32
    %c0_85 = arith.constant 0 : index
    %103 = arith.index_cast %102 : i32 to index
    %c0_86 = arith.constant 0 : index
    %c0_87 = arith.constant 0 : index
    %104 = vector.load %arg2[%c0_85, %103, %c0_86, %c0_87] : memref<1x18x18x4xf32, #tpu.memory_space<vmem>>, vector<1x1x16x4xf32>
    %105 = vector.shape_cast %104 : vector<1x1x16x4xf32> to vector<16x4xf32>
    %cst_88 = arith.constant dense<0.000000e+00> : vector<16x128xf32>
    %106 = tpu.matmul %105, %7, %cst_88 {dimension_numbers = #tpu.dot_dimension_numbers<[1], [0], [0], [1], [0, 0, 1, 1], [], []>} : vector<16x4xf32>, vector<4x128xf32>, vector<16x128xf32> -> vector<16x128xf32>
    %107 = arith.addf %101, %106 : vector<16x128xf32>
    %c1_i32_89 = arith.constant 1 : i32
    %108 = arith.addi %82, %c1_i32_89 : i32
    %c0_90 = arith.constant 0 : index
    %109 = arith.index_cast %108 : i32 to index
    %c1_91 = arith.constant 1 : index
    %c0_92 = arith.constant 0 : index
    %110 = vector.load %arg2[%c0_90, %109, %c1_91, %c0_92] : memref<1x18x18x4xf32, #tpu.memory_space<vmem>>, vector<1x1x16x4xf32>
    %111 = vector.shape_cast %110 : vector<1x1x16x4xf32> to vector<16x4xf32>
    %cst_93 = arith.constant dense<0.000000e+00> : vector<16x128xf32>
    %112 = tpu.matmul %111, %9, %cst_93 {dimension_numbers = #tpu.dot_dimension_numbers<[1], [0], [0], [1], [0, 0, 1, 1], [], []>} : vector<16x4xf32>, vector<4x128xf32>, vector<16x128xf32> -> vector<16x128xf32>
    %113 = arith.addf %107, %112 : vector<16x128xf32>
    %c1_i32_94 = arith.constant 1 : i32
    %114 = arith.addi %82, %c1_i32_94 : i32
    %c0_95 = arith.constant 0 : index
    %115 = arith.index_cast %114 : i32 to index
    %c2_96 = arith.constant 2 : index
    %c0_97 = arith.constant 0 : index
    %116 = vector.load %arg2[%c0_95, %115, %c2_96, %c0_97] : memref<1x18x18x4xf32, #tpu.memory_space<vmem>>, vector<1x1x16x4xf32>
    %117 = vector.shape_cast %116 : vector<1x1x16x4xf32> to vector<16x4xf32>
    %cst_98 = arith.constant dense<0.000000e+00> : vector<16x128xf32>
    %118 = tpu.matmul %117, %11, %cst_98 {dimension_numbers = #tpu.dot_dimension_numbers<[1], [0], [0], [1], [0, 0, 1, 1], [], []>} : vector<16x4xf32>, vector<4x128xf32>, vector<16x128xf32> -> vector<16x128xf32>
    %119 = arith.addf %113, %118 : vector<16x128xf32>
    %c2_i32_99 = arith.constant 2 : i32
    %120 = arith.addi %82, %c2_i32_99 : i32
    %c0_100 = arith.constant 0 : index
    %121 = arith.index_cast %120 : i32 to index
    %c0_101 = arith.constant 0 : index
    %c0_102 = arith.constant 0 : index
    %122 = vector.load %arg2[%c0_100, %121, %c0_101, %c0_102] : memref<1x18x18x4xf32, #tpu.memory_space<vmem>>, vector<1x1x16x4xf32>
    %123 = vector.shape_cast %122 : vector<1x1x16x4xf32> to vector<16x4xf32>
    %cst_103 = arith.constant dense<0.000000e+00> : vector<16x128xf32>
    %124 = tpu.matmul %123, %13, %cst_103 {dimension_numbers = #tpu.dot_dimension_numbers<[1], [0], [0], [1], [0, 0, 1, 1], [], []>} : vector<16x4xf32>, vector<4x128xf32>, vector<16x128xf32> -> vector<16x128xf32>
    %125 = arith.addf %119, %124 : vector<16x128xf32>
    %c2_i32_104 = arith.constant 2 : i32
    %126 = arith.addi %82, %c2_i32_104 : i32
    %c0_105 = arith.constant 0 : index
    %127 = arith.index_cast %126 : i32 to index
    %c1_106 = arith.constant 1 : index
    %c0_107 = arith.constant 0 : index
    %128 = vector.load %arg2[%c0_105, %127, %c1_106, %c0_107] : memref<1x18x18x4xf32, #tpu.memory_space<vmem>>, vector<1x1x16x4xf32>
    %129 = vector.shape_cast %128 : vector<1x1x16x4xf32> to vector<16x4xf32>
    %cst_108 = arith.constant dense<0.000000e+00> : vector<16x128xf32>
    %130 = tpu.matmul %129, %15, %cst_108 {dimension_numbers = #tpu.dot_dimension_numbers<[1], [0], [0], [1], [0, 0, 1, 1], [], []>} : vector<16x4xf32>, vector<4x128xf32>, vector<16x128xf32> -> vector<16x128xf32>
    %131 = arith.addf %125, %130 : vector<16x128xf32>
    %c2_i32_109 = arith.constant 2 : i32
    %132 = arith.addi %82, %c2_i32_109 : i32
    %c0_110 = arith.constant 0 : index
    %133 = arith.index_cast %132 : i32 to index
    %c2_111 = arith.constant 2 : index
    %c0_112 = arith.constant 0 : index
    %134 = vector.load %arg2[%c0_110, %133, %c2_111, %c0_112] : memref<1x18x18x4xf32, #tpu.memory_space<vmem>>, vector<1x1x16x4xf32>
    %135 = vector.shape_cast %134 : vector<1x1x16x4xf32> to vector<16x4xf32>
    %cst_113 = arith.constant dense<0.000000e+00> : vector<16x128xf32>
    %136 = tpu.matmul %135, %17, %cst_113 {dimension_numbers = #tpu.dot_dimension_numbers<[1], [0], [0], [1], [0, 0, 1, 1], [], []>} : vector<16x4xf32>, vector<4x128xf32>, vector<16x128xf32> -> vector<16x128xf32>
    %137 = arith.addf %131, %136 : vector<16x128xf32>
    %138 = vector.broadcast %18 : vector<1x128xf32> to vector<16x128xf32>
    %139 = arith.addf %137, %138 : vector<16x128xf32>
    %c0_114 = arith.constant 0 : index
    %c16 = arith.constant 16 : index
    %c0_115 = arith.constant 0 : index
    %140 = vector.load %arg5[%c0_114, %c16, %c0_115] : memref<1x128x128xf32, #tpu.memory_space<vmem>>, vector<1x16x128xf32>
    %141 = vector.shape_cast %140 : vector<1x16x128xf32> to vector<16x128xf32>
    %142 = vector.shape_cast %139 : vector<16x128xf32> to vector<1x16x128xf32>
    tpu.vector_store %arg5[%c0_114, %c16, %c0_115], %142 {strides = array<i32>} : memref<1x128x128xf32, #tpu.memory_space<vmem>>, vector<1x16x128xf32>,
    %c8_i32_116 = arith.constant 8 : i32
    %143 = arith.muli %arg1, %c8_i32_116 : i32
    %c2_i32_117 = arith.constant 2 : i32
    %144 = arith.addi %143, %c2_i32_117 : i32
    %cst_118 = arith.constant 0.000000e+00 : f32
    %145 = vector.broadcast %cst_118 : f32 to vector<16x128xf32>
    %c0_i32_119 = arith.constant 0 : i32
    %146 = arith.addi %144, %c0_i32_119 : i32
    %c0_120 = arith.constant 0 : index
    %147 = arith.index_cast %146 : i32 to index
    %c0_121 = arith.constant 0 : index
    %c0_122 = arith.constant 0 : index
    %148 = vector.load %arg2[%c0_120, %147, %c0_121, %c0_122] : memref<1x18x18x4xf32, #tpu.memory_space<vmem>>, vector<1x1x16x4xf32>
    %149 = vector.shape_cast %148 : vector<1x1x16x4xf32> to vector<16x4xf32>
    %cst_123 = arith.constant dense<0.000000e+00> : vector<16x128xf32>
    %150 = tpu.matmul %149, %1, %cst_123 {dimension_numbers = #tpu.dot_dimension_numbers<[1], [0], [0], [1], [0, 0, 1, 1], [], []>} : vector<16x4xf32>, vector<4x128xf32>, vector<16x128xf32> -> vector<16x128xf32>
    %151 = arith.addf %145, %150 : vector<16x128xf32>
    %c0_i32_124 = arith.constant 0 : i32
    %152 = arith.addi %144, %c0_i32_124 : i32
    %c0_125 = arith.constant 0 : index
    %153 = arith.index_cast %152 : i32 to index
    %c1_126 = arith.constant 1 : index
    %c0_127 = arith.constant 0 : index
    %154 = vector.load %arg2[%c0_125, %153, %c1_126, %c0_127] : memref<1x18x18x4xf32, #tpu.memory_space<vmem>>, vector<1x1x16x4xf32>
    %155 = vector.shape_cast %154 : vector<1x1x16x4xf32> to vector<16x4xf32>
    %cst_128 = arith.constant dense<0.000000e+00> : vector<16x128xf32>
    %156 = tpu.matmul %155, %3, %cst_128 {dimension_numbers = #tpu.dot_dimension_numbers<[1], [0], [0], [1], [0, 0, 1, 1], [], []>} : vector<16x4xf32>, vector<4x128xf32>, vector<16x128xf32> -> vector<16x128xf32>
    %157 = arith.addf %151, %156 : vector<16x128xf32>
    %c0_i32_129 = arith.constant 0 : i32
    %158 = arith.addi %144, %c0_i32_129 : i32
    %c0_130 = arith.constant 0 : index
    %159 = arith.index_cast %158 : i32 to index
    %c2_131 = arith.constant 2 : index
    %c0_132 = arith.constant 0 : index
    %160 = vector.load %arg2[%c0_130, %159, %c2_131, %c0_132] : memref<1x18x18x4xf32, #tpu.memory_space<vmem>>, vector<1x1x16x4xf32>
    %161 = vector.shape_cast %160 : vector<1x1x16x4xf32> to vector<16x4xf32>
    %cst_133 = arith.constant dense<0.000000e+00> : vector<16x128xf32>
    %162 = tpu.matmul %161, %5, %cst_133 {dimension_numbers = #tpu.dot_dimension_numbers<[1], [0], [0], [1], [0, 0, 1, 1], [], []>} : vector<16x4xf32>, vector<4x128xf32>, vector<16x128xf32> -> vector<16x128xf32>
    %163 = arith.addf %157, %162 : vector<16x128xf32>
    %c1_i32_134 = arith.constant 1 : i32
    %164 = arith.addi %144, %c1_i32_134 : i32
    %c0_135 = arith.constant 0 : index
    %165 = arith.index_cast %164 : i32 to index
    %c0_136 = arith.constant 0 : index
    %c0_137 = arith.constant 0 : index
    %166 = vector.load %arg2[%c0_135, %165, %c0_136, %c0_137] : memref<1x18x18x4xf32, #tpu.memory_space<vmem>>, vector<1x1x16x4xf32>
    %167 = vector.shape_cast %166 : vector<1x1x16x4xf32> to vector<16x4xf32>
    %cst_138 = arith.constant dense<0.000000e+00> : vector<16x128xf32>
    %168 = tpu.matmul %167, %7, %cst_138 {dimension_numbers = #tpu.dot_dimension_numbers<[1], [0], [0], [1], [0, 0, 1, 1], [], []>} : vector<16x4xf32>, vector<4x128xf32>, vector<16x128xf32> -> vector<16x128xf32>
    %169 = arith.addf %163, %168 : vector<16x128xf32>
    %c1_i32_139 = arith.constant 1 : i32
    %170 = arith.addi %144, %c1_i32_139 : i32
    %c0_140 = arith.constant 0 : index
    %171 = arith.index_cast %170 : i32 to index
    %c1_141 = arith.constant 1 : index
    %c0_142 = arith.constant 0 : index
    %172 = vector.load %arg2[%c0_140, %171, %c1_141, %c0_142] : memref<1x18x18x4xf32, #tpu.memory_space<vmem>>, vector<1x1x16x4xf32>
    %173 = vector.shape_cast %172 : vector<1x1x16x4xf32> to vector<16x4xf32>
    %cst_143 = arith.constant dense<0.000000e+00> : vector<16x128xf32>
    %174 = tpu.matmul %173, %9, %cst_143 {dimension_numbers = #tpu.dot_dimension_numbers<[1], [0], [0], [1], [0, 0, 1, 1], [], []>} : vector<16x4xf32>, vector<4x128xf32>, vector<16x128xf32> -> vector<16x128xf32>
    %175 = arith.addf %169, %174 : vector<16x128xf32>
    %c1_i32_144 = arith.constant 1 : i32
    %176 = arith.addi %144, %c1_i32_144 : i32
    %c0_145 = arith.constant 0 : index
    %177 = arith.index_cast %176 : i32 to index
    %c2_146 = arith.constant 2 : index
    %c0_147 = arith.constant 0 : index
    %178 = vector.load %arg2[%c0_145, %177, %c2_146, %c0_147] : memref<1x18x18x4xf32, #tpu.memory_space<vmem>>, vector<1x1x16x4xf32>
    %179 = vector.shape_cast %178 : vector<1x1x16x4xf32> to vector<16x4xf32>
    %cst_148 = arith.constant dense<0.000000e+00> : vector<16x128xf32>
    %180 = tpu.matmul %179, %11, %cst_148 {dimension_numbers = #tpu.dot_dimension_numbers<[1], [0], [0], [1], [0, 0, 1, 1], [], []>} : vector<16x4xf32>, vector<4x128xf32>, vector<16x128xf32> -> vector<16x128xf32>
    %181 = arith.addf %175, %180 : vector<16x128xf32>
    %c2_i32_149 = arith.constant 2 : i32
    %182 = arith.addi %144, %c2_i32_149 : i32
    %c0_150 = arith.constant 0 : index
    %183 = arith.index_cast %182 : i32 to index
    %c0_151 = arith.constant 0 : index
    %c0_152 = arith.constant 0 : index
    %184 = vector.load %arg2[%c0_150, %183, %c0_151, %c0_152] : memref<1x18x18x4xf32, #tpu.memory_space<vmem>>, vector<1x1x16x4xf32>
    %185 = vector.shape_cast %184 : vector<1x1x16x4xf32> to vector<16x4xf32>
    %cst_153 = arith.constant dense<0.000000e+00> : vector<16x128xf32>
    %186 = tpu.matmul %185, %13, %cst_153 {dimension_numbers = #tpu.dot_dimension_numbers<[1], [0], [0], [1], [0, 0, 1, 1], [], []>} : vector<16x4xf32>, vector<4x128xf32>, vector<16x128xf32> -> vector<16x128xf32>
    %187 = arith.addf %181, %186 : vector<16x128xf32>
    %c2_i32_154 = arith.constant 2 : i32
    %188 = arith.addi %144, %c2_i32_154 : i32
    %c0_155 = arith.constant 0 : index
    %189 = arith.index_cast %188 : i32 to index
    %c1_156 = arith.constant 1 : index
    %c0_157 = arith.constant 0 : index
    %190 = vector.load %arg2[%c0_155, %189, %c1_156, %c0_157] : memref<1x18x18x4xf32, #tpu.memory_space<vmem>>, vector<1x1x16x4xf32>
    %191 = vector.shape_cast %190 : vector<1x1x16x4xf32> to vector<16x4xf32>
    %cst_158 = arith.constant dense<0.000000e+00> : vector<16x128xf32>
    %192 = tpu.matmul %191, %15, %cst_158 {dimension_numbers = #tpu.dot_dimension_numbers<[1], [0], [0], [1], [0, 0, 1, 1], [], []>} : vector<16x4xf32>, vector<4x128xf32>, vector<16x128xf32> -> vector<16x128xf32>
    %193 = arith.addf %187, %192 : vector<16x128xf32>
    %c2_i32_159 = arith.constant 2 : i32
    %194 = arith.addi %144, %c2_i32_159 : i32
    %c0_160 = arith.constant 0 : index
    %195 = arith.index_cast %194 : i32 to index
    %c2_161 = arith.constant 2 : index
    %c0_162 = arith.constant 0 : index
    %196 = vector.load %arg2[%c0_160, %195, %c2_161, %c0_162] : memref<1x18x18x4xf32, #tpu.memory_space<vmem>>, vector<1x1x16x4xf32>
    %197 = vector.shape_cast %196 : vector<1x1x16x4xf32> to vector<16x4xf32>
    %cst_163 = arith.constant dense<0.000000e+00> : vector<16x128xf32>
    %198 = tpu.matmul %197, %17, %cst_163 {dimension_numbers = #tpu.dot_dimension_numbers<[1], [0], [0], [1], [0, 0, 1, 1], [], []>} : vector<16x4xf32>, vector<4x128xf32>, vector<16x128xf32> -> vector<16x128xf32>
    %199 = arith.addf %193, %198 : vector<16x128xf32>
    %200 = vector.broadcast %18 : vector<1x128xf32> to vector<16x128xf32>
    %201 = arith.addf %199, %200 : vector<16x128xf32>
    %c0_164 = arith.constant 0 : index
    %c32 = arith.constant 32 : index
    %c0_165 = arith.constant 0 : index
    %202 = vector.load %arg5[%c0_164, %c32, %c0_165] : memref<1x128x128xf32, #tpu.memory_space<vmem>>, vector<1x16x128xf32>
    %203 = vector.shape_cast %202 : vector<1x16x128xf32> to vector<16x128xf32>
    %204 = vector.shape_cast %201 : vector<16x128xf32> to vector<1x16x128xf32>
    tpu.vector_store %arg5[%c0_164, %c32, %c0_165], %204 {strides = array<i32>} : memref<1x128x128xf32, #tpu.memory_space<vmem>>, vector<1x16x128xf32>,
    %c8_i32_166 = arith.constant 8 : i32
    %205 = arith.muli %arg1, %c8_i32_166 : i32
    %c3_i32 = arith.constant 3 : i32
    %206 = arith.addi %205, %c3_i32 : i32
    %cst_167 = arith.constant 0.000000e+00 : f32
    %207 = vector.broadcast %cst_167 : f32 to vector<16x128xf32>
    %c0_i32_168 = arith.constant 0 : i32
    %208 = arith.addi %206, %c0_i32_168 : i32
    %c0_169 = arith.constant 0 : index
    %209 = arith.index_cast %208 : i32 to index
    %c0_170 = arith.constant 0 : index
    %c0_171 = arith.constant 0 : index
    %210 = vector.load %arg2[%c0_169, %209, %c0_170, %c0_171] : memref<1x18x18x4xf32, #tpu.memory_space<vmem>>, vector<1x1x16x4xf32>
    %211 = vector.shape_cast %210 : vector<1x1x16x4xf32> to vector<16x4xf32>
    %cst_172 = arith.constant dense<0.000000e+00> : vector<16x128xf32>
    %212 = tpu.matmul %211, %1, %cst_172 {dimension_numbers = #tpu.dot_dimension_numbers<[1], [0], [0], [1], [0, 0, 1, 1], [], []>} : vector<16x4xf32>, vector<4x128xf32>, vector<16x128xf32> -> vector<16x128xf32>
    %213 = arith.addf %207, %212 : vector<16x128xf32>
    %c0_i32_173 = arith.constant 0 : i32
    %214 = arith.addi %206, %c0_i32_173 : i32
    %c0_174 = arith.constant 0 : index
    %215 = arith.index_cast %214 : i32 to index
    %c1_175 = arith.constant 1 : index
    %c0_176 = arith.constant 0 : index
    %216 = vector.load %arg2[%c0_174, %215, %c1_175, %c0_176] : memref<1x18x18x4xf32, #tpu.memory_space<vmem>>, vector<1x1x16x4xf32>
    %217 = vector.shape_cast %216 : vector<1x1x16x4xf32> to vector<16x4xf32>
    %cst_177 = arith.constant dense<0.000000e+00> : vector<16x128xf32>
    %218 = tpu.matmul %217, %3, %cst_177 {dimension_numbers = #tpu.dot_dimension_numbers<[1], [0], [0], [1], [0, 0, 1, 1], [], []>} : vector<16x4xf32>, vector<4x128xf32>, vector<16x128xf32> -> vector<16x128xf32>
    %219 = arith.addf %213, %218 : vector<16x128xf32>
    %c0_i32_178 = arith.constant 0 : i32
    %220 = arith.addi %206, %c0_i32_178 : i32
    %c0_179 = arith.constant 0 : index
    %221 = arith.index_cast %220 : i32 to index
    %c2_180 = arith.constant 2 : index
    %c0_181 = arith.constant 0 : index
    %222 = vector.load %arg2[%c0_179, %221, %c2_180, %c0_181] : memref<1x18x18x4xf32, #tpu.memory_space<vmem>>, vector<1x1x16x4xf32>
    %223 = vector.shape_cast %222 : vector<1x1x16x4xf32> to vector<16x4xf32>
    %cst_182 = arith.constant dense<0.000000e+00> : vector<16x128xf32>
    %224 = tpu.matmul %223, %5, %cst_182 {dimension_numbers = #tpu.dot_dimension_numbers<[1], [0], [0], [1], [0, 0, 1, 1], [], []>} : vector<16x4xf32>, vector<4x128xf32>, vector<16x128xf32> -> vector<16x128xf32>
    %225 = arith.addf %219, %224 : vector<16x128xf32>
    %c1_i32_183 = arith.constant 1 : i32
    %226 = arith.addi %206, %c1_i32_183 : i32
    %c0_184 = arith.constant 0 : index
    %227 = arith.index_cast %226 : i32 to index
    %c0_185 = arith.constant 0 : index
    %c0_186 = arith.constant 0 : index
    %228 = vector.load %arg2[%c0_184, %227, %c0_185, %c0_186] : memref<1x18x18x4xf32, #tpu.memory_space<vmem>>, vector<1x1x16x4xf32>
    %229 = vector.shape_cast %228 : vector<1x1x16x4xf32> to vector<16x4xf32>
    %cst_187 = arith.constant dense<0.000000e+00> : vector<16x128xf32>
    %230 = tpu.matmul %229, %7, %cst_187 {dimension_numbers = #tpu.dot_dimension_numbers<[1], [0], [0], [1], [0, 0, 1, 1], [], []>} : vector<16x4xf32>, vector<4x128xf32>, vector<16x128xf32> -> vector<16x128xf32>
    %231 = arith.addf %225, %230 : vector<16x128xf32>
    %c1_i32_188 = arith.constant 1 : i32
    %232 = arith.addi %206, %c1_i32_188 : i32
    %c0_189 = arith.constant 0 : index
    %233 = arith.index_cast %232 : i32 to index
    %c1_190 = arith.constant 1 : index
    %c0_191 = arith.constant 0 : index
    %234 = vector.load %arg2[%c0_189, %233, %c1_190, %c0_191] : memref<1x18x18x4xf32, #tpu.memory_space<vmem>>, vector<1x1x16x4xf32>
    %235 = vector.shape_cast %234 : vector<1x1x16x4xf32> to vector<16x4xf32>
    %cst_192 = arith.constant dense<0.000000e+00> : vector<16x128xf32>
    %236 = tpu.matmul %235, %9, %cst_192 {dimension_numbers = #tpu.dot_dimension_numbers<[1], [0], [0], [1], [0, 0, 1, 1], [], []>} : vector<16x4xf32>, vector<4x128xf32>, vector<16x128xf32> -> vector<16x128xf32>
    %237 = arith.addf %231, %236 : vector<16x128xf32>
    %c1_i32_193 = arith.constant 1 : i32
    %238 = arith.addi %206, %c1_i32_193 : i32
    %c0_194 = arith.constant 0 : index
    %239 = arith.index_cast %238 : i32 to index
    %c2_195 = arith.constant 2 : index
    %c0_196 = arith.constant 0 : index
    %240 = vector.load %arg2[%c0_194, %239, %c2_195, %c0_196] : memref<1x18x18x4xf32, #tpu.memory_space<vmem>>, vector<1x1x16x4xf32>
    %241 = vector.shape_cast %240 : vector<1x1x16x4xf32> to vector<16x4xf32>
    %cst_197 = arith.constant dense<0.000000e+00> : vector<16x128xf32>
    %242 = tpu.matmul %241, %11, %cst_197 {dimension_numbers = #tpu.dot_dimension_numbers<[1], [0], [0], [1], [0, 0, 1, 1], [], []>} : vector<16x4xf32>, vector<4x128xf32>, vector<16x128xf32> -> vector<16x128xf32>
    %243 = arith.addf %237, %242 : vector<16x128xf32>
    %c2_i32_198 = arith.constant 2 : i32
    %244 = arith.addi %206, %c2_i32_198 : i32
    %c0_199 = arith.constant 0 : index
    %245 = arith.index_cast %244 : i32 to index
    %c0_200 = arith.constant 0 : index
    %c0_201 = arith.constant 0 : index
    %246 = vector.load %arg2[%c0_199, %245, %c0_200, %c0_201] : memref<1x18x18x4xf32, #tpu.memory_space<vmem>>, vector<1x1x16x4xf32>
    %247 = vector.shape_cast %246 : vector<1x1x16x4xf32> to vector<16x4xf32>
    %cst_202 = arith.constant dense<0.000000e+00> : vector<16x128xf32>
    %248 = tpu.matmul %247, %13, %cst_202 {dimension_numbers = #tpu.dot_dimension_numbers<[1], [0], [0], [1], [0, 0, 1, 1], [], []>} : vector<16x4xf32>, vector<4x128xf32>, vector<16x128xf32> -> vector<16x128xf32>
    %249 = arith.addf %243, %248 : vector<16x128xf32>
    %c2_i32_203 = arith.constant 2 : i32
    %250 = arith.addi %206, %c2_i32_203 : i32
    %c0_204 = arith.constant 0 : index
    %251 = arith.index_cast %250 : i32 to index
    %c1_205 = arith.constant 1 : index
    %c0_206 = arith.constant 0 : index
    %252 = vector.load %arg2[%c0_204, %251, %c1_205, %c0_206] : memref<1x18x18x4xf32, #tpu.memory_space<vmem>>, vector<1x1x16x4xf32>
    %253 = vector.shape_cast %252 : vector<1x1x16x4xf32> to vector<16x4xf32>
    %cst_207 = arith.constant dense<0.000000e+00> : vector<16x128xf32>
    %254 = tpu.matmul %253, %15, %cst_207 {dimension_numbers = #tpu.dot_dimension_numbers<[1], [0], [0], [1], [0, 0, 1, 1], [], []>} : vector<16x4xf32>, vector<4x128xf32>, vector<16x128xf32> -> vector<16x128xf32>
    %255 = arith.addf %249, %254 : vector<16x128xf32>
    %c2_i32_208 = arith.constant 2 : i32
    %256 = arith.addi %206, %c2_i32_208 : i32
    %c0_209 = arith.constant 0 : index
    %257 = arith.index_cast %256 : i32 to index
    %c2_210 = arith.constant 2 : index
    %c0_211 = arith.constant 0 : index
    %258 = vector.load %arg2[%c0_209, %257, %c2_210, %c0_211] : memref<1x18x18x4xf32, #tpu.memory_space<vmem>>, vector<1x1x16x4xf32>
    %259 = vector.shape_cast %258 : vector<1x1x16x4xf32> to vector<16x4xf32>
    %cst_212 = arith.constant dense<0.000000e+00> : vector<16x128xf32>
    %260 = tpu.matmul %259, %17, %cst_212 {dimension_numbers = #tpu.dot_dimension_numbers<[1], [0], [0], [1], [0, 0, 1, 1], [], []>} : vector<16x4xf32>, vector<4x128xf32>, vector<16x128xf32> -> vector<16x128xf32>
    %261 = arith.addf %255, %260 : vector<16x128xf32>
    %262 = vector.broadcast %18 : vector<1x128xf32> to vector<16x128xf32>
    %263 = arith.addf %261, %262 : vector<16x128xf32>
    %c0_213 = arith.constant 0 : index
    %c48 = arith.constant 48 : index
    %c0_214 = arith.constant 0 : index
    %264 = vector.load %arg5[%c0_213, %c48, %c0_214] : memref<1x128x128xf32, #tpu.memory_space<vmem>>, vector<1x16x128xf32>
    %265 = vector.shape_cast %264 : vector<1x16x128xf32> to vector<16x128xf32>
    %266 = vector.shape_cast %263 : vector<16x128xf32> to vector<1x16x128xf32>
    tpu.vector_store %arg5[%c0_213, %c48, %c0_214], %266 {strides = array<i32>} : memref<1x128x128xf32, #tpu.memory_space<vmem>>, vector<1x16x128xf32>,
    %c8_i32_215 = arith.constant 8 : i32
    %267 = arith.muli %arg1, %c8_i32_215 : i32
    %c4_i32 = arith.constant 4 : i32
    %268 = arith.addi %267, %c4_i32 : i32
    %cst_216 = arith.constant 0.000000e+00 : f32
    %269 = vector.broadcast %cst_216 : f32 to vector<16x128xf32>
    %c0_i32_217 = arith.constant 0 : i32
    %270 = arith.addi %268, %c0_i32_217 : i32
    %c0_218 = arith.constant 0 : index
    %271 = arith.index_cast %270 : i32 to index
    %c0_219 = arith.constant 0 : index
    %c0_220 = arith.constant 0 : index
    %272 = vector.load %arg2[%c0_218, %271, %c0_219, %c0_220] : memref<1x18x18x4xf32, #tpu.memory_space<vmem>>, vector<1x1x16x4xf32>
    %273 = vector.shape_cast %272 : vector<1x1x16x4xf32> to vector<16x4xf32>
    %cst_221 = arith.constant dense<0.000000e+00> : vector<16x128xf32>
    %274 = tpu.matmul %273, %1, %cst_221 {dimension_numbers = #tpu.dot_dimension_numbers<[1], [0], [0], [1], [0, 0, 1, 1], [], []>} : vector<16x4xf32>, vector<4x128xf32>, vector<16x128xf32> -> vector<16x128xf32>
    %275 = arith.addf %269, %274 : vector<16x128xf32>
    %c0_i32_222 = arith.constant 0 : i32
    %276 = arith.addi %268, %c0_i32_222 : i32
    %c0_223 = arith.constant 0 : index
    %277 = arith.index_cast %276 : i32 to index
    %c1_224 = arith.constant 1 : index
    %c0_225 = arith.constant 0 : index
    %278 = vector.load %arg2[%c0_223, %277, %c1_224, %c0_225] : memref<1x18x18x4xf32, #tpu.memory_space<vmem>>, vector<1x1x16x4xf32>
    %279 = vector.shape_cast %278 : vector<1x1x16x4xf32> to vector<16x4xf32>
    %cst_226 = arith.constant dense<0.000000e+00> : vector<16x128xf32>
    %280 = tpu.matmul %279, %3, %cst_226 {dimension_numbers = #tpu.dot_dimension_numbers<[1], [0], [0], [1], [0, 0, 1, 1], [], []>} : vector<16x4xf32>, vector<4x128xf32>, vector<16x128xf32> -> vector<16x128xf32>
    %281 = arith.addf %275, %280 : vector<16x128xf32>
    %c0_i32_227 = arith.constant 0 : i32
    %282 = arith.addi %268, %c0_i32_227 : i32
    %c0_228 = arith.constant 0 : index
    %283 = arith.index_cast %282 : i32 to index
    %c2_229 = arith.constant 2 : index
    %c0_230 = arith.constant 0 : index
    %284 = vector.load %arg2[%c0_228, %283, %c2_229, %c0_230] : memref<1x18x18x4xf32, #tpu.memory_space<vmem>>, vector<1x1x16x4xf32>
    %285 = vector.shape_cast %284 : vector<1x1x16x4xf32> to vector<16x4xf32>
    %cst_231 = arith.constant dense<0.000000e+00> : vector<16x128xf32>
    %286 = tpu.matmul %285, %5, %cst_231 {dimension_numbers = #tpu.dot_dimension_numbers<[1], [0], [0], [1], [0, 0, 1, 1], [], []>} : vector<16x4xf32>, vector<4x128xf32>, vector<16x128xf32> -> vector<16x128xf32>
    %287 = arith.addf %281, %286 : vector<16x128xf32>
    %c1_i32_232 = arith.constant 1 : i32
    %288 = arith.addi %268, %c1_i32_232 : i32
    %c0_233 = arith.constant 0 : index
    %289 = arith.index_cast %288 : i32 to index
    %c0_234 = arith.constant 0 : index
    %c0_235 = arith.constant 0 : index
    %290 = vector.load %arg2[%c0_233, %289, %c0_234, %c0_235] : memref<1x18x18x4xf32, #tpu.memory_space<vmem>>, vector<1x1x16x4xf32>
    %291 = vector.shape_cast %290 : vector<1x1x16x4xf32> to vector<16x4xf32>
    %cst_236 = arith.constant dense<0.000000e+00> : vector<16x128xf32>
    %292 = tpu.matmul %291, %7, %cst_236 {dimension_numbers = #tpu.dot_dimension_numbers<[1], [0], [0], [1], [0, 0, 1, 1], [], []>} : vector<16x4xf32>, vector<4x128xf32>, vector<16x128xf32> -> vector<16x128xf32>
    %293 = arith.addf %287, %292 : vector<16x128xf32>
    %c1_i32_237 = arith.constant 1 : i32
    %294 = arith.addi %268, %c1_i32_237 : i32
    %c0_238 = arith.constant 0 : index
    %295 = arith.index_cast %294 : i32 to index
    %c1_239 = arith.constant 1 : index
    %c0_240 = arith.constant 0 : index
    %296 = vector.load %arg2[%c0_238, %295, %c1_239, %c0_240] : memref<1x18x18x4xf32, #tpu.memory_space<vmem>>, vector<1x1x16x4xf32>
    %297 = vector.shape_cast %296 : vector<1x1x16x4xf32> to vector<16x4xf32>
    %cst_241 = arith.constant dense<0.000000e+00> : vector<16x128xf32>
    %298 = tpu.matmul %297, %9, %cst_241 {dimension_numbers = #tpu.dot_dimension_numbers<[1], [0], [0], [1], [0, 0, 1, 1], [], []>} : vector<16x4xf32>, vector<4x128xf32>, vector<16x128xf32> -> vector<16x128xf32>
    %299 = arith.addf %293, %298 : vector<16x128xf32>
    %c1_i32_242 = arith.constant 1 : i32
    %300 = arith.addi %268, %c1_i32_242 : i32
    %c0_243 = arith.constant 0 : index
    %301 = arith.index_cast %300 : i32 to index
    %c2_244 = arith.constant 2 : index
    %c0_245 = arith.constant 0 : index
    %302 = vector.load %arg2[%c0_243, %301, %c2_244, %c0_245] : memref<1x18x18x4xf32, #tpu.memory_space<vmem>>, vector<1x1x16x4xf32>
    %303 = vector.shape_cast %302 : vector<1x1x16x4xf32> to vector<16x4xf32>
    %cst_246 = arith.constant dense<0.000000e+00> : vector<16x128xf32>
    %304 = tpu.matmul %303, %11, %cst_246 {dimension_numbers = #tpu.dot_dimension_numbers<[1], [0], [0], [1], [0, 0, 1, 1], [], []>} : vector<16x4xf32>, vector<4x128xf32>, vector<16x128xf32> -> vector<16x128xf32>
    %305 = arith.addf %299, %304 : vector<16x128xf32>
    %c2_i32_247 = arith.constant 2 : i32
    %306 = arith.addi %268, %c2_i32_247 : i32
    %c0_248 = arith.constant 0 : index
    %307 = arith.index_cast %306 : i32 to index
    %c0_249 = arith.constant 0 : index
    %c0_250 = arith.constant 0 : index
    %308 = vector.load %arg2[%c0_248, %307, %c0_249, %c0_250] : memref<1x18x18x4xf32, #tpu.memory_space<vmem>>, vector<1x1x16x4xf32>
    %309 = vector.shape_cast %308 : vector<1x1x16x4xf32> to vector<16x4xf32>
    %cst_251 = arith.constant dense<0.000000e+00> : vector<16x128xf32>
    %310 = tpu.matmul %309, %13, %cst_251 {dimension_numbers = #tpu.dot_dimension_numbers<[1], [0], [0], [1], [0, 0, 1, 1], [], []>} : vector<16x4xf32>, vector<4x128xf32>, vector<16x128xf32> -> vector<16x128xf32>
    %311 = arith.addf %305, %310 : vector<16x128xf32>
    %c2_i32_252 = arith.constant 2 : i32
    %312 = arith.addi %268, %c2_i32_252 : i32
    %c0_253 = arith.constant 0 : index
    %313 = arith.index_cast %312 : i32 to index
    %c1_254 = arith.constant 1 : index
    %c0_255 = arith.constant 0 : index
    %314 = vector.load %arg2[%c0_253, %313, %c1_254, %c0_255] : memref<1x18x18x4xf32, #tpu.memory_space<vmem>>, vector<1x1x16x4xf32>
    %315 = vector.shape_cast %314 : vector<1x1x16x4xf32> to vector<16x4xf32>
    %cst_256 = arith.constant dense<0.000000e+00> : vector<16x128xf32>
    %316 = tpu.matmul %315, %15, %cst_256 {dimension_numbers = #tpu.dot_dimension_numbers<[1], [0], [0], [1], [0, 0, 1, 1], [], []>} : vector<16x4xf32>, vector<4x128xf32>, vector<16x128xf32> -> vector<16x128xf32>
    %317 = arith.addf %311, %316 : vector<16x128xf32>
    %c2_i32_257 = arith.constant 2 : i32
    %318 = arith.addi %268, %c2_i32_257 : i32
    %c0_258 = arith.constant 0 : index
    %319 = arith.index_cast %318 : i32 to index
    %c2_259 = arith.constant 2 : index
    %c0_260 = arith.constant 0 : index
    %320 = vector.load %arg2[%c0_258, %319, %c2_259, %c0_260] : memref<1x18x18x4xf32, #tpu.memory_space<vmem>>, vector<1x1x16x4xf32>
    %321 = vector.shape_cast %320 : vector<1x1x16x4xf32> to vector<16x4xf32>
    %cst_261 = arith.constant dense<0.000000e+00> : vector<16x128xf32>
    %322 = tpu.matmul %321, %17, %cst_261 {dimension_numbers = #tpu.dot_dimension_numbers<[1], [0], [0], [1], [0, 0, 1, 1], [], []>} : vector<16x4xf32>, vector<4x128xf32>, vector<16x128xf32> -> vector<16x128xf32>
    %323 = arith.addf %317, %322 : vector<16x128xf32>
    %324 = vector.broadcast %18 : vector<1x128xf32> to vector<16x128xf32>
    %325 = arith.addf %323, %324 : vector<16x128xf32>
    %c0_262 = arith.constant 0 : index
    %c64 = arith.constant 64 : index
    %c0_263 = arith.constant 0 : index
    %326 = vector.load %arg5[%c0_262, %c64, %c0_263] : memref<1x128x128xf32, #tpu.memory_space<vmem>>, vector<1x16x128xf32>
    %327 = vector.shape_cast %326 : vector<1x16x128xf32> to vector<16x128xf32>
    %328 = vector.shape_cast %325 : vector<16x128xf32> to vector<1x16x128xf32>
    tpu.vector_store %arg5[%c0_262, %c64, %c0_263], %328 {strides = array<i32>} : memref<1x128x128xf32, #tpu.memory_space<vmem>>, vector<1x16x128xf32>,
    %c8_i32_264 = arith.constant 8 : i32
    %329 = arith.muli %arg1, %c8_i32_264 : i32
    %c5_i32 = arith.constant 5 : i32
    %330 = arith.addi %329, %c5_i32 : i32
    %cst_265 = arith.constant 0.000000e+00 : f32
    %331 = vector.broadcast %cst_265 : f32 to vector<16x128xf32>
    %c0_i32_266 = arith.constant 0 : i32
    %332 = arith.addi %330, %c0_i32_266 : i32
    %c0_267 = arith.constant 0 : index
    %333 = arith.index_cast %332 : i32 to index
    %c0_268 = arith.constant 0 : index
    %c0_269 = arith.constant 0 : index
    %334 = vector.load %arg2[%c0_267, %333, %c0_268, %c0_269] : memref<1x18x18x4xf32, #tpu.memory_space<vmem>>, vector<1x1x16x4xf32>
    %335 = vector.shape_cast %334 : vector<1x1x16x4xf32> to vector<16x4xf32>
    %cst_270 = arith.constant dense<0.000000e+00> : vector<16x128xf32>
    %336 = tpu.matmul %335, %1, %cst_270 {dimension_numbers = #tpu.dot_dimension_numbers<[1], [0], [0], [1], [0, 0, 1, 1], [], []>} : vector<16x4xf32>, vector<4x128xf32>, vector<16x128xf32> -> vector<16x128xf32>
    %337 = arith.addf %331, %336 : vector<16x128xf32>
    %c0_i32_271 = arith.constant 0 : i32
    %338 = arith.addi %330, %c0_i32_271 : i32
    %c0_272 = arith.constant 0 : index
    %339 = arith.index_cast %338 : i32 to index
    %c1_273 = arith.constant 1 : index
    %c0_274 = arith.constant 0 : index
    %340 = vector.load %arg2[%c0_272, %339, %c1_273, %c0_274] : memref<1x18x18x4xf32, #tpu.memory_space<vmem>>, vector<1x1x16x4xf32>
    %341 = vector.shape_cast %340 : vector<1x1x16x4xf32> to vector<16x4xf32>
    %cst_275 = arith.constant dense<0.000000e+00> : vector<16x128xf32>
    %342 = tpu.matmul %341, %3, %cst_275 {dimension_numbers = #tpu.dot_dimension_numbers<[1], [0], [0], [1], [0, 0, 1, 1], [], []>} : vector<16x4xf32>, vector<4x128xf32>, vector<16x128xf32> -> vector<16x128xf32>
    %343 = arith.addf %337, %342 : vector<16x128xf32>
    %c0_i32_276 = arith.constant 0 : i32
    %344 = arith.addi %330, %c0_i32_276 : i32
    %c0_277 = arith.constant 0 : index
    %345 = arith.index_cast %344 : i32 to index
    %c2_278 = arith.constant 2 : index
    %c0_279 = arith.constant 0 : index
    %346 = vector.load %arg2[%c0_277, %345, %c2_278, %c0_279] : memref<1x18x18x4xf32, #tpu.memory_space<vmem>>, vector<1x1x16x4xf32>
    %347 = vector.shape_cast %346 : vector<1x1x16x4xf32> to vector<16x4xf32>
    %cst_280 = arith.constant dense<0.000000e+00> : vector<16x128xf32>
    %348 = tpu.matmul %347, %5, %cst_280 {dimension_numbers = #tpu.dot_dimension_numbers<[1], [0], [0], [1], [0, 0, 1, 1], [], []>} : vector<16x4xf32>, vector<4x128xf32>, vector<16x128xf32> -> vector<16x128xf32>
    %349 = arith.addf %343, %348 : vector<16x128xf32>
    %c1_i32_281 = arith.constant 1 : i32
    %350 = arith.addi %330, %c1_i32_281 : i32
    %c0_282 = arith.constant 0 : index
    %351 = arith.index_cast %350 : i32 to index
    %c0_283 = arith.constant 0 : index
    %c0_284 = arith.constant 0 : index
    %352 = vector.load %arg2[%c0_282, %351, %c0_283, %c0_284] : memref<1x18x18x4xf32, #tpu.memory_space<vmem>>, vector<1x1x16x4xf32>
    %353 = vector.shape_cast %352 : vector<1x1x16x4xf32> to vector<16x4xf32>
    %cst_285 = arith.constant dense<0.000000e+00> : vector<16x128xf32>
    %354 = tpu.matmul %353, %7, %cst_285 {dimension_numbers = #tpu.dot_dimension_numbers<[1], [0], [0], [1], [0, 0, 1, 1], [], []>} : vector<16x4xf32>, vector<4x128xf32>, vector<16x128xf32> -> vector<16x128xf32>
    %355 = arith.addf %349, %354 : vector<16x128xf32>
    %c1_i32_286 = arith.constant 1 : i32
    %356 = arith.addi %330, %c1_i32_286 : i32
    %c0_287 = arith.constant 0 : index
    %357 = arith.index_cast %356 : i32 to index
    %c1_288 = arith.constant 1 : index
    %c0_289 = arith.constant 0 : index
    %358 = vector.load %arg2[%c0_287, %357, %c1_288, %c0_289] : memref<1x18x18x4xf32, #tpu.memory_space<vmem>>, vector<1x1x16x4xf32>
    %359 = vector.shape_cast %358 : vector<1x1x16x4xf32> to vector<16x4xf32>
    %cst_290 = arith.constant dense<0.000000e+00> : vector<16x128xf32>
    %360 = tpu.matmul %359, %9, %cst_290 {dimension_numbers = #tpu.dot_dimension_numbers<[1], [0], [0], [1], [0, 0, 1, 1], [], []>} : vector<16x4xf32>, vector<4x128xf32>, vector<16x128xf32> -> vector<16x128xf32>
    %361 = arith.addf %355, %360 : vector<16x128xf32>
    %c1_i32_291 = arith.constant 1 : i32
    %362 = arith.addi %330, %c1_i32_291 : i32
    %c0_292 = arith.constant 0 : index
    %363 = arith.index_cast %362 : i32 to index
    %c2_293 = arith.constant 2 : index
    %c0_294 = arith.constant 0 : index
    %364 = vector.load %arg2[%c0_292, %363, %c2_293, %c0_294] : memref<1x18x18x4xf32, #tpu.memory_space<vmem>>, vector<1x1x16x4xf32>
    %365 = vector.shape_cast %364 : vector<1x1x16x4xf32> to vector<16x4xf32>
    %cst_295 = arith.constant dense<0.000000e+00> : vector<16x128xf32>
    %366 = tpu.matmul %365, %11, %cst_295 {dimension_numbers = #tpu.dot_dimension_numbers<[1], [0], [0], [1], [0, 0, 1, 1], [], []>} : vector<16x4xf32>, vector<4x128xf32>, vector<16x128xf32> -> vector<16x128xf32>
    %367 = arith.addf %361, %366 : vector<16x128xf32>
    %c2_i32_296 = arith.constant 2 : i32
    %368 = arith.addi %330, %c2_i32_296 : i32
    %c0_297 = arith.constant 0 : index
    %369 = arith.index_cast %368 : i32 to index
    %c0_298 = arith.constant 0 : index
    %c0_299 = arith.constant 0 : index
    %370 = vector.load %arg2[%c0_297, %369, %c0_298, %c0_299] : memref<1x18x18x4xf32, #tpu.memory_space<vmem>>, vector<1x1x16x4xf32>
    %371 = vector.shape_cast %370 : vector<1x1x16x4xf32> to vector<16x4xf32>
    %cst_300 = arith.constant dense<0.000000e+00> : vector<16x128xf32>
    %372 = tpu.matmul %371, %13, %cst_300 {dimension_numbers = #tpu.dot_dimension_numbers<[1], [0], [0], [1], [0, 0, 1, 1], [], []>} : vector<16x4xf32>, vector<4x128xf32>, vector<16x128xf32> -> vector<16x128xf32>
    %373 = arith.addf %367, %372 : vector<16x128xf32>
    %c2_i32_301 = arith.constant 2 : i32
    %374 = arith.addi %330, %c2_i32_301 : i32
    %c0_302 = arith.constant 0 : index
    %375 = arith.index_cast %374 : i32 to index
    %c1_303 = arith.constant 1 : index
    %c0_304 = arith.constant 0 : index
    %376 = vector.load %arg2[%c0_302, %375, %c1_303, %c0_304] : memref<1x18x18x4xf32, #tpu.memory_space<vmem>>, vector<1x1x16x4xf32>
    %377 = vector.shape_cast %376 : vector<1x1x16x4xf32> to vector<16x4xf32>
    %cst_305 = arith.constant dense<0.000000e+00> : vector<16x128xf32>
    %378 = tpu.matmul %377, %15, %cst_305 {dimension_numbers = #tpu.dot_dimension_numbers<[1], [0], [0], [1], [0, 0, 1, 1], [], []>} : vector<16x4xf32>, vector<4x128xf32>, vector<16x128xf32> -> vector<16x128xf32>
    %379 = arith.addf %373, %378 : vector<16x128xf32>
    %c2_i32_306 = arith.constant 2 : i32
    %380 = arith.addi %330, %c2_i32_306 : i32
    %c0_307 = arith.constant 0 : index
    %381 = arith.index_cast %380 : i32 to index
    %c2_308 = arith.constant 2 : index
    %c0_309 = arith.constant 0 : index
    %382 = vector.load %arg2[%c0_307, %381, %c2_308, %c0_309] : memref<1x18x18x4xf32, #tpu.memory_space<vmem>>, vector<1x1x16x4xf32>
    %383 = vector.shape_cast %382 : vector<1x1x16x4xf32> to vector<16x4xf32>
    %cst_310 = arith.constant dense<0.000000e+00> : vector<16x128xf32>
    %384 = tpu.matmul %383, %17, %cst_310 {dimension_numbers = #tpu.dot_dimension_numbers<[1], [0], [0], [1], [0, 0, 1, 1], [], []>} : vector<16x4xf32>, vector<4x128xf32>, vector<16x128xf32> -> vector<16x128xf32>
    %385 = arith.addf %379, %384 : vector<16x128xf32>
    %386 = vector.broadcast %18 : vector<1x128xf32> to vector<16x128xf32>
    %387 = arith.addf %385, %386 : vector<16x128xf32>
    %c0_311 = arith.constant 0 : index
    %c80 = arith.constant 80 : index
    %c0_312 = arith.constant 0 : index
    %388 = vector.load %arg5[%c0_311, %c80, %c0_312] : memref<1x128x128xf32, #tpu.memory_space<vmem>>, vector<1x16x128xf32>
    %389 = vector.shape_cast %388 : vector<1x16x128xf32> to vector<16x128xf32>
    %390 = vector.shape_cast %387 : vector<16x128xf32> to vector<1x16x128xf32>
    tpu.vector_store %arg5[%c0_311, %c80, %c0_312], %390 {strides = array<i32>} : memref<1x128x128xf32, #tpu.memory_space<vmem>>, vector<1x16x128xf32>,
    %c8_i32_313 = arith.constant 8 : i32
    %391 = arith.muli %arg1, %c8_i32_313 : i32
    %c6_i32 = arith.constant 6 : i32
    %392 = arith.addi %391, %c6_i32 : i32
    %cst_314 = arith.constant 0.000000e+00 : f32
    %393 = vector.broadcast %cst_314 : f32 to vector<16x128xf32>
    %c0_i32_315 = arith.constant 0 : i32
    %394 = arith.addi %392, %c0_i32_315 : i32
    %c0_316 = arith.constant 0 : index
    %395 = arith.index_cast %394 : i32 to index
    %c0_317 = arith.constant 0 : index
    %c0_318 = arith.constant 0 : index
    %396 = vector.load %arg2[%c0_316, %395, %c0_317, %c0_318] : memref<1x18x18x4xf32, #tpu.memory_space<vmem>>, vector<1x1x16x4xf32>
    %397 = vector.shape_cast %396 : vector<1x1x16x4xf32> to vector<16x4xf32>
    %cst_319 = arith.constant dense<0.000000e+00> : vector<16x128xf32>
    %398 = tpu.matmul %397, %1, %cst_319 {dimension_numbers = #tpu.dot_dimension_numbers<[1], [0], [0], [1], [0, 0, 1, 1], [], []>} : vector<16x4xf32>, vector<4x128xf32>, vector<16x128xf32> -> vector<16x128xf32>
    %399 = arith.addf %393, %398 : vector<16x128xf32>
    %c0_i32_320 = arith.constant 0 : i32
    %400 = arith.addi %392, %c0_i32_320 : i32
    %c0_321 = arith.constant 0 : index
    %401 = arith.index_cast %400 : i32 to index
    %c1_322 = arith.constant 1 : index
    %c0_323 = arith.constant 0 : index
    %402 = vector.load %arg2[%c0_321, %401, %c1_322, %c0_323] : memref<1x18x18x4xf32, #tpu.memory_space<vmem>>, vector<1x1x16x4xf32>
    %403 = vector.shape_cast %402 : vector<1x1x16x4xf32> to vector<16x4xf32>
    %cst_324 = arith.constant dense<0.000000e+00> : vector<16x128xf32>
    %404 = tpu.matmul %403, %3, %cst_324 {dimension_numbers = #tpu.dot_dimension_numbers<[1], [0], [0], [1], [0, 0, 1, 1], [], []>} : vector<16x4xf32>, vector<4x128xf32>, vector<16x128xf32> -> vector<16x128xf32>
    %405 = arith.addf %399, %404 : vector<16x128xf32>
    %c0_i32_325 = arith.constant 0 : i32
    %406 = arith.addi %392, %c0_i32_325 : i32
    %c0_326 = arith.constant 0 : index
    %407 = arith.index_cast %406 : i32 to index
    %c2_327 = arith.constant 2 : index
    %c0_328 = arith.constant 0 : index
    %408 = vector.load %arg2[%c0_326, %407, %c2_327, %c0_328] : memref<1x18x18x4xf32, #tpu.memory_space<vmem>>, vector<1x1x16x4xf32>
    %409 = vector.shape_cast %408 : vector<1x1x16x4xf32> to vector<16x4xf32>
    %cst_329 = arith.constant dense<0.000000e+00> : vector<16x128xf32>
    %410 = tpu.matmul %409, %5, %cst_329 {dimension_numbers = #tpu.dot_dimension_numbers<[1], [0], [0], [1], [0, 0, 1, 1], [], []>} : vector<16x4xf32>, vector<4x128xf32>, vector<16x128xf32> -> vector<16x128xf32>
    %411 = arith.addf %405, %410 : vector<16x128xf32>
    %c1_i32_330 = arith.constant 1 : i32
    %412 = arith.addi %392, %c1_i32_330 : i32
    %c0_331 = arith.constant 0 : index
    %413 = arith.index_cast %412 : i32 to index
    %c0_332 = arith.constant 0 : index
    %c0_333 = arith.constant 0 : index
    %414 = vector.load %arg2[%c0_331, %413, %c0_332, %c0_333] : memref<1x18x18x4xf32, #tpu.memory_space<vmem>>, vector<1x1x16x4xf32>
    %415 = vector.shape_cast %414 : vector<1x1x16x4xf32> to vector<16x4xf32>
    %cst_334 = arith.constant dense<0.000000e+00> : vector<16x128xf32>
    %416 = tpu.matmul %415, %7, %cst_334 {dimension_numbers = #tpu.dot_dimension_numbers<[1], [0], [0], [1], [0, 0, 1, 1], [], []>} : vector<16x4xf32>, vector<4x128xf32>, vector<16x128xf32> -> vector<16x128xf32>
    %417 = arith.addf %411, %416 : vector<16x128xf32>
    %c1_i32_335 = arith.constant 1 : i32
    %418 = arith.addi %392, %c1_i32_335 : i32
    %c0_336 = arith.constant 0 : index
    %419 = arith.index_cast %418 : i32 to index
    %c1_337 = arith.constant 1 : index
    %c0_338 = arith.constant 0 : index
    %420 = vector.load %arg2[%c0_336, %419, %c1_337, %c0_338] : memref<1x18x18x4xf32, #tpu.memory_space<vmem>>, vector<1x1x16x4xf32>
    %421 = vector.shape_cast %420 : vector<1x1x16x4xf32> to vector<16x4xf32>
    %cst_339 = arith.constant dense<0.000000e+00> : vector<16x128xf32>
    %422 = tpu.matmul %421, %9, %cst_339 {dimension_numbers = #tpu.dot_dimension_numbers<[1], [0], [0], [1], [0, 0, 1, 1], [], []>} : vector<16x4xf32>, vector<4x128xf32>, vector<16x128xf32> -> vector<16x128xf32>
    %423 = arith.addf %417, %422 : vector<16x128xf32>
    %c1_i32_340 = arith.constant 1 : i32
    %424 = arith.addi %392, %c1_i32_340 : i32
    %c0_341 = arith.constant 0 : index
    %425 = arith.index_cast %424 : i32 to index
    %c2_342 = arith.constant 2 : index
    %c0_343 = arith.constant 0 : index
    %426 = vector.load %arg2[%c0_341, %425, %c2_342, %c0_343] : memref<1x18x18x4xf32, #tpu.memory_space<vmem>>, vector<1x1x16x4xf32>
    %427 = vector.shape_cast %426 : vector<1x1x16x4xf32> to vector<16x4xf32>
    %cst_344 = arith.constant dense<0.000000e+00> : vector<16x128xf32>
    %428 = tpu.matmul %427, %11, %cst_344 {dimension_numbers = #tpu.dot_dimension_numbers<[1], [0], [0], [1], [0, 0, 1, 1], [], []>} : vector<16x4xf32>, vector<4x128xf32>, vector<16x128xf32> -> vector<16x128xf32>
    %429 = arith.addf %423, %428 : vector<16x128xf32>
    %c2_i32_345 = arith.constant 2 : i32
    %430 = arith.addi %392, %c2_i32_345 : i32
    %c0_346 = arith.constant 0 : index
    %431 = arith.index_cast %430 : i32 to index
    %c0_347 = arith.constant 0 : index
    %c0_348 = arith.constant 0 : index
    %432 = vector.load %arg2[%c0_346, %431, %c0_347, %c0_348] : memref<1x18x18x4xf32, #tpu.memory_space<vmem>>, vector<1x1x16x4xf32>
    %433 = vector.shape_cast %432 : vector<1x1x16x4xf32> to vector<16x4xf32>
    %cst_349 = arith.constant dense<0.000000e+00> : vector<16x128xf32>
    %434 = tpu.matmul %433, %13, %cst_349 {dimension_numbers = #tpu.dot_dimension_numbers<[1], [0], [0], [1], [0, 0, 1, 1], [], []>} : vector<16x4xf32>, vector<4x128xf32>, vector<16x128xf32> -> vector<16x128xf32>
    %435 = arith.addf %429, %434 : vector<16x128xf32>
    %c2_i32_350 = arith.constant 2 : i32
    %436 = arith.addi %392, %c2_i32_350 : i32
    %c0_351 = arith.constant 0 : index
    %437 = arith.index_cast %436 : i32 to index
    %c1_352 = arith.constant 1 : index
    %c0_353 = arith.constant 0 : index
    %438 = vector.load %arg2[%c0_351, %437, %c1_352, %c0_353] : memref<1x18x18x4xf32, #tpu.memory_space<vmem>>, vector<1x1x16x4xf32>
    %439 = vector.shape_cast %438 : vector<1x1x16x4xf32> to vector<16x4xf32>
    %cst_354 = arith.constant dense<0.000000e+00> : vector<16x128xf32>
    %440 = tpu.matmul %439, %15, %cst_354 {dimension_numbers = #tpu.dot_dimension_numbers<[1], [0], [0], [1], [0, 0, 1, 1], [], []>} : vector<16x4xf32>, vector<4x128xf32>, vector<16x128xf32> -> vector<16x128xf32>
    %441 = arith.addf %435, %440 : vector<16x128xf32>
    %c2_i32_355 = arith.constant 2 : i32
    %442 = arith.addi %392, %c2_i32_355 : i32
    %c0_356 = arith.constant 0 : index
    %443 = arith.index_cast %442 : i32 to index
    %c2_357 = arith.constant 2 : index
    %c0_358 = arith.constant 0 : index
    %444 = vector.load %arg2[%c0_356, %443, %c2_357, %c0_358] : memref<1x18x18x4xf32, #tpu.memory_space<vmem>>, vector<1x1x16x4xf32>
    %445 = vector.shape_cast %444 : vector<1x1x16x4xf32> to vector<16x4xf32>
    %cst_359 = arith.constant dense<0.000000e+00> : vector<16x128xf32>
    %446 = tpu.matmul %445, %17, %cst_359 {dimension_numbers = #tpu.dot_dimension_numbers<[1], [0], [0], [1], [0, 0, 1, 1], [], []>} : vector<16x4xf32>, vector<4x128xf32>, vector<16x128xf32> -> vector<16x128xf32>
    %447 = arith.addf %441, %446 : vector<16x128xf32>
    %448 = vector.broadcast %18 : vector<1x128xf32> to vector<16x128xf32>
    %449 = arith.addf %447, %448 : vector<16x128xf32>
    %c0_360 = arith.constant 0 : index
    %c96 = arith.constant 96 : index
    %c0_361 = arith.constant 0 : index
    %450 = vector.load %arg5[%c0_360, %c96, %c0_361] : memref<1x128x128xf32, #tpu.memory_space<vmem>>, vector<1x16x128xf32>
    %451 = vector.shape_cast %450 : vector<1x16x128xf32> to vector<16x128xf32>
    %452 = vector.shape_cast %449 : vector<16x128xf32> to vector<1x16x128xf32>
    tpu.vector_store %arg5[%c0_360, %c96, %c0_361], %452 {strides = array<i32>} : memref<1x128x128xf32, #tpu.memory_space<vmem>>, vector<1x16x128xf32>,
    %c8_i32_362 = arith.constant 8 : i32
    %453 = arith.muli %arg1, %c8_i32_362 : i32
    %c7_i32 = arith.constant 7 : i32
    %454 = arith.addi %453, %c7_i32 : i32
    %cst_363 = arith.constant 0.000000e+00 : f32
    %455 = vector.broadcast %cst_363 : f32 to vector<16x128xf32>
    %c0_i32_364 = arith.constant 0 : i32
    %456 = arith.addi %454, %c0_i32_364 : i32
    %c0_365 = arith.constant 0 : index
    %457 = arith.index_cast %456 : i32 to index
    %c0_366 = arith.constant 0 : index
    %c0_367 = arith.constant 0 : index
    %458 = vector.load %arg2[%c0_365, %457, %c0_366, %c0_367] : memref<1x18x18x4xf32, #tpu.memory_space<vmem>>, vector<1x1x16x4xf32>
    %459 = vector.shape_cast %458 : vector<1x1x16x4xf32> to vector<16x4xf32>
    %cst_368 = arith.constant dense<0.000000e+00> : vector<16x128xf32>
    %460 = tpu.matmul %459, %1, %cst_368 {dimension_numbers = #tpu.dot_dimension_numbers<[1], [0], [0], [1], [0, 0, 1, 1], [], []>} : vector<16x4xf32>, vector<4x128xf32>, vector<16x128xf32> -> vector<16x128xf32>
    %461 = arith.addf %455, %460 : vector<16x128xf32>
    %c0_i32_369 = arith.constant 0 : i32
    %462 = arith.addi %454, %c0_i32_369 : i32
    %c0_370 = arith.constant 0 : index
    %463 = arith.index_cast %462 : i32 to index
    %c1_371 = arith.constant 1 : index
    %c0_372 = arith.constant 0 : index
    %464 = vector.load %arg2[%c0_370, %463, %c1_371, %c0_372] : memref<1x18x18x4xf32, #tpu.memory_space<vmem>>, vector<1x1x16x4xf32>
    %465 = vector.shape_cast %464 : vector<1x1x16x4xf32> to vector<16x4xf32>
    %cst_373 = arith.constant dense<0.000000e+00> : vector<16x128xf32>
    %466 = tpu.matmul %465, %3, %cst_373 {dimension_numbers = #tpu.dot_dimension_numbers<[1], [0], [0], [1], [0, 0, 1, 1], [], []>} : vector<16x4xf32>, vector<4x128xf32>, vector<16x128xf32> -> vector<16x128xf32>
    %467 = arith.addf %461, %466 : vector<16x128xf32>
    %c0_i32_374 = arith.constant 0 : i32
    %468 = arith.addi %454, %c0_i32_374 : i32
    %c0_375 = arith.constant 0 : index
    %469 = arith.index_cast %468 : i32 to index
    %c2_376 = arith.constant 2 : index
    %c0_377 = arith.constant 0 : index
    %470 = vector.load %arg2[%c0_375, %469, %c2_376, %c0_377] : memref<1x18x18x4xf32, #tpu.memory_space<vmem>>, vector<1x1x16x4xf32>
    %471 = vector.shape_cast %470 : vector<1x1x16x4xf32> to vector<16x4xf32>
    %cst_378 = arith.constant dense<0.000000e+00> : vector<16x128xf32>
    %472 = tpu.matmul %471, %5, %cst_378 {dimension_numbers = #tpu.dot_dimension_numbers<[1], [0], [0], [1], [0, 0, 1, 1], [], []>} : vector<16x4xf32>, vector<4x128xf32>, vector<16x128xf32> -> vector<16x128xf32>
    %473 = arith.addf %467, %472 : vector<16x128xf32>
    %c1_i32_379 = arith.constant 1 : i32
    %474 = arith.addi %454, %c1_i32_379 : i32
    %c0_380 = arith.constant 0 : index
    %475 = arith.index_cast %474 : i32 to index
    %c0_381 = arith.constant 0 : index
    %c0_382 = arith.constant 0 : index
    %476 = vector.load %arg2[%c0_380, %475, %c0_381, %c0_382] : memref<1x18x18x4xf32, #tpu.memory_space<vmem>>, vector<1x1x16x4xf32>
    %477 = vector.shape_cast %476 : vector<1x1x16x4xf32> to vector<16x4xf32>
    %cst_383 = arith.constant dense<0.000000e+00> : vector<16x128xf32>
    %478 = tpu.matmul %477, %7, %cst_383 {dimension_numbers = #tpu.dot_dimension_numbers<[1], [0], [0], [1], [0, 0, 1, 1], [], []>} : vector<16x4xf32>, vector<4x128xf32>, vector<16x128xf32> -> vector<16x128xf32>
    %479 = arith.addf %473, %478 : vector<16x128xf32>
    %c1_i32_384 = arith.constant 1 : i32
    %480 = arith.addi %454, %c1_i32_384 : i32
    %c0_385 = arith.constant 0 : index
    %481 = arith.index_cast %480 : i32 to index
    %c1_386 = arith.constant 1 : index
    %c0_387 = arith.constant 0 : index
    %482 = vector.load %arg2[%c0_385, %481, %c1_386, %c0_387] : memref<1x18x18x4xf32, #tpu.memory_space<vmem>>, vector<1x1x16x4xf32>
    %483 = vector.shape_cast %482 : vector<1x1x16x4xf32> to vector<16x4xf32>
    %cst_388 = arith.constant dense<0.000000e+00> : vector<16x128xf32>
    %484 = tpu.matmul %483, %9, %cst_388 {dimension_numbers = #tpu.dot_dimension_numbers<[1], [0], [0], [1], [0, 0, 1, 1], [], []>} : vector<16x4xf32>, vector<4x128xf32>, vector<16x128xf32> -> vector<16x128xf32>
    %485 = arith.addf %479, %484 : vector<16x128xf32>
    %c1_i32_389 = arith.constant 1 : i32
    %486 = arith.addi %454, %c1_i32_389 : i32
    %c0_390 = arith.constant 0 : index
    %487 = arith.index_cast %486 : i32 to index
    %c2_391 = arith.constant 2 : index
    %c0_392 = arith.constant 0 : index
    %488 = vector.load %arg2[%c0_390, %487, %c2_391, %c0_392] : memref<1x18x18x4xf32, #tpu.memory_space<vmem>>, vector<1x1x16x4xf32>
    %489 = vector.shape_cast %488 : vector<1x1x16x4xf32> to vector<16x4xf32>
    %cst_393 = arith.constant dense<0.000000e+00> : vector<16x128xf32>
    %490 = tpu.matmul %489, %11, %cst_393 {dimension_numbers = #tpu.dot_dimension_numbers<[1], [0], [0], [1], [0, 0, 1, 1], [], []>} : vector<16x4xf32>, vector<4x128xf32>, vector<16x128xf32> -> vector<16x128xf32>
    %491 = arith.addf %485, %490 : vector<16x128xf32>
    %c2_i32_394 = arith.constant 2 : i32
    %492 = arith.addi %454, %c2_i32_394 : i32
    %c0_395 = arith.constant 0 : index
    %493 = arith.index_cast %492 : i32 to index
    %c0_396 = arith.constant 0 : index
    %c0_397 = arith.constant 0 : index
    %494 = vector.load %arg2[%c0_395, %493, %c0_396, %c0_397] : memref<1x18x18x4xf32, #tpu.memory_space<vmem>>, vector<1x1x16x4xf32>
    %495 = vector.shape_cast %494 : vector<1x1x16x4xf32> to vector<16x4xf32>
    %cst_398 = arith.constant dense<0.000000e+00> : vector<16x128xf32>
    %496 = tpu.matmul %495, %13, %cst_398 {dimension_numbers = #tpu.dot_dimension_numbers<[1], [0], [0], [1], [0, 0, 1, 1], [], []>} : vector<16x4xf32>, vector<4x128xf32>, vector<16x128xf32> -> vector<16x128xf32>
    %497 = arith.addf %491, %496 : vector<16x128xf32>
    %c2_i32_399 = arith.constant 2 : i32
    %498 = arith.addi %454, %c2_i32_399 : i32
    %c0_400 = arith.constant 0 : index
    %499 = arith.index_cast %498 : i32 to index
    %c1_401 = arith.constant 1 : index
    %c0_402 = arith.constant 0 : index
    %500 = vector.load %arg2[%c0_400, %499, %c1_401, %c0_402] : memref<1x18x18x4xf32, #tpu.memory_space<vmem>>, vector<1x1x16x4xf32>
    %501 = vector.shape_cast %500 : vector<1x1x16x4xf32> to vector<16x4xf32>
    %cst_403 = arith.constant dense<0.000000e+00> : vector<16x128xf32>
    %502 = tpu.matmul %501, %15, %cst_403 {dimension_numbers = #tpu.dot_dimension_numbers<[1], [0], [0], [1], [0, 0, 1, 1], [], []>} : vector<16x4xf32>, vector<4x128xf32>, vector<16x128xf32> -> vector<16x128xf32>
    %503 = arith.addf %497, %502 : vector<16x128xf32>
    %c2_i32_404 = arith.constant 2 : i32
    %504 = arith.addi %454, %c2_i32_404 : i32
    %c0_405 = arith.constant 0 : index
    %505 = arith.index_cast %504 : i32 to index
    %c2_406 = arith.constant 2 : index
    %c0_407 = arith.constant 0 : index
    %506 = vector.load %arg2[%c0_405, %505, %c2_406, %c0_407] : memref<1x18x18x4xf32, #tpu.memory_space<vmem>>, vector<1x1x16x4xf32>
    %507 = vector.shape_cast %506 : vector<1x1x16x4xf32> to vector<16x4xf32>
    %cst_408 = arith.constant dense<0.000000e+00> : vector<16x128xf32>
    %508 = tpu.matmul %507, %17, %cst_408 {dimension_numbers = #tpu.dot_dimension_numbers<[1], [0], [0], [1], [0, 0, 1, 1], [], []>} : vector<16x4xf32>, vector<4x128xf32>, vector<16x128xf32> -> vector<16x128xf32>
    %509 = arith.addf %503, %508 : vector<16x128xf32>
    %510 = vector.broadcast %18 : vector<1x128xf32> to vector<16x128xf32>
    %511 = arith.addf %509, %510 : vector<16x128xf32>
    %c0_409 = arith.constant 0 : index
    %c112 = arith.constant 112 : index
    %c0_410 = arith.constant 0 : index
    %512 = vector.load %arg5[%c0_409, %c112, %c0_410] : memref<1x128x128xf32, #tpu.memory_space<vmem>>, vector<1x16x128xf32>
    %513 = vector.shape_cast %512 : vector<1x16x128xf32> to vector<16x128xf32>
    %514 = vector.shape_cast %511 : vector<16x128xf32> to vector<1x16x128xf32>
    tpu.vector_store %arg5[%c0_409, %c112, %c0_410], %514 {strides = array<i32>} : memref<1x128x128xf32, #tpu.memory_space<vmem>>, vector<1x16x128xf32>,
    return
  }
  func.func @transform_0(%arg0: i32, %arg1: i32) -> (i32, i32, i32, i32) {
    %c0_i32 = arith.constant 0 : i32
    %c0_i32_0 = arith.constant 0 : i32
    %c0_i32_1 = arith.constant 0 : i32
    %c0_i32_2 = arith.constant 0 : i32
    return %arg0, %c0_i32, %c0_i32_0, %c0_i32_1 : i32, i32, i32, i32
  }
  func.func @transform_1(%arg0: i32, %arg1: i32) -> (i32, i32, i32) {
    %c0_i32 = arith.constant 0 : i32
    %c0_i32_0 = arith.constant 0 : i32
    %c0_i32_1 = arith.constant 0 : i32
    %c0_i32_2 = arith.constant 0 : i32
    return %c0_i32, %c0_i32_0, %c0_i32_1 : i32, i32, i32
  }
  func.func @transform_2(%arg0: i32, %arg1: i32) -> (i32, i32) {
    %c0_i32 = arith.constant 0 : i32
    %c0_i32_0 = arith.constant 0 : i32
    %c0_i32_1 = arith.constant 0 : i32
    return %c0_i32, %c0_i32_0 : i32, i32
  }
  func.func @transform_3(%arg0: i32, %arg1: i32) -> (i32, i32, i32) {
    %c0_i32 = arith.constant 0 : i32
    %c0_i32_0 = arith.constant 0 : i32
    return %arg0, %arg1, %c0_i32 : i32, i32, i32
  }
}

</mosaic_0001>

<llo_original>
// kernel: conv2d_pallas.1
$region0: #{conv2d_pallas.1}
  #allocation0 [shape = 'u32[]', space=smem, size = 0x4, offset = 0x4, fixed_abs, tag = 'smem constant byte address 0x4 - core index']
  #allocation1 [shape = 'u32[144,128]{1,0:T(1,128)}', space=vmem, size = 0x12000, scoped, tag = 'internal scratch']
  %s0 = inlined_call_operand.vmem [shape: f32[2,18,18,4], index: 0, kind: input, shape index: {}]
  %s1 = inlined_call_operand.vmem [shape: f32[9,4,128], index: 1, kind: input, shape index: {}]
  %s2 = inlined_call_operand.vmem [shape: f32[1,128], index: 2, kind: input, shape index: {}]
  %s3 = inlined_call_operand.vmem [shape: f32[2,256,128], index: 3, kind: output, shape index: {}]
  %s4 = sld [smem:[#allocation0]]
  $region45: #{conv2d_pallas.1} parent=0
    _
  %s6 = ssub.s32 1, %s4
  %s7 = scalar_select 0, %s6, %s4
  loop: start=0, step=1, limit=6
  $region2: #{conv2d_pallas.1} parent=0 // loop_pre_header
    _
  $region3: #{conv2d_pallas.1} parent=0 // loop_header
    %s9 = sphi 0, %s13
    %p10 = scmp.ge.s32.totalorder %s9, 6
    %s16 = sphi 0, %s28
    %s17 = sphi 0, %s24
    %s18 = sphi 0, %s16
    %s19 = sphi 0, %s17
    %s20 = sphi 0, %s18
    %s21 = sphi 0, %s19
    %s31 = sphi 0, %s33
    %s34 = sphi 0, %s31
    %s35 = sphi 0, %s34
    %s51 = sphi 0, %s35
    %s55 = sphi 0, %s55
    %s57 = sphi 0, %s55
    %s58 = sphi 0, %s57
    %s72 = sphi 0, %s58
    %s76 = sphi 0, %s76
    %s78 = sphi 0, %s76
    %s79 = sphi 0, %s78
    %s93 = sphi 0, %s79
    %s101 = sphi 0, %s103
    %s104 = sphi 0, %s101
    %s105 = sphi 0, %s104
    %s121 = sphi 0, %s105
  $region4: #{conv2d_pallas.1} parent=0 // loop_header_branch
    %12 = sbr.rel (%p10) target = $region8
  $region5: #{conv2d_pallas.1} parent=0 // loop_body
    %s14 = ssub.s32 %s9, 1
    %s15 = ssub.s32 %s9, 2
    %s22 = sadd.s32 1, %s17
    %p23 = scmp.ge.s32.totalorder %s22, 2
    %s24 = scalar_select %p23, 0, %s22
    %s25 = sadd.s32 1, %s16
    %s26 = scalar_select %p23, %s25, %s16
    %p27 = scmp.ge.s32.totalorder %s26, 2
    %s28 = scalar_select %p27, 0, %s26
    %s29 = ssub.s32 %s16, %s28
    %p30 = scmp.eq.s32.totalorder %s29, 0
    %s32 = sadd.s32 %s31, 1
    %s33 = scalar_select %p30, %s31, %s32
    %p36 = pneg %p30
    %p37 = scmp.eq.s32.totalorder %s9, 3
    %p38 = por %p36, %p37
    %p39 = scmp.ne.s32.totalorder %s31, %s34
    %p40 = scmp.eq.s32.totalorder %s9, 0
    %p41 = por %p39, %p40
    %p42 = scmp.ne.s32.totalorder %s31, %s34
    %p43 = scmp.eq.s32.totalorder %s14, 3
    %p44 = por %p42, %p43
    %p45 = scmp.ne.s32.totalorder %s34, %s35
    %p46 = scmp.eq.s32.totalorder %s14, 0
    %p47 = por %p45, %p46
    %p48 = scmp.ne.s32.totalorder %s34, %s35
    %p49 = scmp.eq.s32.totalorder %s15, 3
    %p50 = por %p48, %p49
    %p52 = scmp.ne.s32.totalorder %s35, %s51
    %p53 = scmp.eq.s32.totalorder %s15, 0
    %p54 = por %p52, %p53
    %s56 = sadd.s32 %s55, 1
    %p59 = scmp.eq.s32.totalorder %s9, 3
    %p60 = scmp.ne.s32.totalorder %s55, %s57
    %p61 = scmp.eq.s32.totalorder %s9, 0
    %p62 = por %p60, %p61
    %p63 = scmp.ne.s32.totalorder %s55, %s57
    %p64 = scmp.eq.s32.totalorder %s14, 3
    %p65 = por %p63, %p64
    %p66 = scmp.ne.s32.totalorder %s57, %s58
    %p67 = scmp.eq.s32.totalorder %s14, 0
    %p68 = por %p66, %p67
    %p69 = scmp.ne.s32.totalorder %s57, %s58
    %p70 = scmp.eq.s32.totalorder %s15, 3
    %p71 = por %p69, %p70
    %p73 = scmp.ne.s32.totalorder %s58, %s72
    %p74 = scmp.eq.s32.totalorder %s15, 0
    %p75 = por %p73, %p74
    %s77 = sadd.s32 %s76, 1
    %p80 = scmp.eq.s32.totalorder %s9, 3
    %p81 = scmp.ne.s32.totalorder %s76, %s78
    %p82 = scmp.eq.s32.totalorder %s9, 0
    %p83 = por %p81, %p82
    %p84 = scmp.ne.s32.totalorder %s76, %s78
    %p85 = scmp.eq.s32.totalorder %s14, 3
    %p86 = por %p84, %p85
    %p87 = scmp.ne.s32.totalorder %s78, %s79
    %p88 = scmp.eq.s32.totalorder %s14, 0
    %p89 = por %p87, %p88
    %p90 = scmp.ne.s32.totalorder %s78, %s79
    %p91 = scmp.eq.s32.totalorder %s15, 3
    %p92 = por %p90, %p91
    %p94 = scmp.ne.s32.totalorder %s79, %s93
    %p95 = scmp.eq.s32.totalorder %s15, 0
    %p96 = por %p94, %p95
    %s97 = ssub.s32 %s16, %s28
    %s98 = ssub.s32 %s17, %s24
    %s99 = sor.u32 %s97, %s98
    %p100 = scmp.eq.s32.totalorder %s99, 0
    %s102 = sadd.s32 %s101, 1
    %s103 = scalar_select %p100, %s101, %s102
    %p106 = pneg %p100
    %p107 = scmp.eq.s32.totalorder %s9, 3
    %p108 = por %p106, %p107
    %p109 = scmp.ne.s32.totalorder %s101, %s104
    %p110 = scmp.eq.s32.totalorder %s9, 0
    %p111 = por %p109, %p110
    %p112 = scmp.ne.s32.totalorder %s101, %s104
    %p113 = scmp.eq.s32.totalorder %s14, 3
    %p114 = por %p112, %p113
    %p115 = scmp.ne.s32.totalorder %s104, %s105
    %p116 = scmp.eq.s32.totalorder %s14, 0
    %p117 = por %p115, %p116
    %p118 = scmp.ne.s32.totalorder %s104, %s105
    %p119 = scmp.eq.s32.totalorder %s15, 3
    %p120 = por %p118, %p119
    %p122 = scmp.ne.s32.totalorder %s105, %s121
    %p123 = scmp.eq.s32.totalorder %s15, 0
    %p124 = por %p122, %p123
    %p125 = scmp.le.s32.totalorder 1, %s9
    %p126 = scmp.lt.s32.totalorder %s9, 5
    %p127 = pnand %p125, %p126
    %p128 = pneg %p127
    // Predicated region
    $region9: #{conv2d_pallas.1} parent=5 // pred_check
      _
    $region10: #{conv2d_pallas.1} parent=5 // pred_check_branch
      %130 = sbr.rel (%p127) target = $region12
    $region11: #{conv2d_pallas.1} parent=5 // pred_region
      %s131 = ssub.s32 %s9, 1
      // Predicated region
      $region13: #{conv2d_pallas.1} parent=11 // pred_check
        %p132 = pneg %p68
      $region14: #{conv2d_pallas.1} parent=11 // pred_check_branch
        %134 = sbr.rel (%p132) target = $region16
      $region15: #{conv2d_pallas.1} parent=11 // pred_region
        _
      $region16: #{conv2d_pallas.1} parent=11 // pred_fallthru
        _
      // Predicated region
      $region17: #{conv2d_pallas.1} parent=11 // pred_check
        %p135 = pneg %p89
      $region18: #{conv2d_pallas.1} parent=11 // pred_check_branch
        %137 = sbr.rel (%p135) target = $region20
      $region19: #{conv2d_pallas.1} parent=11 // pred_region
        _
      $region20: #{conv2d_pallas.1} parent=11 // pred_fallthru
        _
    $region12: #{conv2d_pallas.1} parent=5 // pred_fallthru
      _
    %p138 = scmp.lt.s32.totalorder %s9, 4
    // Predicated region
    $region21: #{conv2d_pallas.1} parent=5 // pred_check
      %p139 = pneg %p138
    $region22: #{conv2d_pallas.1} parent=5 // pred_check_branch
      %141 = sbr.rel (%p139) target = $region24
    $region23: #{conv2d_pallas.1} parent=5 // pred_region
      // Predicated region
      $region25: #{conv2d_pallas.1} parent=23 // pred_check
        %p142 = pneg %p41
      $region26: #{conv2d_pallas.1} parent=23 // pred_check_branch
        %144 = sbr.rel (%p142) target = $region28
      $region27: #{conv2d_pallas.1} parent=23 // pred_region
        %p145 = scmp.lt.s32.totalorder %s16, 1
        %s146 = scalar_select %p145, %s16, 1
        %s147 = smul.addr %s146, 54
        %s148 = smul.addr %s147, 8
        %s149 = scalar_lea.vmem %s0, %s148
      $region28: #{conv2d_pallas.1} parent=23 // pred_fallthru
        _
    $region24: #{conv2d_pallas.1} parent=5 // pred_fallthru
      _
    %p150 = scmp.le.s32.totalorder 1, %s9
    %p151 = scmp.lt.s32.totalorder %s9, 5
    %p152 = pnand %p150, %p151
    %p153 = pneg %p152
    // Predicated region
    $region29: #{conv2d_pallas.1} parent=5 // pred_check
      _
    $region30: #{conv2d_pallas.1} parent=5 // pred_check_branch
      %155 = sbr.rel (%p152) target = $region32
    $region31: #{conv2d_pallas.1} parent=5 // pred_region
      %s156 = ssub.s32 %s9, 1
      %p157 = scmp.lt.s32.totalorder %s18, 1
      %s158 = scalar_select %p157, %s18, 1
      %s159 = smul.addr %s158, 54
      %s160 = smul.addr %s159, 8
      %s161 = scalar_lea.vmem %s0, %s160
      %p162 = pneg %p47
      %p163 = pneg %p44
      %p164 = pneg %p68
      %p165 = pneg %p65
      %p166 = pneg %p89
      %p167 = pneg %p86
      %p168 = pneg %p117
      %p169 = pneg %p114
      %s170 = smul.u32 16, %s19
      %p171 = scmp.lt.s32.totalorder %s18, 1
      %s172 = scalar_select %p171, %s18, 1
      %p173 = scmp.lt.s32.totalorder %s170, 31
      %s174 = scalar_select %p173, %s170, 31
      %s175 = smul.addr %s172, 32
      %s176 = sadd.s32 %s174, %s175
      %s177 = smul.addr %s176, 8
      %s178 = scalar_lea.vmem %s3, %s177
      %p179 = scmp.lt.s32.totalorder %s18, 1
      %s180 = scalar_select %p179, %s18, 1
      %s181 = smul.addr %s180, 54
      %s182 = smul.addr %s181, 8
      %s183 = scalar_lea.vmem %s0, %s182
      %s184 = smul.u32 16, %s19
      %p185 = scmp.lt.s32.totalorder %s18, 1
      %s186 = scalar_select %p185, %s18, 1
      %p187 = scmp.lt.s32.totalorder %s184, 31
      %s188 = scalar_select %p187, %s184, 31
      %s189 = smul.addr %s186, 32
      %s190 = sadd.s32 %s188, %s189
      %s191 = smul.addr %s190, 8
      %s192 = scalar_lea.vmem %s3, %s191
      %s193 = smul.u32 16, %s19
      %v194 = vld [vmem:[%s1] sm:$0xf]
      %s195 = scalar_lea.vmem %s1, 4
      %v196 = vld [vmem:[%s195] sm:$0xf]
      %s197 = scalar_lea.vmem %s1, 8
      %v198 = vld [vmem:[%s197] sm:$0xf]
      %s199 = scalar_lea.vmem %s1, 12
      %v200 = vld [vmem:[%s199] sm:$0xf]
      %s201 = scalar_lea.vmem %s1, 16
      %v202 = vld [vmem:[%s201] sm:$0xf]
      %s203 = scalar_lea.vmem %s1, 20
      %v204 = vld [vmem:[%s203] sm:$0xf]
      %s205 = scalar_lea.vmem %s1, 24
      %v206 = vld [vmem:[%s205] sm:$0xf]
      %s207 = scalar_lea.vmem %s1, 28
      %v208 = vld [vmem:[%s207] sm:$0xf]
      %s209 = scalar_lea.vmem %s1, 32
      %v210 = vld [vmem:[%s209] sm:$0xf]
      %v211 = vld [vmem:[%s2] sm:$0x1]
      %s212 = smul.u32 %s19, 8
      %s213 = smul.u32 %s212, 24
      %s214 = scalar_lea.vmem %s183, %s213
      %v215 = vld [vmem:[%s214] sm:$0xff]
      %v216 = vld [vmem:[%s214 + $0x8] sm:$0xff]
      %v217 = vld [vmem:[%s214 + $0x1] sm:$0xff]
      %v218 = vld [vmem:[%s214 + $0x9] sm:$0xff]
      %vm219 = vcmask 31744
      %v221 = vsel %vm219, %v217, 0
      %v224 = vsel %vm219, %v218, 0
      %vm226 = vcmask 1043456
      %v228 = vsel %vm226, %v196, 0
      %230 = vmatprep.subr.mxu0 0.0
      %231 = vmatpush1.msra.mxu0 %v228
      %232 = vmatprep.subr.mxu0 0.0
      %233 = vmatpush1.msra.mxu0 0.0
      %234 = vmatprep.subr.mxu0 0.0
      %235 = vmatpush1.msra.mxu0 0.0
      %236 = vmatprep.subr.mxu0 0.0
      %237 = vmatpush1.msra.mxu0 0.0
      %238 = vmatprep.subr.mxu0 0.0
      %239 = vmatpush1.msra.mxu0 0.0
      %240 = vmatprep.subr.mxu0 0.0
      %241 = vmatpush1.msra.mxu0 0.0
      %242 = vmatprep.subr.mxu0 0.0
      %243 = vmatpush1.msra.mxu0 0.0
      %244 = vmatprep.subr.mxu0 0.0
      %245 = vmatpush1.msra.mxu0 0.0
      %246 = vmatprep.subr.mxu0 0.0
      %247 = vmatpush1.msra.mxu0 0.0
      %248 = vmatprep.subr.mxu0 0.0
      %249 = vmatpush1.msra.mxu0 0.0
      %250 = vmatprep.subr.mxu0 0.0
      %251 = vmatpush1.msra.mxu0 0.0
      %252 = vmatprep.subr.mxu0 0.0
      %253 = vmatpush1.msra.mxu0 0.0
      %254 = vmatprep.subr.mxu0 0.0
      %255 = vmatpush1.msra.mxu0 0.0
      %256 = vmatprep.subr.mxu0 0.0
      %257 = vmatpush1.msra.mxu0 0.0
      %258 = vmatprep.subr.mxu0 0.0
      %259 = vmatpush1.msra.mxu0 0.0
      %260 = vmatprep.subr.mxu0 0.0
      %261 = vmatpush1.msra.mxu0 0.0
      %262 = vmatprep.subr.mxu0 0.0
      %263 = vmatpush1.msra.mxu0 0.0
      %264 = vmatprep.subr.mxu0 0.0
      %265 = vmatpush1.msra.mxu0 0.0
      %266 = vmatprep.subr.mxu0 0.0
      %267 = vmatpush1.msra.mxu0 0.0
      %268 = vmatprep.subr.mxu0 0.0
      %269 = vmatpush1.msra.mxu0 0.0
      %270 = vmatprep.subr.mxu0 0.0
      %271 = vmatpush1.msra.mxu0 0.0
      %272 = vmatprep.subr.mxu0 0.0
      %273 = vmatpush1.msra.mxu0 0.0
      %274 = vmatprep.subr.mxu0 0.0
      %275 = vmatpush1.msra.mxu0 0.0
      %276 = vmatprep.subr.mxu0 0.0
      %277 = vmatpush1.msra.mxu0 0.0
      %278 = vmatprep.subr.mxu0 0.0
      %279 = vmatpush1.msra.mxu0 0.0
      %280 = vmatprep.subr.mxu0 0.0
      %281 = vmatpush1.msra.mxu0 0.0
      %282 = vmatprep.subr.mxu0 0.0
      %283 = vmatpush1.msra.mxu0 0.0
      %284 = vmatprep.subr.mxu0 0.0
      %285 = vmatpush1.msra.mxu0 0.0
      %286 = vmatprep.subr.mxu0 0.0
      %287 = vmatpush1.msra.mxu0 0.0
      %288 = vmatprep.subr.mxu0 0.0
      %289 = vmatpush1.msra.mxu0 0.0
      %290 = vmatprep.subr.mxu0 0.0
      %291 = vmatpush1.msra.mxu0 0.0
      %292 = vmatprep.subr.mxu0 0.0
      %293 = vmatpush1.msra.mxu0 0.0
      %294 = vmatprep.mubr.f32.mxu0 0.0
      %295 = vmatmul.mubr.f32.gmra.mrb[0].mxu0 %v221
      %v296 = vpop.f32.mrb[0].mxu0
      %v297 = vadd.f32 0.0, %v296
      %v298 = vpop.f32.mrb[0].mxu0
      %299 = vmatprep.mubr.f32.mxu0 0.0
      %300 = vmatmul.mubr.f32.gmra.mrb[0].mxu0 %v224
      %v301 = vpop.f32.mrb[0].mxu0
      %v302 = vadd.f32 0.0, %v301
      %v303 = vpop.f32.mrb[0].mxu0
      %304 = vdwg.mxu0
      %v306 = vsel %vm219, %v215, 0
      %v309 = vsel %vm219, %v216, 0
      %v312 = vsel %vm226, %v194, 0
      %314 = vmatprep.subr.mxu0 0.0
      %315 = vmatpush1.msra.mxu0 %v312
      %316 = vmatprep.subr.mxu0 0.0
      %317 = vmatpush1.msra.mxu0 0.0
      %318 = vmatprep.subr.mxu0 0.0
      %319 = vmatpush1.msra.mxu0 0.0
      %320 = vmatprep.subr.mxu0 0.0
      %321 = vmatpush1.msra.mxu0 0.0
      %322 = vmatprep.subr.mxu0 0.0
      %323 = vmatpush1.msra.mxu0 0.0
      %324 = vmatprep.subr.mxu0 0.0
      %325 = vmatpush1.msra.mxu0 0.0
      %326 = vmatprep.subr.mxu0 0.0
      %327 = vmatpush1.msra.mxu0 0.0
      %328 = vmatprep.subr.mxu0 0.0
      %329 = vmatpush1.msra.mxu0 0.0
      %330 = vmatprep.subr.mxu0 0.0
      %331 = vmatpush1.msra.mxu0 0.0
      %332 = vmatprep.subr.mxu0 0.0
      %333 = vmatpush1.msra.mxu0 0.0
      %334 = vmatprep.subr.mxu0 0.0
      %335 = vmatpush1.msra.mxu0 0.0
      %336 = vmatprep.subr.mxu0 0.0
      %337 = vmatpush1.msra.mxu0 0.0
      %338 = vmatprep.subr.mxu0 0.0
      %339 = vmatpush1.msra.mxu0 0.0
      %340 = vmatprep.subr.mxu0 0.0
      %341 = vmatpush1.msra.mxu0 0.0
      %342 = vmatprep.subr.mxu0 0.0
      %343 = vmatpush1.msra.mxu0 0.0
      %344 = vmatprep.subr.mxu0 0.0
      %345 = vmatpush1.msra.mxu0 0.0
      %346 = vmatprep.subr.mxu0 0.0
      %347 = vmatpush1.msra.mxu0 0.0
      %348 = vmatprep.subr.mxu0 0.0
      %349 = vmatpush1.msra.mxu0 0.0
      %350 = vmatprep.subr.mxu0 0.0
      %351 = vmatpush1.msra.mxu0 0.0
      %352 = vmatprep.subr.mxu0 0.0
      %353 = vmatpush1.msra.mxu0 0.0
      %354 = vmatprep.subr.mxu0 0.0
      %355 = vmatpush1.msra.mxu0 0.0
      %356 = vmatprep.subr.mxu0 0.0
      %357 = vmatpush1.msra.mxu0 0.0
      %358 = vmatprep.subr.mxu0 0.0
      %359 = vmatpush1.msra.mxu0 0.0
      %360 = vmatprep.subr.mxu0 0.0
      %361 = vmatpush1.msra.mxu0 0.0
      %362 = vmatprep.subr.mxu0 0.0
      %363 = vmatpush1.msra.mxu0 0.0
      %364 = vmatprep.subr.mxu0 0.0
      %365 = vmatpush1.msra.mxu0 0.0
      %366 = vmatprep.subr.mxu0 0.0
      %367 = vmatpush1.msra.mxu0 0.0
      %368 = vmatprep.subr.mxu0 0.0
      %369 = vmatpush1.msra.mxu0 0.0
      %370 = vmatprep.subr.mxu0 0.0
      %371 = vmatpush1.msra.mxu0 0.0
      %372 = vmatprep.subr.mxu0 0.0
      %373 = vmatpush1.msra.mxu0 0.0
      %374 = vmatprep.subr.mxu0 0.0
      %375 = vmatpush1.msra.mxu0 0.0
      %376 = vmatprep.subr.mxu0 0.0
      %377 = vmatpush1.msra.mxu0 0.0
      %378 = vmatprep.mubr.f32.mxu0 0.0
      %379 = vmatmul.mubr.f32.gmra.mrb[0].mxu0 %v306
      %v380 = vpop.f32.mrb[0].mxu0
      %v381 = vadd.f32 %v297, %v380
      %v382 = vpop.f32.mrb[0].mxu0
      %383 = vmatprep.mubr.f32.mxu0 0.0
      %384 = vmatmul.mubr.f32.gmra.mrb[0].mxu0 %v309
      %v385 = vpop.f32.mrb[0].mxu0
      %v386 = vadd.f32 %v302, %v385
      %v387 = vpop.f32.mrb[0].mxu0
      %388 = vdwg.mxu0
      %v389 = vld [vmem:[%s214 + $0x2] sm:$0xff]
      %v390 = vld [vmem:[%s214 + $0xa] sm:$0xff]
      %v392 = vsel %vm219, %v389, 0
      %v395 = vsel %vm219, %v390, 0
      %v398 = vsel %vm226, %v198, 0
      %400 = vmatprep.subr.mxu0 0.0
      %401 = vmatpush1.msra.mxu0 %v398
      %402 = vmatprep.subr.mxu0 0.0
      %403 = vmatpush1.msra.mxu0 0.0
      %404 = vmatprep.subr.mxu0 0.0
      %405 = vmatpush1.msra.mxu0 0.0
      %406 = vmatprep.subr.mxu0 0.0
      %407 = vmatpush1.msra.mxu0 0.0
      %408 = vmatprep.subr.mxu0 0.0
      %409 = vmatpush1.msra.mxu0 0.0
      %410 = vmatprep.subr.mxu0 0.0
      %411 = vmatpush1.msra.mxu0 0.0
      %412 = vmatprep.subr.mxu0 0.0
      %413 = vmatpush1.msra.mxu0 0.0
      %414 = vmatprep.subr.mxu0 0.0
      %415 = vmatpush1.msra.mxu0 0.0
      %416 = vmatprep.subr.mxu0 0.0
      %417 = vmatpush1.msra.mxu0 0.0
      %418 = vmatprep.subr.mxu0 0.0
      %419 = vmatpush1.msra.mxu0 0.0
      %420 = vmatprep.subr.mxu0 0.0
      %421 = vmatpush1.msra.mxu0 0.0
      %422 = vmatprep.subr.mxu0 0.0
      %423 = vmatpush1.msra.mxu0 0.0
      %424 = vmatprep.subr.mxu0 0.0
      %425 = vmatpush1.msra.mxu0 0.0
      %426 = vmatprep.subr.mxu0 0.0
      %427 = vmatpush1.msra.mxu0 0.0
      %428 = vmatprep.subr.mxu0 0.0
      %429 = vmatpush1.msra.mxu0 0.0
      %430 = vmatprep.subr.mxu0 0.0
      %431 = vmatpush1.msra.mxu0 0.0
      %432 = vmatprep.subr.mxu0 0.0
      %433 = vmatpush1.msra.mxu0 0.0
      %434 = vmatprep.subr.mxu0 0.0
      %435 = vmatpush1.msra.mxu0 0.0
      %436 = vmatprep.subr.mxu0 0.0
      %437 = vmatpush1.msra.mxu0 0.0
      %438 = vmatprep.subr.mxu0 0.0
      %439 = vmatpush1.msra.mxu0 0.0
      %440 = vmatprep.subr.mxu0 0.0
      %441 = vmatpush1.msra.mxu0 0.0
      %442 = vmatprep.subr.mxu0 0.0
      %443 = vmatpush1.msra.mxu0 0.0
      %444 = vmatprep.subr.mxu0 0.0
      %445 = vmatpush1.msra.mxu0 0.0
      %446 = vmatprep.subr.mxu0 0.0
      %447 = vmatpush1.msra.mxu0 0.0
      %448 = vmatprep.subr.mxu0 0.0
      %449 = vmatpush1.msra.mxu0 0.0
      %450 = vmatprep.subr.mxu0 0.0
      %451 = vmatpush1.msra.mxu0 0.0
      %452 = vmatprep.subr.mxu0 0.0
      %453 = vmatpush1.msra.mxu0 0.0
      %454 = vmatprep.subr.mxu0 0.0
      %455 = vmatpush1.msra.mxu0 0.0
      %456 = vmatprep.subr.mxu0 0.0
      %457 = vmatpush1.msra.mxu0 0.0
      %458 = vmatprep.subr.mxu0 0.0
      %459 = vmatpush1.msra.mxu0 0.0
      %460 = vmatprep.subr.mxu0 0.0
      %461 = vmatpush1.msra.mxu0 0.0
      %462 = vmatprep.subr.mxu0 0.0
      %463 = vmatpush1.msra.mxu0 0.0
      %464 = vmatprep.mubr.f32.mxu0 0.0
      %465 = vmatmul.mubr.f32.gmra.mrb[0].mxu0 %v392
      %v466 = vpop.f32.mrb[0].mxu0
      %v467 = vadd.f32 0.0, %v466
      %v468 = vpop.f32.mrb[0].mxu0
      %469 = vmatprep.mubr.f32.mxu0 0.0
      %470 = vmatmul.mubr.f32.gmra.mrb[0].mxu0 %v395
      %v471 = vpop.f32.mrb[0].mxu0
      %v472 = vadd.f32 0.0, %v471
      %v473 = vpop.f32.mrb[0].mxu0
      %474 = vdwg.mxu0
      %v475 = vadd.f32 %v381, %v467
      %v476 = vadd.f32 %v386, %v472
      %s477 = sadd.s32 %s212, 1
      %s478 = smul.u32 %s477, 24
      %s479 = scalar_lea.vmem %s183, %s478
      %v480 = vld [vmem:[%s479] sm:$0xff]
      %v481 = vld [vmem:[%s479 + $0x8] sm:$0xff]
      %v483 = vsel %vm219, %v480, 0
      %v486 = vsel %vm219, %v481, 0
      %v489 = vsel %vm226, %v200, 0
      %491 = vmatprep.subr.mxu0 0.0
      %492 = vmatpush1.msra.mxu0 %v489
      %493 = vmatprep.subr.mxu0 0.0
      %494 = vmatpush1.msra.mxu0 0.0
      %495 = vmatprep.subr.mxu0 0.0
      %496 = vmatpush1.msra.mxu0 0.0
      %497 = vmatprep.subr.mxu0 0.0
      %498 = vmatpush1.msra.mxu0 0.0
      %499 = vmatprep.subr.mxu0 0.0
      %500 = vmatpush1.msra.mxu0 0.0
      %501 = vmatprep.subr.mxu0 0.0
      %502 = vmatpush1.msra.mxu0 0.0
      %503 = vmatprep.subr.mxu0 0.0
      %504 = vmatpush1.msra.mxu0 0.0
      %505 = vmatprep.subr.mxu0 0.0
      %506 = vmatpush1.msra.mxu0 0.0
      %507 = vmatprep.subr.mxu0 0.0
      %508 = vmatpush1.msra.mxu0 0.0
      %509 = vmatprep.subr.mxu0 0.0
      %510 = vmatpush1.msra.mxu0 0.0
      %511 = vmatprep.subr.mxu0 0.0
      %512 = vmatpush1.msra.mxu0 0.0
      %513 = vmatprep.subr.mxu0 0.0
      %514 = vmatpush1.msra.mxu0 0.0
      %515 = vmatprep.subr.mxu0 0.0
      %516 = vmatpush1.msra.mxu0 0.0
      %517 = vmatprep.subr.mxu0 0.0
      %518 = vmatpush1.msra.mxu0 0.0
      %519 = vmatprep.subr.mxu0 0.0
      %520 = vmatpush1.msra.mxu0 0.0
      %521 = vmatprep.subr.mxu0 0.0
      %522 = vmatpush1.msra.mxu0 0.0
      %523 = vmatprep.subr.mxu0 0.0
      %524 = vmatpush1.msra.mxu0 0.0
      %525 = vmatprep.subr.mxu0 0.0
      %526 = vmatpush1.msra.mxu0 0.0
      %527 = vmatprep.subr.mxu0 0.0
      %528 = vmatpush1.msra.mxu0 0.0
      %529 = vmatprep.subr.mxu0 0.0
      %530 = vmatpush1.msra.mxu0 0.0
      %531 = vmatprep.subr.mxu0 0.0
      %532 = vmatpush1.msra.mxu0 0.0
      %533 = vmatprep.subr.mxu0 0.0
      %534 = vmatpush1.msra.mxu0 0.0
      %535 = vmatprep.subr.mxu0 0.0
      %536 = vmatpush1.msra.mxu0 0.0
      %537 = vmatprep.subr.mxu0 0.0
      %538 = vmatpush1.msra.mxu0 0.0
      %539 = vmatprep.subr.mxu0 0.0
      %540 = vmatpush1.msra.mxu0 0.0
      %541 = vmatprep.subr.mxu0 0.0
      %542 = vmatpush1.msra.mxu0 0.0
      %543 = vmatprep.subr.mxu0 0.0
      %544 = vmatpush1.msra.mxu0 0.0
      %545 = vmatprep.subr.mxu0 0.0
      %546 = vmatpush1.msra.mxu0 0.0
      %547 = vmatprep.subr.mxu0 0.0
      %548 = vmatpush1.msra.mxu0 0.0
      %549 = vmatprep.subr.mxu0 0.0
      %550 = vmatpush1.msra.mxu0 0.0
      %551 = vmatprep.subr.mxu0 0.0
      %552 = vmatpush1.msra.mxu0 0.0
      %553 = vmatprep.subr.mxu0 0.0
      %554 = vmatpush1.msra.mxu0 0.0
      %555 = vmatprep.mubr.f32.mxu0 0.0
      %556 = vmatmul.mubr.f32.gmra.mrb[0].mxu0 %v483
      %v557 = vpop.f32.mrb[0].mxu0
      %v558 = vadd.f32 0.0, %v557
      %v559 = vpop.f32.mrb[0].mxu0
      %560 = vmatprep.mubr.f32.mxu0 0.0
      %561 = vmatmul.mubr.f32.gmra.mrb[0].mxu0 %v486
      %v562 = vpop.f32.mrb[0].mxu0
      %v563 = vadd.f32 0.0, %v562
      %v564 = vpop.f32.mrb[0].mxu0
      %565 = vdwg.mxu0
      %v566 = vadd.f32 %v475, %v558
      %v567 = vadd.f32 %v476, %v563
      %v568 = vld [vmem:[%s479 + $0x1] sm:$0xff]
      %v569 = vld [vmem:[%s479 + $0x9] sm:$0xff]
      %v571 = vsel %vm219, %v568, 0
      %v574 = vsel %vm219, %v569, 0
      %v577 = vsel %vm226, %v202, 0
      %579 = vmatprep.subr.mxu0 0.0
      %580 = vmatpush1.msra.mxu0 %v577
      %581 = vmatprep.subr.mxu0 0.0
      %582 = vmatpush1.msra.mxu0 0.0
      %583 = vmatprep.subr.mxu0 0.0
      %584 = vmatpush1.msra.mxu0 0.0
      %585 = vmatprep.subr.mxu0 0.0
      %586 = vmatpush1.msra.mxu0 0.0
      %587 = vmatprep.subr.mxu0 0.0
      %588 = vmatpush1.msra.mxu0 0.0
      %589 = vmatprep.subr.mxu0 0.0
      %590 = vmatpush1.msra.mxu0 0.0
      %591 = vmatprep.subr.mxu0 0.0
      %592 = vmatpush1.msra.mxu0 0.0
      %593 = vmatprep.subr.mxu0 0.0
      %594 = vmatpush1.msra.mxu0 0.0
      %595 = vmatprep.subr.mxu0 0.0
      %596 = vmatpush1.msra.mxu0 0.0
      %597 = vmatprep.subr.mxu0 0.0
      %598 = vmatpush1.msra.mxu0 0.0
      %599 = vmatprep.subr.mxu0 0.0
      %600 = vmatpush1.msra.mxu0 0.0
      %601 = vmatprep.subr.mxu0 0.0
      %602 = vmatpush1.msra.mxu0 0.0
      %603 = vmatprep.subr.mxu0 0.0
      %604 = vmatpush1.msra.mxu0 0.0
      %605 = vmatprep.subr.mxu0 0.0
      %606 = vmatpush1.msra.mxu0 0.0
      %607 = vmatprep.subr.mxu0 0.0
      %608 = vmatpush1.msra.mxu0 0.0
      %609 = vmatprep.subr.mxu0 0.0
      %610 = vmatpush1.msra.mxu0 0.0
      %611 = vmatprep.subr.mxu0 0.0
      %612 = vmatpush1.msra.mxu0 0.0
      %613 = vmatprep.subr.mxu0 0.0
      %614 = vmatpush1.msra.mxu0 0.0
      %615 = vmatprep.subr.mxu0 0.0
      %616 = vmatpush1.msra.mxu0 0.0
      %617 = vmatprep.subr.mxu0 0.0
      %618 = vmatpush1.msra.mxu0 0.0
      %619 = vmatprep.subr.mxu0 0.0
      %620 = vmatpush1.msra.mxu0 0.0
      %621 = vmatprep.subr.mxu0 0.0
      %622 = vmatpush1.msra.mxu0 0.0
      %623 = vmatprep.subr.mxu0 0.0
      %624 = vmatpush1.msra.mxu0 0.0
      %625 = vmatprep.subr.mxu0 0.0
      %626 = vmatpush1.msra.mxu0 0.0
      %627 = vmatprep.subr.mxu0 0.0
      %628 = vmatpush1.msra.mxu0 0.0
      %629 = vmatprep.subr.mxu0 0.0
      %630 = vmatpush1.msra.mxu0 0.0
      %631 = vmatprep.subr.mxu0 0.0
      %632 = vmatpush1.msra.mxu0 0.0
      %633 = vmatprep.subr.mxu0 0.0
      %634 = vmatpush1.msra.mxu0 0.0
      %635 = vmatprep.subr.mxu0 0.0
      %636 = vmatpush1.msra.mxu0 0.0
      %637 = vmatprep.subr.mxu0 0.0
      %638 = vmatpush1.msra.mxu0 0.0
      %639 = vmatprep.subr.mxu0 0.0
      %640 = vmatpush1.msra.mxu0 0.0
      %641 = vmatprep.subr.mxu0 0.0
      %642 = vmatpush1.msra.mxu0 0.0
      %643 = vmatprep.mubr.f32.mxu0 0.0
      %644 = vmatmul.mubr.f32.gmra.mrb[0].mxu0 %v571
      %v645 = vpop.f32.mrb[0].mxu0
      %v646 = vadd.f32 0.0, %v645
      %v647 = vpop.f32.mrb[0].mxu0
      %648 = vmatprep.mubr.f32.mxu0 0.0
      %649 = vmatmul.mubr.f32.gmra.mrb[0].mxu0 %v574
      %v650 = vpop.f32.mrb[0].mxu0
      %v651 = vadd.f32 0.0, %v650
      %v652 = vpop.f32.mrb[0].mxu0
      %653 = vdwg.mxu0
      %v654 = vadd.f32 %v566, %v646
      %v655 = vadd.f32 %v567, %v651
      %v656 = vld [vmem:[%s479 + $0x2] sm:$0xff]
      %v657 = vld [vmem:[%s479 + $0xa] sm:$0xff]
      %v659 = vsel %vm219, %v656, 0
      %v662 = vsel %vm219, %v657, 0
      %v665 = vsel %vm226, %v204, 0
      %667 = vmatprep.subr.mxu0 0.0
      %668 = vmatpush1.msra.mxu0 %v665
      %669 = vmatprep.subr.mxu0 0.0
      %670 = vmatpush1.msra.mxu0 0.0
      %671 = vmatprep.subr.mxu0 0.0
      %672 = vmatpush1.msra.mxu0 0.0
      %673 = vmatprep.subr.mxu0 0.0
      %674 = vmatpush1.msra.mxu0 0.0
      %675 = vmatprep.subr.mxu0 0.0
      %676 = vmatpush1.msra.mxu0 0.0
      %677 = vmatprep.subr.mxu0 0.0
      %678 = vmatpush1.msra.mxu0 0.0
      %679 = vmatprep.subr.mxu0 0.0
      %680 = vmatpush1.msra.mxu0 0.0
      %681 = vmatprep.subr.mxu0 0.0
      %682 = vmatpush1.msra.mxu0 0.0
      %683 = vmatprep.subr.mxu0 0.0
      %684 = vmatpush1.msra.mxu0 0.0
      %685 = vmatprep.subr.mxu0 0.0
      %686 = vmatpush1.msra.mxu0 0.0
      %687 = vmatprep.subr.mxu0 0.0
      %688 = vmatpush1.msra.mxu0 0.0
      %689 = vmatprep.subr.mxu0 0.0
      %690 = vmatpush1.msra.mxu0 0.0
      %691 = vmatprep.subr.mxu0 0.0
      %692 = vmatpush1.msra.mxu0 0.0
      %693 = vmatprep.subr.mxu0 0.0
      %694 = vmatpush1.msra.mxu0 0.0
      %695 = vmatprep.subr.mxu0 0.0
      %696 = vmatpush1.msra.mxu0 0.0
      %697 = vmatprep.subr.mxu0 0.0
      %698 = vmatpush1.msra.mxu0 0.0
      %699 = vmatprep.subr.mxu0 0.0
      %700 = vmatpush1.msra.mxu0 0.0
      %701 = vmatprep.subr.mxu0 0.0
      %702 = vmatpush1.msra.mxu0 0.0
      %703 = vmatprep.subr.mxu0 0.0
      %704 = vmatpush1.msra.mxu0 0.0
      %705 = vmatprep.subr.mxu0 0.0
      %706 = vmatpush1.msra.mxu0 0.0
      %707 = vmatprep.subr.mxu0 0.0
      %708 = vmatpush1.msra.mxu0 0.0
      %709 = vmatprep.subr.mxu0 0.0
      %710 = vmatpush1.msra.mxu0 0.0
      %711 = vmatprep.subr.mxu0 0.0
      %712 = vmatpush1.msra.mxu0 0.0
      %713 = vmatprep.subr.mxu0 0.0
      %714 = vmatpush1.msra.mxu0 0.0
      %715 = vmatprep.subr.mxu0 0.0
      %716 = vmatpush1.msra.mxu0 0.0
      %717 = vmatprep.subr.mxu0 0.0
      %718 = vmatpush1.msra.mxu0 0.0
      %719 = vmatprep.subr.mxu0 0.0
      %720 = vmatpush1.msra.mxu0 0.0
      %721 = vmatprep.subr.mxu0 0.0
      %722 = vmatpush1.msra.mxu0 0.0
      %723 = vmatprep.subr.mxu0 0.0
      %724 = vmatpush1.msra.mxu0 0.0
      %725 = vmatprep.subr.mxu0 0.0
      %726 = vmatpush1.msra.mxu0 0.0
      %727 = vmatprep.subr.mxu0 0.0
      %728 = vmatpush1.msra.mxu0 0.0
      %729 = vmatprep.subr.mxu0 0.0
      %730 = vmatpush1.msra.mxu0 0.0
      %731 = vmatprep.mubr.f32.mxu0 0.0
      %732 = vmatmul.mubr.f32.gmra.mrb[0].mxu0 %v659
      %v733 = vpop.f32.mrb[0].mxu0
      %v734 = vadd.f32 0.0, %v733
      %v735 = vpop.f32.mrb[0].mxu0
      %736 = vmatprep.mubr.f32.mxu0 0.0
      %737 = vmatmul.mubr.f32.gmra.mrb[0].mxu0 %v662
      %v738 = vpop.f32.mrb[0].mxu0
      %v739 = vadd.f32 0.0, %v738
      %v740 = vpop.f32.mrb[0].mxu0
      %741 = vdwg.mxu0
      %v742 = vadd.f32 %v654, %v734
      %v743 = vadd.f32 %v655, %v739
      %s744 = sadd.s32 %s212, 2
      %s745 = smul.u32 %s744, 24
      %s746 = scalar_lea.vmem %s183, %s745
      %v747 = vld [vmem:[%s746] sm:$0xff]
      %v748 = vld [vmem:[%s746 + $0x8] sm:$0xff]
      %v750 = vsel %vm219, %v747, 0
      %v753 = vsel %vm219, %v748, 0
      %v756 = vsel %vm226, %v206, 0
      %758 = vmatprep.subr.mxu0 0.0
      %759 = vmatpush1.msra.mxu0 %v756
      %760 = vmatprep.subr.mxu0 0.0
      %761 = vmatpush1.msra.mxu0 0.0
      %762 = vmatprep.subr.mxu0 0.0
      %763 = vmatpush1.msra.mxu0 0.0
      %764 = vmatprep.subr.mxu0 0.0
      %765 = vmatpush1.msra.mxu0 0.0
      %766 = vmatprep.subr.mxu0 0.0
      %767 = vmatpush1.msra.mxu0 0.0
      %768 = vmatprep.subr.mxu0 0.0
      %769 = vmatpush1.msra.mxu0 0.0
      %770 = vmatprep.subr.mxu0 0.0
      %771 = vmatpush1.msra.mxu0 0.0
      %772 = vmatprep.subr.mxu0 0.0
      %773 = vmatpush1.msra.mxu0 0.0
      %774 = vmatprep.subr.mxu0 0.0
      %775 = vmatpush1.msra.mxu0 0.0
      %776 = vmatprep.subr.mxu0 0.0
      %777 = vmatpush1.msra.mxu0 0.0
      %778 = vmatprep.subr.mxu0 0.0
      %779 = vmatpush1.msra.mxu0 0.0
      %780 = vmatprep.subr.mxu0 0.0
      %781 = vmatpush1.msra.mxu0 0.0
      %782 = vmatprep.subr.mxu0 0.0
      %783 = vmatpush1.msra.mxu0 0.0
      %784 = vmatprep.subr.mxu0 0.0
      %785 = vmatpush1.msra.mxu0 0.0
      %786 = vmatprep.subr.mxu0 0.0
      %787 = vmatpush1.msra.mxu0 0.0
      %788 = vmatprep.subr.mxu0 0.0
      %789 = vmatpush1.msra.mxu0 0.0
      %790 = vmatprep.subr.mxu0 0.0
      %791 = vmatpush1.msra.mxu0 0.0
      %792 = vmatprep.subr.mxu0 0.0
      %793 = vmatpush1.msra.mxu0 0.0
      %794 = vmatprep.subr.mxu0 0.0
      %795 = vmatpush1.msra.mxu0 0.0
      %796 = vmatprep.subr.mxu0 0.0
      %797 = vmatpush1.msra.mxu0 0.0
      %798 = vmatprep.subr.mxu0 0.0
      %799 = vmatpush1.msra.mxu0 0.0
      %800 = vmatprep.subr.mxu0 0.0
      %801 = vmatpush1.msra.mxu0 0.0
      %802 = vmatprep.subr.mxu0 0.0
      %803 = vmatpush1.msra.mxu0 0.0
      %804 = vmatprep.subr.mxu0 0.0
      %805 = vmatpush1.msra.mxu0 0.0
      %806 = vmatprep.subr.mxu0 0.0
      %807 = vmatpush1.msra.mxu0 0.0
      %808 = vmatprep.subr.mxu0 0.0
      %809 = vmatpush1.msra.mxu0 0.0
      %810 = vmatprep.subr.mxu0 0.0
      %811 = vmatpush1.msra.mxu0 0.0
      %812 = vmatprep.subr.mxu0 0.0
      %813 = vmatpush1.msra.mxu0 0.0
      %814 = vmatprep.subr.mxu0 0.0
      %815 = vmatpush1.msra.mxu0 0.0
      %816 = vmatprep.subr.mxu0 0.0
      %817 = vmatpush1.msra.mxu0 0.0
      %818 = vmatprep.subr.mxu0 0.0
      %819 = vmatpush1.msra.mxu0 0.0
      %820 = vmatprep.subr.mxu0 0.0
      %821 = vmatpush1.msra.mxu0 0.0
      %822 = vmatprep.mubr.f32.mxu0 0.0
      %823 = vmatmul.mubr.f32.gmra.mrb[0].mxu0 %v750
      %v824 = vpop.f32.mrb[0].mxu0
      %v825 = vadd.f32 0.0, %v824
      %v826 = vpop.f32.mrb[0].mxu0
      %827 = vmatprep.mubr.f32.mxu0 0.0
      %828 = vmatmul.mubr.f32.gmra.mrb[0].mxu0 %v753
      %v829 = vpop.f32.mrb[0].mxu0
      %v830 = vadd.f32 0.0, %v829
      %v831 = vpop.f32.mrb[0].mxu0
      %832 = vdwg.mxu0
      %v833 = vadd.f32 %v742, %v825
      %v834 = vadd.f32 %v743, %v830
      %v835 = vld [vmem:[%s746 + $0x1] sm:$0xff]
      %v836 = vld [vmem:[%s746 + $0x9] sm:$0xff]
      %v838 = vsel %vm219, %v835, 0
      %v841 = vsel %vm219, %v836, 0
      %v844 = vsel %vm226, %v208, 0
      %846 = vmatprep.subr.mxu0 0.0
      %847 = vmatpush1.msra.mxu0 %v844
      %848 = vmatprep.subr.mxu0 0.0
      %849 = vmatpush1.msra.mxu0 0.0
      %850 = vmatprep.subr.mxu0 0.0
      %851 = vmatpush1.msra.mxu0 0.0
      %852 = vmatprep.subr.mxu0 0.0
      %853 = vmatpush1.msra.mxu0 0.0
      %854 = vmatprep.subr.mxu0 0.0
      %855 = vmatpush1.msra.mxu0 0.0
      %856 = vmatprep.subr.mxu0 0.0
      %857 = vmatpush1.msra.mxu0 0.0
      %858 = vmatprep.subr.mxu0 0.0
      %859 = vmatpush1.msra.mxu0 0.0
      %860 = vmatprep.subr.mxu0 0.0
      %861 = vmatpush1.msra.mxu0 0.0
      %862 = vmatprep.subr.mxu0 0.0
      %863 = vmatpush1.msra.mxu0 0.0
      %864 = vmatprep.subr.mxu0 0.0
      %865 = vmatpush1.msra.mxu0 0.0
      %866 = vmatprep.subr.mxu0 0.0
      %867 = vmatpush1.msra.mxu0 0.0
      %868 = vmatprep.subr.mxu0 0.0
      %869 = vmatpush1.msra.mxu0 0.0
      %870 = vmatprep.subr.mxu0 0.0
      %871 = vmatpush1.msra.mxu0 0.0
      %872 = vmatprep.subr.mxu0 0.0
      %873 = vmatpush1.msra.mxu0 0.0
      %874 = vmatprep.subr.mxu0 0.0
      %875 = vmatpush1.msra.mxu0 0.0
      %876 = vmatprep.subr.mxu0 0.0
      %877 = vmatpush1.msra.mxu0 0.0
      %878 = vmatprep.subr.mxu0 0.0
      %879 = vmatpush1.msra.mxu0 0.0
      %880 = vmatprep.subr.mxu0 0.0
      %881 = vmatpush1.msra.mxu0 0.0
      %882 = vmatprep.subr.mxu0 0.0
      %883 = vmatpush1.msra.mxu0 0.0
      %884 = vmatprep.subr.mxu0 0.0
      %885 = vmatpush1.msra.mxu0 0.0
      %886 = vmatprep.subr.mxu0 0.0
      %887 = vmatpush1.msra.mxu0 0.0
      %888 = vmatprep.subr.mxu0 0.0
      %889 = vmatpush1.msra.mxu0 0.0
      %890 = vmatprep.subr.mxu0 0.0
      %891 = vmatpush1.msra.mxu0 0.0
      %892 = vmatprep.subr.mxu0 0.0
      %893 = vmatpush1.msra.mxu0 0.0
      %894 = vmatprep.subr.mxu0 0.0
      %895 = vmatpush1.msra.mxu0 0.0
      %896 = vmatprep.subr.mxu0 0.0
      %897 = vmatpush1.msra.mxu0 0.0
      %898 = vmatprep.subr.mxu0 0.0
      %899 = vmatpush1.msra.mxu0 0.0
      %900 = vmatprep.subr.mxu0 0.0
      %901 = vmatpush1.msra.mxu0 0.0
      %902 = vmatprep.subr.mxu0 0.0
      %903 = vmatpush1.msra.mxu0 0.0
      %904 = vmatprep.subr.mxu0 0.0
      %905 = vmatpush1.msra.mxu0 0.0
      %906 = vmatprep.subr.mxu0 0.0
      %907 = vmatpush1.msra.mxu0 0.0
      %908 = vmatprep.subr.mxu0 0.0
      %909 = vmatpush1.msra.mxu0 0.0
      %910 = vmatprep.mubr.f32.mxu0 0.0
      %911 = vmatmul.mubr.f32.gmra.mrb[0].mxu0 %v838
      %v912 = vpop.f32.mrb[0].mxu0
      %v913 = vadd.f32 0.0, %v912
      %v914 = vpop.f32.mrb[0].mxu0
      %915 = vmatprep.mubr.f32.mxu0 0.0
      %916 = vmatmul.mubr.f32.gmra.mrb[0].mxu0 %v841
      %v917 = vpop.f32.mrb[0].mxu0
      %v918 = vadd.f32 0.0, %v917
      %v919 = vpop.f32.mrb[0].mxu0
      %920 = vdwg.mxu0
      %v921 = vadd.f32 %v833, %v913
      %v922 = vadd.f32 %v834, %v918
      %v923 = vld [vmem:[%s746 + $0x2] sm:$0xff]
      %v924 = vld [vmem:[%s746 + $0xa] sm:$0xff]
      %v926 = vsel %vm219, %v923, 0
      %v929 = vsel %vm219, %v924, 0
      %v932 = vsel %vm226, %v210, 0
      %934 = vmatprep.subr.mxu0 0.0
      %935 = vmatpush1.msra.mxu0 %v932
      %936 = vmatprep.subr.mxu0 0.0
      %937 = vmatpush1.msra.mxu0 0.0
      %938 = vmatprep.subr.mxu0 0.0
      %939 = vmatpush1.msra.mxu0 0.0
      %940 = vmatprep.subr.mxu0 0.0
      %941 = vmatpush1.msra.mxu0 0.0
      %942 = vmatprep.subr.mxu0 0.0
      %943 = vmatpush1.msra.mxu0 0.0
      %944 = vmatprep.subr.mxu0 0.0
      %945 = vmatpush1.msra.mxu0 0.0
      %946 = vmatprep.subr.mxu0 0.0
      %947 = vmatpush1.msra.mxu0 0.0
      %948 = vmatprep.subr.mxu0 0.0
      %949 = vmatpush1.msra.mxu0 0.0
      %950 = vmatprep.subr.mxu0 0.0
      %951 = vmatpush1.msra.mxu0 0.0
      %952 = vmatprep.subr.mxu0 0.0
      %953 = vmatpush1.msra.mxu0 0.0
      %954 = vmatprep.subr.mxu0 0.0
      %955 = vmatpush1.msra.mxu0 0.0
      %956 = vmatprep.subr.mxu0 0.0
      %957 = vmatpush1.msra.mxu0 0.0
      %958 = vmatprep.subr.mxu0 0.0
      %959 = vmatpush1.msra.mxu0 0.0
      %960 = vmatprep.subr.mxu0 0.0
      %961 = vmatpush1.msra.mxu0 0.0
      %962 = vmatprep.subr.mxu0 0.0
      %963 = vmatpush1.msra.mxu0 0.0
      %964 = vmatprep.subr.mxu0 0.0
      %965 = vmatpush1.msra.mxu0 0.0
      %966 = vmatprep.subr.mxu0 0.0
      %967 = vmatpush1.msra.mxu0 0.0
      %968 = vmatprep.subr.mxu0 0.0
      %969 = vmatpush1.msra.mxu0 0.0
      %970 = vmatprep.subr.mxu0 0.0
      %971 = vmatpush1.msra.mxu0 0.0
      %972 = vmatprep.subr.mxu0 0.0
      %973 = vmatpush1.msra.mxu0 0.0
      %974 = vmatprep.subr.mxu0 0.0
      %975 = vmatpush1.msra.mxu0 0.0
      %976 = vmatprep.subr.mxu0 0.0
      %977 = vmatpush1.msra.mxu0 0.0
      %978 = vmatprep.subr.mxu0 0.0
      %979 = vmatpush1.msra.mxu0 0.0
      %980 = vmatprep.subr.mxu0 0.0
      %981 = vmatpush1.msra.mxu0 0.0
      %982 = vmatprep.subr.mxu0 0.0
      %983 = vmatpush1.msra.mxu0 0.0
      %984 = vmatprep.subr.mxu0 0.0
      %985 = vmatpush1.msra.mxu0 0.0
      %986 = vmatprep.subr.mxu0 0.0
      %987 = vmatpush1.msra.mxu0 0.0
      %988 = vmatprep.subr.mxu0 0.0
      %989 = vmatpush1.msra.mxu0 0.0
      %990 = vmatprep.subr.mxu0 0.0
      %991 = vmatpush1.msra.mxu0 0.0
      %992 = vmatprep.subr.mxu0 0.0
      %993 = vmatpush1.msra.mxu0 0.0
      %994 = vmatprep.subr.mxu0 0.0
      %995 = vmatpush1.msra.mxu0 0.0
      %996 = vmatprep.subr.mxu0 0.0
      %997 = vmatpush1.msra.mxu0 0.0
      %998 = vmatprep.mubr.f32.mxu0 0.0
      %999 = vmatmul.mubr.f32.gmra.mrb[0].mxu0 %v926
      %v1000 = vpop.f32.mrb[0].mxu0
      %v1001 = vadd.f32 0.0, %v1000
      %v1002 = vpop.f32.mrb[0].mxu0
      %1003 = vmatprep.mubr.f32.mxu0 0.0
      %1004 = vmatmul.mubr.f32.gmra.mrb[0].mxu0 %v929
      %v1005 = vpop.f32.mrb[0].mxu0
      %v1006 = vadd.f32 0.0, %v1005
      %v1007 = vpop.f32.mrb[0].mxu0
      %1008 = vdwg.mxu0
      %v1009 = vadd.f32 %v921, %v1001
      %v1010 = vadd.f32 %v922, %v1006
      %v1012 = vlaneseq
      %v1013 = vshrl.u32 %v1012, 7
      %v1014 = vsub.s32 0, %v1013
      %v1015 = vrot.slane %v211, %v1014
      %v1017 = vadd.f32 %v1009, %v1015
      %v1018 = vadd.f32 %v1010, %v1015
      %1019 = vst [vmem:[%s192] sm:$0xff] %v1017
      %1020 = vst [vmem:[%s192 + $0x8] sm:$0xff] %v1018
      %v1021 = vld [vmem:[%s479] sm:$0xff]
      %v1022 = vld [vmem:[%s479 + $0x8] sm:$0xff]
      %v1023 = vld [vmem:[%s479 + $0x1] sm:$0xff]
      %v1024 = vld [vmem:[%s479 + $0x9] sm:$0xff]
      %v1026 = vsel %vm219, %v1023, 0
      %v1029 = vsel %vm219, %v1024, 0
      %1031 = vmatprep.subr.mxu0 0.0
      %1032 = vmatpush1.msra.mxu0 %v228
      %1033 = vmatprep.subr.mxu0 0.0
      %1034 = vmatpush1.msra.mxu0 0.0
      %1035 = vmatprep.subr.mxu0 0.0
      %1036 = vmatpush1.msra.mxu0 0.0
      %1037 = vmatprep.subr.mxu0 0.0
      %1038 = vmatpush1.msra.mxu0 0.0
      %1039 = vmatprep.subr.mxu0 0.0
      %1040 = vmatpush1.msra.mxu0 0.0
      %1041 = vmatprep.subr.mxu0 0.0
      %1042 = vmatpush1.msra.mxu0 0.0
      %1043 = vmatprep.subr.mxu0 0.0
      %1044 = vmatpush1.msra.mxu0 0.0
      %1045 = vmatprep.subr.mxu0 0.0
      %1046 = vmatpush1.msra.mxu0 0.0
      %1047 = vmatprep.subr.mxu0 0.0
      %1048 = vmatpush1.msra.mxu0 0.0
      %1049 = vmatprep.subr.mxu0 0.0
      %1050 = vmatpush1.msra.mxu0 0.0
      %1051 = vmatprep.subr.mxu0 0.0
      %1052 = vmatpush1.msra.mxu0 0.0
      %1053 = vmatprep.subr.mxu0 0.0
      %1054 = vmatpush1.msra.mxu0 0.0
      %1055 = vmatprep.subr.mxu0 0.0
      %1056 = vmatpush1.msra.mxu0 0.0
      %1057 = vmatprep.subr.mxu0 0.0
      %1058 = vmatpush1.msra.mxu0 0.0
      %1059 = vmatprep.subr.mxu0 0.0
      %1060 = vmatpush1.msra.mxu0 0.0
      %1061 = vmatprep.subr.mxu0 0.0
      %1062 = vmatpush1.msra.mxu0 0.0
      %1063 = vmatprep.subr.mxu0 0.0
      %1064 = vmatpush1.msra.mxu0 0.0
      %1065 = vmatprep.subr.mxu0 0.0
      %1066 = vmatpush1.msra.mxu0 0.0
      %1067 = vmatprep.subr.mxu0 0.0
      %1068 = vmatpush1.msra.mxu0 0.0
      %1069 = vmatprep.subr.mxu0 0.0
      %1070 = vmatpush1.msra.mxu0 0.0
      %1071 = vmatprep.subr.mxu0 0.0
      %1072 = vmatpush1.msra.mxu0 0.0
      %1073 = vmatprep.subr.mxu0 0.0
      %1074 = vmatpush1.msra.mxu0 0.0
      %1075 = vmatprep.subr.mxu0 0.0
      %1076 = vmatpush1.msra.mxu0 0.0
      %1077 = vmatprep.subr.mxu0 0.0
      %1078 = vmatpush1.msra.mxu0 0.0
      %1079 = vmatprep.subr.mxu0 0.0
      %1080 = vmatpush1.msra.mxu0 0.0
      %1081 = vmatprep.subr.mxu0 0.0
      %1082 = vmatpush1.msra.mxu0 0.0
      %1083 = vmatprep.subr.mxu0 0.0
      %1084 = vmatpush1.msra.mxu0 0.0
      %1085 = vmatprep.subr.mxu0 0.0
      %1086 = vmatpush1.msra.mxu0 0.0
      %1087 = vmatprep.subr.mxu0 0.0
      %1088 = vmatpush1.msra.mxu0 0.0
      %1089 = vmatprep.subr.mxu0 0.0
      %1090 = vmatpush1.msra.mxu0 0.0
      %1091 = vmatprep.subr.mxu0 0.0
      %1092 = vmatpush1.msra.mxu0 0.0
      %1093 = vmatprep.subr.mxu0 0.0
      %1094 = vmatpush1.msra.mxu0 0.0
      %1095 = vmatprep.mubr.f32.mxu0 0.0
      %1096 = vmatmul.mubr.f32.gmra.mrb[0].mxu0 %v1026
      %v1097 = vpop.f32.mrb[0].mxu0
      %v1098 = vadd.f32 0.0, %v1097
      %v1099 = vpop.f32.mrb[0].mxu0
      %1100 = vmatprep.mubr.f32.mxu0 0.0
      %1101 = vmatmul.mubr.f32.gmra.mrb[0].mxu0 %v1029
      %v1102 = vpop.f32.mrb[0].mxu0
      %v1103 = vadd.f32 0.0, %v1102
      %v1104 = vpop.f32.mrb[0].mxu0
      %1105 = vdwg.mxu0
      %v1107 = vsel %vm219, %v1021, 0
      %v1110 = vsel %vm219, %v1022, 0
      %1112 = vmatprep.subr.mxu0 0.0
      %1113 = vmatpush1.msra.mxu0 %v312
      %1114 = vmatprep.subr.mxu0 0.0
      %1115 = vmatpush1.msra.mxu0 0.0
      %1116 = vmatprep.subr.mxu0 0.0
      %1117 = vmatpush1.msra.mxu0 0.0
      %1118 = vmatprep.subr.mxu0 0.0
      %1119 = vmatpush1.msra.mxu0 0.0
      %1120 = vmatprep.subr.mxu0 0.0
      %1121 = vmatpush1.msra.mxu0 0.0
      %1122 = vmatprep.subr.mxu0 0.0
      %1123 = vmatpush1.msra.mxu0 0.0
      %1124 = vmatprep.subr.mxu0 0.0
      %1125 = vmatpush1.msra.mxu0 0.0
      %1126 = vmatprep.subr.mxu0 0.0
      %1127 = vmatpush1.msra.mxu0 0.0
      %1128 = vmatprep.subr.mxu0 0.0
      %1129 = vmatpush1.msra.mxu0 0.0
      %1130 = vmatprep.subr.mxu0 0.0
      %1131 = vmatpush1.msra.mxu0 0.0
      %1132 = vmatprep.subr.mxu0 0.0
      %1133 = vmatpush1.msra.mxu0 0.0
      %1134 = vmatprep.subr.mxu0 0.0
      %1135 = vmatpush1.msra.mxu0 0.0
      %1136 = vmatprep.subr.mxu0 0.0
      %1137 = vmatpush1.msra.mxu0 0.0
      %1138 = vmatprep.subr.mxu0 0.0
      %1139 = vmatpush1.msra.mxu0 0.0
      %1140 = vmatprep.subr.mxu0 0.0
      %1141 = vmatpush1.msra.mxu0 0.0
      %1142 = vmatprep.subr.mxu0 0.0
      %1143 = vmatpush1.msra.mxu0 0.0
      %1144 = vmatprep.subr.mxu0 0.0
      %1145 = vmatpush1.msra.mxu0 0.0
      %1146 = vmatprep.subr.mxu0 0.0
      %1147 = vmatpush1.msra.mxu0 0.0
      %1148 = vmatprep.subr.mxu0 0.0
      %1149 = vmatpush1.msra.mxu0 0.0
      %1150 = vmatprep.subr.mxu0 0.0
      %1151 = vmatpush1.msra.mxu0 0.0
      %1152 = vmatprep.subr.mxu0 0.0
      %1153 = vmatpush1.msra.mxu0 0.0
      %1154 = vmatprep.subr.mxu0 0.0
      %1155 = vmatpush1.msra.mxu0 0.0
      %1156 = vmatprep.subr.mxu0 0.0
      %1157 = vmatpush1.msra.mxu0 0.0
      %1158 = vmatprep.subr.mxu0 0.0
      %1159 = vmatpush1.msra.mxu0 0.0
      %1160 = vmatprep.subr.mxu0 0.0
      %1161 = vmatpush1.msra.mxu0 0.0
      %1162 = vmatprep.subr.mxu0 0.0
      %1163 = vmatpush1.msra.mxu0 0.0
      %1164 = vmatprep.subr.mxu0 0.0
      %1165 = vmatpush1.msra.mxu0 0.0
      %1166 = vmatprep.subr.mxu0 0.0
      %1167 = vmatpush1.msra.mxu0 0.0
      %1168 = vmatprep.subr.mxu0 0.0
      %1169 = vmatpush1.msra.mxu0 0.0
      %1170 = vmatprep.subr.mxu0 0.0
      %1171 = vmatpush1.msra.mxu0 0.0
      %1172 = vmatprep.subr.mxu0 0.0
      %1173 = vmatpush1.msra.mxu0 0.0
      %1174 = vmatprep.subr.mxu0 0.0
      %1175 = vmatpush1.msra.mxu0 0.0
      %1176 = vmatprep.mubr.f32.mxu0 0.0
      %1177 = vmatmul.mubr.f32.gmra.mrb[0].mxu0 %v1107
      %v1178 = vpop.f32.mrb[0].mxu0
      %v1179 = vadd.f32 %v1098, %v1178
      %v1180 = vpop.f32.mrb[0].mxu0
      %1181 = vmatprep.mubr.f32.mxu0 0.0
      %1182 = vmatmul.mubr.f32.gmra.mrb[0].mxu0 %v1110
      %v1183 = vpop.f32.mrb[0].mxu0
      %v1184 = vadd.f32 %v1103, %v1183
      %v1185 = vpop.f32.mrb[0].mxu0
      %1186 = vdwg.mxu0
      %v1187 = vld [vmem:[%s479 + $0x2] sm:$0xff]
      %v1188 = vld [vmem:[%s479 + $0xa] sm:$0xff]
      %v1190 = vsel %vm219, %v1187, 0
      %v1193 = vsel %vm219, %v1188, 0
      %1195 = vmatprep.subr.mxu0 0.0
      %1196 = vmatpush1.msra.mxu0 %v398
      %1197 = vmatprep.subr.mxu0 0.0
      %1198 = vmatpush1.msra.mxu0 0.0
      %1199 = vmatprep.subr.mxu0 0.0
      %1200 = vmatpush1.msra.mxu0 0.0
      %1201 = vmatprep.subr.mxu0 0.0
      %1202 = vmatpush1.msra.mxu0 0.0
      %1203 = vmatprep.subr.mxu0 0.0
      %1204 = vmatpush1.msra.mxu0 0.0
      %1205 = vmatprep.subr.mxu0 0.0
      %1206 = vmatpush1.msra.mxu0 0.0
      %1207 = vmatprep.subr.mxu0 0.0
      %1208 = vmatpush1.msra.mxu0 0.0
      %1209 = vmatprep.subr.mxu0 0.0
      %1210 = vmatpush1.msra.mxu0 0.0
      %1211 = vmatprep.subr.mxu0 0.0
      %1212 = vmatpush1.msra.mxu0 0.0
      %1213 = vmatprep.subr.mxu0 0.0
      %1214 = vmatpush1.msra.mxu0 0.0
      %1215 = vmatprep.subr.mxu0 0.0
      %1216 = vmatpush1.msra.mxu0 0.0
      %1217 = vmatprep.subr.mxu0 0.0
      %1218 = vmatpush1.msra.mxu0 0.0
      %1219 = vmatprep.subr.mxu0 0.0
      %1220 = vmatpush1.msra.mxu0 0.0
      %1221 = vmatprep.subr.mxu0 0.0
      %1222 = vmatpush1.msra.mxu0 0.0
      %1223 = vmatprep.subr.mxu0 0.0
      %1224 = vmatpush1.msra.mxu0 0.0
      %1225 = vmatprep.subr.mxu0 0.0
      %1226 = vmatpush1.msra.mxu0 0.0
      %1227 = vmatprep.subr.mxu0 0.0
      %1228 = vmatpush1.msra.mxu0 0.0
      %1229 = vmatprep.subr.mxu0 0.0
      %1230 = vmatpush1.msra.mxu0 0.0
      %1231 = vmatprep.subr.mxu0 0.0
      %1232 = vmatpush1.msra.mxu0 0.0
      %1233 = vmatprep.subr.mxu0 0.0
      %1234 = vmatpush1.msra.mxu0 0.0
      %1235 = vmatprep.subr.mxu0 0.0
      %1236 = vmatpush1.msra.mxu0 0.0
      %1237 = vmatprep.subr.mxu0 0.0
      %1238 = vmatpush1.msra.mxu0 0.0
      %1239 = vmatprep.subr.mxu0 0.0
      %1240 = vmatpush1.msra.mxu0 0.0
      %1241 = vmatprep.subr.mxu0 0.0
      %1242 = vmatpush1.msra.mxu0 0.0
      %1243 = vmatprep.subr.mxu0 0.0
      %1244 = vmatpush1.msra.mxu0 0.0
      %1245 = vmatprep.subr.mxu0 0.0
      %1246 = vmatpush1.msra.mxu0 0.0
      %1247 = vmatprep.subr.mxu0 0.0
      %1248 = vmatpush1.msra.mxu0 0.0
      %1249 = vmatprep.subr.mxu0 0.0
      %1250 = vmatpush1.msra.mxu0 0.0
      %1251 = vmatprep.subr.mxu0 0.0
      %1252 = vmatpush1.msra.mxu0 0.0
      %1253 = vmatprep.subr.mxu0 0.0
      %1254 = vmatpush1.msra.mxu0 0.0
      %1255 = vmatprep.subr.mxu0 0.0
      %1256 = vmatpush1.msra.mxu0 0.0
      %1257 = vmatprep.subr.mxu0 0.0
      %1258 = vmatpush1.msra.mxu0 0.0
      %1259 = vmatprep.mubr.f32.mxu0 0.0
      %1260 = vmatmul.mubr.f32.gmra.mrb[0].mxu0 %v1190
      %v1261 = vpop.f32.mrb[0].mxu0
      %v1262 = vadd.f32 0.0, %v1261
      %v1263 = vpop.f32.mrb[0].mxu0
      %1264 = vmatprep.mubr.f32.mxu0 0.0
      %1265 = vmatmul.mubr.f32.gmra.mrb[0].mxu0 %v1193
      %v1266 = vpop.f32.mrb[0].mxu0
      %v1267 = vadd.f32 0.0, %v1266
      %v1268 = vpop.f32.mrb[0].mxu0
      %1269 = vdwg.mxu0
      %v1270 = vadd.f32 %v1179, %v1262
      %v1271 = vadd.f32 %v1184, %v1267
      %v1272 = vld [vmem:[%s746] sm:$0xff]
      %v1273 = vld [vmem:[%s746 + $0x8] sm:$0xff]
      %v1275 = vsel %vm219, %v1272, 0
      %v1278 = vsel %vm219, %v1273, 0
      %1280 = vmatprep.subr.mxu0 0.0
      %1281 = vmatpush1.msra.mxu0 %v489
      %1282 = vmatprep.subr.mxu0 0.0
      %1283 = vmatpush1.msra.mxu0 0.0
      %1284 = vmatprep.subr.mxu0 0.0
      %1285 = vmatpush1.msra.mxu0 0.0
      %1286 = vmatprep.subr.mxu0 0.0
      %1287 = vmatpush1.msra.mxu0 0.0
      %1288 = vmatprep.subr.mxu0 0.0
      %1289 = vmatpush1.msra.mxu0 0.0
      %1290 = vmatprep.subr.mxu0 0.0
      %1291 = vmatpush1.msra.mxu0 0.0
      %1292 = vmatprep.subr.mxu0 0.0
      %1293 = vmatpush1.msra.mxu0 0.0
      %1294 = vmatprep.subr.mxu0 0.0
      %1295 = vmatpush1.msra.mxu0 0.0
      %1296 = vmatprep.subr.mxu0 0.0
      %1297 = vmatpush1.msra.mxu0 0.0
      %1298 = vmatprep.subr.mxu0 0.0
      %1299 = vmatpush1.msra.mxu0 0.0
      %1300 = vmatprep.subr.mxu0 0.0
      %1301 = vmatpush1.msra.mxu0 0.0
      %1302 = vmatprep.subr.mxu0 0.0
      %1303 = vmatpush1.msra.mxu0 0.0
      %1304 = vmatprep.subr.mxu0 0.0
      %1305 = vmatpush1.msra.mxu0 0.0
      %1306 = vmatprep.subr.mxu0 0.0
      %1307 = vmatpush1.msra.mxu0 0.0
      %1308 = vmatprep.subr.mxu0 0.0
      %1309 = vmatpush1.msra.mxu0 0.0
      %1310 = vmatprep.subr.mxu0 0.0
      %1311 = vmatpush1.msra.mxu0 0.0
      %1312 = vmatprep.subr.mxu0 0.0
      %1313 = vmatpush1.msra.mxu0 0.0
      %1314 = vmatprep.subr.mxu0 0.0
      %1315 = vmatpush1.msra.mxu0 0.0
      %1316 = vmatprep.subr.mxu0 0.0
      %1317 = vmatpush1.msra.mxu0 0.0
      %1318 = vmatprep.subr.mxu0 0.0
      %1319 = vmatpush1.msra.mxu0 0.0
      %1320 = vmatprep.subr.mxu0 0.0
      %1321 = vmatpush1.msra.mxu0 0.0
      %1322 = vmatprep.subr.mxu0 0.0
      %1323 = vmatpush1.msra.mxu0 0.0
      %1324 = vmatprep.subr.mxu0 0.0
      %1325 = vmatpush1.msra.mxu0 0.0
      %1326 = vmatprep.subr.mxu0 0.0
      %1327 = vmatpush1.msra.mxu0 0.0
      %1328 = vmatprep.subr.mxu0 0.0
      %1329 = vmatpush1.msra.mxu0 0.0
      %1330 = vmatprep.subr.mxu0 0.0
      %1331 = vmatpush1.msra.mxu0 0.0
      %1332 = vmatprep.subr.mxu0 0.0
      %1333 = vmatpush1.msra.mxu0 0.0
      %1334 = vmatprep.subr.mxu0 0.0
      %1335 = vmatpush1.msra.mxu0 0.0
      %1336 = vmatprep.subr.mxu0 0.0
      %1337 = vmatpush1.msra.mxu0 0.0
      %1338 = vmatprep.subr.mxu0 0.0
      %1339 = vmatpush1.msra.mxu0 0.0
      %1340 = vmatprep.subr.mxu0 0.0
      %1341 = vmatpush1.msra.mxu0 0.0
      %1342 = vmatprep.subr.mxu0 0.0
      %1343 = vmatpush1.msra.mxu0 0.0
      %1344 = vmatprep.mubr.f32.mxu0 0.0
      %1345 = vmatmul.mubr.f32.gmra.mrb[0].mxu0 %v1275
      %v1346 = vpop.f32.mrb[0].mxu0
      %v1347 = vadd.f32 0.0, %v1346
      %v1348 = vpop.f32.mrb[0].mxu0
      %1349 = vmatprep.mubr.f32.mxu0 0.0
      %1350 = vmatmul.mubr.f32.gmra.mrb[0].mxu0 %v1278
      %v1351 = vpop.f32.mrb[0].mxu0
      %v1352 = vadd.f32 0.0, %v1351
      %v1353 = vpop.f32.mrb[0].mxu0
      %1354 = vdwg.mxu0
      %v1355 = vadd.f32 %v1270, %v1347
      %v1356 = vadd.f32 %v1271, %v1352
      %v1357 = vld [vmem:[%s746 + $0x1] sm:$0xff]
      %v1358 = vld [vmem:[%s746 + $0x9] sm:$0xff]
      %v1360 = vsel %vm219, %v1357, 0
      %v1363 = vsel %vm219, %v1358, 0
      %1365 = vmatprep.subr.mxu0 0.0
      %1366 = vmatpush1.msra.mxu0 %v577
      %1367 = vmatprep.subr.mxu0 0.0
      %1368 = vmatpush1.msra.mxu0 0.0
      %1369 = vmatprep.subr.mxu0 0.0
      %1370 = vmatpush1.msra.mxu0 0.0
      %1371 = vmatprep.subr.mxu0 0.0
      %1372 = vmatpush1.msra.mxu0 0.0
      %1373 = vmatprep.subr.mxu0 0.0
      %1374 = vmatpush1.msra.mxu0 0.0
      %1375 = vmatprep.subr.mxu0 0.0
      %1376 = vmatpush1.msra.mxu0 0.0
      %1377 = vmatprep.subr.mxu0 0.0
      %1378 = vmatpush1.msra.mxu0 0.0
      %1379 = vmatprep.subr.mxu0 0.0
      %1380 = vmatpush1.msra.mxu0 0.0
      %1381 = vmatprep.subr.mxu0 0.0
      %1382 = vmatpush1.msra.mxu0 0.0
      %1383 = vmatprep.subr.mxu0 0.0
      %1384 = vmatpush1.msra.mxu0 0.0
      %1385 = vmatprep.subr.mxu0 0.0
      %1386 = vmatpush1.msra.mxu0 0.0
      %1387 = vmatprep.subr.mxu0 0.0
      %1388 = vmatpush1.msra.mxu0 0.0
      %1389 = vmatprep.subr.mxu0 0.0
      %1390 = vmatpush1.msra.mxu0 0.0
      %1391 = vmatprep.subr.mxu0 0.0
      %1392 = vmatpush1.msra.mxu0 0.0
      %1393 = vmatprep.subr.mxu0 0.0
      %1394 = vmatpush1.msra.mxu0 0.0
      %1395 = vmatprep.subr.mxu0 0.0
      %1396 = vmatpush1.msra.mxu0 0.0
      %1397 = vmatprep.subr.mxu0 0.0
      %1398 = vmatpush1.msra.mxu0 0.0
      %1399 = vmatprep.subr.mxu0 0.0
      %1400 = vmatpush1.msra.mxu0 0.0
      %1401 = vmatprep.subr.mxu0 0.0
      %1402 = vmatpush1.msra.mxu0 0.0
      %1403 = vmatprep.subr.mxu0 0.0
      %1404 = vmatpush1.msra.mxu0 0.0
      %1405 = vmatprep.subr.mxu0 0.0
      %1406 = vmatpush1.msra.mxu0 0.0
      %1407 = vmatprep.subr.mxu0 0.0
      %1408 = vmatpush1.msra.mxu0 0.0
      %1409 = vmatprep.subr.mxu0 0.0
      %1410 = vmatpush1.msra.mxu0 0.0
      %1411 = vmatprep.subr.mxu0 0.0
      %1412 = vmatpush1.msra.mxu0 0.0
      %1413 = vmatprep.subr.mxu0 0.0
      %1414 = vmatpush1.msra.mxu0 0.0
      %1415 = vmatprep.subr.mxu0 0.0
      %1416 = vmatpush1.msra.mxu0 0.0
      %1417 = vmatprep.subr.mxu0 0.0
      %1418 = vmatpush1.msra.mxu0 0.0
      %1419 = vmatprep.subr.mxu0 0.0
      %1420 = vmatpush1.msra.mxu0 0.0
      %1421 = vmatprep.subr.mxu0 0.0
      %1422 = vmatpush1.msra.mxu0 0.0
      %1423 = vmatprep.subr.mxu0 0.0
      %1424 = vmatpush1.msra.mxu0 0.0
      %1425 = vmatprep.subr.mxu0 0.0
      %1426 = vmatpush1.msra.mxu0 0.0
      %1427 = vmatprep.subr.mxu0 0.0
      %1428 = vmatpush1.msra.mxu0 0.0
      %1429 = vmatprep.mubr.f32.mxu0 0.0
      %1430 = vmatmul.mubr.f32.gmra.mrb[0].mxu0 %v1360
      %v1431 = vpop.f32.mrb[0].mxu0
      %v1432 = vadd.f32 0.0, %v1431
      %v1433 = vpop.f32.mrb[0].mxu0
      %1434 = vmatprep.mubr.f32.mxu0 0.0
      %1435 = vmatmul.mubr.f32.gmra.mrb[0].mxu0 %v1363
      %v1436 = vpop.f32.mrb[0].mxu0
      %v1437 = vadd.f32 0.0, %v1436
      %v1438 = vpop.f32.mrb[0].mxu0
      %1439 = vdwg.mxu0
      %v1440 = vadd.f32 %v1355, %v1432
      %v1441 = vadd.f32 %v1356, %v1437
      %v1442 = vld [vmem:[%s746 + $0x2] sm:$0xff]
      %v1443 = vld [vmem:[%s746 + $0xa] sm:$0xff]
      %v1445 = vsel %vm219, %v1442, 0
      %v1448 = vsel %vm219, %v1443, 0
      %1450 = vmatprep.subr.mxu0 0.0
      %1451 = vmatpush1.msra.mxu0 %v665
      %1452 = vmatprep.subr.mxu0 0.0
      %1453 = vmatpush1.msra.mxu0 0.0
      %1454 = vmatprep.subr.mxu0 0.0
      %1455 = vmatpush1.msra.mxu0 0.0
      %1456 = vmatprep.subr.mxu0 0.0
      %1457 = vmatpush1.msra.mxu0 0.0
      %1458 = vmatprep.subr.mxu0 0.0
      %1459 = vmatpush1.msra.mxu0 0.0
      %1460 = vmatprep.subr.mxu0 0.0
      %1461 = vmatpush1.msra.mxu0 0.0
      %1462 = vmatprep.subr.mxu0 0.0
      %1463 = vmatpush1.msra.mxu0 0.0
      %1464 = vmatprep.subr.mxu0 0.0
      %1465 = vmatpush1.msra.mxu0 0.0
      %1466 = vmatprep.subr.mxu0 0.0
      %1467 = vmatpush1.msra.mxu0 0.0
      %1468 = vmatprep.subr.mxu0 0.0
      %1469 = vmatpush1.msra.mxu0 0.0
      %1470 = vmatprep.subr.mxu0 0.0
      %1471 = vmatpush1.msra.mxu0 0.0
      %1472 = vmatprep.subr.mxu0 0.0
      %1473 = vmatpush1.msra.mxu0 0.0
      %1474 = vmatprep.subr.mxu0 0.0
      %1475 = vmatpush1.msra.mxu0 0.0
      %1476 = vmatprep.subr.mxu0 0.0
      %1477 = vmatpush1.msra.mxu0 0.0
      %1478 = vmatprep.subr.mxu0 0.0
      %1479 = vmatpush1.msra.mxu0 0.0
      %1480 = vmatprep.subr.mxu0 0.0
      %1481 = vmatpush1.msra.mxu0 0.0
      %1482 = vmatprep.subr.mxu0 0.0
      %1483 = vmatpush1.msra.mxu0 0.0
      %1484 = vmatprep.subr.mxu0 0.0
      %1485 = vmatpush1.msra.mxu0 0.0
      %1486 = vmatprep.subr.mxu0 0.0
      %1487 = vmatpush1.msra.mxu0 0.0
      %1488 = vmatprep.subr.mxu0 0.0
      %1489 = vmatpush1.msra.mxu0 0.0
      %1490 = vmatprep.subr.mxu0 0.0
      %1491 = vmatpush1.msra.mxu0 0.0
      %1492 = vmatprep.subr.mxu0 0.0
      %1493 = vmatpush1.msra.mxu0 0.0
      %1494 = vmatprep.subr.mxu0 0.0
      %1495 = vmatpush1.msra.mxu0 0.0
      %1496 = vmatprep.subr.mxu0 0.0
      %1497 = vmatpush1.msra.mxu0 0.0
      %1498 = vmatprep.subr.mxu0 0.0
      %1499 = vmatpush1.msra.mxu0 0.0
      %1500 = vmatprep.subr.mxu0 0.0
      %1501 = vmatpush1.msra.mxu0 0.0
      %1502 = vmatprep.subr.mxu0 0.0
      %1503 = vmatpush1.msra.mxu0 0.0
      %1504 = vmatprep.subr.mxu0 0.0
      %1505 = vmatpush1.msra.mxu0 0.0
      %1506 = vmatprep.subr.mxu0 0.0
      %1507 = vmatpush1.msra.mxu0 0.0
      %1508 = vmatprep.subr.mxu0 0.0
      %1509 = vmatpush1.msra.mxu0 0.0
      %1510 = vmatprep.subr.mxu0 0.0
      %1511 = vmatpush1.msra.mxu0 0.0
      %1512 = vmatprep.subr.mxu0 0.0
      %1513 = vmatpush1.msra.mxu0 0.0
      %1514 = vmatprep.mubr.f32.mxu0 0.0
      %1515 = vmatmul.mubr.f32.gmra.mrb[0].mxu0 %v1445
      %v1516 = vpop.f32.mrb[0].mxu0
      %v1517 = vadd.f32 0.0, %v1516
      %v1518 = vpop.f32.mrb[0].mxu0
      %1519 = vmatprep.mubr.f32.mxu0 0.0
      %1520 = vmatmul.mubr.f32.gmra.mrb[0].mxu0 %v1448
      %v1521 = vpop.f32.mrb[0].mxu0
      %v1522 = vadd.f32 0.0, %v1521
      %v1523 = vpop.f32.mrb[0].mxu0
      %1524 = vdwg.mxu0
      %v1525 = vadd.f32 %v1440, %v1517
      %v1526 = vadd.f32 %v1441, %v1522
      %s1527 = sadd.s32 %s212, 3
      %s1528 = smul.u32 %s1527, 24
      %s1529 = scalar_lea.vmem %s183, %s1528
      %v1530 = vld [vmem:[%s1529] sm:$0xff]
      %v1531 = vld [vmem:[%s1529 + $0x8] sm:$0xff]
      %v1533 = vsel %vm219, %v1530, 0
      %v1536 = vsel %vm219, %v1531, 0
      %1538 = vmatprep.subr.mxu0 0.0
      %1539 = vmatpush1.msra.mxu0 %v756
      %1540 = vmatprep.subr.mxu0 0.0
      %1541 = vmatpush1.msra.mxu0 0.0
      %1542 = vmatprep.subr.mxu0 0.0
      %1543 = vmatpush1.msra.mxu0 0.0
      %1544 = vmatprep.subr.mxu0 0.0
      %1545 = vmatpush1.msra.mxu0 0.0
      %1546 = vmatprep.subr.mxu0 0.0
      %1547 = vmatpush1.msra.mxu0 0.0
      %1548 = vmatprep.subr.mxu0 0.0
      %1549 = vmatpush1.msra.mxu0 0.0
      %1550 = vmatprep.subr.mxu0 0.0
      %1551 = vmatpush1.msra.mxu0 0.0
      %1552 = vmatprep.subr.mxu0 0.0
      %1553 = vmatpush1.msra.mxu0 0.0
      %1554 = vmatprep.subr.mxu0 0.0
      %1555 = vmatpush1.msra.mxu0 0.0
      %1556 = vmatprep.subr.mxu0 0.0
      %1557 = vmatpush1.msra.mxu0 0.0
      %1558 = vmatprep.subr.mxu0 0.0
      %1559 = vmatpush1.msra.mxu0 0.0
      %1560 = vmatprep.subr.mxu0 0.0
      %1561 = vmatpush1.msra.mxu0 0.0
      %1562 = vmatprep.subr.mxu0 0.0
      %1563 = vmatpush1.msra.mxu0 0.0
      %1564 = vmatprep.subr.mxu0 0.0
      %1565 = vmatpush1.msra.mxu0 0.0
      %1566 = vmatprep.subr.mxu0 0.0
      %1567 = vmatpush1.msra.mxu0 0.0
      %1568 = vmatprep.subr.mxu0 0.0
      %1569 = vmatpush1.msra.mxu0 0.0
      %1570 = vmatprep.subr.mxu0 0.0
      %1571 = vmatpush1.msra.mxu0 0.0
      %1572 = vmatprep.subr.mxu0 0.0
      %1573 = vmatpush1.msra.mxu0 0.0
      %1574 = vmatprep.subr.mxu0 0.0
      %1575 = vmatpush1.msra.mxu0 0.0
      %1576 = vmatprep.subr.mxu0 0.0
      %1577 = vmatpush1.msra.mxu0 0.0
      %1578 = vmatprep.subr.mxu0 0.0
      %1579 = vmatpush1.msra.mxu0 0.0
      %1580 = vmatprep.subr.mxu0 0.0
      %1581 = vmatpush1.msra.mxu0 0.0
      %1582 = vmatprep.subr.mxu0 0.0
      %1583 = vmatpush1.msra.mxu0 0.0
      %1584 = vmatprep.subr.mxu0 0.0
      %1585 = vmatpush1.msra.mxu0 0.0
      %1586 = vmatprep.subr.mxu0 0.0
      %1587 = vmatpush1.msra.mxu0 0.0
      %1588 = vmatprep.subr.mxu0 0.0
      %1589 = vmatpush1.msra.mxu0 0.0
      %1590 = vmatprep.subr.mxu0 0.0
      %1591 = vmatpush1.msra.mxu0 0.0
      %1592 = vmatprep.subr.mxu0 0.0
      %1593 = vmatpush1.msra.mxu0 0.0
      %1594 = vmatprep.subr.mxu0 0.0
      %1595 = vmatpush1.msra.mxu0 0.0
      %1596 = vmatprep.subr.mxu0 0.0
      %1597 = vmatpush1.msra.mxu0 0.0
      %1598 = vmatprep.subr.mxu0 0.0
      %1599 = vmatpush1.msra.mxu0 0.0
      %1600 = vmatprep.subr.mxu0 0.0
      %1601 = vmatpush1.msra.mxu0 0.0
      %1602 = vmatprep.mubr.f32.mxu0 0.0
      %1603 = vmatmul.mubr.f32.gmra.mrb[0].mxu0 %v1533
      %v1604 = vpop.f32.mrb[0].mxu0
      %v1605 = vadd.f32 0.0, %v1604
      %v1606 = vpop.f32.mrb[0].mxu0
      %1607 = vmatprep.mubr.f32.mxu0 0.0
      %1608 = vmatmul.mubr.f32.gmra.mrb[0].mxu0 %v1536
      %v1609 = vpop.f32.mrb[0].mxu0
      %v1610 = vadd.f32 0.0, %v1609
      %v1611 = vpop.f32.mrb[0].mxu0
      %1612 = vdwg.mxu0
      %v1613 = vadd.f32 %v1525, %v1605
      %v1614 = vadd.f32 %v1526, %v1610
      %v1615 = vld [vmem:[%s1529 + $0x1] sm:$0xff]
      %v1616 = vld [vmem:[%s1529 + $0x9] sm:$0xff]
      %v1618 = vsel %vm219, %v1615, 0
      %v1621 = vsel %vm219, %v1616, 0
      %1623 = vmatprep.subr.mxu0 0.0
      %1624 = vmatpush1.msra.mxu0 %v844
      %1625 = vmatprep.subr.mxu0 0.0
      %1626 = vmatpush1.msra.mxu0 0.0
      %1627 = vmatprep.subr.mxu0 0.0
      %1628 = vmatpush1.msra.mxu0 0.0
      %1629 = vmatprep.subr.mxu0 0.0
      %1630 = vmatpush1.msra.mxu0 0.0
      %1631 = vmatprep.subr.mxu0 0.0
      %1632 = vmatpush1.msra.mxu0 0.0
      %1633 = vmatprep.subr.mxu0 0.0
      %1634 = vmatpush1.msra.mxu0 0.0
      %1635 = vmatprep.subr.mxu0 0.0
      %1636 = vmatpush1.msra.mxu0 0.0
      %1637 = vmatprep.subr.mxu0 0.0
      %1638 = vmatpush1.msra.mxu0 0.0
      %1639 = vmatprep.subr.mxu0 0.0
      %1640 = vmatpush1.msra.mxu0 0.0
      %1641 = vmatprep.subr.mxu0 0.0
      %1642 = vmatpush1.msra.mxu0 0.0
      %1643 = vmatprep.subr.mxu0 0.0
      %1644 = vmatpush1.msra.mxu0 0.0
      %1645 = vmatprep.subr.mxu0 0.0
      %1646 = vmatpush1.msra.mxu0 0.0
      %1647 = vmatprep.subr.mxu0 0.0
      %1648 = vmatpush1.msra.mxu0 0.0
      %1649 = vmatprep.subr.mxu0 0.0
      %1650 = vmatpush1.msra.mxu0 0.0
      %1651 = vmatprep.subr.mxu0 0.0
      %1652 = vmatpush1.msra.mxu0 0.0
      %1653 = vmatprep.subr.mxu0 0.0
      %1654 = vmatpush1.msra.mxu0 0.0
      %1655 = vmatprep.subr.mxu0 0.0
      %1656 = vmatpush1.msra.mxu0 0.0
      %1657 = vmatprep.subr.mxu0 0.0
      %1658 = vmatpush1.msra.mxu0 0.0
      %1659 = vmatprep.subr.mxu0 0.0
      %1660 = vmatpush1.msra.mxu0 0.0
      %1661 = vmatprep.subr.mxu0 0.0
      %1662 = vmatpush1.msra.mxu0 0.0
      %1663 = vmatprep.subr.mxu0 0.0
      %1664 = vmatpush1.msra.mxu0 0.0
      %1665 = vmatprep.subr.mxu0 0.0
      %1666 = vmatpush1.msra.mxu0 0.0
      %1667 = vmatprep.subr.mxu0 0.0
      %1668 = vmatpush1.msra.mxu0 0.0
      %1669 = vmatprep.subr.mxu0 0.0
      %1670 = vmatpush1.msra.mxu0 0.0
      %1671 = vmatprep.subr.mxu0 0.0
      %1672 = vmatpush1.msra.mxu0 0.0
      %1673 = vmatprep.subr.mxu0 0.0
      %1674 = vmatpush1.msra.mxu0 0.0
      %1675 = vmatprep.subr.mxu0 0.0
      %1676 = vmatpush1.msra.mxu0 0.0
      %1677 = vmatprep.subr.mxu0 0.0
      %1678 = vmatpush1.msra.mxu0 0.0
      %1679 = vmatprep.subr.mxu0 0.0
      %1680 = vmatpush1.msra.mxu0 0.0
      %1681 = vmatprep.subr.mxu0 0.0
      %1682 = vmatpush1.msra.mxu0 0.0
      %1683 = vmatprep.subr.mxu0 0.0
      %1684 = vmatpush1.msra.mxu0 0.0
      %1685 = vmatprep.subr.mxu0 0.0
      %1686 = vmatpush1.msra.mxu0 0.0
      %1687 = vmatprep.mubr.f32.mxu0 0.0
      %1688 = vmatmul.mubr.f32.gmra.mrb[0].mxu0 %v1618
      %v1689 = vpop.f32.mrb[0].mxu0
      %v1690 = vadd.f32 0.0, %v1689
      %v1691 = vpop.f32.mrb[0].mxu0
      %1692 = vmatprep.mubr.f32.mxu0 0.0
      %1693 = vmatmul.mubr.f32.gmra.mrb[0].mxu0 %v1621
      %v1694 = vpop.f32.mrb[0].mxu0
      %v1695 = vadd.f32 0.0, %v1694
      %v1696 = vpop.f32.mrb[0].mxu0
      %1697 = vdwg.mxu0
      %v1698 = vadd.f32 %v1613, %v1690
      %v1699 = vadd.f32 %v1614, %v1695
      %v1700 = vld [vmem:[%s1529 + $0x2] sm:$0xff]
      %v1701 = vld [vmem:[%s1529 + $0xa] sm:$0xff]
      %v1703 = vsel %vm219, %v1700, 0
      %v1706 = vsel %vm219, %v1701, 0
      %1708 = vmatprep.subr.mxu0 0.0
      %1709 = vmatpush1.msra.mxu0 %v932
      %1710 = vmatprep.subr.mxu0 0.0
      %1711 = vmatpush1.msra.mxu0 0.0
      %1712 = vmatprep.subr.mxu0 0.0
      %1713 = vmatpush1.msra.mxu0 0.0
      %1714 = vmatprep.subr.mxu0 0.0
      %1715 = vmatpush1.msra.mxu0 0.0
      %1716 = vmatprep.subr.mxu0 0.0
      %1717 = vmatpush1.msra.mxu0 0.0
      %1718 = vmatprep.subr.mxu0 0.0
      %1719 = vmatpush1.msra.mxu0 0.0
      %1720 = vmatprep.subr.mxu0 0.0
      %1721 = vmatpush1.msra.mxu0 0.0
      %1722 = vmatprep.subr.mxu0 0.0
      %1723 = vmatpush1.msra.mxu0 0.0
      %1724 = vmatprep.subr.mxu0 0.0
      %1725 = vmatpush1.msra.mxu0 0.0
      %1726 = vmatprep.subr.mxu0 0.0
      %1727 = vmatpush1.msra.mxu0 0.0
      %1728 = vmatprep.subr.mxu0 0.0
      %1729 = vmatpush1.msra.mxu0 0.0
      %1730 = vmatprep.subr.mxu0 0.0
      %1731 = vmatpush1.msra.mxu0 0.0
      %1732 = vmatprep.subr.mxu0 0.0
      %1733 = vmatpush1.msra.mxu0 0.0
      %1734 = vmatprep.subr.mxu0 0.0
      %1735 = vmatpush1.msra.mxu0 0.0
      %1736 = vmatprep.subr.mxu0 0.0
      %1737 = vmatpush1.msra.mxu0 0.0
      %1738 = vmatprep.subr.mxu0 0.0
      %1739 = vmatpush1.msra.mxu0 0.0
      %1740 = vmatprep.subr.mxu0 0.0
      %1741 = vmatpush1.msra.mxu0 0.0
      %1742 = vmatprep.subr.mxu0 0.0
      %1743 = vmatpush1.msra.mxu0 0.0
      %1744 = vmatprep.subr.mxu0 0.0
      %1745 = vmatpush1.msra.mxu0 0.0
      %1746 = vmatprep.subr.mxu0 0.0
      %1747 = vmatpush1.msra.mxu0 0.0
      %1748 = vmatprep.subr.mxu0 0.0
      %1749 = vmatpush1.msra.mxu0 0.0
      %1750 = vmatprep.subr.mxu0 0.0
      %1751 = vmatpush1.msra.mxu0 0.0
      %1752 = vmatprep.subr.mxu0 0.0
      %1753 = vmatpush1.msra.mxu0 0.0
      %1754 = vmatprep.subr.mxu0 0.0
      %1755 = vmatpush1.msra.mxu0 0.0
      %1756 = vmatprep.subr.mxu0 0.0
      %1757 = vmatpush1.msra.mxu0 0.0
      %1758 = vmatprep.subr.mxu0 0.0
      %1759 = vmatpush1.msra.mxu0 0.0
      %1760 = vmatprep.subr.mxu0 0.0
      %1761 = vmatpush1.msra.mxu0 0.0
      %1762 = vmatprep.subr.mxu0 0.0
      %1763 = vmatpush1.msra.mxu0 0.0
      %1764 = vmatprep.subr.mxu0 0.0
      %1765 = vmatpush1.msra.mxu0 0.0
      %1766 = vmatprep.subr.mxu0 0.0
      %1767 = vmatpush1.msra.mxu0 0.0
      %1768 = vmatprep.subr.mxu0 0.0
      %1769 = vmatpush1.msra.mxu0 0.0
      %1770 = vmatprep.subr.mxu0 0.0
      %1771 = vmatpush1.msra.mxu0 0.0
      %1772 = vmatprep.mubr.f32.mxu0 0.0
      %1773 = vmatmul.mubr.f32.gmra.mrb[0].mxu0 %v1703
      %v1774 = vpop.f32.mrb[0].mxu0
      %v1775 = vadd.f32 0.0, %v1774
      %v1776 = vpop.f32.mrb[0].mxu0
      %1777 = vmatprep.mubr.f32.mxu0 0.0
      %1778 = vmatmul.mubr.f32.gmra.mrb[0].mxu0 %v1706
      %v1779 = vpop.f32.mrb[0].mxu0
      %v1780 = vadd.f32 0.0, %v1779
      %v1781 = vpop.f32.mrb[0].mxu0
      %1782 = vdwg.mxu0
      %v1783 = vadd.f32 %v1698, %v1775
      %v1784 = vadd.f32 %v1699, %v1780
      %v1785 = vadd.f32 %v1783, %v1015
      %v1786 = vadd.f32 %v1784, %v1015
      %1787 = vst [vmem:[%s192 + $0x10] sm:$0xff] %v1785
      %1788 = vst [vmem:[%s192 + $0x18] sm:$0xff] %v1786
      %v1789 = vld [vmem:[%s746] sm:$0xff]
      %v1790 = vld [vmem:[%s746 + $0x8] sm:$0xff]
      %v1791 = vld [vmem:[%s746 + $0x1] sm:$0xff]
      %v1792 = vld [vmem:[%s746 + $0x9] sm:$0xff]
      %v1794 = vsel %vm219, %v1791, 0
      %v1797 = vsel %vm219, %v1792, 0
      %1799 = vmatprep.subr.mxu0 0.0
      %1800 = vmatpush1.msra.mxu0 %v228
      %1801 = vmatprep.subr.mxu0 0.0
      %1802 = vmatpush1.msra.mxu0 0.0
      %1803 = vmatprep.subr.mxu0 0.0
      %1804 = vmatpush1.msra.mxu0 0.0
      %1805 = vmatprep.subr.mxu0 0.0
      %1806 = vmatpush1.msra.mxu0 0.0
      %1807 = vmatprep.subr.mxu0 0.0
      %1808 = vmatpush1.msra.mxu0 0.0
      %1809 = vmatprep.subr.mxu0 0.0
      %1810 = vmatpush1.msra.mxu0 0.0
      %1811 = vmatprep.subr.mxu0 0.0
      %1812 = vmatpush1.msra.mxu0 0.0
      %1813 = vmatprep.subr.mxu0 0.0
      %1814 = vmatpush1.msra.mxu0 0.0
      %1815 = vmatprep.subr.mxu0 0.0
      %1816 = vmatpush1.msra.mxu0 0.0
      %1817 = vmatprep.subr.mxu0 0.0
      %1818 = vmatpush1.msra.mxu0 0.0
      %1819 = vmatprep.subr.mxu0 0.0
      %1820 = vmatpush1.msra.mxu0 0.0
      %1821 = vmatprep.subr.mxu0 0.0
      %1822 = vmatpush1.msra.mxu0 0.0
      %1823 = vmatprep.subr.mxu0 0.0
      %1824 = vmatpush1.msra.mxu0 0.0
      %1825 = vmatprep.subr.mxu0 0.0
      %1826 = vmatpush1.msra.mxu0 0.0
      %1827 = vmatprep.subr.mxu0 0.0
      %1828 = vmatpush1.msra.mxu0 0.0
      %1829 = vmatprep.subr.mxu0 0.0
      %1830 = vmatpush1.msra.mxu0 0.0
      %1831 = vmatprep.subr.mxu0 0.0
      %1832 = vmatpush1.msra.mxu0 0.0
      %1833 = vmatprep.subr.mxu0 0.0
      %1834 = vmatpush1.msra.mxu0 0.0
      %1835 = vmatprep.subr.mxu0 0.0
      %1836 = vmatpush1.msra.mxu0 0.0
      %1837 = vmatprep.subr.mxu0 0.0
      %1838 = vmatpush1.msra.mxu0 0.0
      %1839 = vmatprep.subr.mxu0 0.0
      %1840 = vmatpush1.msra.mxu0 0.0
      %1841 = vmatprep.subr.mxu0 0.0
      %1842 = vmatpush1.msra.mxu0 0.0
      %1843 = vmatprep.subr.mxu0 0.0
      %1844 = vmatpush1.msra.mxu0 0.0
      %1845 = vmatprep.subr.mxu0 0.0
      %1846 = vmatpush1.msra.mxu0 0.0
      %1847 = vmatprep.subr.mxu0 0.0
      %1848 = vmatpush1.msra.mxu0 0.0
      %1849 = vmatprep.subr.mxu0 0.0
      %1850 = vmatpush1.msra.mxu0 0.0
      %1851 = vmatprep.subr.mxu0 0.0
      %1852 = vmatpush1.msra.mxu0 0.0
      %1853 = vmatprep.subr.mxu0 0.0
      %1854 = vmatpush1.msra.mxu0 0.0
      %1855 = vmatprep.subr.mxu0 0.0
      %1856 = vmatpush1.msra.mxu0 0.0
      %1857 = vmatprep.subr.mxu0 0.0
      %1858 = vmatpush1.msra.mxu0 0.0
      %1859 = vmatprep.subr.mxu0 0.0
      %1860 = vmatpush1.msra.mxu0 0.0
      %1861 = vmatprep.subr.mxu0 0.0
      %1862 = vmatpush1.msra.mxu0 0.0
      %1863 = vmatprep.mubr.f32.mxu0 0.0
      %1864 = vmatmul.mubr.f32.gmra.mrb[0].mxu0 %v1794
      %v1865 = vpop.f32.mrb[0].mxu0
      %v1866 = vadd.f32 0.0, %v1865
      %v1867 = vpop.f32.mrb[0].mxu0
      %1868 = vmatprep.mubr.f32.mxu0 0.0
      %1869 = vmatmul.mubr.f32.gmra.mrb[0].mxu0 %v1797
      %v1870 = vpop.f32.mrb[0].mxu0
      %v1871 = vadd.f32 0.0, %v1870
      %v1872 = vpop.f32.mrb[0].mxu0
      %1873 = vdwg.mxu0
      %v1875 = vsel %vm219, %v1789, 0
      %v1878 = vsel %vm219, %v1790, 0
      %1880 = vmatprep.subr.mxu0 0.0
      %1881 = vmatpush1.msra.mxu0 %v312
      %1882 = vmatprep.subr.mxu0 0.0
      %1883 = vmatpush1.msra.mxu0 0.0
      %1884 = vmatprep.subr.mxu0 0.0
      %1885 = vmatpush1.msra.mxu0 0.0
      %1886 = vmatprep.subr.mxu0 0.0
      %1887 = vmatpush1.msra.mxu0 0.0
      %1888 = vmatprep.subr.mxu0 0.0
      %1889 = vmatpush1.msra.mxu0 0.0
      %1890 = vmatprep.subr.mxu0 0.0
      %1891 = vmatpush1.msra.mxu0 0.0
      %1892 = vmatprep.subr.mxu0 0.0
      %1893 = vmatpush1.msra.mxu0 0.0
      %1894 = vmatprep.subr.mxu0 0.0
      %1895 = vmatpush1.msra.mxu0 0.0
      %1896 = vmatprep.subr.mxu0 0.0
      %1897 = vmatpush1.msra.mxu0 0.0
      %1898 = vmatprep.subr.mxu0 0.0
      %1899 = vmatpush1.msra.mxu0 0.0
      %1900 = vmatprep.subr.mxu0 0.0
      %1901 = vmatpush1.msra.mxu0 0.0
      %1902 = vmatprep.subr.mxu0 0.0
      %1903 = vmatpush1.msra.mxu0 0.0
      %1904 = vmatprep.subr.mxu0 0.0
      %1905 = vmatpush1.msra.mxu0 0.0
      %1906 = vmatprep.subr.mxu0 0.0
      %1907 = vmatpush1.msra.mxu0 0.0
      %1908 = vmatprep.subr.mxu0 0.0
      %1909 = vmatpush1.msra.mxu0 0.0
      %1910 = vmatprep.subr.mxu0 0.0
      %1911 = vmatpush1.msra.mxu0 0.0
      %1912 = vmatprep.subr.mxu0 0.0
      %1913 = vmatpush1.msra.mxu0 0.0
      %1914 = vmatprep.subr.mxu0 0.0
      %1915 = vmatpush1.msra.mxu0 0.0
      %1916 = vmatprep.subr.mxu0 0.0
      %1917 = vmatpush1.msra.mxu0 0.0
      %1918 = vmatprep.subr.mxu0 0.0
      %1919 = vmatpush1.msra.mxu0 0.0
      %1920 = vmatprep.subr.mxu0 0.0
      %1921 = vmatpush1.msra.mxu0 0.0
      %1922 = vmatprep.subr.mxu0 0.0
      %1923 = vmatpush1.msra.mxu0 0.0
      %1924 = vmatprep.subr.mxu0 0.0
      %1925 = vmatpush1.msra.mxu0 0.0
      %1926 = vmatprep.subr.mxu0 0.0
      %1927 = vmatpush1.msra.mxu0 0.0
      %1928 = vmatprep.subr.mxu0 0.0
      %1929 = vmatpush1.msra.mxu0 0.0
      %1930 = vmatprep.subr.mxu0 0.0
      %1931 = vmatpush1.msra.mxu0 0.0
      %1932 = vmatprep.subr.mxu0 0.0
      %1933 = vmatpush1.msra.mxu0 0.0
      %1934 = vmatprep.subr.mxu0 0.0
      %1935 = vmatpush1.msra.mxu0 0.0
      %1936 = vmatprep.subr.mxu0 0.0
      %1937 = vmatpush1.msra.mxu0 0.0
      %1938 = vmatprep.subr.mxu0 0.0
      %1939 = vmatpush1.msra.mxu0 0.0
      %1940 = vmatprep.subr.mxu0 0.0
      %1941 = vmatpush1.msra.mxu0 0.0
      %1942 = vmatprep.subr.mxu0 0.0
      %1943 = vmatpush1.msra.mxu0 0.0
      %1944 = vmatprep.mubr.f32.mxu0 0.0
      %1945 = vmatmul.mubr.f32.gmra.mrb[0].mxu0 %v1875
      %v1946 = vpop.f32.mrb[0].mxu0
      %v1947 = vadd.f32 %v1866, %v1946
      %v1948 = vpop.f32.mrb[0].mxu0
      %1949 = vmatprep.mubr.f32.mxu0 0.0
      %1950 = vmatmul.mubr.f32.gmra.mrb[0].mxu0 %v1878
      %v1951 = vpop.f32.mrb[0].mxu0
      %v1952 = vadd.f32 %v1871, %v1951
      %v1953 = vpop.f32.mrb[0].mxu0
      %1954 = vdwg.mxu0
      %v1955 = vld [vmem:[%s746 + $0x2] sm:$0xff]
      %v1956 = vld [vmem:[%s746 + $0xa] sm:$0xff]
      %v1958 = vsel %vm219, %v1955, 0
      %v1961 = vsel %vm219, %v1956, 0
      %1963 = vmatprep.subr.mxu0 0.0
      %1964 = vmatpush1.msra.mxu0 %v398
      %1965 = vmatprep.subr.mxu0 0.0
      %1966 = vmatpush1.msra.mxu0 0.0
      %1967 = vmatprep.subr.mxu0 0.0
      %1968 = vmatpush1.msra.mxu0 0.0
      %1969 = vmatprep.subr.mxu0 0.0
      %1970 = vmatpush1.msra.mxu0 0.0
      %1971 = vmatprep.subr.mxu0 0.0
      %1972 = vmatpush1.msra.mxu0 0.0
      %1973 = vmatprep.subr.mxu0 0.0
      %1974 = vmatpush1.msra.mxu0 0.0
      %1975 = vmatprep.subr.mxu0 0.0
      %1976 = vmatpush1.msra.mxu0 0.0
      %1977 = vmatprep.subr.mxu0 0.0
      %1978 = vmatpush1.msra.mxu0 0.0
      %1979 = vmatprep.subr.mxu0 0.0
      %1980 = vmatpush1.msra.mxu0 0.0
      %1981 = vmatprep.subr.mxu0 0.0
      %1982 = vmatpush1.msra.mxu0 0.0
      %1983 = vmatprep.subr.mxu0 0.0
      %1984 = vmatpush1.msra.mxu0 0.0
      %1985 = vmatprep.subr.mxu0 0.0
      %1986 = vmatpush1.msra.mxu0 0.0
      %1987 = vmatprep.subr.mxu0 0.0
      %1988 = vmatpush1.msra.mxu0 0.0
      %1989 = vmatprep.subr.mxu0 0.0
      %1990 = vmatpush1.msra.mxu0 0.0
      %1991 = vmatprep.subr.mxu0 0.0
      %1992 = vmatpush1.msra.mxu0 0.0
      %1993 = vmatprep.subr.mxu0 0.0
      %1994 = vmatpush1.msra.mxu0 0.0
      %1995 = vmatprep.subr.mxu0 0.0
      %1996 = vmatpush1.msra.mxu0 0.0
      %1997 = vmatprep.subr.mxu0 0.0
      %1998 = vmatpush1.msra.mxu0 0.0
      %1999 = vmatprep.subr.mxu0 0.0
      %2000 = vmatpush1.msra.mxu0 0.0
      %2001 = vmatprep.subr.mxu0 0.0
      %2002 = vmatpush1.msra.mxu0 0.0
      %2003 = vmatprep.subr.mxu0 0.0
      %2004 = vmatpush1.msra.mxu0 0.0
      %2005 = vmatprep.subr.mxu0 0.0
      %2006 = vmatpush1.msra.mxu0 0.0
      %2007 = vmatprep.subr.mxu0 0.0
      %2008 = vmatpush1.msra.mxu0 0.0
      %2009 = vmatprep.subr.mxu0 0.0
      %2010 = vmatpush1.msra.mxu0 0.0
      %2011 = vmatprep.subr.mxu0 0.0
      %2012 = vmatpush1.msra.mxu0 0.0
      %2013 = vmatprep.subr.mxu0 0.0
      %2014 = vmatpush1.msra.mxu0 0.0
      %2015 = vmatprep.subr.mxu0 0.0
      %2016 = vmatpush1.msra.mxu0 0.0
      %2017 = vmatprep.subr.mxu0 0.0
      %2018 = vmatpush1.msra.mxu0 0.0
      %2019 = vmatprep.subr.mxu0 0.0
      %2020 = vmatpush1.msra.mxu0 0.0
      %2021 = vmatprep.subr.mxu0 0.0
      %2022 = vmatpush1.msra.mxu0 0.0
      %2023 = vmatprep.subr.mxu0 0.0
      %2024 = vmatpush1.msra.mxu0 0.0
      %2025 = vmatprep.subr.mxu0 0.0
      %2026 = vmatpush1.msra.mxu0 0.0
      %2027 = vmatprep.mubr.f32.mxu0 0.0
      %2028 = vmatmul.mubr.f32.gmra.mrb[0].mxu0 %v1958
      %v2029 = vpop.f32.mrb[0].mxu0
      %v2030 = vadd.f32 0.0, %v2029
      %v2031 = vpop.f32.mrb[0].mxu0
      %2032 = vmatprep.mubr.f32.mxu0 0.0
      %2033 = vmatmul.mubr.f32.gmra.mrb[0].mxu0 %v1961
      %v2034 = vpop.f32.mrb[0].mxu0
      %v2035 = vadd.f32 0.0, %v2034
      %v2036 = vpop.f32.mrb[0].mxu0
      %2037 = vdwg.mxu0
      %v2038 = vadd.f32 %v1947, %v2030
      %v2039 = vadd.f32 %v1952, %v2035
      %v2040 = vld [vmem:[%s1529] sm:$0xff]
      %v2041 = vld [vmem:[%s1529 + $0x8] sm:$0xff]
      %v2043 = vsel %vm219, %v2040, 0
      %v2046 = vsel %vm219, %v2041, 0
      %2048 = vmatprep.subr.mxu0 0.0
      %2049 = vmatpush1.msra.mxu0 %v489
      %2050 = vmatprep.subr.mxu0 0.0
      %2051 = vmatpush1.msra.mxu0 0.0
      %2052 = vmatprep.subr.mxu0 0.0
      %2053 = vmatpush1.msra.mxu0 0.0
      %2054 = vmatprep.subr.mxu0 0.0
      %2055 = vmatpush1.msra.mxu0 0.0
      %2056 = vmatprep.subr.mxu0 0.0
      %2057 = vmatpush1.msra.mxu0 0.0
      %2058 = vmatprep.subr.mxu0 0.0
      %2059 = vmatpush1.msra.mxu0 0.0
      %2060 = vmatprep.subr.mxu0 0.0
      %2061 = vmatpush1.msra.mxu0 0.0
      %2062 = vmatprep.subr.mxu0 0.0
      %2063 = vmatpush1.msra.mxu0 0.0
      %2064 = vmatprep.subr.mxu0 0.0
      %2065 = vmatpush1.msra.mxu0 0.0
      %2066 = vmatprep.subr.mxu0 0.0
      %2067 = vmatpush1.msra.mxu0 0.0
      %2068 = vmatprep.subr.mxu0 0.0
      %2069 = vmatpush1.msra.mxu0 0.0
      %2070 = vmatprep.subr.mxu0 0.0
      %2071 = vmatpush1.msra.mxu0 0.0
      %2072 = vmatprep.subr.mxu0 0.0
      %2073 = vmatpush1.msra.mxu0 0.0
      %2074 = vmatprep.subr.mxu0 0.0
      %2075 = vmatpush1.msra.mxu0 0.0
      %2076 = vmatprep.subr.mxu0 0.0
      %2077 = vmatpush1.msra.mxu0 0.0
      %2078 = vmatprep.subr.mxu0 0.0
      %2079 = vmatpush1.msra.mxu0 0.0
      %2080 = vmatprep.subr.mxu0 0.0
      %2081 = vmatpush1.msra.mxu0 0.0
      %2082 = vmatprep.subr.mxu0 0.0
      %2083 = vmatpush1.msra.mxu0 0.0
      %2084 = vmatprep.subr.mxu0 0.0
      %2085 = vmatpush1.msra.mxu0 0.0
      %2086 = vmatprep.subr.mxu0 0.0
      %2087 = vmatpush1.msra.mxu0 0.0
      %2088 = vmatprep.subr.mxu0 0.0
      %2089 = vmatpush1.msra.mxu0 0.0
      %2090 = vmatprep.subr.mxu0 0.0
      %2091 = vmatpush1.msra.mxu0 0.0
      %2092 = vmatprep.subr.mxu0 0.0
      %2093 = vmatpush1.msra.mxu0 0.0
      %2094 = vmatprep.subr.mxu0 0.0
      %2095 = vmatpush1.msra.mxu0 0.0
      %2096 = vmatprep.subr.mxu0 0.0
      %2097 = vmatpush1.msra.mxu0 0.0
      %2098 = vmatprep.subr.mxu0 0.0
      %2099 = vmatpush1.msra.mxu0 0.0
      %2100 = vmatprep.subr.mxu0 0.0
      %2101 = vmatpush1.msra.mxu0 0.0
      %2102 = vmatprep.subr.mxu0 0.0
      %2103 = vmatpush1.msra.mxu0 0.0
      %2104 = vmatprep.subr.mxu0 0.0
      %2105 = vmatpush1.msra.mxu0 0.0
      %2106 = vmatprep.subr.mxu0 0.0
      %2107 = vmatpush1.msra.mxu0 0.0
      %2108 = vmatprep.subr.mxu0 0.0
      %2109 = vmatpush1.msra.mxu0 0.0
      %2110 = vmatprep.subr.mxu0 0.0
      %2111 = vmatpush1.msra.mxu0 0.0
      %2112 = vmatprep.mubr.f32.mxu0 0.0
      %2113 = vmatmul.mubr.f32.gmra.mrb[0].mxu0 %v2043
      %v2114 = vpop.f32.mrb[0].mxu0
      %v2115 = vadd.f32 0.0, %v2114
      %v2116 = vpop.f32.mrb[0].mxu0
      %2117 = vmatprep.mubr.f32.mxu0 0.0
      %2118 = vmatmul.mubr.f32.gmra.mrb[0].mxu0 %v2046
      %v2119 = vpop.f32.mrb[0].mxu0
      %v2120 = vadd.f32 0.0, %v2119
      %v2121 = vpop.f32.mrb[0].mxu0
      %2122 = vdwg.mxu0
      %v2123 = vadd.f32 %v2038, %v2115
      %v2124 = vadd.f32 %v2039, %v2120
      %v2125 = vld [vmem:[%s1529 + $0x1] sm:$0xff]
      %v2126 = vld [vmem:[%s1529 + $0x9] sm:$0xff]
      %v2128 = vsel %vm219, %v2125, 0
      %v2131 = vsel %vm219, %v2126, 0
      %2133 = vmatprep.subr.mxu0 0.0
      %2134 = vmatpush1.msra.mxu0 %v577
      %2135 = vmatprep.subr.mxu0 0.0
      %2136 = vmatpush1.msra.mxu0 0.0
      %2137 = vmatprep.subr.mxu0 0.0
      %2138 = vmatpush1.msra.mxu0 0.0
      %2139 = vmatprep.subr.mxu0 0.0
      %2140 = vmatpush1.msra.mxu0 0.0
      %2141 = vmatprep.subr.mxu0 0.0
      %2142 = vmatpush1.msra.mxu0 0.0
      %2143 = vmatprep.subr.mxu0 0.0
      %2144 = vmatpush1.msra.mxu0 0.0
      %2145 = vmatprep.subr.mxu0 0.0
      %2146 = vmatpush1.msra.mxu0 0.0
      %2147 = vmatprep.subr.mxu0 0.0
      %2148 = vmatpush1.msra.mxu0 0.0
      %2149 = vmatprep.subr.mxu0 0.0
      %2150 = vmatpush1.msra.mxu0 0.0
      %2151 = vmatprep.subr.mxu0 0.0
      %2152 = vmatpush1.msra.mxu0 0.0
      %2153 = vmatprep.subr.mxu0 0.0
      %2154 = vmatpush1.msra.mxu0 0.0
      %2155 = vmatprep.subr.mxu0 0.0
      %2156 = vmatpush1.msra.mxu0 0.0
      %2157 = vmatprep.subr.mxu0 0.0
      %2158 = vmatpush1.msra.mxu0 0.0
      %2159 = vmatprep.subr.mxu0 0.0
      %2160 = vmatpush1.msra.mxu0 0.0
      %2161 = vmatprep.subr.mxu0 0.0
      %2162 = vmatpush1.msra.mxu0 0.0
      %2163 = vmatprep.subr.mxu0 0.0
      %2164 = vmatpush1.msra.mxu0 0.0
      %2165 = vmatprep.subr.mxu0 0.0
      %2166 = vmatpush1.msra.mxu0 0.0
      %2167 = vmatprep.subr.mxu0 0.0
      %2168 = vmatpush1.msra.mxu0 0.0
      %2169 = vmatprep.subr.mxu0 0.0
      %2170 = vmatpush1.msra.mxu0 0.0
      %2171 = vmatprep.subr.mxu0 0.0
      %2172 = vmatpush1.msra.mxu0 0.0
      %2173 = vmatprep.subr.mxu0 0.0
      %2174 = vmatpush1.msra.mxu0 0.0
      %2175 = vmatprep.subr.mxu0 0.0
      %2176 = vmatpush1.msra.mxu0 0.0
      %2177 = vmatprep.subr.mxu0 0.0
      %2178 = vmatpush1.msra.mxu0 0.0
      %2179 = vmatprep.subr.mxu0 0.0
      %2180 = vmatpush1.msra.mxu0 0.0
      %2181 = vmatprep.subr.mxu0 0.0
      %2182 = vmatpush1.msra.mxu0 0.0
      %2183 = vmatprep.subr.mxu0 0.0
      %2184 = vmatpush1.msra.mxu0 0.0
      %2185 = vmatprep.subr.mxu0 0.0
      %2186 = vmatpush1.msra.mxu0 0.0
      %2187 = vmatprep.subr.mxu0 0.0
      %2188 = vmatpush1.msra.mxu0 0.0
      %2189 = vmatprep.subr.mxu0 0.0
      %2190 = vmatpush1.msra.mxu0 0.0
      %2191 = vmatprep.subr.mxu0 0.0
      %2192 = vmatpush1.msra.mxu0 0.0
      %2193 = vmatprep.subr.mxu0 0.0
      %2194 = vmatpush1.msra.mxu0 0.0
      %2195 = vmatprep.subr.mxu0 0.0
      %2196 = vmatpush1.msra.mxu0 0.0
      %2197 = vmatprep.mubr.f32.mxu0 0.0
      %2198 = vmatmul.mubr.f32.gmra.mrb[0].mxu0 %v2128
      %v2199 = vpop.f32.mrb[0].mxu0
      %v2200 = vadd.f32 0.0, %v2199
      %v2201 = vpop.f32.mrb[0].mxu0
      %2202 = vmatprep.mubr.f32.mxu0 0.0
      %2203 = vmatmul.mubr.f32.gmra.mrb[0].mxu0 %v2131
      %v2204 = vpop.f32.mrb[0].mxu0
      %v2205 = vadd.f32 0.0, %v2204
      %v2206 = vpop.f32.mrb[0].mxu0
      %2207 = vdwg.mxu0
      %v2208 = vadd.f32 %v2123, %v2200
      %v2209 = vadd.f32 %v2124, %v2205
      %v2210 = vld [vmem:[%s1529 + $0x2] sm:$0xff]
      %v2211 = vld [vmem:[%s1529 + $0xa] sm:$0xff]
      %v2213 = vsel %vm219, %v2210, 0
      %v2216 = vsel %vm219, %v2211, 0
      %2218 = vmatprep.subr.mxu0 0.0
      %2219 = vmatpush1.msra.mxu0 %v665
      %2220 = vmatprep.subr.mxu0 0.0
      %2221 = vmatpush1.msra.mxu0 0.0
      %2222 = vmatprep.subr.mxu0 0.0
      %2223 = vmatpush1.msra.mxu0 0.0
      %2224 = vmatprep.subr.mxu0 0.0
      %2225 = vmatpush1.msra.mxu0 0.0
      %2226 = vmatprep.subr.mxu0 0.0
      %2227 = vmatpush1.msra.mxu0 0.0
      %2228 = vmatprep.subr.mxu0 0.0
      %2229 = vmatpush1.msra.mxu0 0.0
      %2230 = vmatprep.subr.mxu0 0.0
      %2231 = vmatpush1.msra.mxu0 0.0
      %2232 = vmatprep.subr.mxu0 0.0
      %2233 = vmatpush1.msra.mxu0 0.0
      %2234 = vmatprep.subr.mxu0 0.0
      %2235 = vmatpush1.msra.mxu0 0.0
      %2236 = vmatprep.subr.mxu0 0.0
      %2237 = vmatpush1.msra.mxu0 0.0
      %2238 = vmatprep.subr.mxu0 0.0
      %2239 = vmatpush1.msra.mxu0 0.0
      %2240 = vmatprep.subr.mxu0 0.0
      %2241 = vmatpush1.msra.mxu0 0.0
      %2242 = vmatprep.subr.mxu0 0.0
      %2243 = vmatpush1.msra.mxu0 0.0
      %2244 = vmatprep.subr.mxu0 0.0
      %2245 = vmatpush1.msra.mxu0 0.0
      %2246 = vmatprep.subr.mxu0 0.0
      %2247 = vmatpush1.msra.mxu0 0.0
      %2248 = vmatprep.subr.mxu0 0.0
      %2249 = vmatpush1.msra.mxu0 0.0
      %2250 = vmatprep.subr.mxu0 0.0
      %2251 = vmatpush1.msra.mxu0 0.0
      %2252 = vmatprep.subr.mxu0 0.0
      %2253 = vmatpush1.msra.mxu0 0.0
      %2254 = vmatprep.subr.mxu0 0.0
      %2255 = vmatpush1.msra.mxu0 0.0
      %2256 = vmatprep.subr.mxu0 0.0
      %2257 = vmatpush1.msra.mxu0 0.0
      %2258 = vmatprep.subr.mxu0 0.0
      %2259 = vmatpush1.msra.mxu0 0.0
      %2260 = vmatprep.subr.mxu0 0.0
      %2261 = vmatpush1.msra.mxu0 0.0
      %2262 = vmatprep.subr.mxu0 0.0
      %2263 = vmatpush1.msra.mxu0 0.0
      %2264 = vmatprep.subr.mxu0 0.0
      %2265 = vmatpush1.msra.mxu0 0.0
      %2266 = vmatprep.subr.mxu0 0.0
      %2267 = vmatpush1.msra.mxu0 0.0
      %2268 = vmatprep.subr.mxu0 0.0
      %2269 = vmatpush1.msra.mxu0 0.0
      %2270 = vmatprep.subr.mxu0 0.0
      %2271 = vmatpush1.msra.mxu0 0.0
      %2272 = vmatprep.subr.mxu0 0.0
      %2273 = vmatpush1.msra.mxu0 0.0
      %2274 = vmatprep.subr.mxu0 0.0
      %2275 = vmatpush1.msra.mxu0 0.0
      %2276 = vmatprep.subr.mxu0 0.0
      %2277 = vmatpush1.msra.mxu0 0.0
      %2278 = vmatprep.subr.mxu0 0.0
      %2279 = vmatpush1.msra.mxu0 0.0
      %2280 = vmatprep.subr.mxu0 0.0
      %2281 = vmatpush1.msra.mxu0 0.0
      %2282 = vmatprep.mubr.f32.mxu0 0.0
      %2283 = vmatmul.mubr.f32.gmra.mrb[0].mxu0 %v2213
      %v2284 = vpop.f32.mrb[0].mxu0
      %v2285 = vadd.f32 0.0, %v2284
      %v2286 = vpop.f32.mrb[0].mxu0
      %2287 = vmatprep.mubr.f32.mxu0 0.0
      %2288 = vmatmul.mubr.f32.gmra.mrb[0].mxu0 %v2216
      %v2289 = vpop.f32.mrb[0].mxu0
      %v2290 = vadd.f32 0.0, %v2289
      %v2291 = vpop.f32.mrb[0].mxu0
      %2292 = vdwg.mxu0
      %v2293 = vadd.f32 %v2208, %v2285
      %v2294 = vadd.f32 %v2209, %v2290
      %s2295 = sadd.s32 %s212, 4
      %s2296 = smul.u32 %s2295, 24
      %s2297 = scalar_lea.vmem %s183, %s2296
      %v2298 = vld [vmem:[%s2297] sm:$0xff]
      %v2299 = vld [vmem:[%s2297 + $0x8] sm:$0xff]
      %v2301 = vsel %vm219, %v2298, 0
      %v2304 = vsel %vm219, %v2299, 0
      %2306 = vmatprep.subr.mxu0 0.0
      %2307 = vmatpush1.msra.mxu0 %v756
      %2308 = vmatprep.subr.mxu0 0.0
      %2309 = vmatpush1.msra.mxu0 0.0
      %2310 = vmatprep.subr.mxu0 0.0
      %2311 = vmatpush1.msra.mxu0 0.0
      %2312 = vmatprep.subr.mxu0 0.0
      %2313 = vmatpush1.msra.mxu0 0.0
      %2314 = vmatprep.subr.mxu0 0.0
      %2315 = vmatpush1.msra.mxu0 0.0
      %2316 = vmatprep.subr.mxu0 0.0
      %2317 = vmatpush1.msra.mxu0 0.0
      %2318 = vmatprep.subr.mxu0 0.0
      %2319 = vmatpush1.msra.mxu0 0.0
      %2320 = vmatprep.subr.mxu0 0.0
      %2321 = vmatpush1.msra.mxu0 0.0
      %2322 = vmatprep.subr.mxu0 0.0
      %2323 = vmatpush1.msra.mxu0 0.0
      %2324 = vmatprep.subr.mxu0 0.0
      %2325 = vmatpush1.msra.mxu0 0.0
      %2326 = vmatprep.subr.mxu0 0.0
      %2327 = vmatpush1.msra.mxu0 0.0
      %2328 = vmatprep.subr.mxu0 0.0
      %2329 = vmatpush1.msra.mxu0 0.0
      %2330 = vmatprep.subr.mxu0 0.0
      %2331 = vmatpush1.msra.mxu0 0.0
      %2332 = vmatprep.subr.mxu0 0.0
      %2333 = vmatpush1.msra.mxu0 0.0
      %2334 = vmatprep.subr.mxu0 0.0
      %2335 = vmatpush1.msra.mxu0 0.0
      %2336 = vmatprep.subr.mxu0 0.0
      %2337 = vmatpush1.msra.mxu0 0.0
      %2338 = vmatprep.subr.mxu0 0.0
      %2339 = vmatpush1.msra.mxu0 0.0
      %2340 = vmatprep.subr.mxu0 0.0
      %2341 = vmatpush1.msra.mxu0 0.0
      %2342 = vmatprep.subr.mxu0 0.0
      %2343 = vmatpush1.msra.mxu0 0.0
      %2344 = vmatprep.subr.mxu0 0.0
      %2345 = vmatpush1.msra.mxu0 0.0
      %2346 = vmatprep.subr.mxu0 0.0
      %2347 = vmatpush1.msra.mxu0 0.0
      %2348 = vmatprep.subr.mxu0 0.0
      %2349 = vmatpush1.msra.mxu0 0.0
      %2350 = vmatprep.subr.mxu0 0.0
      %2351 = vmatpush1.msra.mxu0 0.0
      %2352 = vmatprep.subr.mxu0 0.0
      %2353 = vmatpush1.msra.mxu0 0.0
      %2354 = vmatprep.subr.mxu0 0.0
      %2355 = vmatpush1.msra.mxu0 0.0
      %2356 = vmatprep.subr.mxu0 0.0
      %2357 = vmatpush1.msra.mxu0 0.0
      %2358 = vmatprep.subr.mxu0 0.0
      %2359 = vmatpush1.msra.mxu0 0.0
      %2360 = vmatprep.subr.mxu0 0.0
      %2361 = vmatpush1.msra.mxu0 0.0
      %2362 = vmatprep.subr.mxu0 0.0
      %2363 = vmatpush1.msra.mxu0 0.0
      %2364 = vmatprep.subr.mxu0 0.0
      %2365 = vmatpush1.msra.mxu0 0.0
      %2366 = vmatprep.subr.mxu0 0.0
      %2367 = vmatpush1.msra.mxu0 0.0
      %2368 = vmatprep.subr.mxu0 0.0
      %2369 = vmatpush1.msra.mxu0 0.0
      %2370 = vmatprep.mubr.f32.mxu0 0.0
      %2371 = vmatmul.mubr.f32.gmra.mrb[0].mxu0 %v2301
      %v2372 = vpop.f32.mrb[0].mxu0
      %v2373 = vadd.f32 0.0, %v2372
      %v2374 = vpop.f32.mrb[0].mxu0
      %2375 = vmatprep.mubr.f32.mxu0 0.0
      %2376 = vmatmul.mubr.f32.gmra.mrb[0].mxu0 %v2304
      %v2377 = vpop.f32.mrb[0].mxu0
      %v2378 = vadd.f32 0.0, %v2377
      %v2379 = vpop.f32.mrb[0].mxu0
      %2380 = vdwg.mxu0
      %v2381 = vadd.f32 %v2293, %v2373
      %v2382 = vadd.f32 %v2294, %v2378
      %v2383 = vld [vmem:[%s2297 + $0x1] sm:$0xff]
      %v2384 = vld [vmem:[%s2297 + $0x9] sm:$0xff]
      %v2386 = vsel %vm219, %v2383, 0
      %v2389 = vsel %vm219, %v2384, 0
      %2391 = vmatprep.subr.mxu0 0.0
      %2392 = vmatpush1.msra.mxu0 %v844
      %2393 = vmatprep.subr.mxu0 0.0
      %2394 = vmatpush1.msra.mxu0 0.0
      %2395 = vmatprep.subr.mxu0 0.0
      %2396 = vmatpush1.msra.mxu0 0.0
      %2397 = vmatprep.subr.mxu0 0.0
      %2398 = vmatpush1.msra.mxu0 0.0
      %2399 = vmatprep.subr.mxu0 0.0
      %2400 = vmatpush1.msra.mxu0 0.0
      %2401 = vmatprep.subr.mxu0 0.0
      %2402 = vmatpush1.msra.mxu0 0.0
      %2403 = vmatprep.subr.mxu0 0.0
      %2404 = vmatpush1.msra.mxu0 0.0
      %2405 = vmatprep.subr.mxu0 0.0
      %2406 = vmatpush1.msra.mxu0 0.0
      %2407 = vmatprep.subr.mxu0 0.0
      %2408 = vmatpush1.msra.mxu0 0.0
      %2409 = vmatprep.subr.mxu0 0.0
      %2410 = vmatpush1.msra.mxu0 0.0
      %2411 = vmatprep.subr.mxu0 0.0
      %2412 = vmatpush1.msra.mxu0 0.0
      %2413 = vmatprep.subr.mxu0 0.0
      %2414 = vmatpush1.msra.mxu0 0.0
      %2415 = vmatprep.subr.mxu0 0.0
      %2416 = vmatpush1.msra.mxu0 0.0
      %2417 = vmatprep.subr.mxu0 0.0
      %2418 = vmatpush1.msra.mxu0 0.0
      %2419 = vmatprep.subr.mxu0 0.0
      %2420 = vmatpush1.msra.mxu0 0.0
      %2421 = vmatprep.subr.mxu0 0.0
      %2422 = vmatpush1.msra.mxu0 0.0
      %2423 = vmatprep.subr.mxu0 0.0
      %2424 = vmatpush1.msra.mxu0 0.0
      %2425 = vmatprep.subr.mxu0 0.0
      %2426 = vmatpush1.msra.mxu0 0.0
      %2427 = vmatprep.subr.mxu0 0.0
      %2428 = vmatpush1.msra.mxu0 0.0
      %2429 = vmatprep.subr.mxu0 0.0
      %2430 = vmatpush1.msra.mxu0 0.0
      %2431 = vmatprep.subr.mxu0 0.0
      %2432 = vmatpush1.msra.mxu0 0.0
      %2433 = vmatprep.subr.mxu0 0.0
      %2434 = vmatpush1.msra.mxu0 0.0
      %2435 = vmatprep.subr.mxu0 0.0
      %2436 = vmatpush1.msra.mxu0 0.0
      %2437 = vmatprep.subr.mxu0 0.0
      %2438 = vmatpush1.msra.mxu0 0.0
      %2439 = vmatprep.subr.mxu0 0.0
      %2440 = vmatpush1.msra.mxu0 0.0
      %2441 = vmatprep.subr.mxu0 0.0
      %2442 = vmatpush1.msra.mxu0 0.0
      %2443 = vmatprep.subr.mxu0 0.0
      %2444 = vmatpush1.msra.mxu0 0.0
      %2445 = vmatprep.subr.mxu0 0.0
      %2446 = vmatpush1.msra.mxu0 0.0
      %2447 = vmatprep.subr.mxu0 0.0
      %2448 = vmatpush1.msra.mxu0 0.0
      %2449 = vmatprep.subr.mxu0 0.0
      %2450 = vmatpush1.msra.mxu0 0.0
      %2451 = vmatprep.subr.mxu0 0.0
      %2452 = vmatpush1.msra.mxu0 0.0
      %2453 = vmatprep.subr.mxu0 0.0
      %2454 = vmatpush1.msra.mxu0 0.0
      %2455 = vmatprep.mubr.f32.mxu0 0.0
      %2456 = vmatmul.mubr.f32.gmra.mrb[0].mxu0 %v2386
      %v2457 = vpop.f32.mrb[0].mxu0
      %v2458 = vadd.f32 0.0, %v2457
      %v2459 = vpop.f32.mrb[0].mxu0
      %2460 = vmatprep.mubr.f32.mxu0 0.0
      %2461 = vmatmul.mubr.f32.gmra.mrb[0].mxu0 %v2389
      %v2462 = vpop.f32.mrb[0].mxu0
      %v2463 = vadd.f32 0.0, %v2462
      %v2464 = vpop.f32.mrb[0].mxu0
      %2465 = vdwg.mxu0
      %v2466 = vadd.f32 %v2381, %v2458
      %v2467 = vadd.f32 %v2382, %v2463
      %v2468 = vld [vmem:[%s2297 + $0x2] sm:$0xff]
      %v2469 = vld [vmem:[%s2297 + $0xa] sm:$0xff]
      %v2471 = vsel %vm219, %v2468, 0
      %v2474 = vsel %vm219, %v2469, 0
      %2476 = vmatprep.subr.mxu0 0.0
      %2477 = vmatpush1.msra.mxu0 %v932
      %2478 = vmatprep.subr.mxu0 0.0
      %2479 = vmatpush1.msra.mxu0 0.0
      %2480 = vmatprep.subr.mxu0 0.0
      %2481 = vmatpush1.msra.mxu0 0.0
      %2482 = vmatprep.subr.mxu0 0.0
      %2483 = vmatpush1.msra.mxu0 0.0
      %2484 = vmatprep.subr.mxu0 0.0
      %2485 = vmatpush1.msra.mxu0 0.0
      %2486 = vmatprep.subr.mxu0 0.0
      %2487 = vmatpush1.msra.mxu0 0.0
      %2488 = vmatprep.subr.mxu0 0.0
      %2489 = vmatpush1.msra.mxu0 0.0
      %2490 = vmatprep.subr.mxu0 0.0
      %2491 = vmatpush1.msra.mxu0 0.0
      %2492 = vmatprep.subr.mxu0 0.0
      %2493 = vmatpush1.msra.mxu0 0.0
      %2494 = vmatprep.subr.mxu0 0.0
      %2495 = vmatpush1.msra.mxu0 0.0
      %2496 = vmatprep.subr.mxu0 0.0
      %2497 = vmatpush1.msra.mxu0 0.0
      %2498 = vmatprep.subr.mxu0 0.0
      %2499 = vmatpush1.msra.mxu0 0.0
      %2500 = vmatprep.subr.mxu0 0.0
      %2501 = vmatpush1.msra.mxu0 0.0
      %2502 = vmatprep.subr.mxu0 0.0
      %2503 = vmatpush1.msra.mxu0 0.0
      %2504 = vmatprep.subr.mxu0 0.0
      %2505 = vmatpush1.msra.mxu0 0.0
      %2506 = vmatprep.subr.mxu0 0.0
      %2507 = vmatpush1.msra.mxu0 0.0
      %2508 = vmatprep.subr.mxu0 0.0
      %2509 = vmatpush1.msra.mxu0 0.0
      %2510 = vmatprep.subr.mxu0 0.0
      %2511 = vmatpush1.msra.mxu0 0.0
      %2512 = vmatprep.subr.mxu0 0.0
      %2513 = vmatpush1.msra.mxu0 0.0
      %2514 = vmatprep.subr.mxu0 0.0
      %2515 = vmatpush1.msra.mxu0 0.0
      %2516 = vmatprep.subr.mxu0 0.0
      %2517 = vmatpush1.msra.mxu0 0.0
      %2518 = vmatprep.subr.mxu0 0.0
      %2519 = vmatpush1.msra.mxu0 0.0
      %2520 = vmatprep.subr.mxu0 0.0
      %2521 = vmatpush1.msra.mxu0 0.0
      %2522 = vmatprep.subr.mxu0 0.0
      %2523 = vmatpush1.msra.mxu0 0.0
      %2524 = vmatprep.subr.mxu0 0.0
      %2525 = vmatpush1.msra.mxu0 0.0
      %2526 = vmatprep.subr.mxu0 0.0
      %2527 = vmatpush1.msra.mxu0 0.0
      %2528 = vmatprep.subr.mxu0 0.0
      %2529 = vmatpush1.msra.mxu0 0.0
      %2530 = vmatprep.subr.mxu0 0.0
      %2531 = vmatpush1.msra.mxu0 0.0
      %2532 = vmatprep.subr.mxu0 0.0
      %2533 = vmatpush1.msra.mxu0 0.0
      %2534 = vmatprep.subr.mxu0 0.0
      %2535 = vmatpush1.msra.mxu0 0.0
      %2536 = vmatprep.subr.mxu0 0.0
      %2537 = vmatpush1.msra.mxu0 0.0
      %2538 = vmatprep.subr.mxu0 0.0
      %2539 = vmatpush1.msra.mxu0 0.0
      %2540 = vmatprep.mubr.f32.mxu0 0.0
      %2541 = vmatmul.mubr.f32.gmra.mrb[0].mxu0 %v2471
      %v2542 = vpop.f32.mrb[0].mxu0
      %v2543 = vadd.f32 0.0, %v2542
      %v2544 = vpop.f32.mrb[0].mxu0
      %2545 = vmatprep.mubr.f32.mxu0 0.0
      %2546 = vmatmul.mubr.f32.gmra.mrb[0].mxu0 %v2474
      %v2547 = vpop.f32.mrb[0].mxu0
      %v2548 = vadd.f32 0.0, %v2547
      %v2549 = vpop.f32.mrb[0].mxu0
      %2550 = vdwg.mxu0
      %v2551 = vadd.f32 %v2466, %v2543
      %v2552 = vadd.f32 %v2467, %v2548
      %v2553 = vadd.f32 %v2551, %v1015
      %v2554 = vadd.f32 %v2552, %v1015
      %2555 = vst [vmem:[%s192 + $0x20] sm:$0xff] %v2553
      %2556 = vst [vmem:[%s192 + $0x28] sm:$0xff] %v2554
      %v2557 = vld [vmem:[%s1529] sm:$0xff]
      %v2558 = vld [vmem:[%s1529 + $0x8] sm:$0xff]
      %v2559 = vld [vmem:[%s1529 + $0x1] sm:$0xff]
      %v2560 = vld [vmem:[%s1529 + $0x9] sm:$0xff]
      %v2562 = vsel %vm219, %v2559, 0
      %v2565 = vsel %vm219, %v2560, 0
      %2567 = vmatprep.subr.mxu0 0.0
      %2568 = vmatpush1.msra.mxu0 %v228
      %2569 = vmatprep.subr.mxu0 0.0
      %2570 = vmatpush1.msra.mxu0 0.0
      %2571 = vmatprep.subr.mxu0 0.0
      %2572 = vmatpush1.msra.mxu0 0.0
      %2573 = vmatprep.subr.mxu0 0.0
      %2574 = vmatpush1.msra.mxu0 0.0
      %2575 = vmatprep.subr.mxu0 0.0
      %2576 = vmatpush1.msra.mxu0 0.0
      %2577 = vmatprep.subr.mxu0 0.0
      %2578 = vmatpush1.msra.mxu0 0.0
      %2579 = vmatprep.subr.mxu0 0.0
      %2580 = vmatpush1.msra.mxu0 0.0
      %2581 = vmatprep.subr.mxu0 0.0
      %2582 = vmatpush1.msra.mxu0 0.0
      %2583 = vmatprep.subr.mxu0 0.0
      %2584 = vmatpush1.msra.mxu0 0.0
      %2585 = vmatprep.subr.mxu0 0.0
      %2586 = vmatpush1.msra.mxu0 0.0
      %2587 = vmatprep.subr.mxu0 0.0
      %2588 = vmatpush1.msra.mxu0 0.0
      %2589 = vmatprep.subr.mxu0 0.0
      %2590 = vmatpush1.msra.mxu0 0.0
      %2591 = vmatprep.subr.mxu0 0.0
      %2592 = vmatpush1.msra.mxu0 0.0
      %2593 = vmatprep.subr.mxu0 0.0
      %2594 = vmatpush1.msra.mxu0 0.0
      %2595 = vmatprep.subr.mxu0 0.0
      %2596 = vmatpush1.msra.mxu0 0.0
      %2597 = vmatprep.subr.mxu0 0.0
      %2598 = vmatpush1.msra.mxu0 0.0
      %2599 = vmatprep.subr.mxu0 0.0
      %2600 = vmatpush1.msra.mxu0 0.0
      %2601 = vmatprep.subr.mxu0 0.0
      %2602 = vmatpush1.msra.mxu0 0.0
      %2603 = vmatprep.subr.mxu0 0.0
      %2604 = vmatpush1.msra.mxu0 0.0
      %2605 = vmatprep.subr.mxu0 0.0
      %2606 = vmatpush1.msra.mxu0 0.0
      %2607 = vmatprep.subr.mxu0 0.0
      %2608 = vmatpush1.msra.mxu0 0.0
      %2609 = vmatprep.subr.mxu0 0.0
      %2610 = vmatpush1.msra.mxu0 0.0
      %2611 = vmatprep.subr.mxu0 0.0
      %2612 = vmatpush1.msra.mxu0 0.0
      %2613 = vmatprep.subr.mxu0 0.0
      %2614 = vmatpush1.msra.mxu0 0.0
      %2615 = vmatprep.subr.mxu0 0.0
      %2616 = vmatpush1.msra.mxu0 0.0
      %2617 = vmatprep.subr.mxu0 0.0
      %2618 = vmatpush1.msra.mxu0 0.0
      %2619 = vmatprep.subr.mxu0 0.0
      %2620 = vmatpush1.msra.mxu0 0.0
      %2621 = vmatprep.subr.mxu0 0.0
      %2622 = vmatpush1.msra.mxu0 0.0
      %2623 = vmatprep.subr.mxu0 0.0
      %2624 = vmatpush1.msra.mxu0 0.0
      %2625 = vmatprep.subr.mxu0 0.0
      %2626 = vmatpush1.msra.mxu0 0.0
      %2627 = vmatprep.subr.mxu0 0.0
      %2628 = vmatpush1.msra.mxu0 0.0
      %2629 = vmatprep.subr.mxu0 0.0
      %2630 = vmatpush1.msra.mxu0 0.0
      %2631 = vmatprep.mubr.f32.mxu0 0.0
      %2632 = vmatmul.mubr.f32.gmra.mrb[0].mxu0 %v2562
      %v2633 = vpop.f32.mrb[0].mxu0
      %v2634 = vadd.f32 0.0, %v2633
      %v2635 = vpop.f32.mrb[0].mxu0
      %2636 = vmatprep.mubr.f32.mxu0 0.0
      %2637 = vmatmul.mubr.f32.gmra.mrb[0].mxu0 %v2565
      %v2638 = vpop.f32.mrb[0].mxu0
      %v2639 = vadd.f32 0.0, %v2638
      %v2640 = vpop.f32.mrb[0].mxu0
      %2641 = vdwg.mxu0
      %v2643 = vsel %vm219, %v2557, 0
      %v2646 = vsel %vm219, %v2558, 0
      %2648 = vmatprep.subr.mxu0 0.0
      %2649 = vmatpush1.msra.mxu0 %v312
      %2650 = vmatprep.subr.mxu0 0.0
      %2651 = vmatpush1.msra.mxu0 0.0
      %2652 = vmatprep.subr.mxu0 0.0
      %2653 = vmatpush1.msra.mxu0 0.0
      %2654 = vmatprep.subr.mxu0 0.0
      %2655 = vmatpush1.msra.mxu0 0.0
      %2656 = vmatprep.subr.mxu0 0.0
      %2657 = vmatpush1.msra.mxu0 0.0
      %2658 = vmatprep.subr.mxu0 0.0
      %2659 = vmatpush1.msra.mxu0 0.0
      %2660 = vmatprep.subr.mxu0 0.0
      %2661 = vmatpush1.msra.mxu0 0.0
      %2662 = vmatprep.subr.mxu0 0.0
      %2663 = vmatpush1.msra.mxu0 0.0
      %2664 = vmatprep.subr.mxu0 0.0
      %2665 = vmatpush1.msra.mxu0 0.0
      %2666 = vmatprep.subr.mxu0 0.0
      %2667 = vmatpush1.msra.mxu0 0.0
      %2668 = vmatprep.subr.mxu0 0.0
      %2669 = vmatpush1.msra.mxu0 0.0
      %2670 = vmatprep.subr.mxu0 0.0
      %2671 = vmatpush1.msra.mxu0 0.0
      %2672 = vmatprep.subr.mxu0 0.0
      %2673 = vmatpush1.msra.mxu0 0.0
      %2674 = vmatprep.subr.mxu0 0.0
      %2675 = vmatpush1.msra.mxu0 0.0
      %2676 = vmatprep.subr.mxu0 0.0
      %2677 = vmatpush1.msra.mxu0 0.0
      %2678 = vmatprep.subr.mxu0 0.0
      %2679 = vmatpush1.msra.mxu0 0.0
      %2680 = vmatprep.subr.mxu0 0.0
      %2681 = vmatpush1.msra.mxu0 0.0
      %2682 = vmatprep.subr.mxu0 0.0
      %2683 = vmatpush1.msra.mxu0 0.0
      %2684 = vmatprep.subr.mxu0 0.0
      %2685 = vmatpush1.msra.mxu0 0.0
      %2686 = vmatprep.subr.mxu0 0.0
      %2687 = vmatpush1.msra.mxu0 0.0
      %2688 = vmatprep.subr.mxu0 0.0
      %2689 = vmatpush1.msra.mxu0 0.0
      %2690 = vmatprep.subr.mxu0 0.0
      %2691 = vmatpush1.msra.mxu0 0.0
      %2692 = vmatprep.subr.mxu0 0.0
      %2693 = vmatpush1.msra.mxu0 0.0
      %2694 = vmatprep.subr.mxu0 0.0
      %2695 = vmatpush1.msra.mxu0 0.0
      %2696 = vmatprep.subr.mxu0 0.0
      %2697 = vmatpush1.msra.mxu0 0.0
      %2698 = vmatprep.subr.mxu0 0.0
      %2699 = vmatpush1.msra.mxu0 0.0
      %2700 = vmatprep.subr.mxu0 0.0
      %2701 = vmatpush1.msra.mxu0 0.0
      %2702 = vmatprep.subr.mxu0 0.0
      %2703 = vmatpush1.msra.mxu0 0.0
      %2704 = vmatprep.subr.mxu0 0.0
      %2705 = vmatpush1.msra.mxu0 0.0
      %2706 = vmatprep.subr.mxu0 0.0
      %2707 = vmatpush1.msra.mxu0 0.0
      %2708 = vmatprep.subr.mxu0 0.0
      %2709 = vmatpush1.msra.mxu0 0.0
      %2710 = vmatprep.subr.mxu0 0.0
      %2711 = vmatpush1.msra.mxu0 0.0
      %2712 = vmatprep.mubr.f32.mxu0 0.0
      %2713 = vmatmul.mubr.f32.gmra.mrb[0].mxu0 %v2643
      %v2714 = vpop.f32.mrb[0].mxu0
      %v2715 = vadd.f32 %v2634, %v2714
      %v2716 = vpop.f32.mrb[0].mxu0
      %2717 = vmatprep.mubr.f32.mxu0 0.0
      %2718 = vmatmul.mubr.f32.gmra.mrb[0].mxu0 %v2646
      %v2719 = vpop.f32.mrb[0].mxu0
      %v2720 = vadd.f32 %v2639, %v2719
      %v2721 = vpop.f32.mrb[0].mxu0
      %2722 = vdwg.mxu0
      %v2723 = vld [vmem:[%s1529 + $0x2] sm:$0xff]
      %v2724 = vld [vmem:[%s1529 + $0xa] sm:$0xff]
      %v2726 = vsel %vm219, %v2723, 0
      %v2729 = vsel %vm219, %v2724, 0
      %2731 = vmatprep.subr.mxu0 0.0
      %2732 = vmatpush1.msra.mxu0 %v398
      %2733 = vmatprep.subr.mxu0 0.0
      %2734 = vmatpush1.msra.mxu0 0.0
      %2735 = vmatprep.subr.mxu0 0.0
      %2736 = vmatpush1.msra.mxu0 0.0
      %2737 = vmatprep.subr.mxu0 0.0
      %2738 = vmatpush1.msra.mxu0 0.0
      %2739 = vmatprep.subr.mxu0 0.0
      %2740 = vmatpush1.msra.mxu0 0.0
      %2741 = vmatprep.subr.mxu0 0.0
      %2742 = vmatpush1.msra.mxu0 0.0
      %2743 = vmatprep.subr.mxu0 0.0
      %2744 = vmatpush1.msra.mxu0 0.0
      %2745 = vmatprep.subr.mxu0 0.0
      %2746 = vmatpush1.msra.mxu0 0.0
      %2747 = vmatprep.subr.mxu0 0.0
      %2748 = vmatpush1.msra.mxu0 0.0
      %2749 = vmatprep.subr.mxu0 0.0
      %2750 = vmatpush1.msra.mxu0 0.0
      %2751 = vmatprep.subr.mxu0 0.0
      %2752 = vmatpush1.msra.mxu0 0.0
      %2753 = vmatprep.subr.mxu0 0.0
      %2754 = vmatpush1.msra.mxu0 0.0
      %2755 = vmatprep.subr.mxu0 0.0
      %2756 = vmatpush1.msra.mxu0 0.0
      %2757 = vmatprep.subr.mxu0 0.0
      %2758 = vmatpush1.msra.mxu0 0.0
      %2759 = vmatprep.subr.mxu0 0.0
      %2760 = vmatpush1.msra.mxu0 0.0
      %2761 = vmatprep.subr.mxu0 0.0
      %2762 = vmatpush1.msra.mxu0 0.0
      %2763 = vmatprep.subr.mxu0 0.0
      %2764 = vmatpush1.msra.mxu0 0.0
      %2765 = vmatprep.subr.mxu0 0.0
      %2766 = vmatpush1.msra.mxu0 0.0
      %2767 = vmatprep.subr.mxu0 0.0
      %2768 = vmatpush1.msra.mxu0 0.0
      %2769 = vmatprep.subr.mxu0 0.0
      %2770 = vmatpush1.msra.mxu0 0.0
      %2771 = vmatprep.subr.mxu0 0.0
      %2772 = vmatpush1.msra.mxu0 0.0
      %2773 = vmatprep.subr.mxu0 0.0
      %2774 = vmatpush1.msra.mxu0 0.0
      %2775 = vmatprep.subr.mxu0 0.0
      %2776 = vmatpush1.msra.mxu0 0.0
      %2777 = vmatprep.subr.mxu0 0.0
      %2778 = vmatpush1.msra.mxu0 0.0
      %2779 = vmatprep.subr.mxu0 0.0
      %2780 = vmatpush1.msra.mxu0 0.0
      %2781 = vmatprep.subr.mxu0 0.0
      %2782 = vmatpush1.msra.mxu0 0.0
      %2783 = vmatprep.subr.mxu0 0.0
      %2784 = vmatpush1.msra.mxu0 0.0
      %2785 = vmatprep.subr.mxu0 0.0
      %2786 = vmatpush1.msra.mxu0 0.0
      %2787 = vmatprep.subr.mxu0 0.0
      %2788 = vmatpush1.msra.mxu0 0.0
      %2789 = vmatprep.subr.mxu0 0.0
      %2790 = vmatpush1.msra.mxu0 0.0
      %2791 = vmatprep.subr.mxu0 0.0
      %2792 = vmatpush1.msra.mxu0 0.0
      %2793 = vmatprep.subr.mxu0 0.0
      %2794 = vmatpush1.msra.mxu0 0.0
      %2795 = vmatprep.mubr.f32.mxu0 0.0
      %2796 = vmatmul.mubr.f32.gmra.mrb[0].mxu0 %v2726
      %v2797 = vpop.f32.mrb[0].mxu0
      %v2798 = vadd.f32 0.0, %v2797
      %v2799 = vpop.f32.mrb[0].mxu0
      %2800 = vmatprep.mubr.f32.mxu0 0.0
      %2801 = vmatmul.mubr.f32.gmra.mrb[0].mxu0 %v2729
      %v2802 = vpop.f32.mrb[0].mxu0
      %v2803 = vadd.f32 0.0, %v2802
      %v2804 = vpop.f32.mrb[0].mxu0
      %2805 = vdwg.mxu0
      %v2806 = vadd.f32 %v2715, %v2798
      %v2807 = vadd.f32 %v2720, %v2803
      %v2808 = vld [vmem:[%s2297] sm:$0xff]
      %v2809 = vld [vmem:[%s2297 + $0x8] sm:$0xff]
      %v2811 = vsel %vm219, %v2808, 0
      %v2814 = vsel %vm219, %v2809, 0
      %2816 = vmatprep.subr.mxu0 0.0
      %2817 = vmatpush1.msra.mxu0 %v489
      %2818 = vmatprep.subr.mxu0 0.0
      %2819 = vmatpush1.msra.mxu0 0.0
      %2820 = vmatprep.subr.mxu0 0.0
      %2821 = vmatpush1.msra.mxu0 0.0
      %2822 = vmatprep.subr.mxu0 0.0
      %2823 = vmatpush1.msra.mxu0 0.0
      %2824 = vmatprep.subr.mxu0 0.0
      %2825 = vmatpush1.msra.mxu0 0.0
      %2826 = vmatprep.subr.mxu0 0.0
      %2827 = vmatpush1.msra.mxu0 0.0
      %2828 = vmatprep.subr.mxu0 0.0
      %2829 = vmatpush1.msra.mxu0 0.0
      %2830 = vmatprep.subr.mxu0 0.0
      %2831 = vmatpush1.msra.mxu0 0.0
      %2832 = vmatprep.subr.mxu0 0.0
      %2833 = vmatpush1.msra.mxu0 0.0
      %2834 = vmatprep.subr.mxu0 0.0
      %2835 = vmatpush1.msra.mxu0 0.0
      %2836 = vmatprep.subr.mxu0 0.0
      %2837 = vmatpush1.msra.mxu0 0.0
      %2838 = vmatprep.subr.mxu0 0.0
      %2839 = vmatpush1.msra.mxu0 0.0
      %2840 = vmatprep.subr.mxu0 0.0
      %2841 = vmatpush1.msra.mxu0 0.0
      %2842 = vmatprep.subr.mxu0 0.0
      %2843 = vmatpush1.msra.mxu0 0.0
      %2844 = vmatprep.subr.mxu0 0.0
      %2845 = vmatpush1.msra.mxu0 0.0
      %2846 = vmatprep.subr.mxu0 0.0
      %2847 = vmatpush1.msra.mxu0 0.0
      %2848 = vmatprep.subr.mxu0 0.0
      %2849 = vmatpush1.msra.mxu0 0.0
      %2850 = vmatprep.subr.mxu0 0.0
      %2851 = vmatpush1.msra.mxu0 0.0
      %2852 = vmatprep.subr.mxu0 0.0
      %2853 = vmatpush1.msra.mxu0 0.0
      %2854 = vmatprep.subr.mxu0 0.0
      %2855 = vmatpush1.msra.mxu0 0.0
      %2856 = vmatprep.subr.mxu0 0.0
      %2857 = vmatpush1.msra.mxu0 0.0
      %2858 = vmatprep.subr.mxu0 0.0
      %2859 = vmatpush1.msra.mxu0 0.0
      %2860 = vmatprep.subr.mxu0 0.0
      %2861 = vmatpush1.msra.mxu0 0.0
      %2862 = vmatprep.subr.mxu0 0.0
      %2863 = vmatpush1.msra.mxu0 0.0
      %2864 = vmatprep.subr.mxu0 0.0
      %2865 = vmatpush1.msra.mxu0 0.0
      %2866 = vmatprep.subr.mxu0 0.0
      %2867 = vmatpush1.msra.mxu0 0.0
      %2868 = vmatprep.subr.mxu0 0.0
      %2869 = vmatpush1.msra.mxu0 0.0
      %2870 = vmatprep.subr.mxu0 0.0
      %2871 = vmatpush1.msra.mxu0 0.0
      %2872 = vmatprep.subr.mxu0 0.0
      %2873 = vmatpush1.msra.mxu0 0.0
      %2874 = vmatprep.subr.mxu0 0.0
      %2875 = vmatpush1.msra.mxu0 0.0
      %2876 = vmatprep.subr.mxu0 0.0
      %2877 = vmatpush1.msra.mxu0 0.0
      %2878 = vmatprep.subr.mxu0 0.0
      %2879 = vmatpush1.msra.mxu0 0.0
      %2880 = vmatprep.mubr.f32.mxu0 0.0
      %2881 = vmatmul.mubr.f32.gmra.mrb[0].mxu0 %v2811
      %v2882 = vpop.f32.mrb[0].mxu0
      %v2883 = vadd.f32 0.0, %v2882
      %v2884 = vpop.f32.mrb[0].mxu0
      %2885 = vmatprep.mubr.f32.mxu0 0.0
      %2886 = vmatmul.mubr.f32.gmra.mrb[0].mxu0 %v2814
      %v2887 = vpop.f32.mrb[0].mxu0
      %v2888 = vadd.f32 0.0, %v2887
      %v2889 = vpop.f32.mrb[0].mxu0
      %2890 = vdwg.mxu0
      %v2891 = vadd.f32 %v2806, %v2883
      %v2892 = vadd.f32 %v2807, %v2888
      %v2893 = vld [vmem:[%s2297 + $0x1] sm:$0xff]
      %v2894 = vld [vmem:[%s2297 + $0x9] sm:$0xff]
      %v2896 = vsel %vm219, %v2893, 0
      %v2899 = vsel %vm219, %v2894, 0
      %2901 = vmatprep.subr.mxu0 0.0
      %2902 = vmatpush1.msra.mxu0 %v577
      %2903 = vmatprep.subr.mxu0 0.0
      %2904 = vmatpush1.msra.mxu0 0.0
      %2905 = vmatprep.subr.mxu0 0.0
      %2906 = vmatpush1.msra.mxu0 0.0
      %2907 = vmatprep.subr.mxu0 0.0
      %2908 = vmatpush1.msra.mxu0 0.0
      %2909 = vmatprep.subr.mxu0 0.0
      %2910 = vmatpush1.msra.mxu0 0.0
      %2911 = vmatprep.subr.mxu0 0.0
      %2912 = vmatpush1.msra.mxu0 0.0
      %2913 = vmatprep.subr.mxu0 0.0
      %2914 = vmatpush1.msra.mxu0 0.0
      %2915 = vmatprep.subr.mxu0 0.0
      %2916 = vmatpush1.msra.mxu0 0.0
      %2917 = vmatprep.subr.mxu0 0.0
      %2918 = vmatpush1.msra.mxu0 0.0
      %2919 = vmatprep.subr.mxu0 0.0
      %2920 = vmatpush1.msra.mxu0 0.0
      %2921 = vmatprep.subr.mxu0 0.0
      %2922 = vmatpush1.msra.mxu0 0.0
      %2923 = vmatprep.subr.mxu0 0.0
      %2924 = vmatpush1.msra.mxu0 0.0
      %2925 = vmatprep.subr.mxu0 0.0
      %2926 = vmatpush1.msra.mxu0 0.0
      %2927 = vmatprep.subr.mxu0 0.0
      %2928 = vmatpush1.msra.mxu0 0.0
      %2929 = vmatprep.subr.mxu0 0.0
      %2930 = vmatpush1.msra.mxu0 0.0
      %2931 = vmatprep.subr.mxu0 0.0
      %2932 = vmatpush1.msra.mxu0 0.0
      %2933 = vmatprep.subr.mxu0 0.0
      %2934 = vmatpush1.msra.mxu0 0.0
      %2935 = vmatprep.subr.mxu0 0.0
      %2936 = vmatpush1.msra.mxu0 0.0
      %2937 = vmatprep.subr.mxu0 0.0
      %2938 = vmatpush1.msra.mxu0 0.0
      %2939 = vmatprep.subr.mxu0 0.0
      %2940 = vmatpush1.msra.mxu0 0.0
      %2941 = vmatprep.subr.mxu0 0.0
      %2942 = vmatpush1.msra.mxu0 0.0
      %2943 = vmatprep.subr.mxu0 0.0
      %2944 = vmatpush1.msra.mxu0 0.0
      %2945 = vmatprep.subr.mxu0 0.0
      %2946 = vmatpush1.msra.mxu0 0.0
      %2947 = vmatprep.subr.mxu0 0.0
      %2948 = vmatpush1.msra.mxu0 0.0
      %2949 = vmatprep.subr.mxu0 0.0
      %2950 = vmatpush1.msra.mxu0 0.0
      %2951 = vmatprep.subr.mxu0 0.0
      %2952 = vmatpush1.msra.mxu0 0.0
      %2953 = vmatprep.subr.mxu0 0.0
      %2954 = vmatpush1.msra.mxu0 0.0
      %2955 = vmatprep.subr.mxu0 0.0
      %2956 = vmatpush1.msra.mxu0 0.0
      %2957 = vmatprep.subr.mxu0 0.0
      %2958 = vmatpush1.msra.mxu0 0.0
      %2959 = vmatprep.subr.mxu0 0.0
      %2960 = vmatpush1.msra.mxu0 0.0
      %2961 = vmatprep.subr.mxu0 0.0
      %2962 = vmatpush1.msra.mxu0 0.0
      %2963 = vmatprep.subr.mxu0 0.0
      %2964 = vmatpush1.msra.mxu0 0.0
      %2965 = vmatprep.mubr.f32.mxu0 0.0
      %2966 = vmatmul.mubr.f32.gmra.mrb[0].mxu0 %v2896
      %v2967 = vpop.f32.mrb[0].mxu0
      %v2968 = vadd.f32 0.0, %v2967
      %v2969 = vpop.f32.mrb[0].mxu0
      %2970 = vmatprep.mubr.f32.mxu0 0.0
      %2971 = vmatmul.mubr.f32.gmra.mrb[0].mxu0 %v2899
      %v2972 = vpop.f32.mrb[0].mxu0
      %v2973 = vadd.f32 0.0, %v2972
      %v2974 = vpop.f32.mrb[0].mxu0
      %2975 = vdwg.mxu0
      %v2976 = vadd.f32 %v2891, %v2968
      %v2977 = vadd.f32 %v2892, %v2973
      %v2978 = vld [vmem:[%s2297 + $0x2] sm:$0xff]
      %v2979 = vld [vmem:[%s2297 + $0xa] sm:$0xff]
      %v2981 = vsel %vm219, %v2978, 0
      %v2984 = vsel %vm219, %v2979, 0
      %2986 = vmatprep.subr.mxu0 0.0
      %2987 = vmatpush1.msra.mxu0 %v665
      %2988 = vmatprep.subr.mxu0 0.0
      %2989 = vmatpush1.msra.mxu0 0.0
      %2990 = vmatprep.subr.mxu0 0.0
      %2991 = vmatpush1.msra.mxu0 0.0
      %2992 = vmatprep.subr.mxu0 0.0
      %2993 = vmatpush1.msra.mxu0 0.0
      %2994 = vmatprep.subr.mxu0 0.0
      %2995 = vmatpush1.msra.mxu0 0.0
      %2996 = vmatprep.subr.mxu0 0.0
      %2997 = vmatpush1.msra.mxu0 0.0
      %2998 = vmatprep.subr.mxu0 0.0
      %2999 = vmatpush1.msra.mxu0 0.0
      %3000 = vmatprep.subr.mxu0 0.0
      %3001 = vmatpush1.msra.mxu0 0.0
      %3002 = vmatprep.subr.mxu0 0.0
      %3003 = vmatpush1.msra.mxu0 0.0
      %3004 = vmatprep.subr.mxu0 0.0
      %3005 = vmatpush1.msra.mxu0 0.0
      %3006 = vmatprep.subr.mxu0 0.0
      %3007 = vmatpush1.msra.mxu0 0.0
      %3008 = vmatprep.subr.mxu0 0.0
      %3009 = vmatpush1.msra.mxu0 0.0
      %3010 = vmatprep.subr.mxu0 0.0
      %3011 = vmatpush1.msra.mxu0 0.0
      %3012 = vmatprep.subr.mxu0 0.0
      %3013 = vmatpush1.msra.mxu0 0.0
      %3014 = vmatprep.subr.mxu0 0.0
      %3015 = vmatpush1.msra.mxu0 0.0
      %3016 = vmatprep.subr.mxu0 0.0
      %3017 = vmatpush1.msra.mxu0 0.0
      %3018 = vmatprep.subr.mxu0 0.0
      %3019 = vmatpush1.msra.mxu0 0.0
      %3020 = vmatprep.subr.mxu0 0.0
      %3021 = vmatpush1.msra.mxu0 0.0
      %3022 = vmatprep.subr.mxu0 0.0
      %3023 = vmatpush1.msra.mxu0 0.0
      %3024 = vmatprep.subr.mxu0 0.0
      %3025 = vmatpush1.msra.mxu0 0.0
      %3026 = vmatprep.subr.mxu0 0.0
      %3027 = vmatpush1.msra.mxu0 0.0
      %3028 = vmatprep.subr.mxu0 0.0
      %3029 = vmatpush1.msra.mxu0 0.0
      %3030 = vmatprep.subr.mxu0 0.0
      %3031 = vmatpush1.msra.mxu0 0.0
      %3032 = vmatprep.subr.mxu0 0.0
      %3033 = vmatpush1.msra.mxu0 0.0
      %3034 = vmatprep.subr.mxu0 0.0
      %3035 = vmatpush1.msra.mxu0 0.0
      %3036 = vmatprep.subr.mxu0 0.0
      %3037 = vmatpush1.msra.mxu0 0.0
      %3038 = vmatprep.subr.mxu0 0.0
      %3039 = vmatpush1.msra.mxu0 0.0
      %3040 = vmatprep.subr.mxu0 0.0
      %3041 = vmatpush1.msra.mxu0 0.0
      %3042 = vmatprep.subr.mxu0 0.0
      %3043 = vmatpush1.msra.mxu0 0.0
      %3044 = vmatprep.subr.mxu0 0.0
      %3045 = vmatpush1.msra.mxu0 0.0
      %3046 = vmatprep.subr.mxu0 0.0
      %3047 = vmatpush1.msra.mxu0 0.0
      %3048 = vmatprep.subr.mxu0 0.0
      %3049 = vmatpush1.msra.mxu0 0.0
      %3050 = vmatprep.mubr.f32.mxu0 0.0
      %3051 = vmatmul.mubr.f32.gmra.mrb[0].mxu0 %v2981
      %v3052 = vpop.f32.mrb[0].mxu0
      %v3053 = vadd.f32 0.0, %v3052
      %v3054 = vpop.f32.mrb[0].mxu0
      %3055 = vmatprep.mubr.f32.mxu0 0.0
      %3056 = vmatmul.mubr.f32.gmra.mrb[0].mxu0 %v2984
      %v3057 = vpop.f32.mrb[0].mxu0
      %v3058 = vadd.f32 0.0, %v3057
      %v3059 = vpop.f32.mrb[0].mxu0
      %3060 = vdwg.mxu0
      %v3061 = vadd.f32 %v2976, %v3053
      %v3062 = vadd.f32 %v2977, %v3058
      %s3063 = sadd.s32 %s212, 5
      %s3064 = smul.u32 %s3063, 24
      %s3065 = scalar_lea.vmem %s183, %s3064
      %v3066 = vld [vmem:[%s3065] sm:$0xff]
      %v3067 = vld [vmem:[%s3065 + $0x8] sm:$0xff]
      %v3069 = vsel %vm219, %v3066, 0
      %v3072 = vsel %vm219, %v3067, 0
      %3074 = vmatprep.subr.mxu0 0.0
      %3075 = vmatpush1.msra.mxu0 %v756
      %3076 = vmatprep.subr.mxu0 0.0
      %3077 = vmatpush1.msra.mxu0 0.0
      %3078 = vmatprep.subr.mxu0 0.0
      %3079 = vmatpush1.msra.mxu0 0.0
      %3080 = vmatprep.subr.mxu0 0.0
      %3081 = vmatpush1.msra.mxu0 0.0
      %3082 = vmatprep.subr.mxu0 0.0
      %3083 = vmatpush1.msra.mxu0 0.0
      %3084 = vmatprep.subr.mxu0 0.0
      %3085 = vmatpush1.msra.mxu0 0.0
      %3086 = vmatprep.subr.mxu0 0.0
      %3087 = vmatpush1.msra.mxu0 0.0
      %3088 = vmatprep.subr.mxu0 0.0
      %3089 = vmatpush1.msra.mxu0 0.0
      %3090 = vmatprep.subr.mxu0 0.0
      %3091 = vmatpush1.msra.mxu0 0.0
      %3092 = vmatprep.subr.mxu0 0.0
      %3093 = vmatpush1.msra.mxu0 0.0
      %3094 = vmatprep.subr.mxu0 0.0
      %3095 = vmatpush1.msra.mxu0 0.0
      %3096 = vmatprep.subr.mxu0 0.0
      %3097 = vmatpush1.msra.mxu0 0.0
      %3098 = vmatprep.subr.mxu0 0.0
      %3099 = vmatpush1.msra.mxu0 0.0
      %3100 = vmatprep.subr.mxu0 0.0
      %3101 = vmatpush1.msra.mxu0 0.0
      %3102 = vmatprep.subr.mxu0 0.0
      %3103 = vmatpush1.msra.mxu0 0.0
      %3104 = vmatprep.subr.mxu0 0.0
      %3105 = vmatpush1.msra.mxu0 0.0
      %3106 = vmatprep.subr.mxu0 0.0
      %3107 = vmatpush1.msra.mxu0 0.0
      %3108 = vmatprep.subr.mxu0 0.0
      %3109 = vmatpush1.msra.mxu0 0.0
      %3110 = vmatprep.subr.mxu0 0.0
      %3111 = vmatpush1.msra.mxu0 0.0
      %3112 = vmatprep.subr.mxu0 0.0
      %3113 = vmatpush1.msra.mxu0 0.0
      %3114 = vmatprep.subr.mxu0 0.0
      %3115 = vmatpush1.msra.mxu0 0.0
      %3116 = vmatprep.subr.mxu0 0.0
      %3117 = vmatpush1.msra.mxu0 0.0
      %3118 = vmatprep.subr.mxu0 0.0
      %3119 = vmatpush1.msra.mxu0 0.0
      %3120 = vmatprep.subr.mxu0 0.0
      %3121 = vmatpush1.msra.mxu0 0.0
      %3122 = vmatprep.subr.mxu0 0.0
      %3123 = vmatpush1.msra.mxu0 0.0
      %3124 = vmatprep.subr.mxu0 0.0
      %3125 = vmatpush1.msra.mxu0 0.0
      %3126 = vmatprep.subr.mxu0 0.0
      %3127 = vmatpush1.msra.mxu0 0.0
      %3128 = vmatprep.subr.mxu0 0.0
      %3129 = vmatpush1.msra.mxu0 0.0
      %3130 = vmatprep.subr.mxu0 0.0
      %3131 = vmatpush1.msra.mxu0 0.0
      %3132 = vmatprep.subr.mxu0 0.0
      %3133 = vmatpush1.msra.mxu0 0.0
      %3134 = vmatprep.subr.mxu0 0.0
      %3135 = vmatpush1.msra.mxu0 0.0
      %3136 = vmatprep.subr.mxu0 0.0
      %3137 = vmatpush1.msra.mxu0 0.0
      %3138 = vmatprep.mubr.f32.mxu0 0.0
      %3139 = vmatmul.mubr.f32.gmra.mrb[0].mxu0 %v3069
      %v3140 = vpop.f32.mrb[0].mxu0
      %v3141 = vadd.f32 0.0, %v3140
      %v3142 = vpop.f32.mrb[0].mxu0
      %3143 = vmatprep.mubr.f32.mxu0 0.0
      %3144 = vmatmul.mubr.f32.gmra.mrb[0].mxu0 %v3072
      %v3145 = vpop.f32.mrb[0].mxu0
      %v3146 = vadd.f32 0.0, %v3145
      %v3147 = vpop.f32.mrb[0].mxu0
      %3148 = vdwg.mxu0
      %v3149 = vadd.f32 %v3061, %v3141
      %v3150 = vadd.f32 %v3062, %v3146
      %v3151 = vld [vmem:[%s3065 + $0x1] sm:$0xff]
      %v3152 = vld [vmem:[%s3065 + $0x9] sm:$0xff]
      %v3154 = vsel %vm219, %v3151, 0
      %v3157 = vsel %vm219, %v3152, 0
      %3159 = vmatprep.subr.mxu0 0.0
      %3160 = vmatpush1.msra.mxu0 %v844
      %3161 = vmatprep.subr.mxu0 0.0
      %3162 = vmatpush1.msra.mxu0 0.0
      %3163 = vmatprep.subr.mxu0 0.0
      %3164 = vmatpush1.msra.mxu0 0.0
      %3165 = vmatprep.subr.mxu0 0.0
      %3166 = vmatpush1.msra.mxu0 0.0
      %3167 = vmatprep.subr.mxu0 0.0
      %3168 = vmatpush1.msra.mxu0 0.0
      %3169 = vmatprep.subr.mxu0 0.0
      %3170 = vmatpush1.msra.mxu0 0.0
      %3171 = vmatprep.subr.mxu0 0.0
      %3172 = vmatpush1.msra.mxu0 0.0
      %3173 = vmatprep.subr.mxu0 0.0
      %3174 = vmatpush1.msra.mxu0 0.0
      %3175 = vmatprep.subr.mxu0 0.0
      %3176 = vmatpush1.msra.mxu0 0.0
      %3177 = vmatprep.subr.mxu0 0.0
      %3178 = vmatpush1.msra.mxu0 0.0
      %3179 = vmatprep.subr.mxu0 0.0
      %3180 = vmatpush1.msra.mxu0 0.0
      %3181 = vmatprep.subr.mxu0 0.0
      %3182 = vmatpush1.msra.mxu0 0.0
      %3183 = vmatprep.subr.mxu0 0.0
      %3184 = vmatpush1.msra.mxu0 0.0
      %3185 = vmatprep.subr.mxu0 0.0
      %3186 = vmatpush1.msra.mxu0 0.0
      %3187 = vmatprep.subr.mxu0 0.0
      %3188 = vmatpush1.msra.mxu0 0.0
      %3189 = vmatprep.subr.mxu0 0.0
      %3190 = vmatpush1.msra.mxu0 0.0
      %3191 = vmatprep.subr.mxu0 0.0
      %3192 = vmatpush1.msra.mxu0 0.0
      %3193 = vmatprep.subr.mxu0 0.0
      %3194 = vmatpush1.msra.mxu0 0.0
      %3195 = vmatprep.subr.mxu0 0.0
      %3196 = vmatpush1.msra.mxu0 0.0
      %3197 = vmatprep.subr.mxu0 0.0
      %3198 = vmatpush1.msra.mxu0 0.0
      %3199 = vmatprep.subr.mxu0 0.0
      %3200 = vmatpush1.msra.mxu0 0.0
      %3201 = vmatprep.subr.mxu0 0.0
      %3202 = vmatpush1.msra.mxu0 0.0
      %3203 = vmatprep.subr.mxu0 0.0
      %3204 = vmatpush1.msra.mxu0 0.0
      %3205 = vmatprep.subr.mxu0 0.0
      %3206 = vmatpush1.msra.mxu0 0.0
      %3207 = vmatprep.subr.mxu0 0.0
      %3208 = vmatpush1.msra.mxu0 0.0
      %3209 = vmatprep.subr.mxu0 0.0
      %3210 = vmatpush1.msra.mxu0 0.0
      %3211 = vmatprep.subr.mxu0 0.0
      %3212 = vmatpush1.msra.mxu0 0.0
      %3213 = vmatprep.subr.mxu0 0.0
      %3214 = vmatpush1.msra.mxu0 0.0
      %3215 = vmatprep.subr.mxu0 0.0
      %3216 = vmatpush1.msra.mxu0 0.0
      %3217 = vmatprep.subr.mxu0 0.0
      %3218 = vmatpush1.msra.mxu0 0.0
      %3219 = vmatprep.subr.mxu0 0.0
      %3220 = vmatpush1.msra.mxu0 0.0
      %3221 = vmatprep.subr.mxu0 0.0
      %3222 = vmatpush1.msra.mxu0 0.0
      %3223 = vmatprep.mubr.f32.mxu0 0.0
      %3224 = vmatmul.mubr.f32.gmra.mrb[0].mxu0 %v3154
      %v3225 = vpop.f32.mrb[0].mxu0
      %v3226 = vadd.f32 0.0, %v3225
      %v3227 = vpop.f32.mrb[0].mxu0
      %3228 = vmatprep.mubr.f32.mxu0 0.0
      %3229 = vmatmul.mubr.f32.gmra.mrb[0].mxu0 %v3157
      %v3230 = vpop.f32.mrb[0].mxu0
      %v3231 = vadd.f32 0.0, %v3230
      %v3232 = vpop.f32.mrb[0].mxu0
      %3233 = vdwg.mxu0
      %v3234 = vadd.f32 %v3149, %v3226
      %v3235 = vadd.f32 %v3150, %v3231
      %v3236 = vld [vmem:[%s3065 + $0x2] sm:$0xff]
      %v3237 = vld [vmem:[%s3065 + $0xa] sm:$0xff]
      %v3239 = vsel %vm219, %v3236, 0
      %v3242 = vsel %vm219, %v3237, 0
      %3244 = vmatprep.subr.mxu0 0.0
      %3245 = vmatpush1.msra.mxu0 %v932
      %3246 = vmatprep.subr.mxu0 0.0
      %3247 = vmatpush1.msra.mxu0 0.0
      %3248 = vmatprep.subr.mxu0 0.0
      %3249 = vmatpush1.msra.mxu0 0.0
      %3250 = vmatprep.subr.mxu0 0.0
      %3251 = vmatpush1.msra.mxu0 0.0
      %3252 = vmatprep.subr.mxu0 0.0
      %3253 = vmatpush1.msra.mxu0 0.0
      %3254 = vmatprep.subr.mxu0 0.0
      %3255 = vmatpush1.msra.mxu0 0.0
      %3256 = vmatprep.subr.mxu0 0.0
      %3257 = vmatpush1.msra.mxu0 0.0
      %3258 = vmatprep.subr.mxu0 0.0
      %3259 = vmatpush1.msra.mxu0 0.0
      %3260 = vmatprep.subr.mxu0 0.0
      %3261 = vmatpush1.msra.mxu0 0.0
      %3262 = vmatprep.subr.mxu0 0.0
      %3263 = vmatpush1.msra.mxu0 0.0
      %3264 = vmatprep.subr.mxu0 0.0
      %3265 = vmatpush1.msra.mxu0 0.0
      %3266 = vmatprep.subr.mxu0 0.0
      %3267 = vmatpush1.msra.mxu0 0.0
      %3268 = vmatprep.subr.mxu0 0.0
      %3269 = vmatpush1.msra.mxu0 0.0
      %3270 = vmatprep.subr.mxu0 0.0
      %3271 = vmatpush1.msra.mxu0 0.0
      %3272 = vmatprep.subr.mxu0 0.0
      %3273 = vmatpush1.msra.mxu0 0.0
      %3274 = vmatprep.subr.mxu0 0.0
      %3275 = vmatpush1.msra.mxu0 0.0
      %3276 = vmatprep.subr.mxu0 0.0
      %3277 = vmatpush1.msra.mxu0 0.0
      %3278 = vmatprep.subr.mxu0 0.0
      %3279 = vmatpush1.msra.mxu0 0.0
      %3280 = vmatprep.subr.mxu0 0.0
      %3281 = vmatpush1.msra.mxu0 0.0
      %3282 = vmatprep.subr.mxu0 0.0
      %3283 = vmatpush1.msra.mxu0 0.0
      %3284 = vmatprep.subr.mxu0 0.0
      %3285 = vmatpush1.msra.mxu0 0.0
      %3286 = vmatprep.subr.mxu0 0.0
      %3287 = vmatpush1.msra.mxu0 0.0
      %3288 = vmatprep.subr.mxu0 0.0
      %3289 = vmatpush1.msra.mxu0 0.0
      %3290 = vmatprep.subr.mxu0 0.0
      %3291 = vmatpush1.msra.mxu0 0.0
      %3292 = vmatprep.subr.mxu0 0.0
      %3293 = vmatpush1.msra.mxu0 0.0
      %3294 = vmatprep.subr.mxu0 0.0
      %3295 = vmatpush1.msra.mxu0 0.0
      %3296 = vmatprep.subr.mxu0 0.0
      %3297 = vmatpush1.msra.mxu0 0.0
      %3298 = vmatprep.subr.mxu0 0.0
      %3299 = vmatpush1.msra.mxu0 0.0
      %3300 = vmatprep.subr.mxu0 0.0
      %3301 = vmatpush1.msra.mxu0 0.0
      %3302 = vmatprep.subr.mxu0 0.0
      %3303 = vmatpush1.msra.mxu0 0.0
      %3304 = vmatprep.subr.mxu0 0.0
      %3305 = vmatpush1.msra.mxu0 0.0
      %3306 = vmatprep.subr.mxu0 0.0
      %3307 = vmatpush1.msra.mxu0 0.0
      %3308 = vmatprep.mubr.f32.mxu0 0.0
      %3309 = vmatmul.mubr.f32.gmra.mrb[0].mxu0 %v3239
      %v3310 = vpop.f32.mrb[0].mxu0
      %v3311 = vadd.f32 0.0, %v3310
      %v3312 = vpop.f32.mrb[0].mxu0
      %3313 = vmatprep.mubr.f32.mxu0 0.0
      %3314 = vmatmul.mubr.f32.gmra.mrb[0].mxu0 %v3242
      %v3315 = vpop.f32.mrb[0].mxu0
      %v3316 = vadd.f32 0.0, %v3315
      %v3317 = vpop.f32.mrb[0].mxu0
      %3318 = vdwg.mxu0
      %v3319 = vadd.f32 %v3234, %v3311
      %v3320 = vadd.f32 %v3235, %v3316
      %v3321 = vadd.f32 %v3319, %v1015
      %v3322 = vadd.f32 %v3320, %v1015
      %3323 = vst [vmem:[%s192 + $0x30] sm:$0xff] %v3321
      %3324 = vst [vmem:[%s192 + $0x38] sm:$0xff] %v3322
      %v3325 = vld [vmem:[%s2297] sm:$0xff]
      %v3326 = vld [vmem:[%s2297 + $0x8] sm:$0xff]
      %v3327 = vld [vmem:[%s2297 + $0x1] sm:$0xff]
      %v3328 = vld [vmem:[%s2297 + $0x9] sm:$0xff]
      %v3330 = vsel %vm219, %v3327, 0
      %v3333 = vsel %vm219, %v3328, 0
      %3335 = vmatprep.subr.mxu0 0.0
      %3336 = vmatpush1.msra.mxu0 %v228
      %3337 = vmatprep.subr.mxu0 0.0
      %3338 = vmatpush1.msra.mxu0 0.0
      %3339 = vmatprep.subr.mxu0 0.0
      %3340 = vmatpush1.msra.mxu0 0.0
      %3341 = vmatprep.subr.mxu0 0.0
      %3342 = vmatpush1.msra.mxu0 0.0
      %3343 = vmatprep.subr.mxu0 0.0
      %3344 = vmatpush1.msra.mxu0 0.0
      %3345 = vmatprep.subr.mxu0 0.0
      %3346 = vmatpush1.msra.mxu0 0.0
      %3347 = vmatprep.subr.mxu0 0.0
      %3348 = vmatpush1.msra.mxu0 0.0
      %3349 = vmatprep.subr.mxu0 0.0
      %3350 = vmatpush1.msra.mxu0 0.0
      %3351 = vmatprep.subr.mxu0 0.0
      %3352 = vmatpush1.msra.mxu0 0.0
      %3353 = vmatprep.subr.mxu0 0.0
      %3354 = vmatpush1.msra.mxu0 0.0
      %3355 = vmatprep.subr.mxu0 0.0
      %3356 = vmatpush1.msra.mxu0 0.0
      %3357 = vmatprep.subr.mxu0 0.0
      %3358 = vmatpush1.msra.mxu0 0.0
      %3359 = vmatprep.subr.mxu0 0.0
      %3360 = vmatpush1.msra.mxu0 0.0
      %3361 = vmatprep.subr.mxu0 0.0
      %3362 = vmatpush1.msra.mxu0 0.0
      %3363 = vmatprep.subr.mxu0 0.0
      %3364 = vmatpush1.msra.mxu0 0.0
      %3365 = vmatprep.subr.mxu0 0.0
      %3366 = vmatpush1.msra.mxu0 0.0
      %3367 = vmatprep.subr.mxu0 0.0
      %3368 = vmatpush1.msra.mxu0 0.0
      %3369 = vmatprep.subr.mxu0 0.0
      %3370 = vmatpush1.msra.mxu0 0.0
      %3371 = vmatprep.subr.mxu0 0.0
      %3372 = vmatpush1.msra.mxu0 0.0
      %3373 = vmatprep.subr.mxu0 0.0
      %3374 = vmatpush1.msra.mxu0 0.0
      %3375 = vmatprep.subr.mxu0 0.0
      %3376 = vmatpush1.msra.mxu0 0.0
      %3377 = vmatprep.subr.mxu0 0.0
      %3378 = vmatpush1.msra.mxu0 0.0
      %3379 = vmatprep.subr.mxu0 0.0
      %3380 = vmatpush1.msra.mxu0 0.0
      %3381 = vmatprep.subr.mxu0 0.0
      %3382 = vmatpush1.msra.mxu0 0.0
      %3383 = vmatprep.subr.mxu0 0.0
      %3384 = vmatpush1.msra.mxu0 0.0
      %3385 = vmatprep.subr.mxu0 0.0
      %3386 = vmatpush1.msra.mxu0 0.0
      %3387 = vmatprep.subr.mxu0 0.0
      %3388 = vmatpush1.msra.mxu0 0.0
      %3389 = vmatprep.subr.mxu0 0.0
      %3390 = vmatpush1.msra.mxu0 0.0
      %3391 = vmatprep.subr.mxu0 0.0
      %3392 = vmatpush1.msra.mxu0 0.0
      %3393 = vmatprep.subr.mxu0 0.0
      %3394 = vmatpush1.msra.mxu0 0.0
      %3395 = vmatprep.subr.mxu0 0.0
      %3396 = vmatpush1.msra.mxu0 0.0
      %3397 = vmatprep.subr.mxu0 0.0
      %3398 = vmatpush1.msra.mxu0 0.0
      %3399 = vmatprep.mubr.f32.mxu0 0.0
      %3400 = vmatmul.mubr.f32.gmra.mrb[0].mxu0 %v3330
      %v3401 = vpop.f32.mrb[0].mxu0
      %v3402 = vadd.f32 0.0, %v3401
      %v3403 = vpop.f32.mrb[0].mxu0
      %3404 = vmatprep.mubr.f32.mxu0 0.0
      %3405 = vmatmul.mubr.f32.gmra.mrb[0].mxu0 %v3333
      %v3406 = vpop.f32.mrb[0].mxu0
      %v3407 = vadd.f32 0.0, %v3406
      %v3408 = vpop.f32.mrb[0].mxu0
      %3409 = vdwg.mxu0
      %v3411 = vsel %vm219, %v3325, 0
      %v3414 = vsel %vm219, %v3326, 0
      %3416 = vmatprep.subr.mxu0 0.0
      %3417 = vmatpush1.msra.mxu0 %v312
      %3418 = vmatprep.subr.mxu0 0.0
      %3419 = vmatpush1.msra.mxu0 0.0
      %3420 = vmatprep.subr.mxu0 0.0
      %3421 = vmatpush1.msra.mxu0 0.0
      %3422 = vmatprep.subr.mxu0 0.0
      %3423 = vmatpush1.msra.mxu0 0.0
      %3424 = vmatprep.subr.mxu0 0.0
      %3425 = vmatpush1.msra.mxu0 0.0
      %3426 = vmatprep.subr.mxu0 0.0
      %3427 = vmatpush1.msra.mxu0 0.0
      %3428 = vmatprep.subr.mxu0 0.0
      %3429 = vmatpush1.msra.mxu0 0.0
      %3430 = vmatprep.subr.mxu0 0.0
      %3431 = vmatpush1.msra.mxu0 0.0
      %3432 = vmatprep.subr.mxu0 0.0
      %3433 = vmatpush1.msra.mxu0 0.0
      %3434 = vmatprep.subr.mxu0 0.0
      %3435 = vmatpush1.msra.mxu0 0.0
      %3436 = vmatprep.subr.mxu0 0.0
      %3437 = vmatpush1.msra.mxu0 0.0
      %3438 = vmatprep.subr.mxu0 0.0
      %3439 = vmatpush1.msra.mxu0 0.0
      %3440 = vmatprep.subr.mxu0 0.0
      %3441 = vmatpush1.msra.mxu0 0.0
      %3442 = vmatprep.subr.mxu0 0.0
      %3443 = vmatpush1.msra.mxu0 0.0
      %3444 = vmatprep.subr.mxu0 0.0
      %3445 = vmatpush1.msra.mxu0 0.0
      %3446 = vmatprep.subr.mxu0 0.0
      %3447 = vmatpush1.msra.mxu0 0.0
      %3448 = vmatprep.subr.mxu0 0.0
      %3449 = vmatpush1.msra.mxu0 0.0
      %3450 = vmatprep.subr.mxu0 0.0
      %3451 = vmatpush1.msra.mxu0 0.0
      %3452 = vmatprep.subr.mxu0 0.0
      %3453 = vmatpush1.msra.mxu0 0.0
      %3454 = vmatprep.subr.mxu0 0.0
      %3455 = vmatpush1.msra.mxu0 0.0
      %3456 = vmatprep.subr.mxu0 0.0
      %3457 = vmatpush1.msra.mxu0 0.0
      %3458 = vmatprep.subr.mxu0 0.0
      %3459 = vmatpush1.msra.mxu0 0.0
      %3460 = vmatprep.subr.mxu0 0.0
      %3461 = vmatpush1.msra.mxu0 0.0
      %3462 = vmatprep.subr.mxu0 0.0
      %3463 = vmatpush1.msra.mxu0 0.0
      %3464 = vmatprep.subr.mxu0 0.0
      %3465 = vmatpush1.msra.mxu0 0.0
      %3466 = vmatprep.subr.mxu0 0.0
      %3467 = vmatpush1.msra.mxu0 0.0
      %3468 = vmatprep.subr.mxu0 0.0
      %3469 = vmatpush1.msra.mxu0 0.0
      %3470 = vmatprep.subr.mxu0 0.0
      %3471 = vmatpush1.msra.mxu0 0.0
      %3472 = vmatprep.subr.mxu0 0.0
      %3473 = vmatpush1.msra.mxu0 0.0
      %3474 = vmatprep.subr.mxu0 0.0
      %3475 = vmatpush1.msra.mxu0 0.0
      %3476 = vmatprep.subr.mxu0 0.0
      %3477 = vmatpush1.msra.mxu0 0.0
      %3478 = vmatprep.subr.mxu0 0.0
      %3479 = vmatpush1.msra.mxu0 0.0
      %3480 = vmatprep.mubr.f32.mxu0 0.0
      %3481 = vmatmul.mubr.f32.gmra.mrb[0].mxu0 %v3411
      %v3482 = vpop.f32.mrb[0].mxu0
      %v3483 = vadd.f32 %v3402, %v3482
      %v3484 = vpop.f32.mrb[0].mxu0
      %3485 = vmatprep.mubr.f32.mxu0 0.0
      %3486 = vmatmul.mubr.f32.gmra.mrb[0].mxu0 %v3414
      %v3487 = vpop.f32.mrb[0].mxu0
      %v3488 = vadd.f32 %v3407, %v3487
      %v3489 = vpop.f32.mrb[0].mxu0
      %3490 = vdwg.mxu0
      %v3491 = vld [vmem:[%s2297 + $0x2] sm:$0xff]
      %v3492 = vld [vmem:[%s2297 + $0xa] sm:$0xff]
      %v3494 = vsel %vm219, %v3491, 0
      %v3497 = vsel %vm219, %v3492, 0
      %3499 = vmatprep.subr.mxu0 0.0
      %3500 = vmatpush1.msra.mxu0 %v398
      %3501 = vmatprep.subr.mxu0 0.0
      %3502 = vmatpush1.msra.mxu0 0.0
      %3503 = vmatprep.subr.mxu0 0.0
      %3504 = vmatpush1.msra.mxu0 0.0
      %3505 = vmatprep.subr.mxu0 0.0
      %3506 = vmatpush1.msra.mxu0 0.0
      %3507 = vmatprep.subr.mxu0 0.0
      %3508 = vmatpush1.msra.mxu0 0.0
      %3509 = vmatprep.subr.mxu0 0.0
      %3510 = vmatpush1.msra.mxu0 0.0
      %3511 = vmatprep.subr.mxu0 0.0
      %3512 = vmatpush1.msra.mxu0 0.0
      %3513 = vmatprep.subr.mxu0 0.0
      %3514 = vmatpush1.msra.mxu0 0.0
      %3515 = vmatprep.subr.mxu0 0.0
      %3516 = vmatpush1.msra.mxu0 0.0
      %3517 = vmatprep.subr.mxu0 0.0
      %3518 = vmatpush1.msra.mxu0 0.0
      %3519 = vmatprep.subr.mxu0 0.0
      %3520 = vmatpush1.msra.mxu0 0.0
      %3521 = vmatprep.subr.mxu0 0.0
      %3522 = vmatpush1.msra.mxu0 0.0
      %3523 = vmatprep.subr.mxu0 0.0
      %3524 = vmatpush1.msra.mxu0 0.0
      %3525 = vmatprep.subr.mxu0 0.0
      %3526 = vmatpush1.msra.mxu0 0.0
      %3527 = vmatprep.subr.mxu0 0.0
      %3528 = vmatpush1.msra.mxu0 0.0
      %3529 = vmatprep.subr.mxu0 0.0
      %3530 = vmatpush1.msra.mxu0 0.0
      %3531 = vmatprep.subr.mxu0 0.0
      %3532 = vmatpush1.msra.mxu0 0.0
      %3533 = vmatprep.subr.mxu0 0.0
      %3534 = vmatpush1.msra.mxu0 0.0
      %3535 = vmatprep.subr.mxu0 0.0
      %3536 = vmatpush1.msra.mxu0 0.0
      %3537 = vmatprep.subr.mxu0 0.0
      %3538 = vmatpush1.msra.mxu0 0.0
      %3539 = vmatprep.subr.mxu0 0.0
      %3540 = vmatpush1.msra.mxu0 0.0
      %3541 = vmatprep.subr.mxu0 0.0
      %3542 = vmatpush1.msra.mxu0 0.0
      %3543 = vmatprep.subr.mxu0 0.0
      %3544 = vmatpush1.msra.mxu0 0.0
      %3545 = vmatprep.subr.mxu0 0.0
      %3546 = vmatpush1.msra.mxu0 0.0
      %3547 = vmatprep.subr.mxu0 0.0
      %3548 = vmatpush1.msra.mxu0 0.0
      %3549 = vmatprep.subr.mxu0 0.0
      %3550 = vmatpush1.msra.mxu0 0.0
      %3551 = vmatprep.subr.mxu0 0.0
      %3552 = vmatpush1.msra.mxu0 0.0
      %3553 = vmatprep.subr.mxu0 0.0
      %3554 = vmatpush1.msra.mxu0 0.0
      %3555 = vmatprep.subr.mxu0 0.0
      %3556 = vmatpush1.msra.mxu0 0.0
      %3557 = vmatprep.subr.mxu0 0.0
      %3558 = vmatpush1.msra.mxu0 0.0
      %3559 = vmatprep.subr.mxu0 0.0
      %3560 = vmatpush1.msra.mxu0 0.0
      %3561 = vmatprep.subr.mxu0 0.0
      %3562 = vmatpush1.msra.mxu0 0.0
      %3563 = vmatprep.mubr.f32.mxu0 0.0
      %3564 = vmatmul.mubr.f32.gmra.mrb[0].mxu0 %v3494
      %v3565 = vpop.f32.mrb[0].mxu0
      %v3566 = vadd.f32 0.0, %v3565
      %v3567 = vpop.f32.mrb[0].mxu0
      %3568 = vmatprep.mubr.f32.mxu0 0.0
      %3569 = vmatmul.mubr.f32.gmra.mrb[0].mxu0 %v3497
      %v3570 = vpop.f32.mrb[0].mxu0
      %v3571 = vadd.f32 0.0, %v3570
      %v3572 = vpop.f32.mrb[0].mxu0
      %3573 = vdwg.mxu0
      %v3574 = vadd.f32 %v3483, %v3566
      %v3575 = vadd.f32 %v3488, %v3571
      %v3576 = vld [vmem:[%s3065] sm:$0xff]
      %v3577 = vld [vmem:[%s3065 + $0x8] sm:$0xff]
      %v3579 = vsel %vm219, %v3576, 0
      %v3582 = vsel %vm219, %v3577, 0
      %3584 = vmatprep.subr.mxu0 0.0
      %3585 = vmatpush1.msra.mxu0 %v489
      %3586 = vmatprep.subr.mxu0 0.0
      %3587 = vmatpush1.msra.mxu0 0.0
      %3588 = vmatprep.subr.mxu0 0.0
      %3589 = vmatpush1.msra.mxu0 0.0
      %3590 = vmatprep.subr.mxu0 0.0
      %3591 = vmatpush1.msra.mxu0 0.0
      %3592 = vmatprep.subr.mxu0 0.0
      %3593 = vmatpush1.msra.mxu0 0.0
      %3594 = vmatprep.subr.mxu0 0.0
      %3595 = vmatpush1.msra.mxu0 0.0
      %3596 = vmatprep.subr.mxu0 0.0
      %3597 = vmatpush1.msra.mxu0 0.0
      %3598 = vmatprep.subr.mxu0 0.0
      %3599 = vmatpush1.msra.mxu0 0.0
      %3600 = vmatprep.subr.mxu0 0.0
      %3601 = vmatpush1.msra.mxu0 0.0
      %3602 = vmatprep.subr.mxu0 0.0
      %3603 = vmatpush1.msra.mxu0 0.0
      %3604 = vmatprep.subr.mxu0 0.0
      %3605 = vmatpush1.msra.mxu0 0.0
      %3606 = vmatprep.subr.mxu0 0.0
      %3607 = vmatpush1.msra.mxu0 0.0
      %3608 = vmatprep.subr.mxu0 0.0
      %3609 = vmatpush1.msra.mxu0 0.0
      %3610 = vmatprep.subr.mxu0 0.0
      %3611 = vmatpush1.msra.mxu0 0.0
      %3612 = vmatprep.subr.mxu0 0.0
      %3613 = vmatpush1.msra.mxu0 0.0
      %3614 = vmatprep.subr.mxu0 0.0
      %3615 = vmatpush1.msra.mxu0 0.0
      %3616 = vmatprep.subr.mxu0 0.0
      %3617 = vmatpush1.msra.mxu0 0.0
      %3618 = vmatprep.subr.mxu0 0.0
      %3619 = vmatpush1.msra.mxu0 0.0
      %3620 = vmatprep.subr.mxu0 0.0
      %3621 = vmatpush1.msra.mxu0 0.0
      %3622 = vmatprep.subr.mxu0 0.0
      %3623 = vmatpush1.msra.mxu0 0.0
      %3624 = vmatprep.subr.mxu0 0.0
      %3625 = vmatpush1.msra.mxu0 0.0
      %3626 = vmatprep.subr.mxu0 0.0
      %3627 = vmatpush1.msra.mxu0 0.0
      %3628 = vmatprep.subr.mxu0 0.0
      %3629 = vmatpush1.msra.mxu0 0.0
      %3630 = vmatprep.subr.mxu0 0.0
      %3631 = vmatpush1.msra.mxu0 0.0
      %3632 = vmatprep.subr.mxu0 0.0
      %3633 = vmatpush1.msra.mxu0 0.0
      %3634 = vmatprep.subr.mxu0 0.0
      %3635 = vmatpush1.msra.mxu0 0.0
      %3636 = vmatprep.subr.mxu0 0.0
      %3637 = vmatpush1.msra.mxu0 0.0
      %3638 = vmatprep.subr.mxu0 0.0
      %3639 = vmatpush1.msra.mxu0 0.0
      %3640 = vmatprep.subr.mxu0 0.0
      %3641 = vmatpush1.msra.mxu0 0.0
      %3642 = vmatprep.subr.mxu0 0.0
      %3643 = vmatpush1.msra.mxu0 0.0
      %3644 = vmatprep.subr.mxu0 0.0
      %3645 = vmatpush1.msra.mxu0 0.0
      %3646 = vmatprep.subr.mxu0 0.0
      %3647 = vmatpush1.msra.mxu0 0.0
      %3648 = vmatprep.mubr.f32.mxu0 0.0
      %3649 = vmatmul.mubr.f32.gmra.mrb[0].mxu0 %v3579
      %v3650 = vpop.f32.mrb[0].mxu0
      %v3651 = vadd.f32 0.0, %v3650
      %v3652 = vpop.f32.mrb[0].mxu0
      %3653 = vmatprep.mubr.f32.mxu0 0.0
      %3654 = vmatmul.mubr.f32.gmra.mrb[0].mxu0 %v3582
      %v3655 = vpop.f32.mrb[0].mxu0
      %v3656 = vadd.f32 0.0, %v3655
      %v3657 = vpop.f32.mrb[0].mxu0
      %3658 = vdwg.mxu0
      %v3659 = vadd.f32 %v3574, %v3651
      %v3660 = vadd.f32 %v3575, %v3656
      %v3661 = vld [vmem:[%s3065 + $0x1] sm:$0xff]
      %v3662 = vld [vmem:[%s3065 + $0x9] sm:$0xff]
      %v3664 = vsel %vm219, %v3661, 0
      %v3667 = vsel %vm219, %v3662, 0
      %3669 = vmatprep.subr.mxu0 0.0
      %3670 = vmatpush1.msra.mxu0 %v577
      %3671 = vmatprep.subr.mxu0 0.0
      %3672 = vmatpush1.msra.mxu0 0.0
      %3673 = vmatprep.subr.mxu0 0.0
      %3674 = vmatpush1.msra.mxu0 0.0
      %3675 = vmatprep.subr.mxu0 0.0
      %3676 = vmatpush1.msra.mxu0 0.0
      %3677 = vmatprep.subr.mxu0 0.0
      %3678 = vmatpush1.msra.mxu0 0.0
      %3679 = vmatprep.subr.mxu0 0.0
      %3680 = vmatpush1.msra.mxu0 0.0
      %3681 = vmatprep.subr.mxu0 0.0
      %3682 = vmatpush1.msra.mxu0 0.0
      %3683 = vmatprep.subr.mxu0 0.0
      %3684 = vmatpush1.msra.mxu0 0.0
      %3685 = vmatprep.subr.mxu0 0.0
      %3686 = vmatpush1.msra.mxu0 0.0
      %3687 = vmatprep.subr.mxu0 0.0
      %3688 = vmatpush1.msra.mxu0 0.0
      %3689 = vmatprep.subr.mxu0 0.0
      %3690 = vmatpush1.msra.mxu0 0.0
      %3691 = vmatprep.subr.mxu0 0.0
      %3692 = vmatpush1.msra.mxu0 0.0
      %3693 = vmatprep.subr.mxu0 0.0
      %3694 = vmatpush1.msra.mxu0 0.0
      %3695 = vmatprep.subr.mxu0 0.0
      %3696 = vmatpush1.msra.mxu0 0.0
      %3697 = vmatprep.subr.mxu0 0.0
      %3698 = vmatpush1.msra.mxu0 0.0
      %3699 = vmatprep.subr.mxu0 0.0
      %3700 = vmatpush1.msra.mxu0 0.0
      %3701 = vmatprep.subr.mxu0 0.0
      %3702 = vmatpush1.msra.mxu0 0.0
      %3703 = vmatprep.subr.mxu0 0.0
      %3704 = vmatpush1.msra.mxu0 0.0
      %3705 = vmatprep.subr.mxu0 0.0
      %3706 = vmatpush1.msra.mxu0 0.0
      %3707 = vmatprep.subr.mxu0 0.0
      %3708 = vmatpush1.msra.mxu0 0.0
      %3709 = vmatprep.subr.mxu0 0.0
      %3710 = vmatpush1.msra.mxu0 0.0
      %3711 = vmatprep.subr.mxu0 0.0
      %3712 = vmatpush1.msra.mxu0 0.0
      %3713 = vmatprep.subr.mxu0 0.0
      %3714 = vmatpush1.msra.mxu0 0.0
      %3715 = vmatprep.subr.mxu0 0.0
      %3716 = vmatpush1.msra.mxu0 0.0
      %3717 = vmatprep.subr.mxu0 0.0
      %3718 = vmatpush1.msra.mxu0 0.0
      %3719 = vmatprep.subr.mxu0 0.0
      %3720 = vmatpush1.msra.mxu0 0.0
      %3721 = vmatprep.subr.mxu0 0.0
      %3722 = vmatpush1.msra.mxu0 0.0
      %3723 = vmatprep.subr.mxu0 0.0
      %3724 = vmatpush1.msra.mxu0 0.0
      %3725 = vmatprep.subr.mxu0 0.0
      %3726 = vmatpush1.msra.mxu0 0.0
      %3727 = vmatprep.subr.mxu0 0.0
      %3728 = vmatpush1.msra.mxu0 0.0
      %3729 = vmatprep.subr.mxu0 0.0
      %3730 = vmatpush1.msra.mxu0 0.0
      %3731 = vmatprep.subr.mxu0 0.0
      %3732 = vmatpush1.msra.mxu0 0.0
      %3733 = vmatprep.mubr.f32.mxu0 0.0
      %3734 = vmatmul.mubr.f32.gmra.mrb[0].mxu0 %v3664
      %v3735 = vpop.f32.mrb[0].mxu0
      %v3736 = vadd.f32 0.0, %v3735
      %v3737 = vpop.f32.mrb[0].mxu0
      %3738 = vmatprep.mubr.f32.mxu0 0.0
      %3739 = vmatmul.mubr.f32.gmra.mrb[0].mxu0 %v3667
      %v3740 = vpop.f32.mrb[0].mxu0
      %v3741 = vadd.f32 0.0, %v3740
      %v3742 = vpop.f32.mrb[0].mxu0
      %3743 = vdwg.mxu0
      %v3744 = vadd.f32 %v3659, %v3736
      %v3745 = vadd.f32 %v3660, %v3741
      %v3746 = vld [vmem:[%s3065 + $0x2] sm:$0xff]
      %v3747 = vld [vmem:[%s3065 + $0xa] sm:$0xff]
      %v3749 = vsel %vm219, %v3746, 0
      %v3752 = vsel %vm219, %v3747, 0
      %3754 = vmatprep.subr.mxu0 0.0
      %3755 = vmatpush1.msra.mxu0 %v665
      %3756 = vmatprep.subr.mxu0 0.0
      %3757 = vmatpush1.msra.mxu0 0.0
      %3758 = vmatprep.subr.mxu0 0.0
      %3759 = vmatpush1.msra.mxu0 0.0
      %3760 = vmatprep.subr.mxu0 0.0
      %3761 = vmatpush1.msra.mxu0 0.0
      %3762 = vmatprep.subr.mxu0 0.0
      %3763 = vmatpush1.msra.mxu0 0.0
      %3764 = vmatprep.subr.mxu0 0.0
      %3765 = vmatpush1.msra.mxu0 0.0
      %3766 = vmatprep.subr.mxu0 0.0
      %3767 = vmatpush1.msra.mxu0 0.0
      %3768 = vmatprep.subr.mxu0 0.0
      %3769 = vmatpush1.msra.mxu0 0.0
      %3770 = vmatprep.subr.mxu0 0.0
      %3771 = vmatpush1.msra.mxu0 0.0
      %3772 = vmatprep.subr.mxu0 0.0
      %3773 = vmatpush1.msra.mxu0 0.0
      %3774 = vmatprep.subr.mxu0 0.0
      %3775 = vmatpush1.msra.mxu0 0.0
      %3776 = vmatprep.subr.mxu0 0.0
      %3777 = vmatpush1.msra.mxu0 0.0
      %3778 = vmatprep.subr.mxu0 0.0
      %3779 = vmatpush1.msra.mxu0 0.0
      %3780 = vmatprep.subr.mxu0 0.0
      %3781 = vmatpush1.msra.mxu0 0.0
      %3782 = vmatprep.subr.mxu0 0.0
      %3783 = vmatpush1.msra.mxu0 0.0
      %3784 = vmatprep.subr.mxu0 0.0
      %3785 = vmatpush1.msra.mxu0 0.0
      %3786 = vmatprep.subr.mxu0 0.0
      %3787 = vmatpush1.msra.mxu0 0.0
      %3788 = vmatprep.subr.mxu0 0.0
      %3789 = vmatpush1.msra.mxu0 0.0
      %3790 = vmatprep.subr.mxu0 0.0
      %3791 = vmatpush1.msra.mxu0 0.0
      %3792 = vmatprep.subr.mxu0 0.0
      %3793 = vmatpush1.msra.mxu0 0.0
      %3794 = vmatprep.subr.mxu0 0.0
      %3795 = vmatpush1.msra.mxu0 0.0
      %3796 = vmatprep.subr.mxu0 0.0
      %3797 = vmatpush1.msra.mxu0 0.0
      %3798 = vmatprep.subr.mxu0 0.0
      %3799 = vmatpush1.msra.mxu0 0.0
      %3800 = vmatprep.subr.mxu0 0.0
      %3801 = vmatpush1.msra.mxu0 0.0
      %3802 = vmatprep.subr.mxu0 0.0
      %3803 = vmatpush1.msra.mxu0 0.0
      %3804 = vmatprep.subr.mxu0 0.0
      %3805 = vmatpush1.msra.mxu0 0.0
      %3806 = vmatprep.subr.mxu0 0.0
      %3807 = vmatpush1.msra.mxu0 0.0
      %3808 = vmatprep.subr.mxu0 0.0
      %3809 = vmatpush1.msra.mxu0 0.0
      %3810 = vmatprep.subr.mxu0 0.0
      %3811 = vmatpush1.msra.mxu0 0.0
      %3812 = vmatprep.subr.mxu0 0.0
      %3813 = vmatpush1.msra.mxu0 0.0
      %3814 = vmatprep.subr.mxu0 0.0
      %3815 = vmatpush1.msra.mxu0 0.0
      %3816 = vmatprep.subr.mxu0 0.0
      %3817 = vmatpush1.msra.mxu0 0.0
      %3818 = vmatprep.mubr.f32.mxu0 0.0
      %3819 = vmatmul.mubr.f32.gmra.mrb[0].mxu0 %v3749
      %v3820 = vpop.f32.mrb[0].mxu0
      %v3821 = vadd.f32 0.0, %v3820
      %v3822 = vpop.f32.mrb[0].mxu0
      %3823 = vmatprep.mubr.f32.mxu0 0.0
      %3824 = vmatmul.mubr.f32.gmra.mrb[0].mxu0 %v3752
      %v3825 = vpop.f32.mrb[0].mxu0
      %v3826 = vadd.f32 0.0, %v3825
      %v3827 = vpop.f32.mrb[0].mxu0
      %3828 = vdwg.mxu0
      %v3829 = vadd.f32 %v3744, %v3821
      %v3830 = vadd.f32 %v3745, %v3826
      %s3831 = sadd.s32 %s212, 6
      %s3832 = smul.u32 %s3831, 24
      %s3833 = scalar_lea.vmem %s183, %s3832
      %v3834 = vld [vmem:[%s3833] sm:$0xff]
      %v3835 = vld [vmem:[%s3833 + $0x8] sm:$0xff]
      %v3837 = vsel %vm219, %v3834, 0
      %v3840 = vsel %vm219, %v3835, 0
      %3842 = vmatprep.subr.mxu0 0.0
      %3843 = vmatpush1.msra.mxu0 %v756
      %3844 = vmatprep.subr.mxu0 0.0
      %3845 = vmatpush1.msra.mxu0 0.0
      %3846 = vmatprep.subr.mxu0 0.0
      %3847 = vmatpush1.msra.mxu0 0.0
      %3848 = vmatprep.subr.mxu0 0.0
      %3849 = vmatpush1.msra.mxu0 0.0
      %3850 = vmatprep.subr.mxu0 0.0
      %3851 = vmatpush1.msra.mxu0 0.0
      %3852 = vmatprep.subr.mxu0 0.0
      %3853 = vmatpush1.msra.mxu0 0.0
      %3854 = vmatprep.subr.mxu0 0.0
      %3855 = vmatpush1.msra.mxu0 0.0
      %3856 = vmatprep.subr.mxu0 0.0
      %3857 = vmatpush1.msra.mxu0 0.0
      %3858 = vmatprep.subr.mxu0 0.0
      %3859 = vmatpush1.msra.mxu0 0.0
      %3860 = vmatprep.subr.mxu0 0.0
      %3861 = vmatpush1.msra.mxu0 0.0
      %3862 = vmatprep.subr.mxu0 0.0
      %3863 = vmatpush1.msra.mxu0 0.0
      %3864 = vmatprep.subr.mxu0 0.0
      %3865 = vmatpush1.msra.mxu0 0.0
      %3866 = vmatprep.subr.mxu0 0.0
      %3867 = vmatpush1.msra.mxu0 0.0
      %3868 = vmatprep.subr.mxu0 0.0
      %3869 = vmatpush1.msra.mxu0 0.0
      %3870 = vmatprep.subr.mxu0 0.0
      %3871 = vmatpush1.msra.mxu0 0.0
      %3872 = vmatprep.subr.mxu0 0.0
      %3873 = vmatpush1.msra.mxu0 0.0
      %3874 = vmatprep.subr.mxu0 0.0
      %3875 = vmatpush1.msra.mxu0 0.0
      %3876 = vmatprep.subr.mxu0 0.0
      %3877 = vmatpush1.msra.mxu0 0.0
      %3878 = vmatprep.subr.mxu0 0.0
      %3879 = vmatpush1.msra.mxu0 0.0
      %3880 = vmatprep.subr.mxu0 0.0
      %3881 = vmatpush1.msra.mxu0 0.0
      %3882 = vmatprep.subr.mxu0 0.0
      %3883 = vmatpush1.msra.mxu0 0.0
      %3884 = vmatprep.subr.mxu0 0.0
      %3885 = vmatpush1.msra.mxu0 0.0
      %3886 = vmatprep.subr.mxu0 0.0
      %3887 = vmatpush1.msra.mxu0 0.0
      %3888 = vmatprep.subr.mxu0 0.0
      %3889 = vmatpush1.msra.mxu0 0.0
      %3890 = vmatprep.subr.mxu0 0.0
      %3891 = vmatpush1.msra.mxu0 0.0
      %3892 = vmatprep.subr.mxu0 0.0
      %3893 = vmatpush1.msra.mxu0 0.0
      %3894 = vmatprep.subr.mxu0 0.0
      %3895 = vmatpush1.msra.mxu0 0.0
      %3896 = vmatprep.subr.mxu0 0.0
      %3897 = vmatpush1.msra.mxu0 0.0
      %3898 = vmatprep.subr.mxu0 0.0
      %3899 = vmatpush1.msra.mxu0 0.0
      %3900 = vmatprep.subr.mxu0 0.0
      %3901 = vmatpush1.msra.mxu0 0.0
      %3902 = vmatprep.subr.mxu0 0.0
      %3903 = vmatpush1.msra.mxu0 0.0
      %3904 = vmatprep.subr.mxu0 0.0
      %3905 = vmatpush1.msra.mxu0 0.0
      %3906 = vmatprep.mubr.f32.mxu0 0.0
      %3907 = vmatmul.mubr.f32.gmra.mrb[0].mxu0 %v3837
      %v3908 = vpop.f32.mrb[0].mxu0
      %v3909 = vadd.f32 0.0, %v3908
      %v3910 = vpop.f32.mrb[0].mxu0
      %3911 = vmatprep.mubr.f32.mxu0 0.0
      %3912 = vmatmul.mubr.f32.gmra.mrb[0].mxu0 %v3840
      %v3913 = vpop.f32.mrb[0].mxu0
      %v3914 = vadd.f32 0.0, %v3913
      %v3915 = vpop.f32.mrb[0].mxu0
      %3916 = vdwg.mxu0
      %v3917 = vadd.f32 %v3829, %v3909
      %v3918 = vadd.f32 %v3830, %v3914
      %v3919 = vld [vmem:[%s3833 + $0x1] sm:$0xff]
      %v3920 = vld [vmem:[%s3833 + $0x9] sm:$0xff]
      %v3922 = vsel %vm219, %v3919, 0
      %v3925 = vsel %vm219, %v3920, 0
      %3927 = vmatprep.subr.mxu0 0.0
      %3928 = vmatpush1.msra.mxu0 %v844
      %3929 = vmatprep.subr.mxu0 0.0
      %3930 = vmatpush1.msra.mxu0 0.0
      %3931 = vmatprep.subr.mxu0 0.0
      %3932 = vmatpush1.msra.mxu0 0.0
      %3933 = vmatprep.subr.mxu0 0.0
      %3934 = vmatpush1.msra.mxu0 0.0
      %3935 = vmatprep.subr.mxu0 0.0
      %3936 = vmatpush1.msra.mxu0 0.0
      %3937 = vmatprep.subr.mxu0 0.0
      %3938 = vmatpush1.msra.mxu0 0.0
      %3939 = vmatprep.subr.mxu0 0.0
      %3940 = vmatpush1.msra.mxu0 0.0
      %3941 = vmatprep.subr.mxu0 0.0
      %3942 = vmatpush1.msra.mxu0 0.0
      %3943 = vmatprep.subr.mxu0 0.0
      %3944 = vmatpush1.msra.mxu0 0.0
      %3945 = vmatprep.subr.mxu0 0.0
      %3946 = vmatpush1.msra.mxu0 0.0
      %3947 = vmatprep.subr.mxu0 0.0
      %3948 = vmatpush1.msra.mxu0 0.0
      %3949 = vmatprep.subr.mxu0 0.0
      %3950 = vmatpush1.msra.mxu0 0.0
      %3951 = vmatprep.subr.mxu0 0.0
      %3952 = vmatpush1.msra.mxu0 0.0
      %3953 = vmatprep.subr.mxu0 0.0
      %3954 = vmatpush1.msra.mxu0 0.0
      %3955 = vmatprep.subr.mxu0 0.0
      %3956 = vmatpush1.msra.mxu0 0.0
      %3957 = vmatprep.subr.mxu0 0.0
      %3958 = vmatpush1.msra.mxu0 0.0
      %3959 = vmatprep.subr.mxu0 0.0
      %3960 = vmatpush1.msra.mxu0 0.0
      %3961 = vmatprep.subr.mxu0 0.0
      %3962 = vmatpush1.msra.mxu0 0.0
      %3963 = vmatprep.subr.mxu0 0.0
      %3964 = vmatpush1.msra.mxu0 0.0
      %3965 = vmatprep.subr.mxu0 0.0
      %3966 = vmatpush1.msra.mxu0 0.0
      %3967 = vmatprep.subr.mxu0 0.0
      %3968 = vmatpush1.msra.mxu0 0.0
      %3969 = vmatprep.subr.mxu0 0.0
      %3970 = vmatpush1.msra.mxu0 0.0
      %3971 = vmatprep.subr.mxu0 0.0
      %3972 = vmatpush1.msra.mxu0 0.0
      %3973 = vmatprep.subr.mxu0 0.0
      %3974 = vmatpush1.msra.mxu0 0.0
      %3975 = vmatprep.subr.mxu0 0.0
      %3976 = vmatpush1.msra.mxu0 0.0
      %3977 = vmatprep.subr.mxu0 0.0
      %3978 = vmatpush1.msra.mxu0 0.0
      %3979 = vmatprep.subr.mxu0 0.0
      %3980 = vmatpush1.msra.mxu0 0.0
      %3981 = vmatprep.subr.mxu0 0.0
      %3982 = vmatpush1.msra.mxu0 0.0
      %3983 = vmatprep.subr.mxu0 0.0
      %3984 = vmatpush1.msra.mxu0 0.0
      %3985 = vmatprep.subr.mxu0 0.0
      %3986 = vmatpush1.msra.mxu0 0.0
      %3987 = vmatprep.subr.mxu0 0.0
      %3988 = vmatpush1.msra.mxu0 0.0
      %3989 = vmatprep.subr.mxu0 0.0
      %3990 = vmatpush1.msra.mxu0 0.0
      %3991 = vmatprep.mubr.f32.mxu0 0.0
      %3992 = vmatmul.mubr.f32.gmra.mrb[0].mxu0 %v3922
      %v3993 = vpop.f32.mrb[0].mxu0
      %v3994 = vadd.f32 0.0, %v3993
      %v3995 = vpop.f32.mrb[0].mxu0
      %3996 = vmatprep.mubr.f32.mxu0 0.0
      %3997 = vmatmul.mubr.f32.gmra.mrb[0].mxu0 %v3925
      %v3998 = vpop.f32.mrb[0].mxu0
      %v3999 = vadd.f32 0.0, %v3998
      %v4000 = vpop.f32.mrb[0].mxu0
      %4001 = vdwg.mxu0
      %v4002 = vadd.f32 %v3917, %v3994
      %v4003 = vadd.f32 %v3918, %v3999
      %v4004 = vld [vmem:[%s3833 + $0x2] sm:$0xff]
      %v4005 = vld [vmem:[%s3833 + $0xa] sm:$0xff]
      %v4007 = vsel %vm219, %v4004, 0
      %v4010 = vsel %vm219, %v4005, 0
      %4012 = vmatprep.subr.mxu0 0.0
      %4013 = vmatpush1.msra.mxu0 %v932
      %4014 = vmatprep.subr.mxu0 0.0
      %4015 = vmatpush1.msra.mxu0 0.0
      %4016 = vmatprep.subr.mxu0 0.0
      %4017 = vmatpush1.msra.mxu0 0.0
      %4018 = vmatprep.subr.mxu0 0.0
      %4019 = vmatpush1.msra.mxu0 0.0
      %4020 = vmatprep.subr.mxu0 0.0
      %4021 = vmatpush1.msra.mxu0 0.0
      %4022 = vmatprep.subr.mxu0 0.0
      %4023 = vmatpush1.msra.mxu0 0.0
      %4024 = vmatprep.subr.mxu0 0.0
      %4025 = vmatpush1.msra.mxu0 0.0
      %4026 = vmatprep.subr.mxu0 0.0
      %4027 = vmatpush1.msra.mxu0 0.0
      %4028 = vmatprep.subr.mxu0 0.0
      %4029 = vmatpush1.msra.mxu0 0.0
      %4030 = vmatprep.subr.mxu0 0.0
      %4031 = vmatpush1.msra.mxu0 0.0
      %4032 = vmatprep.subr.mxu0 0.0
      %4033 = vmatpush1.msra.mxu0 0.0
      %4034 = vmatprep.subr.mxu0 0.0
      %4035 = vmatpush1.msra.mxu0 0.0
      %4036 = vmatprep.subr.mxu0 0.0
      %4037 = vmatpush1.msra.mxu0 0.0
      %4038 = vmatprep.subr.mxu0 0.0
      %4039 = vmatpush1.msra.mxu0 0.0
      %4040 = vmatprep.subr.mxu0 0.0
      %4041 = vmatpush1.msra.mxu0 0.0
      %4042 = vmatprep.subr.mxu0 0.0
      %4043 = vmatpush1.msra.mxu0 0.0
      %4044 = vmatprep.subr.mxu0 0.0
      %4045 = vmatpush1.msra.mxu0 0.0
      %4046 = vmatprep.subr.mxu0 0.0
      %4047 = vmatpush1.msra.mxu0 0.0
      %4048 = vmatprep.subr.mxu0 0.0
      %4049 = vmatpush1.msra.mxu0 0.0
      %4050 = vmatprep.subr.mxu0 0.0
      %4051 = vmatpush1.msra.mxu0 0.0
      %4052 = vmatprep.subr.mxu0 0.0
      %4053 = vmatpush1.msra.mxu0 0.0
      %4054 = vmatprep.subr.mxu0 0.0
      %4055 = vmatpush1.msra.mxu0 0.0
      %4056 = vmatprep.subr.mxu0 0.0
      %4057 = vmatpush1.msra.mxu0 0.0
      %4058 = vmatprep.subr.mxu0 0.0
      %4059 = vmatpush1.msra.mxu0 0.0
      %4060 = vmatprep.subr.mxu0 0.0
      %4061 = vmatpush1.msra.mxu0 0.0
      %4062 = vmatprep.subr.mxu0 0.0
      %4063 = vmatpush1.msra.mxu0 0.0
      %4064 = vmatprep.subr.mxu0 0.0
      %4065 = vmatpush1.msra.mxu0 0.0
      %4066 = vmatprep.subr.mxu0 0.0
      %4067 = vmatpush1.msra.mxu0 0.0
      %4068 = vmatprep.subr.mxu0 0.0
      %4069 = vmatpush1.msra.mxu0 0.0
      %4070 = vmatprep.subr.mxu0 0.0
      %4071 = vmatpush1.msra.mxu0 0.0
      %4072 = vmatprep.subr.mxu0 0.0
      %4073 = vmatpush1.msra.mxu0 0.0
      %4074 = vmatprep.subr.mxu0 0.0
      %4075 = vmatpush1.msra.mxu0 0.0
      %4076 = vmatprep.mubr.f32.mxu0 0.0
      %4077 = vmatmul.mubr.f32.gmra.mrb[0].mxu0 %v4007
      %v4078 = vpop.f32.mrb[0].mxu0
      %v4079 = vadd.f32 0.0, %v4078
      %v4080 = vpop.f32.mrb[0].mxu0
      %4081 = vmatprep.mubr.f32.mxu0 0.0
      %4082 = vmatmul.mubr.f32.gmra.mrb[0].mxu0 %v4010
      %v4083 = vpop.f32.mrb[0].mxu0
      %v4084 = vadd.f32 0.0, %v4083
      %v4085 = vpop.f32.mrb[0].mxu0
      %4086 = vdwg.mxu0
      %v4087 = vadd.f32 %v4002, %v4079
      %v4088 = vadd.f32 %v4003, %v4084
      %v4089 = vadd.f32 %v4087, %v1015
      %v4090 = vadd.f32 %v4088, %v1015
      %4091 = vst [vmem:[%s192 + $0x40] sm:$0xff] %v4089
      %4092 = vst [vmem:[%s192 + $0x48] sm:$0xff] %v4090
      %v4093 = vld [vmem:[%s3065] sm:$0xff]
      %v4094 = vld [vmem:[%s3065 + $0x8] sm:$0xff]
      %v4095 = vld [vmem:[%s3065 + $0x1] sm:$0xff]
      %v4096 = vld [vmem:[%s3065 + $0x9] sm:$0xff]
      %v4098 = vsel %vm219, %v4095, 0
      %v4101 = vsel %vm219, %v4096, 0
      %4103 = vmatprep.subr.mxu0 0.0
      %4104 = vmatpush1.msra.mxu0 %v228
      %4105 = vmatprep.subr.mxu0 0.0
      %4106 = vmatpush1.msra.mxu0 0.0
      %4107 = vmatprep.subr.mxu0 0.0
      %4108 = vmatpush1.msra.mxu0 0.0
      %4109 = vmatprep.subr.mxu0 0.0
      %4110 = vmatpush1.msra.mxu0 0.0
      %4111 = vmatprep.subr.mxu0 0.0
      %4112 = vmatpush1.msra.mxu0 0.0
      %4113 = vmatprep.subr.mxu0 0.0
      %4114 = vmatpush1.msra.mxu0 0.0
      %4115 = vmatprep.subr.mxu0 0.0
      %4116 = vmatpush1.msra.mxu0 0.0
      %4117 = vmatprep.subr.mxu0 0.0
      %4118 = vmatpush1.msra.mxu0 0.0
      %4119 = vmatprep.subr.mxu0 0.0
      %4120 = vmatpush1.msra.mxu0 0.0
      %4121 = vmatprep.subr.mxu0 0.0
      %4122 = vmatpush1.msra.mxu0 0.0
      %4123 = vmatprep.subr.mxu0 0.0
      %4124 = vmatpush1.msra.mxu0 0.0
      %4125 = vmatprep.subr.mxu0 0.0
      %4126 = vmatpush1.msra.mxu0 0.0
      %4127 = vmatprep.subr.mxu0 0.0
      %4128 = vmatpush1.msra.mxu0 0.0
      %4129 = vmatprep.subr.mxu0 0.0
      %4130 = vmatpush1.msra.mxu0 0.0
      %4131 = vmatprep.subr.mxu0 0.0
      %4132 = vmatpush1.msra.mxu0 0.0
      %4133 = vmatprep.subr.mxu0 0.0
      %4134 = vmatpush1.msra.mxu0 0.0
      %4135 = vmatprep.subr.mxu0 0.0
      %4136 = vmatpush1.msra.mxu0 0.0
      %4137 = vmatprep.subr.mxu0 0.0
      %4138 = vmatpush1.msra.mxu0 0.0
      %4139 = vmatprep.subr.mxu0 0.0
      %4140 = vmatpush1.msra.mxu0 0.0
      %4141 = vmatprep.subr.mxu0 0.0
      %4142 = vmatpush1.msra.mxu0 0.0
      %4143 = vmatprep.subr.mxu0 0.0
      %4144 = vmatpush1.msra.mxu0 0.0
      %4145 = vmatprep.subr.mxu0 0.0
      %4146 = vmatpush1.msra.mxu0 0.0
      %4147 = vmatprep.subr.mxu0 0.0
      %4148 = vmatpush1.msra.mxu0 0.0
      %4149 = vmatprep.subr.mxu0 0.0
      %4150 = vmatpush1.msra.mxu0 0.0
      %4151 = vmatprep.subr.mxu0 0.0
      %4152 = vmatpush1.msra.mxu0 0.0
      %4153 = vmatprep.subr.mxu0 0.0
      %4154 = vmatpush1.msra.mxu0 0.0
      %4155 = vmatprep.subr.mxu0 0.0
      %4156 = vmatpush1.msra.mxu0 0.0
      %4157 = vmatprep.subr.mxu0 0.0
      %4158 = vmatpush1.msra.mxu0 0.0
      %4159 = vmatprep.subr.mxu0 0.0
      %4160 = vmatpush1.msra.mxu0 0.0
      %4161 = vmatprep.subr.mxu0 0.0
      %4162 = vmatpush1.msra.mxu0 0.0
      %4163 = vmatprep.subr.mxu0 0.0
      %4164 = vmatpush1.msra.mxu0 0.0
      %4165 = vmatprep.subr.mxu0 0.0
      %4166 = vmatpush1.msra.mxu0 0.0
      %4167 = vmatprep.mubr.f32.mxu0 0.0
      %4168 = vmatmul.mubr.f32.gmra.mrb[0].mxu0 %v4098
      %v4169 = vpop.f32.mrb[0].mxu0
      %v4170 = vadd.f32 0.0, %v4169
      %v4171 = vpop.f32.mrb[0].mxu0
      %4172 = vmatprep.mubr.f32.mxu0 0.0
      %4173 = vmatmul.mubr.f32.gmra.mrb[0].mxu0 %v4101
      %v4174 = vpop.f32.mrb[0].mxu0
      %v4175 = vadd.f32 0.0, %v4174
      %v4176 = vpop.f32.mrb[0].mxu0
      %4177 = vdwg.mxu0
      %v4179 = vsel %vm219, %v4093, 0
      %v4182 = vsel %vm219, %v4094, 0
      %4184 = vmatprep.subr.mxu0 0.0
      %4185 = vmatpush1.msra.mxu0 %v312
      %4186 = vmatprep.subr.mxu0 0.0
      %4187 = vmatpush1.msra.mxu0 0.0
      %4188 = vmatprep.subr.mxu0 0.0
      %4189 = vmatpush1.msra.mxu0 0.0
      %4190 = vmatprep.subr.mxu0 0.0
      %4191 = vmatpush1.msra.mxu0 0.0
      %4192 = vmatprep.subr.mxu0 0.0
      %4193 = vmatpush1.msra.mxu0 0.0
      %4194 = vmatprep.subr.mxu0 0.0
      %4195 = vmatpush1.msra.mxu0 0.0
      %4196 = vmatprep.subr.mxu0 0.0
      %4197 = vmatpush1.msra.mxu0 0.0
      %4198 = vmatprep.subr.mxu0 0.0
      %4199 = vmatpush1.msra.mxu0 0.0
      %4200 = vmatprep.subr.mxu0 0.0
      %4201 = vmatpush1.msra.mxu0 0.0
      %4202 = vmatprep.subr.mxu0 0.0
      %4203 = vmatpush1.msra.mxu0 0.0
      %4204 = vmatprep.subr.mxu0 0.0
      %4205 = vmatpush1.msra.mxu0 0.0
      %4206 = vmatprep.subr.mxu0 0.0
      %4207 = vmatpush1.msra.mxu0 0.0
      %4208 = vmatprep.subr.mxu0 0.0
      %4209 = vmatpush1.msra.mxu0 0.0
      %4210 = vmatprep.subr.mxu0 0.0
      %4211 = vmatpush1.msra.mxu0 0.0
      %4212 = vmatprep.subr.mxu0 0.0
      %4213 = vmatpush1.msra.mxu0 0.0
      %4214 = vmatprep.subr.mxu0 0.0
      %4215 = vmatpush1.msra.mxu0 0.0
      %4216 = vmatprep.subr.mxu0 0.0
      %4217 = vmatpush1.msra.mxu0 0.0
      %4218 = vmatprep.subr.mxu0 0.0
      %4219 = vmatpush1.msra.mxu0 0.0
      %4220 = vmatprep.subr.mxu0 0.0
      %4221 = vmatpush1.msra.mxu0 0.0
      %4222 = vmatprep.subr.mxu0 0.0
      %4223 = vmatpush1.msra.mxu0 0.0
      %4224 = vmatprep.subr.mxu0 0.0
      %4225 = vmatpush1.msra.mxu0 0.0
      %4226 = vmatprep.subr.mxu0 0.0
      %4227 = vmatpush1.msra.mxu0 0.0
      %4228 = vmatprep.subr.mxu0 0.0
      %4229 = vmatpush1.msra.mxu0 0.0
      %4230 = vmatprep.subr.mxu0 0.0
      %4231 = vmatpush1.msra.mxu0 0.0
      %4232 = vmatprep.subr.mxu0 0.0
      %4233 = vmatpush1.msra.mxu0 0.0
      %4234 = vmatprep.subr.mxu0 0.0
      %4235 = vmatpush1.msra.mxu0 0.0
      %4236 = vmatprep.subr.mxu0 0.0
      %4237 = vmatpush1.msra.mxu0 0.0
      %4238 = vmatprep.subr.mxu0 0.0
      %4239 = vmatpush1.msra.mxu0 0.0
      %4240 = vmatprep.subr.mxu0 0.0
      %4241 = vmatpush1.msra.mxu0 0.0
      %4242 = vmatprep.subr.mxu0 0.0
      %4243 = vmatpush1.msra.mxu0 0.0
      %4244 = vmatprep.subr.mxu0 0.0
      %4245 = vmatpush1.msra.mxu0 0.0
      %4246 = vmatprep.subr.mxu0 0.0
      %4247 = vmatpush1.msra.mxu0 0.0
      %4248 = vmatprep.mubr.f32.mxu0 0.0
      %4249 = vmatmul.mubr.f32.gmra.mrb[0].mxu0 %v4179
      %v4250 = vpop.f32.mrb[0].mxu0
      %v4251 = vadd.f32 %v4170, %v4250
      %v4252 = vpop.f32.mrb[0].mxu0
      %4253 = vmatprep.mubr.f32.mxu0 0.0
      %4254 = vmatmul.mubr.f32.gmra.mrb[0].mxu0 %v4182
      %v4255 = vpop.f32.mrb[0].mxu0
      %v4256 = vadd.f32 %v4175, %v4255
      %v4257 = vpop.f32.mrb[0].mxu0
      %4258 = vdwg.mxu0
      %v4259 = vld [vmem:[%s3065 + $0x2] sm:$0xff]
      %v4260 = vld [vmem:[%s3065 + $0xa] sm:$0xff]
      %v4262 = vsel %vm219, %v4259, 0
      %v4265 = vsel %vm219, %v4260, 0
      %4267 = vmatprep.subr.mxu0 0.0
      %4268 = vmatpush1.msra.mxu0 %v398
      %4269 = vmatprep.subr.mxu0 0.0
      %4270 = vmatpush1.msra.mxu0 0.0
      %4271 = vmatprep.subr.mxu0 0.0
      %4272 = vmatpush1.msra.mxu0 0.0
      %4273 = vmatprep.subr.mxu0 0.0
      %4274 = vmatpush1.msra.mxu0 0.0
      %4275 = vmatprep.subr.mxu0 0.0
      %4276 = vmatpush1.msra.mxu0 0.0
      %4277 = vmatprep.subr.mxu0 0.0
      %4278 = vmatpush1.msra.mxu0 0.0
      %4279 = vmatprep.subr.mxu0 0.0
      %4280 = vmatpush1.msra.mxu0 0.0
      %4281 = vmatprep.subr.mxu0 0.0
      %4282 = vmatpush1.msra.mxu0 0.0
      %4283 = vmatprep.subr.mxu0 0.0
      %4284 = vmatpush1.msra.mxu0 0.0
      %4285 = vmatprep.subr.mxu0 0.0
      %4286 = vmatpush1.msra.mxu0 0.0
      %4287 = vmatprep.subr.mxu0 0.0
      %4288 = vmatpush1.msra.mxu0 0.0
      %4289 = vmatprep.subr.mxu0 0.0
      %4290 = vmatpush1.msra.mxu0 0.0
      %4291 = vmatprep.subr.mxu0 0.0
      %4292 = vmatpush1.msra.mxu0 0.0
      %4293 = vmatprep.subr.mxu0 0.0
      %4294 = vmatpush1.msra.mxu0 0.0
      %4295 = vmatprep.subr.mxu0 0.0
      %4296 = vmatpush1.msra.mxu0 0.0
      %4297 = vmatprep.subr.mxu0 0.0
      %4298 = vmatpush1.msra.mxu0 0.0
      %4299 = vmatprep.subr.mxu0 0.0
      %4300 = vmatpush1.msra.mxu0 0.0
      %4301 = vmatprep.subr.mxu0 0.0
      %4302 = vmatpush1.msra.mxu0 0.0
      %4303 = vmatprep.subr.mxu0 0.0
      %4304 = vmatpush1.msra.mxu0 0.0
      %4305 = vmatprep.subr.mxu0 0.0
      %4306 = vmatpush1.msra.mxu0 0.0
      %4307 = vmatprep.subr.mxu0 0.0
      %4308 = vmatpush1.msra.mxu0 0.0
      %4309 = vmatprep.subr.mxu0 0.0
      %4310 = vmatpush1.msra.mxu0 0.0
      %4311 = vmatprep.subr.mxu0 0.0
      %4312 = vmatpush1.msra.mxu0 0.0
      %4313 = vmatprep.subr.mxu0 0.0
      %4314 = vmatpush1.msra.mxu0 0.0
      %4315 = vmatprep.subr.mxu0 0.0
      %4316 = vmatpush1.msra.mxu0 0.0
      %4317 = vmatprep.subr.mxu0 0.0
      %4318 = vmatpush1.msra.mxu0 0.0
      %4319 = vmatprep.subr.mxu0 0.0
      %4320 = vmatpush1.msra.mxu0 0.0
      %4321 = vmatprep.subr.mxu0 0.0
      %4322 = vmatpush1.msra.mxu0 0.0
      %4323 = vmatprep.subr.mxu0 0.0
      %4324 = vmatpush1.msra.mxu0 0.0
      %4325 = vmatprep.subr.mxu0 0.0
      %4326 = vmatpush1.msra.mxu0 0.0
      %4327 = vmatprep.subr.mxu0 0.0
      %4328 = vmatpush1.msra.mxu0 0.0
      %4329 = vmatprep.subr.mxu0 0.0
      %4330 = vmatpush1.msra.mxu0 0.0
      %4331 = vmatprep.mubr.f32.mxu0 0.0
      %4332 = vmatmul.mubr.f32.gmra.mrb[0].mxu0 %v4262
      %v4333 = vpop.f32.mrb[0].mxu0
      %v4334 = vadd.f32 0.0, %v4333
      %v4335 = vpop.f32.mrb[0].mxu0
      %4336 = vmatprep.mubr.f32.mxu0 0.0
      %4337 = vmatmul.mubr.f32.gmra.mrb[0].mxu0 %v4265
      %v4338 = vpop.f32.mrb[0].mxu0
      %v4339 = vadd.f32 0.0, %v4338
      %v4340 = vpop.f32.mrb[0].mxu0
      %4341 = vdwg.mxu0
      %v4342 = vadd.f32 %v4251, %v4334
      %v4343 = vadd.f32 %v4256, %v4339
      %v4344 = vld [vmem:[%s3833] sm:$0xff]
      %v4345 = vld [vmem:[%s3833 + $0x8] sm:$0xff]
      %v4347 = vsel %vm219, %v4344, 0
      %v4350 = vsel %vm219, %v4345, 0
      %4352 = vmatprep.subr.mxu0 0.0
      %4353 = vmatpush1.msra.mxu0 %v489
      %4354 = vmatprep.subr.mxu0 0.0
      %4355 = vmatpush1.msra.mxu0 0.0
      %4356 = vmatprep.subr.mxu0 0.0
      %4357 = vmatpush1.msra.mxu0 0.0
      %4358 = vmatprep.subr.mxu0 0.0
      %4359 = vmatpush1.msra.mxu0 0.0
      %4360 = vmatprep.subr.mxu0 0.0
      %4361 = vmatpush1.msra.mxu0 0.0
      %4362 = vmatprep.subr.mxu0 0.0
      %4363 = vmatpush1.msra.mxu0 0.0
      %4364 = vmatprep.subr.mxu0 0.0
      %4365 = vmatpush1.msra.mxu0 0.0
      %4366 = vmatprep.subr.mxu0 0.0
      %4367 = vmatpush1.msra.mxu0 0.0
      %4368 = vmatprep.subr.mxu0 0.0
      %4369 = vmatpush1.msra.mxu0 0.0
      %4370 = vmatprep.subr.mxu0 0.0
      %4371 = vmatpush1.msra.mxu0 0.0
      %4372 = vmatprep.subr.mxu0 0.0
      %4373 = vmatpush1.msra.mxu0 0.0
      %4374 = vmatprep.subr.mxu0 0.0
      %4375 = vmatpush1.msra.mxu0 0.0
      %4376 = vmatprep.subr.mxu0 0.0
      %4377 = vmatpush1.msra.mxu0 0.0
      %4378 = vmatprep.subr.mxu0 0.0
      %4379 = vmatpush1.msra.mxu0 0.0
      %4380 = vmatprep.subr.mxu0 0.0
      %4381 = vmatpush1.msra.mxu0 0.0
      %4382 = vmatprep.subr.mxu0 0.0
      %4383 = vmatpush1.msra.mxu0 0.0
      %4384 = vmatprep.subr.mxu0 0.0
      %4385 = vmatpush1.msra.mxu0 0.0
      %4386 = vmatprep.subr.mxu0 0.0
      %4387 = vmatpush1.msra.mxu0 0.0
      %4388 = vmatprep.subr.mxu0 0.0
      %4389 = vmatpush1.msra.mxu0 0.0
      %4390 = vmatprep.subr.mxu0 0.0
      %4391 = vmatpush1.msra.mxu0 0.0
      %4392 = vmatprep.subr.mxu0 0.0
      %4393 = vmatpush1.msra.mxu0 0.0
      %4394 = vmatprep.subr.mxu0 0.0
      %4395 = vmatpush1.msra.mxu0 0.0
      %4396 = vmatprep.subr.mxu0 0.0
      %4397 = vmatpush1.msra.mxu0 0.0
      %4398 = vmatprep.subr.mxu0 0.0
      %4399 = vmatpush1.msra.mxu0 0.0
      %4400 = vmatprep.subr.mxu0 0.0
      %4401 = vmatpush1.msra.mxu0 0.0
      %4402 = vmatprep.subr.mxu0 0.0
      %4403 = vmatpush1.msra.mxu0 0.0
      %4404 = vmatprep.subr.mxu0 0.0
      %4405 = vmatpush1.msra.mxu0 0.0
      %4406 = vmatprep.subr.mxu0 0.0
      %4407 = vmatpush1.msra.mxu0 0.0
      %4408 = vmatprep.subr.mxu0 0.0
      %4409 = vmatpush1.msra.mxu0 0.0
      %4410 = vmatprep.subr.mxu0 0.0
      %4411 = vmatpush1.msra.mxu0 0.0
      %4412 = vmatprep.subr.mxu0 0.0
      %4413 = vmatpush1.msra.mxu0 0.0
      %4414 = vmatprep.subr.mxu0 0.0
      %4415 = vmatpush1.msra.mxu0 0.0
      %4416 = vmatprep.mubr.f32.mxu0 0.0
      %4417 = vmatmul.mubr.f32.gmra.mrb[0].mxu0 %v4347
      %v4418 = vpop.f32.mrb[0].mxu0
      %v4419 = vadd.f32 0.0, %v4418
      %v4420 = vpop.f32.mrb[0].mxu0
      %4421 = vmatprep.mubr.f32.mxu0 0.0
      %4422 = vmatmul.mubr.f32.gmra.mrb[0].mxu0 %v4350
      %v4423 = vpop.f32.mrb[0].mxu0
      %v4424 = vadd.f32 0.0, %v4423
      %v4425 = vpop.f32.mrb[0].mxu0
      %4426 = vdwg.mxu0
      %v4427 = vadd.f32 %v4342, %v4419
      %v4428 = vadd.f32 %v4343, %v4424
      %v4429 = vld [vmem:[%s3833 + $0x1] sm:$0xff]
      %v4430 = vld [vmem:[%s3833 + $0x9] sm:$0xff]
      %v4432 = vsel %vm219, %v4429, 0
      %v4435 = vsel %vm219, %v4430, 0
      %4437 = vmatprep.subr.mxu0 0.0
      %4438 = vmatpush1.msra.mxu0 %v577
      %4439 = vmatprep.subr.mxu0 0.0
      %4440 = vmatpush1.msra.mxu0 0.0
      %4441 = vmatprep.subr.mxu0 0.0
      %4442 = vmatpush1.msra.mxu0 0.0
      %4443 = vmatprep.subr.mxu0 0.0
      %4444 = vmatpush1.msra.mxu0 0.0
      %4445 = vmatprep.subr.mxu0 0.0
      %4446 = vmatpush1.msra.mxu0 0.0
      %4447 = vmatprep.subr.mxu0 0.0
      %4448 = vmatpush1.msra.mxu0 0.0
      %4449 = vmatprep.subr.mxu0 0.0
      %4450 = vmatpush1.msra.mxu0 0.0
      %4451 = vmatprep.subr.mxu0 0.0
      %4452 = vmatpush1.msra.mxu0 0.0
      %4453 = vmatprep.subr.mxu0 0.0
      %4454 = vmatpush1.msra.mxu0 0.0
      %4455 = vmatprep.subr.mxu0 0.0
      %4456 = vmatpush1.msra.mxu0 0.0
      %4457 = vmatprep.subr.mxu0 0.0
      %4458 = vmatpush1.msra.mxu0 0.0
      %4459 = vmatprep.subr.mxu0 0.0
      %4460 = vmatpush1.msra.mxu0 0.0
      %4461 = vmatprep.subr.mxu0 0.0
      %4462 = vmatpush1.msra.mxu0 0.0
      %4463 = vmatprep.subr.mxu0 0.0
      %4464 = vmatpush1.msra.mxu0 0.0
      %4465 = vmatprep.subr.mxu0 0.0
      %4466 = vmatpush1.msra.mxu0 0.0
      %4467 = vmatprep.subr.mxu0 0.0
      %4468 = vmatpush1.msra.mxu0 0.0
      %4469 = vmatprep.subr.mxu0 0.0
      %4470 = vmatpush1.msra.mxu0 0.0
      %4471 = vmatprep.subr.mxu0 0.0
      %4472 = vmatpush1.msra.mxu0 0.0
      %4473 = vmatprep.subr.mxu0 0.0
      %4474 = vmatpush1.msra.mxu0 0.0
      %4475 = vmatprep.subr.mxu0 0.0
      %4476 = vmatpush1.msra.mxu0 0.0
      %4477 = vmatprep.subr.mxu0 0.0
      %4478 = vmatpush1.msra.mxu0 0.0
      %4479 = vmatprep.subr.mxu0 0.0
      %4480 = vmatpush1.msra.mxu0 0.0
      %4481 = vmatprep.subr.mxu0 0.0
      %4482 = vmatpush1.msra.mxu0 0.0
      %4483 = vmatprep.subr.mxu0 0.0
      %4484 = vmatpush1.msra.mxu0 0.0
      %4485 = vmatprep.subr.mxu0 0.0
      %4486 = vmatpush1.msra.mxu0 0.0
      %4487 = vmatprep.subr.mxu0 0.0
      %4488 = vmatpush1.msra.mxu0 0.0
      %4489 = vmatprep.subr.mxu0 0.0
      %4490 = vmatpush1.msra.mxu0 0.0
      %4491 = vmatprep.subr.mxu0 0.0
      %4492 = vmatpush1.msra.mxu0 0.0
      %4493 = vmatprep.subr.mxu0 0.0
      %4494 = vmatpush1.msra.mxu0 0.0
      %4495 = vmatprep.subr.mxu0 0.0
      %4496 = vmatpush1.msra.mxu0 0.0
      %4497 = vmatprep.subr.mxu0 0.0
      %4498 = vmatpush1.msra.mxu0 0.0
      %4499 = vmatprep.subr.mxu0 0.0
      %4500 = vmatpush1.msra.mxu0 0.0
      %4501 = vmatprep.mubr.f32.mxu0 0.0
      %4502 = vmatmul.mubr.f32.gmra.mrb[0].mxu0 %v4432
      %v4503 = vpop.f32.mrb[0].mxu0
      %v4504 = vadd.f32 0.0, %v4503
      %v4505 = vpop.f32.mrb[0].mxu0
      %4506 = vmatprep.mubr.f32.mxu0 0.0
      %4507 = vmatmul.mubr.f32.gmra.mrb[0].mxu0 %v4435
      %v4508 = vpop.f32.mrb[0].mxu0
      %v4509 = vadd.f32 0.0, %v4508
      %v4510 = vpop.f32.mrb[0].mxu0
      %4511 = vdwg.mxu0
      %v4512 = vadd.f32 %v4427, %v4504
      %v4513 = vadd.f32 %v4428, %v4509
      %v4514 = vld [vmem:[%s3833 + $0x2] sm:$0xff]
      %v4515 = vld [vmem:[%s3833 + $0xa] sm:$0xff]
      %v4517 = vsel %vm219, %v4514, 0
      %v4520 = vsel %vm219, %v4515, 0
      %4522 = vmatprep.subr.mxu0 0.0
      %4523 = vmatpush1.msra.mxu0 %v665
      %4524 = vmatprep.subr.mxu0 0.0
      %4525 = vmatpush1.msra.mxu0 0.0
      %4526 = vmatprep.subr.mxu0 0.0
      %4527 = vmatpush1.msra.mxu0 0.0
      %4528 = vmatprep.subr.mxu0 0.0
      %4529 = vmatpush1.msra.mxu0 0.0
      %4530 = vmatprep.subr.mxu0 0.0
      %4531 = vmatpush1.msra.mxu0 0.0
      %4532 = vmatprep.subr.mxu0 0.0
      %4533 = vmatpush1.msra.mxu0 0.0
      %4534 = vmatprep.subr.mxu0 0.0
      %4535 = vmatpush1.msra.mxu0 0.0
      %4536 = vmatprep.subr.mxu0 0.0
      %4537 = vmatpush1.msra.mxu0 0.0
      %4538 = vmatprep.subr.mxu0 0.0
      %4539 = vmatpush1.msra.mxu0 0.0
      %4540 = vmatprep.subr.mxu0 0.0
      %4541 = vmatpush1.msra.mxu0 0.0
      %4542 = vmatprep.subr.mxu0 0.0
      %4543 = vmatpush1.msra.mxu0 0.0
      %4544 = vmatprep.subr.mxu0 0.0
      %4545 = vmatpush1.msra.mxu0 0.0
      %4546 = vmatprep.subr.mxu0 0.0
      %4547 = vmatpush1.msra.mxu0 0.0
      %4548 = vmatprep.subr.mxu0 0.0
      %4549 = vmatpush1.msra.mxu0 0.0
      %4550 = vmatprep.subr.mxu0 0.0
      %4551 = vmatpush1.msra.mxu0 0.0
      %4552 = vmatprep.subr.mxu0 0.0
      %4553 = vmatpush1.msra.mxu0 0.0
      %4554 = vmatprep.subr.mxu0 0.0
      %4555 = vmatpush1.msra.mxu0 0.0
      %4556 = vmatprep.subr.mxu0 0.0
      %4557 = vmatpush1.msra.mxu0 0.0
      %4558 = vmatprep.subr.mxu0 0.0
      %4559 = vmatpush1.msra.mxu0 0.0
      %4560 = vmatprep.subr.mxu0 0.0
      %4561 = vmatpush1.msra.mxu0 0.0
      %4562 = vmatprep.subr.mxu0 0.0
      %4563 = vmatpush1.msra.mxu0 0.0
      %4564 = vmatprep.subr.mxu0 0.0
      %4565 = vmatpush1.msra.mxu0 0.0
      %4566 = vmatprep.subr.mxu0 0.0
      %4567 = vmatpush1.msra.mxu0 0.0
      %4568 = vmatprep.subr.mxu0 0.0
      %4569 = vmatpush1.msra.mxu0 0.0
      %4570 = vmatprep.subr.mxu0 0.0
      %4571 = vmatpush1.msra.mxu0 0.0
      %4572 = vmatprep.subr.mxu0 0.0
      %4573 = vmatpush1.msra.mxu0 0.0
      %4574 = vmatprep.subr.mxu0 0.0
      %4575 = vmatpush1.msra.mxu0 0.0
      %4576 = vmatprep.subr.mxu0 0.0
      %4577 = vmatpush1.msra.mxu0 0.0
      %4578 = vmatprep.subr.mxu0 0.0
      %4579 = vmatpush1.msra.mxu0 0.0
      %4580 = vmatprep.subr.mxu0 0.0
      %4581 = vmatpush1.msra.mxu0 0.0
      %4582 = vmatprep.subr.mxu0 0.0
      %4583 = vmatpush1.msra.mxu0 0.0
      %4584 = vmatprep.subr.mxu0 0.0
      %4585 = vmatpush1.msra.mxu0 0.0
      %4586 = vmatprep.mubr.f32.mxu0 0.0
      %4587 = vmatmul.mubr.f32.gmra.mrb[0].mxu0 %v4517
      %v4588 = vpop.f32.mrb[0].mxu0
      %v4589 = vadd.f32 0.0, %v4588
      %v4590 = vpop.f32.mrb[0].mxu0
      %4591 = vmatprep.mubr.f32.mxu0 0.0
      %4592 = vmatmul.mubr.f32.gmra.mrb[0].mxu0 %v4520
      %v4593 = vpop.f32.mrb[0].mxu0
      %v4594 = vadd.f32 0.0, %v4593
      %v4595 = vpop.f32.mrb[0].mxu0
      %4596 = vdwg.mxu0
      %v4597 = vadd.f32 %v4512, %v4589
      %v4598 = vadd.f32 %v4513, %v4594
      %s4599 = sadd.s32 %s212, 7
      %s4600 = smul.u32 %s4599, 24
      %s4601 = scalar_lea.vmem %s183, %s4600
      %v4602 = vld [vmem:[%s4601] sm:$0xff]
      %v4603 = vld [vmem:[%s4601 + $0x8] sm:$0xff]
      %v4605 = vsel %vm219, %v4602, 0
      %v4608 = vsel %vm219, %v4603, 0
      %4610 = vmatprep.subr.mxu0 0.0
      %4611 = vmatpush1.msra.mxu0 %v756
      %4612 = vmatprep.subr.mxu0 0.0
      %4613 = vmatpush1.msra.mxu0 0.0
      %4614 = vmatprep.subr.mxu0 0.0
      %4615 = vmatpush1.msra.mxu0 0.0
      %4616 = vmatprep.subr.mxu0 0.0
      %4617 = vmatpush1.msra.mxu0 0.0
      %4618 = vmatprep.subr.mxu0 0.0
      %4619 = vmatpush1.msra.mxu0 0.0
      %4620 = vmatprep.subr.mxu0 0.0
      %4621 = vmatpush1.msra.mxu0 0.0
      %4622 = vmatprep.subr.mxu0 0.0
      %4623 = vmatpush1.msra.mxu0 0.0
      %4624 = vmatprep.subr.mxu0 0.0
      %4625 = vmatpush1.msra.mxu0 0.0
      %4626 = vmatprep.subr.mxu0 0.0
      %4627 = vmatpush1.msra.mxu0 0.0
      %4628 = vmatprep.subr.mxu0 0.0
      %4629 = vmatpush1.msra.mxu0 0.0
      %4630 = vmatprep.subr.mxu0 0.0
      %4631 = vmatpush1.msra.mxu0 0.0
      %4632 = vmatprep.subr.mxu0 0.0
      %4633 = vmatpush1.msra.mxu0 0.0
      %4634 = vmatprep.subr.mxu0 0.0
      %4635 = vmatpush1.msra.mxu0 0.0
      %4636 = vmatprep.subr.mxu0 0.0
      %4637 = vmatpush1.msra.mxu0 0.0
      %4638 = vmatprep.subr.mxu0 0.0
      %4639 = vmatpush1.msra.mxu0 0.0
      %4640 = vmatprep.subr.mxu0 0.0
      %4641 = vmatpush1.msra.mxu0 0.0
      %4642 = vmatprep.subr.mxu0 0.0
      %4643 = vmatpush1.msra.mxu0 0.0
      %4644 = vmatprep.subr.mxu0 0.0
      %4645 = vmatpush1.msra.mxu0 0.0
      %4646 = vmatprep.subr.mxu0 0.0
      %4647 = vmatpush1.msra.mxu0 0.0
      %4648 = vmatprep.subr.mxu0 0.0
      %4649 = vmatpush1.msra.mxu0 0.0
      %4650 = vmatprep.subr.mxu0 0.0
      %4651 = vmatpush1.msra.mxu0 0.0
      %4652 = vmatprep.subr.mxu0 0.0
      %4653 = vmatpush1.msra.mxu0 0.0
      %4654 = vmatprep.subr.mxu0 0.0
      %4655 = vmatpush1.msra.mxu0 0.0
      %4656 = vmatprep.subr.mxu0 0.0
      %4657 = vmatpush1.msra.mxu0 0.0
      %4658 = vmatprep.subr.mxu0 0.0
      %4659 = vmatpush1.msra.mxu0 0.0
      %4660 = vmatprep.subr.mxu0 0.0
      %4661 = vmatpush1.msra.mxu0 0.0
      %4662 = vmatprep.subr.mxu0 0.0
      %4663 = vmatpush1.msra.mxu0 0.0
      %4664 = vmatprep.subr.mxu0 0.0
      %4665 = vmatpush1.msra.mxu0 0.0
      %4666 = vmatprep.subr.mxu0 0.0
      %4667 = vmatpush1.msra.mxu0 0.0
      %4668 = vmatprep.subr.mxu0 0.0
      %4669 = vmatpush1.msra.mxu0 0.0
      %4670 = vmatprep.subr.mxu0 0.0
      %4671 = vmatpush1.msra.mxu0 0.0
      %4672 = vmatprep.subr.mxu0 0.0
      %4673 = vmatpush1.msra.mxu0 0.0
      %4674 = vmatprep.mubr.f32.mxu0 0.0
      %4675 = vmatmul.mubr.f32.gmra.mrb[0].mxu0 %v4605
      %v4676 = vpop.f32.mrb[0].mxu0
      %v4677 = vadd.f32 0.0, %v4676
      %v4678 = vpop.f32.mrb[0].mxu0
      %4679 = vmatprep.mubr.f32.mxu0 0.0
      %4680 = vmatmul.mubr.f32.gmra.mrb[0].mxu0 %v4608
      %v4681 = vpop.f32.mrb[0].mxu0
      %v4682 = vadd.f32 0.0, %v4681
      %v4683 = vpop.f32.mrb[0].mxu0
      %4684 = vdwg.mxu0
      %v4685 = vadd.f32 %v4597, %v4677
      %v4686 = vadd.f32 %v4598, %v4682
      %v4687 = vld [vmem:[%s4601 + $0x1] sm:$0xff]
      %v4688 = vld [vmem:[%s4601 + $0x9] sm:$0xff]
      %v4690 = vsel %vm219, %v4687, 0
      %v4693 = vsel %vm219, %v4688, 0
      %4695 = vmatprep.subr.mxu0 0.0
      %4696 = vmatpush1.msra.mxu0 %v844
      %4697 = vmatprep.subr.mxu0 0.0
      %4698 = vmatpush1.msra.mxu0 0.0
      %4699 = vmatprep.subr.mxu0 0.0
      %4700 = vmatpush1.msra.mxu0 0.0
      %4701 = vmatprep.subr.mxu0 0.0
      %4702 = vmatpush1.msra.mxu0 0.0
      %4703 = vmatprep.subr.mxu0 0.0
      %4704 = vmatpush1.msra.mxu0 0.0
      %4705 = vmatprep.subr.mxu0 0.0
      %4706 = vmatpush1.msra.mxu0 0.0
      %4707 = vmatprep.subr.mxu0 0.0
      %4708 = vmatpush1.msra.mxu0 0.0
      %4709 = vmatprep.subr.mxu0 0.0
      %4710 = vmatpush1.msra.mxu0 0.0
      %4711 = vmatprep.subr.mxu0 0.0
      %4712 = vmatpush1.msra.mxu0 0.0
      %4713 = vmatprep.subr.mxu0 0.0
      %4714 = vmatpush1.msra.mxu0 0.0
      %4715 = vmatprep.subr.mxu0 0.0
      %4716 = vmatpush1.msra.mxu0 0.0
      %4717 = vmatprep.subr.mxu0 0.0
      %4718 = vmatpush1.msra.mxu0 0.0
      %4719 = vmatprep.subr.mxu0 0.0
      %4720 = vmatpush1.msra.mxu0 0.0
      %4721 = vmatprep.subr.mxu0 0.0
      %4722 = vmatpush1.msra.mxu0 0.0
      %4723 = vmatprep.subr.mxu0 0.0
      %4724 = vmatpush1.msra.mxu0 0.0
      %4725 = vmatprep.subr.mxu0 0.0
      %4726 = vmatpush1.msra.mxu0 0.0
      %4727 = vmatprep.subr.mxu0 0.0
      %4728 = vmatpush1.msra.mxu0 0.0
      %4729 = vmatprep.subr.mxu0 0.0
      %4730 = vmatpush1.msra.mxu0 0.0
      %4731 = vmatprep.subr.mxu0 0.0
      %4732 = vmatpush1.msra.mxu0 0.0
      %4733 = vmatprep.subr.mxu0 0.0
      %4734 = vmatpush1.msra.mxu0 0.0
      %4735 = vmatprep.subr.mxu0 0.0
      %4736 = vmatpush1.msra.mxu0 0.0
      %4737 = vmatprep.subr.mxu0 0.0
      %4738 = vmatpush1.msra.mxu0 0.0
      %4739 = vmatprep.subr.mxu0 0.0
      %4740 = vmatpush1.msra.mxu0 0.0
      %4741 = vmatprep.subr.mxu0 0.0
      %4742 = vmatpush1.msra.mxu0 0.0
      %4743 = vmatprep.subr.mxu0 0.0
      %4744 = vmatpush1.msra.mxu0 0.0
      %4745 = vmatprep.subr.mxu0 0.0
      %4746 = vmatpush1.msra.mxu0 0.0
      %4747 = vmatprep.subr.mxu0 0.0
      %4748 = vmatpush1.msra.mxu0 0.0
      %4749 = vmatprep.subr.mxu0 0.0
      %4750 = vmatpush1.msra.mxu0 0.0
      %4751 = vmatprep.subr.mxu0 0.0
      %4752 = vmatpush1.msra.mxu0 0.0
      %4753 = vmatprep.subr.mxu0 0.0
      %4754 = vmatpush1.msra.mxu0 0.0
      %4755 = vmatprep.subr.mxu0 0.0
      %4756 = vmatpush1.msra.mxu0 0.0
      %4757 = vmatprep.subr.mxu0 0.0
      %4758 = vmatpush1.msra.mxu0 0.0
      %4759 = vmatprep.mubr.f32.mxu0 0.0
      %4760 = vmatmul.mubr.f32.gmra.mrb[0].mxu0 %v4690
      %v4761 = vpop.f32.mrb[0].mxu0
      %v4762 = vadd.f32 0.0, %v4761
      %v4763 = vpop.f32.mrb[0].mxu0
      %4764 = vmatprep.mubr.f32.mxu0 0.0
      %4765 = vmatmul.mubr.f32.gmra.mrb[0].mxu0 %v4693
      %v4766 = vpop.f32.mrb[0].mxu0
      %v4767 = vadd.f32 0.0, %v4766
      %v4768 = vpop.f32.mrb[0].mxu0
      %4769 = vdwg.mxu0
      %v4770 = vadd.f32 %v4685, %v4762
      %v4771 = vadd.f32 %v4686, %v4767
      %v4772 = vld [vmem:[%s4601 + $0x2] sm:$0xff]
      %v4773 = vld [vmem:[%s4601 + $0xa] sm:$0xff]
      %v4775 = vsel %vm219, %v4772, 0
      %v4778 = vsel %vm219, %v4773, 0
      %4780 = vmatprep.subr.mxu0 0.0
      %4781 = vmatpush1.msra.mxu0 %v932
      %4782 = vmatprep.subr.mxu0 0.0
      %4783 = vmatpush1.msra.mxu0 0.0
      %4784 = vmatprep.subr.mxu0 0.0
      %4785 = vmatpush1.msra.mxu0 0.0
      %4786 = vmatprep.subr.mxu0 0.0
      %4787 = vmatpush1.msra.mxu0 0.0
      %4788 = vmatprep.subr.mxu0 0.0
      %4789 = vmatpush1.msra.mxu0 0.0
      %4790 = vmatprep.subr.mxu0 0.0
      %4791 = vmatpush1.msra.mxu0 0.0
      %4792 = vmatprep.subr.mxu0 0.0
      %4793 = vmatpush1.msra.mxu0 0.0
      %4794 = vmatprep.subr.mxu0 0.0
      %4795 = vmatpush1.msra.mxu0 0.0
      %4796 = vmatprep.subr.mxu0 0.0
      %4797 = vmatpush1.msra.mxu0 0.0
      %4798 = vmatprep.subr.mxu0 0.0
      %4799 = vmatpush1.msra.mxu0 0.0
      %4800 = vmatprep.subr.mxu0 0.0
      %4801 = vmatpush1.msra.mxu0 0.0
      %4802 = vmatprep.subr.mxu0 0.0
      %4803 = vmatpush1.msra.mxu0 0.0
      %4804 = vmatprep.subr.mxu0 0.0
      %4805 = vmatpush1.msra.mxu0 0.0
      %4806 = vmatprep.subr.mxu0 0.0
      %4807 = vmatpush1.msra.mxu0 0.0
      %4808 = vmatprep.subr.mxu0 0.0
      %4809 = vmatpush1.msra.mxu0 0.0
      %4810 = vmatprep.subr.mxu0 0.0
      %4811 = vmatpush1.msra.mxu0 0.0
      %4812 = vmatprep.subr.mxu0 0.0
      %4813 = vmatpush1.msra.mxu0 0.0
      %4814 = vmatprep.subr.mxu0 0.0
      %4815 = vmatpush1.msra.mxu0 0.0
      %4816 = vmatprep.subr.mxu0 0.0
      %4817 = vmatpush1.msra.mxu0 0.0
      %4818 = vmatprep.subr.mxu0 0.0
      %4819 = vmatpush1.msra.mxu0 0.0
      %4820 = vmatprep.subr.mxu0 0.0
      %4821 = vmatpush1.msra.mxu0 0.0
      %4822 = vmatprep.subr.mxu0 0.0
      %4823 = vmatpush1.msra.mxu0 0.0
      %4824 = vmatprep.subr.mxu0 0.0
      %4825 = vmatpush1.msra.mxu0 0.0
      %4826 = vmatprep.subr.mxu0 0.0
      %4827 = vmatpush1.msra.mxu0 0.0
      %4828 = vmatprep.subr.mxu0 0.0
      %4829 = vmatpush1.msra.mxu0 0.0
      %4830 = vmatprep.subr.mxu0 0.0
      %4831 = vmatpush1.msra.mxu0 0.0
      %4832 = vmatprep.subr.mxu0 0.0
      %4833 = vmatpush1.msra.mxu0 0.0
      %4834 = vmatprep.subr.mxu0 0.0
      %4835 = vmatpush1.msra.mxu0 0.0
      %4836 = vmatprep.subr.mxu0 0.0
      %4837 = vmatpush1.msra.mxu0 0.0
      %4838 = vmatprep.subr.mxu0 0.0
      %4839 = vmatpush1.msra.mxu0 0.0
      %4840 = vmatprep.subr.mxu0 0.0
      %4841 = vmatpush1.msra.mxu0 0.0
      %4842 = vmatprep.subr.mxu0 0.0
      %4843 = vmatpush1.msra.mxu0 0.0
      %4844 = vmatprep.mubr.f32.mxu0 0.0
      %4845 = vmatmul.mubr.f32.gmra.mrb[0].mxu0 %v4775
      %v4846 = vpop.f32.mrb[0].mxu0
      %v4847 = vadd.f32 0.0, %v4846
      %v4848 = vpop.f32.mrb[0].mxu0
      %4849 = vmatprep.mubr.f32.mxu0 0.0
      %4850 = vmatmul.mubr.f32.gmra.mrb[0].mxu0 %v4778
      %v4851 = vpop.f32.mrb[0].mxu0
      %v4852 = vadd.f32 0.0, %v4851
      %v4853 = vpop.f32.mrb[0].mxu0
      %4854 = vdwg.mxu0
      %v4855 = vadd.f32 %v4770, %v4847
      %v4856 = vadd.f32 %v4771, %v4852
      %v4857 = vadd.f32 %v4855, %v1015
      %v4858 = vadd.f32 %v4856, %v1015
      %4859 = vst [vmem:[%s192 + $0x50] sm:$0xff] %v4857
      %4860 = vst [vmem:[%s192 + $0x58] sm:$0xff] %v4858
      %v4861 = vld [vmem:[%s3833] sm:$0xff]
      %v4862 = vld [vmem:[%s3833 + $0x8] sm:$0xff]
      %v4863 = vld [vmem:[%s3833 + $0x1] sm:$0xff]
      %v4864 = vld [vmem:[%s3833 + $0x9] sm:$0xff]
      %v4866 = vsel %vm219, %v4863, 0
      %v4869 = vsel %vm219, %v4864, 0
      %4871 = vmatprep.subr.mxu0 0.0
      %4872 = vmatpush1.msra.mxu0 %v228
      %4873 = vmatprep.subr.mxu0 0.0
      %4874 = vmatpush1.msra.mxu0 0.0
      %4875 = vmatprep.subr.mxu0 0.0
      %4876 = vmatpush1.msra.mxu0 0.0
      %4877 = vmatprep.subr.mxu0 0.0
      %4878 = vmatpush1.msra.mxu0 0.0
      %4879 = vmatprep.subr.mxu0 0.0
      %4880 = vmatpush1.msra.mxu0 0.0
      %4881 = vmatprep.subr.mxu0 0.0
      %4882 = vmatpush1.msra.mxu0 0.0
      %4883 = vmatprep.subr.mxu0 0.0
      %4884 = vmatpush1.msra.mxu0 0.0
      %4885 = vmatprep.subr.mxu0 0.0
      %4886 = vmatpush1.msra.mxu0 0.0
      %4887 = vmatprep.subr.mxu0 0.0
      %4888 = vmatpush1.msra.mxu0 0.0
      %4889 = vmatprep.subr.mxu0 0.0
      %4890 = vmatpush1.msra.mxu0 0.0
      %4891 = vmatprep.subr.mxu0 0.0
      %4892 = vmatpush1.msra.mxu0 0.0
      %4893 = vmatprep.subr.mxu0 0.0
      %4894 = vmatpush1.msra.mxu0 0.0
      %4895 = vmatprep.subr.mxu0 0.0
      %4896 = vmatpush1.msra.mxu0 0.0
      %4897 = vmatprep.subr.mxu0 0.0
      %4898 = vmatpush1.msra.mxu0 0.0
      %4899 = vmatprep.subr.mxu0 0.0
      %4900 = vmatpush1.msra.mxu0 0.0
      %4901 = vmatprep.subr.mxu0 0.0
      %4902 = vmatpush1.msra.mxu0 0.0
      %4903 = vmatprep.subr.mxu0 0.0
      %4904 = vmatpush1.msra.mxu0 0.0
      %4905 = vmatprep.subr.mxu0 0.0
      %4906 = vmatpush1.msra.mxu0 0.0
      %4907 = vmatprep.subr.mxu0 0.0
      %4908 = vmatpush1.msra.mxu0 0.0
      %4909 = vmatprep.subr.mxu0 0.0
      %4910 = vmatpush1.msra.mxu0 0.0
      %4911 = vmatprep.subr.mxu0 0.0
      %4912 = vmatpush1.msra.mxu0 0.0
      %4913 = vmatprep.subr.mxu0 0.0
      %4914 = vmatpush1.msra.mxu0 0.0
      %4915 = vmatprep.subr.mxu0 0.0
      %4916 = vmatpush1.msra.mxu0 0.0
      %4917 = vmatprep.subr.mxu0 0.0
      %4918 = vmatpush1.msra.mxu0 0.0
      %4919 = vmatprep.subr.mxu0 0.0
      %4920 = vmatpush1.msra.mxu0 0.0
      %4921 = vmatprep.subr.mxu0 0.0
      %4922 = vmatpush1.msra.mxu0 0.0
      %4923 = vmatprep.subr.mxu0 0.0
      %4924 = vmatpush1.msra.mxu0 0.0
      %4925 = vmatprep.subr.mxu0 0.0
      %4926 = vmatpush1.msra.mxu0 0.0
      %4927 = vmatprep.subr.mxu0 0.0
      %4928 = vmatpush1.msra.mxu0 0.0
      %4929 = vmatprep.subr.mxu0 0.0
      %4930 = vmatpush1.msra.mxu0 0.0
      %4931 = vmatprep.subr.mxu0 0.0
      %4932 = vmatpush1.msra.mxu0 0.0
      %4933 = vmatprep.subr.mxu0 0.0
      %4934 = vmatpush1.msra.mxu0 0.0
      %4935 = vmatprep.mubr.f32.mxu0 0.0
      %4936 = vmatmul.mubr.f32.gmra.mrb[0].mxu0 %v4866
      %v4937 = vpop.f32.mrb[0].mxu0
      %v4938 = vadd.f32 0.0, %v4937
      %v4939 = vpop.f32.mrb[0].mxu0
      %4940 = vmatprep.mubr.f32.mxu0 0.0
      %4941 = vmatmul.mubr.f32.gmra.mrb[0].mxu0 %v4869
      %v4942 = vpop.f32.mrb[0].mxu0
      %v4943 = vadd.f32 0.0, %v4942
      %v4944 = vpop.f32.mrb[0].mxu0
      %4945 = vdwg.mxu0
      %v4947 = vsel %vm219, %v4861, 0
      %v4950 = vsel %vm219, %v4862, 0
      %4952 = vmatprep.subr.mxu0 0.0
      %4953 = vmatpush1.msra.mxu0 %v312
      %4954 = vmatprep.subr.mxu0 0.0
      %4955 = vmatpush1.msra.mxu0 0.0
      %4956 = vmatprep.subr.mxu0 0.0
      %4957 = vmatpush1.msra.mxu0 0.0
      %4958 = vmatprep.subr.mxu0 0.0
      %4959 = vmatpush1.msra.mxu0 0.0
      %4960 = vmatprep.subr.mxu0 0.0
      %4961 = vmatpush1.msra.mxu0 0.0
      %4962 = vmatprep.subr.mxu0 0.0
      %4963 = vmatpush1.msra.mxu0 0.0
      %4964 = vmatprep.subr.mxu0 0.0
      %4965 = vmatpush1.msra.mxu0 0.0
      %4966 = vmatprep.subr.mxu0 0.0
      %4967 = vmatpush1.msra.mxu0 0.0
      %4968 = vmatprep.subr.mxu0 0.0
      %4969 = vmatpush1.msra.mxu0 0.0
      %4970 = vmatprep.subr.mxu0 0.0
      %4971 = vmatpush1.msra.mxu0 0.0
      %4972 = vmatprep.subr.mxu0 0.0
      %4973 = vmatpush1.msra.mxu0 0.0
      %4974 = vmatprep.subr.mxu0 0.0
      %4975 = vmatpush1.msra.mxu0 0.0
      %4976 = vmatprep.subr.mxu0 0.0
      %4977 = vmatpush1.msra.mxu0 0.0
      %4978 = vmatprep.subr.mxu0 0.0
      %4979 = vmatpush1.msra.mxu0 0.0
      %4980 = vmatprep.subr.mxu0 0.0
      %4981 = vmatpush1.msra.mxu0 0.0
      %4982 = vmatprep.subr.mxu0 0.0
      %4983 = vmatpush1.msra.mxu0 0.0
      %4984 = vmatprep.subr.mxu0 0.0
      %4985 = vmatpush1.msra.mxu0 0.0
      %4986 = vmatprep.subr.mxu0 0.0
      %4987 = vmatpush1.msra.mxu0 0.0
      %4988 = vmatprep.subr.mxu0 0.0
      %4989 = vmatpush1.msra.mxu0 0.0
      %4990 = vmatprep.subr.mxu0 0.0
      %4991 = vmatpush1.msra.mxu0 0.0
      %4992 = vmatprep.subr.mxu0 0.0
      %4993 = vmatpush1.msra.mxu0 0.0
      %4994 = vmatprep.subr.mxu0 0.0
      %4995 = vmatpush1.msra.mxu0 0.0
      %4996 = vmatprep.subr.mxu0 0.0
      %4997 = vmatpush1.msra.mxu0 0.0
      %4998 = vmatprep.subr.mxu0 0.0
      %4999 = vmatpush1.msra.mxu0 0.0
      %5000 = vmatprep.subr.mxu0 0.0
      %5001 = vmatpush1.msra.mxu0 0.0
      %5002 = vmatprep.subr.mxu0 0.0
      %5003 = vmatpush1.msra.mxu0 0.0
      %5004 = vmatprep.subr.mxu0 0.0
      %5005 = vmatpush1.msra.mxu0 0.0
      %5006 = vmatprep.subr.mxu0 0.0
      %5007 = vmatpush1.msra.mxu0 0.0
      %5008 = vmatprep.subr.mxu0 0.0
      %5009 = vmatpush1.msra.mxu0 0.0
      %5010 = vmatprep.subr.mxu0 0.0
      %5011 = vmatpush1.msra.mxu0 0.0
      %5012 = vmatprep.subr.mxu0 0.0
      %5013 = vmatpush1.msra.mxu0 0.0
      %5014 = vmatprep.subr.mxu0 0.0
      %5015 = vmatpush1.msra.mxu0 0.0
      %5016 = vmatprep.mubr.f32.mxu0 0.0
      %5017 = vmatmul.mubr.f32.gmra.mrb[0].mxu0 %v4947
      %v5018 = vpop.f32.mrb[0].mxu0
      %v5019 = vadd.f32 %v4938, %v5018
      %v5020 = vpop.f32.mrb[0].mxu0
      %5021 = vmatprep.mubr.f32.mxu0 0.0
      %5022 = vmatmul.mubr.f32.gmra.mrb[0].mxu0 %v4950
      %v5023 = vpop.f32.mrb[0].mxu0
      %v5024 = vadd.f32 %v4943, %v5023
      %v5025 = vpop.f32.mrb[0].mxu0
      %5026 = vdwg.mxu0
      %v5027 = vld [vmem:[%s3833 + $0x2] sm:$0xff]
      %v5028 = vld [vmem:[%s3833 + $0xa] sm:$0xff]
      %v5030 = vsel %vm219, %v5027, 0
      %v5033 = vsel %vm219, %v5028, 0
      %5035 = vmatprep.subr.mxu0 0.0
      %5036 = vmatpush1.msra.mxu0 %v398
      %5037 = vmatprep.subr.mxu0 0.0
      %5038 = vmatpush1.msra.mxu0 0.0
      %5039 = vmatprep.subr.mxu0 0.0
      %5040 = vmatpush1.msra.mxu0 0.0
      %5041 = vmatprep.subr.mxu0 0.0
      %5042 = vmatpush1.msra.mxu0 0.0
      %5043 = vmatprep.subr.mxu0 0.0
      %5044 = vmatpush1.msra.mxu0 0.0
      %5045 = vmatprep.subr.mxu0 0.0
      %5046 = vmatpush1.msra.mxu0 0.0
      %5047 = vmatprep.subr.mxu0 0.0
      %5048 = vmatpush1.msra.mxu0 0.0
      %5049 = vmatprep.subr.mxu0 0.0
      %5050 = vmatpush1.msra.mxu0 0.0
      %5051 = vmatprep.subr.mxu0 0.0
      %5052 = vmatpush1.msra.mxu0 0.0
      %5053 = vmatprep.subr.mxu0 0.0
      %5054 = vmatpush1.msra.mxu0 0.0
      %5055 = vmatprep.subr.mxu0 0.0
      %5056 = vmatpush1.msra.mxu0 0.0
      %5057 = vmatprep.subr.mxu0 0.0
      %5058 = vmatpush1.msra.mxu0 0.0
      %5059 = vmatprep.subr.mxu0 0.0
      %5060 = vmatpush1.msra.mxu0 0.0
      %5061 = vmatprep.subr.mxu0 0.0
      %5062 = vmatpush1.msra.mxu0 0.0
      %5063 = vmatprep.subr.mxu0 0.0
      %5064 = vmatpush1.msra.mxu0 0.0
      %5065 = vmatprep.subr.mxu0 0.0
      %5066 = vmatpush1.msra.mxu0 0.0
      %5067 = vmatprep.subr.mxu0 0.0
      %5068 = vmatpush1.msra.mxu0 0.0
      %5069 = vmatprep.subr.mxu0 0.0
      %5070 = vmatpush1.msra.mxu0 0.0
      %5071 = vmatprep.subr.mxu0 0.0
      %5072 = vmatpush1.msra.mxu0 0.0
      %5073 = vmatprep.subr.mxu0 0.0
      %5074 = vmatpush1.msra.mxu0 0.0
      %5075 = vmatprep.subr.mxu0 0.0
      %5076 = vmatpush1.msra.mxu0 0.0
      %5077 = vmatprep.subr.mxu0 0.0
      %5078 = vmatpush1.msra.mxu0 0.0
      %5079 = vmatprep.subr.mxu0 0.0
      %5080 = vmatpush1.msra.mxu0 0.0
      %5081 = vmatprep.subr.mxu0 0.0
      %5082 = vmatpush1.msra.mxu0 0.0
      %5083 = vmatprep.subr.mxu0 0.0
      %5084 = vmatpush1.msra.mxu0 0.0
      %5085 = vmatprep.subr.mxu0 0.0
      %5086 = vmatpush1.msra.mxu0 0.0
      %5087 = vmatprep.subr.mxu0 0.0
      %5088 = vmatpush1.msra.mxu0 0.0
      %5089 = vmatprep.subr.mxu0 0.0
      %5090 = vmatpush1.msra.mxu0 0.0
      %5091 = vmatprep.subr.mxu0 0.0
      %5092 = vmatpush1.msra.mxu0 0.0
      %5093 = vmatprep.subr.mxu0 0.0
      %5094 = vmatpush1.msra.mxu0 0.0
      %5095 = vmatprep.subr.mxu0 0.0
      %5096 = vmatpush1.msra.mxu0 0.0
      %5097 = vmatprep.subr.mxu0 0.0
      %5098 = vmatpush1.msra.mxu0 0.0
      %5099 = vmatprep.mubr.f32.mxu0 0.0
      %5100 = vmatmul.mubr.f32.gmra.mrb[0].mxu0 %v5030
      %v5101 = vpop.f32.mrb[0].mxu0
      %v5102 = vadd.f32 0.0, %v5101
      %v5103 = vpop.f32.mrb[0].mxu0
      %5104 = vmatprep.mubr.f32.mxu0 0.0
      %5105 = vmatmul.mubr.f32.gmra.mrb[0].mxu0 %v5033
      %v5106 = vpop.f32.mrb[0].mxu0
      %v5107 = vadd.f32 0.0, %v5106
      %v5108 = vpop.f32.mrb[0].mxu0
      %5109 = vdwg.mxu0
      %v5110 = vadd.f32 %v5019, %v5102
      %v5111 = vadd.f32 %v5024, %v5107
      %v5112 = vld [vmem:[%s4601] sm:$0xff]
      %v5113 = vld [vmem:[%s4601 + $0x8] sm:$0xff]
      %v5115 = vsel %vm219, %v5112, 0
      %v5118 = vsel %vm219, %v5113, 0
      %5120 = vmatprep.subr.mxu0 0.0
      %5121 = vmatpush1.msra.mxu0 %v489
      %5122 = vmatprep.subr.mxu0 0.0
      %5123 = vmatpush1.msra.mxu0 0.0
      %5124 = vmatprep.subr.mxu0 0.0
      %5125 = vmatpush1.msra.mxu0 0.0
      %5126 = vmatprep.subr.mxu0 0.0
      %5127 = vmatpush1.msra.mxu0 0.0
      %5128 = vmatprep.subr.mxu0 0.0
      %5129 = vmatpush1.msra.mxu0 0.0
      %5130 = vmatprep.subr.mxu0 0.0
      %5131 = vmatpush1.msra.mxu0 0.0
      %5132 = vmatprep.subr.mxu0 0.0
      %5133 = vmatpush1.msra.mxu0 0.0
      %5134 = vmatprep.subr.mxu0 0.0
      %5135 = vmatpush1.msra.mxu0 0.0
      %5136 = vmatprep.subr.mxu0 0.0
      %5137 = vmatpush1.msra.mxu0 0.0
      %5138 = vmatprep.subr.mxu0 0.0
      %5139 = vmatpush1.msra.mxu0 0.0
      %5140 = vmatprep.subr.mxu0 0.0
      %5141 = vmatpush1.msra.mxu0 0.0
      %5142 = vmatprep.subr.mxu0 0.0
      %5143 = vmatpush1.msra.mxu0 0.0
      %5144 = vmatprep.subr.mxu0 0.0
      %5145 = vmatpush1.msra.mxu0 0.0
      %5146 = vmatprep.subr.mxu0 0.0
      %5147 = vmatpush1.msra.mxu0 0.0
      %5148 = vmatprep.subr.mxu0 0.0
      %5149 = vmatpush1.msra.mxu0 0.0
      %5150 = vmatprep.subr.mxu0 0.0
      %5151 = vmatpush1.msra.mxu0 0.0
      %5152 = vmatprep.subr.mxu0 0.0
      %5153 = vmatpush1.msra.mxu0 0.0
      %5154 = vmatprep.subr.mxu0 0.0
      %5155 = vmatpush1.msra.mxu0 0.0
      %5156 = vmatprep.subr.mxu0 0.0
      %5157 = vmatpush1.msra.mxu0 0.0
      %5158 = vmatprep.subr.mxu0 0.0
      %5159 = vmatpush1.msra.mxu0 0.0
      %5160 = vmatprep.subr.mxu0 0.0
      %5161 = vmatpush1.msra.mxu0 0.0
      %5162 = vmatprep.subr.mxu0 0.0
      %5163 = vmatpush1.msra.mxu0 0.0
      %5164 = vmatprep.subr.mxu0 0.0
      %5165 = vmatpush1.msra.mxu0 0.0
      %5166 = vmatprep.subr.mxu0 0.0
      %5167 = vmatpush1.msra.mxu0 0.0
      %5168 = vmatprep.subr.mxu0 0.0
      %5169 = vmatpush1.msra.mxu0 0.0
      %5170 = vmatprep.subr.mxu0 0.0
      %5171 = vmatpush1.msra.mxu0 0.0
      %5172 = vmatprep.subr.mxu0 0.0
      %5173 = vmatpush1.msra.mxu0 0.0
      %5174 = vmatprep.subr.mxu0 0.0
      %5175 = vmatpush1.msra.mxu0 0.0
      %5176 = vmatprep.subr.mxu0 0.0
      %5177 = vmatpush1.msra.mxu0 0.0
      %5178 = vmatprep.subr.mxu0 0.0
      %5179 = vmatpush1.msra.mxu0 0.0
      %5180 = vmatprep.subr.mxu0 0.0
      %5181 = vmatpush1.msra.mxu0 0.0
      %5182 = vmatprep.subr.mxu0 0.0
      %5183 = vmatpush1.msra.mxu0 0.0
      %5184 = vmatprep.mubr.f32.mxu0 0.0
      %5185 = vmatmul.mubr.f32.gmra.mrb[0].mxu0 %v5115
      %v5186 = vpop.f32.mrb[0].mxu0
      %v5187 = vadd.f32 0.0, %v5186
      %v5188 = vpop.f32.mrb[0].mxu0
      %5189 = vmatprep.mubr.f32.mxu0 0.0
      %5190 = vmatmul.mubr.f32.gmra.mrb[0].mxu0 %v5118
      %v5191 = vpop.f32.mrb[0].mxu0
      %v5192 = vadd.f32 0.0, %v5191
      %v5193 = vpop.f32.mrb[0].mxu0
      %5194 = vdwg.mxu0
      %v5195 = vadd.f32 %v5110, %v5187
      %v5196 = vadd.f32 %v5111, %v5192
      %v5197 = vld [vmem:[%s4601 + $0x1] sm:$0xff]
      %v5198 = vld [vmem:[%s4601 + $0x9] sm:$0xff]
      %v5200 = vsel %vm219, %v5197, 0
      %v5203 = vsel %vm219, %v5198, 0
      %5205 = vmatprep.subr.mxu0 0.0
      %5206 = vmatpush1.msra.mxu0 %v577
      %5207 = vmatprep.subr.mxu0 0.0
      %5208 = vmatpush1.msra.mxu0 0.0
      %5209 = vmatprep.subr.mxu0 0.0
      %5210 = vmatpush1.msra.mxu0 0.0
      %5211 = vmatprep.subr.mxu0 0.0
      %5212 = vmatpush1.msra.mxu0 0.0
      %5213 = vmatprep.subr.mxu0 0.0
      %5214 = vmatpush1.msra.mxu0 0.0
      %5215 = vmatprep.subr.mxu0 0.0
      %5216 = vmatpush1.msra.mxu0 0.0
      %5217 = vmatprep.subr.mxu0 0.0
      %5218 = vmatpush1.msra.mxu0 0.0
      %5219 = vmatprep.subr.mxu0 0.0
      %5220 = vmatpush1.msra.mxu0 0.0
      %5221 = vmatprep.subr.mxu0 0.0
      %5222 = vmatpush1.msra.mxu0 0.0
      %5223 = vmatprep.subr.mxu0 0.0
      %5224 = vmatpush1.msra.mxu0 0.0
      %5225 = vmatprep.subr.mxu0 0.0
      %5226 = vmatpush1.msra.mxu0 0.0
      %5227 = vmatprep.subr.mxu0 0.0
      %5228 = vmatpush1.msra.mxu0 0.0
      %5229 = vmatprep.subr.mxu0 0.0
      %5230 = vmatpush1.msra.mxu0 0.0
      %5231 = vmatprep.subr.mxu0 0.0
      %5232 = vmatpush1.msra.mxu0 0.0
      %5233 = vmatprep.subr.mxu0 0.0
      %5234 = vmatpush1.msra.mxu0 0.0
      %5235 = vmatprep.subr.mxu0 0.0
      %5236 = vmatpush1.msra.mxu0 0.0
      %5237 = vmatprep.subr.mxu0 0.0
      %5238 = vmatpush1.msra.mxu0 0.0
      %5239 = vmatprep.subr.mxu0 0.0
      %5240 = vmatpush1.msra.mxu0 0.0
      %5241 = vmatprep.subr.mxu0 0.0
      %5242 = vmatpush1.msra.mxu0 0.0
      %5243 = vmatprep.subr.mxu0 0.0
      %5244 = vmatpush1.msra.mxu0 0.0
      %5245 = vmatprep.subr.mxu0 0.0
      %5246 = vmatpush1.msra.mxu0 0.0
      %5247 = vmatprep.subr.mxu0 0.0
      %5248 = vmatpush1.msra.mxu0 0.0
      %5249 = vmatprep.subr.mxu0 0.0
      %5250 = vmatpush1.msra.mxu0 0.0
      %5251 = vmatprep.subr.mxu0 0.0
      %5252 = vmatpush1.msra.mxu0 0.0
      %5253 = vmatprep.subr.mxu0 0.0
      %5254 = vmatpush1.msra.mxu0 0.0
      %5255 = vmatprep.subr.mxu0 0.0
      %5256 = vmatpush1.msra.mxu0 0.0
      %5257 = vmatprep.subr.mxu0 0.0
      %5258 = vmatpush1.msra.mxu0 0.0
      %5259 = vmatprep.subr.mxu0 0.0
      %5260 = vmatpush1.msra.mxu0 0.0
      %5261 = vmatprep.subr.mxu0 0.0
      %5262 = vmatpush1.msra.mxu0 0.0
      %5263 = vmatprep.subr.mxu0 0.0
      %5264 = vmatpush1.msra.mxu0 0.0
      %5265 = vmatprep.subr.mxu0 0.0
      %5266 = vmatpush1.msra.mxu0 0.0
      %5267 = vmatprep.subr.mxu0 0.0
      %5268 = vmatpush1.msra.mxu0 0.0
      %5269 = vmatprep.mubr.f32.mxu0 0.0
      %5270 = vmatmul.mubr.f32.gmra.mrb[0].mxu0 %v5200
      %v5271 = vpop.f32.mrb[0].mxu0
      %v5272 = vadd.f32 0.0, %v5271
      %v5273 = vpop.f32.mrb[0].mxu0
      %5274 = vmatprep.mubr.f32.mxu0 0.0
      %5275 = vmatmul.mubr.f32.gmra.mrb[0].mxu0 %v5203
      %v5276 = vpop.f32.mrb[0].mxu0
      %v5277 = vadd.f32 0.0, %v5276
      %v5278 = vpop.f32.mrb[0].mxu0
      %5279 = vdwg.mxu0
      %v5280 = vadd.f32 %v5195, %v5272
      %v5281 = vadd.f32 %v5196, %v5277
      %v5282 = vld [vmem:[%s4601 + $0x2] sm:$0xff]
      %v5283 = vld [vmem:[%s4601 + $0xa] sm:$0xff]
      %v5285 = vsel %vm219, %v5282, 0
      %v5288 = vsel %vm219, %v5283, 0
      %5290 = vmatprep.subr.mxu0 0.0
      %5291 = vmatpush1.msra.mxu0 %v665
      %5292 = vmatprep.subr.mxu0 0.0
      %5293 = vmatpush1.msra.mxu0 0.0
      %5294 = vmatprep.subr.mxu0 0.0
      %5295 = vmatpush1.msra.mxu0 0.0
      %5296 = vmatprep.subr.mxu0 0.0
      %5297 = vmatpush1.msra.mxu0 0.0
      %5298 = vmatprep.subr.mxu0 0.0
      %5299 = vmatpush1.msra.mxu0 0.0
      %5300 = vmatprep.subr.mxu0 0.0
      %5301 = vmatpush1.msra.mxu0 0.0
      %5302 = vmatprep.subr.mxu0 0.0
      %5303 = vmatpush1.msra.mxu0 0.0
      %5304 = vmatprep.subr.mxu0 0.0
      %5305 = vmatpush1.msra.mxu0 0.0
      %5306 = vmatprep.subr.mxu0 0.0
      %5307 = vmatpush1.msra.mxu0 0.0
      %5308 = vmatprep.subr.mxu0 0.0
      %5309 = vmatpush1.msra.mxu0 0.0
      %5310 = vmatprep.subr.mxu0 0.0
      %5311 = vmatpush1.msra.mxu0 0.0
      %5312 = vmatprep.subr.mxu0 0.0
      %5313 = vmatpush1.msra.mxu0 0.0
      %5314 = vmatprep.subr.mxu0 0.0
      %5315 = vmatpush1.msra.mxu0 0.0
      %5316 = vmatprep.subr.mxu0 0.0
      %5317 = vmatpush1.msra.mxu0 0.0
      %5318 = vmatprep.subr.mxu0 0.0
      %5319 = vmatpush1.msra.mxu0 0.0
      %5320 = vmatprep.subr.mxu0 0.0
      %5321 = vmatpush1.msra.mxu0 0.0
      %5322 = vmatprep.subr.mxu0 0.0
      %5323 = vmatpush1.msra.mxu0 0.0
      %5324 = vmatprep.subr.mxu0 0.0
      %5325 = vmatpush1.msra.mxu0 0.0
      %5326 = vmatprep.subr.mxu0 0.0
      %5327 = vmatpush1.msra.mxu0 0.0
      %5328 = vmatprep.subr.mxu0 0.0
      %5329 = vmatpush1.msra.mxu0 0.0
      %5330 = vmatprep.subr.mxu0 0.0
      %5331 = vmatpush1.msra.mxu0 0.0
      %5332 = vmatprep.subr.mxu0 0.0
      %5333 = vmatpush1.msra.mxu0 0.0
      %5334 = vmatprep.subr.mxu0 0.0
      %5335 = vmatpush1.msra.mxu0 0.0
      %5336 = vmatprep.subr.mxu0 0.0
      %5337 = vmatpush1.msra.mxu0 0.0
      %5338 = vmatprep.subr.mxu0 0.0
      %5339 = vmatpush1.msra.mxu0 0.0
      %5340 = vmatprep.subr.mxu0 0.0
      %5341 = vmatpush1.msra.mxu0 0.0
      %5342 = vmatprep.subr.mxu0 0.0
      %5343 = vmatpush1.msra.mxu0 0.0
      %5344 = vmatprep.subr.mxu0 0.0
      %5345 = vmatpush1.msra.mxu0 0.0
      %5346 = vmatprep.subr.mxu0 0.0
      %5347 = vmatpush1.msra.mxu0 0.0
      %5348 = vmatprep.subr.mxu0 0.0
      %5349 = vmatpush1.msra.mxu0 0.0
      %5350 = vmatprep.subr.mxu0 0.0
      %5351 = vmatpush1.msra.mxu0 0.0
      %5352 = vmatprep.subr.mxu0 0.0
      %5353 = vmatpush1.msra.mxu0 0.0
      %5354 = vmatprep.mubr.f32.mxu0 0.0
      %5355 = vmatmul.mubr.f32.gmra.mrb[0].mxu0 %v5285
      %v5356 = vpop.f32.mrb[0].mxu0
      %v5357 = vadd.f32 0.0, %v5356
      %v5358 = vpop.f32.mrb[0].mxu0
      %5359 = vmatprep.mubr.f32.mxu0 0.0
      %5360 = vmatmul.mubr.f32.gmra.mrb[0].mxu0 %v5288
      %v5361 = vpop.f32.mrb[0].mxu0
      %v5362 = vadd.f32 0.0, %v5361
      %v5363 = vpop.f32.mrb[0].mxu0
      %5364 = vdwg.mxu0
      %v5365 = vadd.f32 %v5280, %v5357
      %v5366 = vadd.f32 %v5281, %v5362
      %s5367 = sadd.s32 %s212, 8
      %s5368 = smul.u32 %s5367, 24
      %s5369 = scalar_lea.vmem %s183, %s5368
      %v5370 = vld [vmem:[%s5369] sm:$0xff]
      %v5371 = vld [vmem:[%s5369 + $0x8] sm:$0xff]
      %v5373 = vsel %vm219, %v5370, 0
      %v5376 = vsel %vm219, %v5371, 0
      %5378 = vmatprep.subr.mxu0 0.0
      %5379 = vmatpush1.msra.mxu0 %v756
      %5380 = vmatprep.subr.mxu0 0.0
      %5381 = vmatpush1.msra.mxu0 0.0
      %5382 = vmatprep.subr.mxu0 0.0
      %5383 = vmatpush1.msra.mxu0 0.0
      %5384 = vmatprep.subr.mxu0 0.0
      %5385 = vmatpush1.msra.mxu0 0.0
      %5386 = vmatprep.subr.mxu0 0.0
      %5387 = vmatpush1.msra.mxu0 0.0
      %5388 = vmatprep.subr.mxu0 0.0
      %5389 = vmatpush1.msra.mxu0 0.0
      %5390 = vmatprep.subr.mxu0 0.0
      %5391 = vmatpush1.msra.mxu0 0.0
      %5392 = vmatprep.subr.mxu0 0.0
      %5393 = vmatpush1.msra.mxu0 0.0
      %5394 = vmatprep.subr.mxu0 0.0
      %5395 = vmatpush1.msra.mxu0 0.0
      %5396 = vmatprep.subr.mxu0 0.0
      %5397 = vmatpush1.msra.mxu0 0.0
      %5398 = vmatprep.subr.mxu0 0.0
      %5399 = vmatpush1.msra.mxu0 0.0
      %5400 = vmatprep.subr.mxu0 0.0
      %5401 = vmatpush1.msra.mxu0 0.0
      %5402 = vmatprep.subr.mxu0 0.0
      %5403 = vmatpush1.msra.mxu0 0.0
      %5404 = vmatprep.subr.mxu0 0.0
      %5405 = vmatpush1.msra.mxu0 0.0
      %5406 = vmatprep.subr.mxu0 0.0
      %5407 = vmatpush1.msra.mxu0 0.0
      %5408 = vmatprep.subr.mxu0 0.0
      %5409 = vmatpush1.msra.mxu0 0.0
      %5410 = vmatprep.subr.mxu0 0.0
      %5411 = vmatpush1.msra.mxu0 0.0
      %5412 = vmatprep.subr.mxu0 0.0
      %5413 = vmatpush1.msra.mxu0 0.0
      %5414 = vmatprep.subr.mxu0 0.0
      %5415 = vmatpush1.msra.mxu0 0.0
      %5416 = vmatprep.subr.mxu0 0.0
      %5417 = vmatpush1.msra.mxu0 0.0
      %5418 = vmatprep.subr.mxu0 0.0
      %5419 = vmatpush1.msra.mxu0 0.0
      %5420 = vmatprep.subr.mxu0 0.0
      %5421 = vmatpush1.msra.mxu0 0.0
      %5422 = vmatprep.subr.mxu0 0.0
      %5423 = vmatpush1.msra.mxu0 0.0
      %5424 = vmatprep.subr.mxu0 0.0
      %5425 = vmatpush1.msra.mxu0 0.0
      %5426 = vmatprep.subr.mxu0 0.0
      %5427 = vmatpush1.msra.mxu0 0.0
      %5428 = vmatprep.subr.mxu0 0.0
      %5429 = vmatpush1.msra.mxu0 0.0
      %5430 = vmatprep.subr.mxu0 0.0
      %5431 = vmatpush1.msra.mxu0 0.0
      %5432 = vmatprep.subr.mxu0 0.0
      %5433 = vmatpush1.msra.mxu0 0.0
      %5434 = vmatprep.subr.mxu0 0.0
      %5435 = vmatpush1.msra.mxu0 0.0
      %5436 = vmatprep.subr.mxu0 0.0
      %5437 = vmatpush1.msra.mxu0 0.0
      %5438 = vmatprep.subr.mxu0 0.0
      %5439 = vmatpush1.msra.mxu0 0.0
      %5440 = vmatprep.subr.mxu0 0.0
      %5441 = vmatpush1.msra.mxu0 0.0
      %5442 = vmatprep.mubr.f32.mxu0 0.0
      %5443 = vmatmul.mubr.f32.gmra.mrb[0].mxu0 %v5373
      %v5444 = vpop.f32.mrb[0].mxu0
      %v5445 = vadd.f32 0.0, %v5444
      %v5446 = vpop.f32.mrb[0].mxu0
      %5447 = vmatprep.mubr.f32.mxu0 0.0
      %5448 = vmatmul.mubr.f32.gmra.mrb[0].mxu0 %v5376
      %v5449 = vpop.f32.mrb[0].mxu0
      %v5450 = vadd.f32 0.0, %v5449
      %v5451 = vpop.f32.mrb[0].mxu0
      %5452 = vdwg.mxu0
      %v5453 = vadd.f32 %v5365, %v5445
      %v5454 = vadd.f32 %v5366, %v5450
      %v5455 = vld [vmem:[%s5369 + $0x1] sm:$0xff]
      %v5456 = vld [vmem:[%s5369 + $0x9] sm:$0xff]
      %v5458 = vsel %vm219, %v5455, 0
      %v5461 = vsel %vm219, %v5456, 0
      %5463 = vmatprep.subr.mxu0 0.0
      %5464 = vmatpush1.msra.mxu0 %v844
      %5465 = vmatprep.subr.mxu0 0.0
      %5466 = vmatpush1.msra.mxu0 0.0
      %5467 = vmatprep.subr.mxu0 0.0
      %5468 = vmatpush1.msra.mxu0 0.0
      %5469 = vmatprep.subr.mxu0 0.0
      %5470 = vmatpush1.msra.mxu0 0.0
      %5471 = vmatprep.subr.mxu0 0.0
      %5472 = vmatpush1.msra.mxu0 0.0
      %5473 = vmatprep.subr.mxu0 0.0
      %5474 = vmatpush1.msra.mxu0 0.0
      %5475 = vmatprep.subr.mxu0 0.0
      %5476 = vmatpush1.msra.mxu0 0.0
      %5477 = vmatprep.subr.mxu0 0.0
      %5478 = vmatpush1.msra.mxu0 0.0
      %5479 = vmatprep.subr.mxu0 0.0
      %5480 = vmatpush1.msra.mxu0 0.0
      %5481 = vmatprep.subr.mxu0 0.0
      %5482 = vmatpush1.msra.mxu0 0.0
      %5483 = vmatprep.subr.mxu0 0.0
      %5484 = vmatpush1.msra.mxu0 0.0
      %5485 = vmatprep.subr.mxu0 0.0
      %5486 = vmatpush1.msra.mxu0 0.0
      %5487 = vmatprep.subr.mxu0 0.0
      %5488 = vmatpush1.msra.mxu0 0.0
      %5489 = vmatprep.subr.mxu0 0.0
      %5490 = vmatpush1.msra.mxu0 0.0
      %5491 = vmatprep.subr.mxu0 0.0
      %5492 = vmatpush1.msra.mxu0 0.0
      %5493 = vmatprep.subr.mxu0 0.0
      %5494 = vmatpush1.msra.mxu0 0.0
      %5495 = vmatprep.subr.mxu0 0.0
      %5496 = vmatpush1.msra.mxu0 0.0
      %5497 = vmatprep.subr.mxu0 0.0
      %5498 = vmatpush1.msra.mxu0 0.0
      %5499 = vmatprep.subr.mxu0 0.0
      %5500 = vmatpush1.msra.mxu0 0.0
      %5501 = vmatprep.subr.mxu0 0.0
      %5502 = vmatpush1.msra.mxu0 0.0
      %5503 = vmatprep.subr.mxu0 0.0
      %5504 = vmatpush1.msra.mxu0 0.0
      %5505 = vmatprep.subr.mxu0 0.0
      %5506 = vmatpush1.msra.mxu0 0.0
      %5507 = vmatprep.subr.mxu0 0.0
      %5508 = vmatpush1.msra.mxu0 0.0
      %5509 = vmatprep.subr.mxu0 0.0
      %5510 = vmatpush1.msra.mxu0 0.0
      %5511 = vmatprep.subr.mxu0 0.0
      %5512 = vmatpush1.msra.mxu0 0.0
      %5513 = vmatprep.subr.mxu0 0.0
      %5514 = vmatpush1.msra.mxu0 0.0
      %5515 = vmatprep.subr.mxu0 0.0
      %5516 = vmatpush1.msra.mxu0 0.0
      %5517 = vmatprep.subr.mxu0 0.0
      %5518 = vmatpush1.msra.mxu0 0.0
      %5519 = vmatprep.subr.mxu0 0.0
      %5520 = vmatpush1.msra.mxu0 0.0
      %5521 = vmatprep.subr.mxu0 0.0
      %5522 = vmatpush1.msra.mxu0 0.0
      %5523 = vmatprep.subr.mxu0 0.0
      %5524 = vmatpush1.msra.mxu0 0.0
      %5525 = vmatprep.subr.mxu0 0.0
      %5526 = vmatpush1.msra.mxu0 0.0
      %5527 = vmatprep.mubr.f32.mxu0 0.0
      %5528 = vmatmul.mubr.f32.gmra.mrb[0].mxu0 %v5458
      %v5529 = vpop.f32.mrb[0].mxu0
      %v5530 = vadd.f32 0.0, %v5529
      %v5531 = vpop.f32.mrb[0].mxu0
      %5532 = vmatprep.mubr.f32.mxu0 0.0
      %5533 = vmatmul.mubr.f32.gmra.mrb[0].mxu0 %v5461
      %v5534 = vpop.f32.mrb[0].mxu0
      %v5535 = vadd.f32 0.0, %v5534
      %v5536 = vpop.f32.mrb[0].mxu0
      %5537 = vdwg.mxu0
      %v5538 = vadd.f32 %v5453, %v5530
      %v5539 = vadd.f32 %v5454, %v5535
      %v5540 = vld [vmem:[%s5369 + $0x2] sm:$0xff]
      %v5541 = vld [vmem:[%s5369 + $0xa] sm:$0xff]
      %v5543 = vsel %vm219, %v5540, 0
      %v5546 = vsel %vm219, %v5541, 0
      %5548 = vmatprep.subr.mxu0 0.0
      %5549 = vmatpush1.msra.mxu0 %v932
      %5550 = vmatprep.subr.mxu0 0.0
      %5551 = vmatpush1.msra.mxu0 0.0
      %5552 = vmatprep.subr.mxu0 0.0
      %5553 = vmatpush1.msra.mxu0 0.0
      %5554 = vmatprep.subr.mxu0 0.0
      %5555 = vmatpush1.msra.mxu0 0.0
      %5556 = vmatprep.subr.mxu0 0.0
      %5557 = vmatpush1.msra.mxu0 0.0
      %5558 = vmatprep.subr.mxu0 0.0
      %5559 = vmatpush1.msra.mxu0 0.0
      %5560 = vmatprep.subr.mxu0 0.0
      %5561 = vmatpush1.msra.mxu0 0.0
      %5562 = vmatprep.subr.mxu0 0.0
      %5563 = vmatpush1.msra.mxu0 0.0
      %5564 = vmatprep.subr.mxu0 0.0
      %5565 = vmatpush1.msra.mxu0 0.0
      %5566 = vmatprep.subr.mxu0 0.0
      %5567 = vmatpush1.msra.mxu0 0.0
      %5568 = vmatprep.subr.mxu0 0.0
      %5569 = vmatpush1.msra.mxu0 0.0
      %5570 = vmatprep.subr.mxu0 0.0
      %5571 = vmatpush1.msra.mxu0 0.0
      %5572 = vmatprep.subr.mxu0 0.0
      %5573 = vmatpush1.msra.mxu0 0.0
      %5574 = vmatprep.subr.mxu0 0.0
      %5575 = vmatpush1.msra.mxu0 0.0
      %5576 = vmatprep.subr.mxu0 0.0
      %5577 = vmatpush1.msra.mxu0 0.0
      %5578 = vmatprep.subr.mxu0 0.0
      %5579 = vmatpush1.msra.mxu0 0.0
      %5580 = vmatprep.subr.mxu0 0.0
      %5581 = vmatpush1.msra.mxu0 0.0
      %5582 = vmatprep.subr.mxu0 0.0
      %5583 = vmatpush1.msra.mxu0 0.0
      %5584 = vmatprep.subr.mxu0 0.0
      %5585 = vmatpush1.msra.mxu0 0.0
      %5586 = vmatprep.subr.mxu0 0.0
      %5587 = vmatpush1.msra.mxu0 0.0
      %5588 = vmatprep.subr.mxu0 0.0
      %5589 = vmatpush1.msra.mxu0 0.0
      %5590 = vmatprep.subr.mxu0 0.0
      %5591 = vmatpush1.msra.mxu0 0.0
      %5592 = vmatprep.subr.mxu0 0.0
      %5593 = vmatpush1.msra.mxu0 0.0
      %5594 = vmatprep.subr.mxu0 0.0
      %5595 = vmatpush1.msra.mxu0 0.0
      %5596 = vmatprep.subr.mxu0 0.0
      %5597 = vmatpush1.msra.mxu0 0.0
      %5598 = vmatprep.subr.mxu0 0.0
      %5599 = vmatpush1.msra.mxu0 0.0
      %5600 = vmatprep.subr.mxu0 0.0
      %5601 = vmatpush1.msra.mxu0 0.0
      %5602 = vmatprep.subr.mxu0 0.0
      %5603 = vmatpush1.msra.mxu0 0.0
      %5604 = vmatprep.subr.mxu0 0.0
      %5605 = vmatpush1.msra.mxu0 0.0
      %5606 = vmatprep.subr.mxu0 0.0
      %5607 = vmatpush1.msra.mxu0 0.0
      %5608 = vmatprep.subr.mxu0 0.0
      %5609 = vmatpush1.msra.mxu0 0.0
      %5610 = vmatprep.subr.mxu0 0.0
      %5611 = vmatpush1.msra.mxu0 0.0
      %5612 = vmatprep.mubr.f32.mxu0 0.0
      %5613 = vmatmul.mubr.f32.gmra.mrb[0].mxu0 %v5543
      %v5614 = vpop.f32.mrb[0].mxu0
      %v5615 = vadd.f32 0.0, %v5614
      %v5616 = vpop.f32.mrb[0].mxu0
      %5617 = vmatprep.mubr.f32.mxu0 0.0
      %5618 = vmatmul.mubr.f32.gmra.mrb[0].mxu0 %v5546
      %v5619 = vpop.f32.mrb[0].mxu0
      %v5620 = vadd.f32 0.0, %v5619
      %v5621 = vpop.f32.mrb[0].mxu0
      %5622 = vdwg.mxu0
      %v5623 = vadd.f32 %v5538, %v5615
      %v5624 = vadd.f32 %v5539, %v5620
      %v5625 = vadd.f32 %v5623, %v1015
      %v5626 = vadd.f32 %v5624, %v1015
      %5627 = vst [vmem:[%s192 + $0x60] sm:$0xff] %v5625
      %5628 = vst [vmem:[%s192 + $0x68] sm:$0xff] %v5626
      %v5629 = vld [vmem:[%s4601] sm:$0xff]
      %v5630 = vld [vmem:[%s4601 + $0x8] sm:$0xff]
      %v5631 = vld [vmem:[%s4601 + $0x1] sm:$0xff]
      %v5632 = vld [vmem:[%s4601 + $0x9] sm:$0xff]
      %v5634 = vsel %vm219, %v5631, 0
      %v5637 = vsel %vm219, %v5632, 0
      %5639 = vmatprep.subr.mxu0 0.0
      %5640 = vmatpush1.msra.mxu0 %v228
      %5641 = vmatprep.subr.mxu0 0.0
      %5642 = vmatpush1.msra.mxu0 0.0
      %5643 = vmatprep.subr.mxu0 0.0
      %5644 = vmatpush1.msra.mxu0 0.0
      %5645 = vmatprep.subr.mxu0 0.0
      %5646 = vmatpush1.msra.mxu0 0.0
      %5647 = vmatprep.subr.mxu0 0.0
      %5648 = vmatpush1.msra.mxu0 0.0
      %5649 = vmatprep.subr.mxu0 0.0
      %5650 = vmatpush1.msra.mxu0 0.0
      %5651 = vmatprep.subr.mxu0 0.0
      %5652 = vmatpush1.msra.mxu0 0.0
      %5653 = vmatprep.subr.mxu0 0.0
      %5654 = vmatpush1.msra.mxu0 0.0
      %5655 = vmatprep.subr.mxu0 0.0
      %5656 = vmatpush1.msra.mxu0 0.0
      %5657 = vmatprep.subr.mxu0 0.0
      %5658 = vmatpush1.msra.mxu0 0.0
      %5659 = vmatprep.subr.mxu0 0.0
      %5660 = vmatpush1.msra.mxu0 0.0
      %5661 = vmatprep.subr.mxu0 0.0
      %5662 = vmatpush1.msra.mxu0 0.0
      %5663 = vmatprep.subr.mxu0 0.0
      %5664 = vmatpush1.msra.mxu0 0.0
      %5665 = vmatprep.subr.mxu0 0.0
      %5666 = vmatpush1.msra.mxu0 0.0
      %5667 = vmatprep.subr.mxu0 0.0
      %5668 = vmatpush1.msra.mxu0 0.0
      %5669 = vmatprep.subr.mxu0 0.0
      %5670 = vmatpush1.msra.mxu0 0.0
      %5671 = vmatprep.subr.mxu0 0.0
      %5672 = vmatpush1.msra.mxu0 0.0
      %5673 = vmatprep.subr.mxu0 0.0
      %5674 = vmatpush1.msra.mxu0 0.0
      %5675 = vmatprep.subr.mxu0 0.0
      %5676 = vmatpush1.msra.mxu0 0.0
      %5677 = vmatprep.subr.mxu0 0.0
      %5678 = vmatpush1.msra.mxu0 0.0
      %5679 = vmatprep.subr.mxu0 0.0
      %5680 = vmatpush1.msra.mxu0 0.0
      %5681 = vmatprep.subr.mxu0 0.0
      %5682 = vmatpush1.msra.mxu0 0.0
      %5683 = vmatprep.subr.mxu0 0.0
      %5684 = vmatpush1.msra.mxu0 0.0
      %5685 = vmatprep.subr.mxu0 0.0
      %5686 = vmatpush1.msra.mxu0 0.0
      %5687 = vmatprep.subr.mxu0 0.0
      %5688 = vmatpush1.msra.mxu0 0.0
      %5689 = vmatprep.subr.mxu0 0.0
      %5690 = vmatpush1.msra.mxu0 0.0
      %5691 = vmatprep.subr.mxu0 0.0
      %5692 = vmatpush1.msra.mxu0 0.0
      %5693 = vmatprep.subr.mxu0 0.0
      %5694 = vmatpush1.msra.mxu0 0.0
      %5695 = vmatprep.subr.mxu0 0.0
      %5696 = vmatpush1.msra.mxu0 0.0
      %5697 = vmatprep.subr.mxu0 0.0
      %5698 = vmatpush1.msra.mxu0 0.0
      %5699 = vmatprep.subr.mxu0 0.0
      %5700 = vmatpush1.msra.mxu0 0.0
      %5701 = vmatprep.subr.mxu0 0.0
      %5702 = vmatpush1.msra.mxu0 0.0
      %5703 = vmatprep.mubr.f32.mxu0 0.0
      %5704 = vmatmul.mubr.f32.gmra.mrb[0].mxu0 %v5634
      %v5705 = vpop.f32.mrb[0].mxu0
      %v5706 = vadd.f32 0.0, %v5705
      %v5707 = vpop.f32.mrb[0].mxu0
      %5708 = vmatprep.mubr.f32.mxu0 0.0
      %5709 = vmatmul.mubr.f32.gmra.mrb[0].mxu0 %v5637
      %v5710 = vpop.f32.mrb[0].mxu0
      %v5711 = vadd.f32 0.0, %v5710
      %v5712 = vpop.f32.mrb[0].mxu0
      %5713 = vdwg.mxu0
      %v5715 = vsel %vm219, %v5629, 0
      %v5718 = vsel %vm219, %v5630, 0
      %5720 = vmatprep.subr.mxu0 0.0
      %5721 = vmatpush1.msra.mxu0 %v312
      %5722 = vmatprep.subr.mxu0 0.0
      %5723 = vmatpush1.msra.mxu0 0.0
      %5724 = vmatprep.subr.mxu0 0.0
      %5725 = vmatpush1.msra.mxu0 0.0
      %5726 = vmatprep.subr.mxu0 0.0
      %5727 = vmatpush1.msra.mxu0 0.0
      %5728 = vmatprep.subr.mxu0 0.0
      %5729 = vmatpush1.msra.mxu0 0.0
      %5730 = vmatprep.subr.mxu0 0.0
      %5731 = vmatpush1.msra.mxu0 0.0
      %5732 = vmatprep.subr.mxu0 0.0
      %5733 = vmatpush1.msra.mxu0 0.0
      %5734 = vmatprep.subr.mxu0 0.0
      %5735 = vmatpush1.msra.mxu0 0.0
      %5736 = vmatprep.subr.mxu0 0.0
      %5737 = vmatpush1.msra.mxu0 0.0
      %5738 = vmatprep.subr.mxu0 0.0
      %5739 = vmatpush1.msra.mxu0 0.0
      %5740 = vmatprep.subr.mxu0 0.0
      %5741 = vmatpush1.msra.mxu0 0.0
      %5742 = vmatprep.subr.mxu0 0.0
      %5743 = vmatpush1.msra.mxu0 0.0
      %5744 = vmatprep.subr.mxu0 0.0
      %5745 = vmatpush1.msra.mxu0 0.0
      %5746 = vmatprep.subr.mxu0 0.0
      %5747 = vmatpush1.msra.mxu0 0.0
      %5748 = vmatprep.subr.mxu0 0.0
      %5749 = vmatpush1.msra.mxu0 0.0
      %5750 = vmatprep.subr.mxu0 0.0
      %5751 = vmatpush1.msra.mxu0 0.0
      %5752 = vmatprep.subr.mxu0 0.0
      %5753 = vmatpush1.msra.mxu0 0.0
      %5754 = vmatprep.subr.mxu0 0.0
      %5755 = vmatpush1.msra.mxu0 0.0
      %5756 = vmatprep.subr.mxu0 0.0
      %5757 = vmatpush1.msra.mxu0 0.0
      %5758 = vmatprep.subr.mxu0 0.0
      %5759 = vmatpush1.msra.mxu0 0.0
      %5760 = vmatprep.subr.mxu0 0.0
      %5761 = vmatpush1.msra.mxu0 0.0
      %5762 = vmatprep.subr.mxu0 0.0
      %5763 = vmatpush1.msra.mxu0 0.0
      %5764 = vmatprep.subr.mxu0 0.0
      %5765 = vmatpush1.msra.mxu0 0.0
      %5766 = vmatprep.subr.mxu0 0.0
      %5767 = vmatpush1.msra.mxu0 0.0
      %5768 = vmatprep.subr.mxu0 0.0
      %5769 = vmatpush1.msra.mxu0 0.0
      %5770 = vmatprep.subr.mxu0 0.0
      %5771 = vmatpush1.msra.mxu0 0.0
      %5772 = vmatprep.subr.mxu0 0.0
      %5773 = vmatpush1.msra.mxu0 0.0
      %5774 = vmatprep.subr.mxu0 0.0
      %5775 = vmatpush1.msra.mxu0 0.0
      %5776 = vmatprep.subr.mxu0 0.0
      %5777 = vmatpush1.msra.mxu0 0.0
      %5778 = vmatprep.subr.mxu0 0.0
      %5779 = vmatpush1.msra.mxu0 0.0
      %5780 = vmatprep.subr.mxu0 0.0
      %5781 = vmatpush1.msra.mxu0 0.0
      %5782 = vmatprep.subr.mxu0 0.0
      %5783 = vmatpush1.msra.mxu0 0.0
      %5784 = vmatprep.mubr.f32.mxu0 0.0
      %5785 = vmatmul.mubr.f32.gmra.mrb[0].mxu0 %v5715
      %v5786 = vpop.f32.mrb[0].mxu0
      %v5787 = vadd.f32 %v5706, %v5786
      %v5788 = vpop.f32.mrb[0].mxu0
      %5789 = vmatprep.mubr.f32.mxu0 0.0
      %5790 = vmatmul.mubr.f32.gmra.mrb[0].mxu0 %v5718
      %v5791 = vpop.f32.mrb[0].mxu0
      %v5792 = vadd.f32 %v5711, %v5791
      %v5793 = vpop.f32.mrb[0].mxu0
      %5794 = vdwg.mxu0
      %v5795 = vld [vmem:[%s4601 + $0x2] sm:$0xff]
      %v5796 = vld [vmem:[%s4601 + $0xa] sm:$0xff]
      %v5798 = vsel %vm219, %v5795, 0
      %v5801 = vsel %vm219, %v5796, 0
      %5803 = vmatprep.subr.mxu0 0.0
      %5804 = vmatpush1.msra.mxu0 %v398
      %5805 = vmatprep.subr.mxu0 0.0
      %5806 = vmatpush1.msra.mxu0 0.0
      %5807 = vmatprep.subr.mxu0 0.0
      %5808 = vmatpush1.msra.mxu0 0.0
      %5809 = vmatprep.subr.mxu0 0.0
      %5810 = vmatpush1.msra.mxu0 0.0
      %5811 = vmatprep.subr.mxu0 0.0
      %5812 = vmatpush1.msra.mxu0 0.0
      %5813 = vmatprep.subr.mxu0 0.0
      %5814 = vmatpush1.msra.mxu0 0.0
      %5815 = vmatprep.subr.mxu0 0.0
      %5816 = vmatpush1.msra.mxu0 0.0
      %5817 = vmatprep.subr.mxu0 0.0
      %5818 = vmatpush1.msra.mxu0 0.0
      %5819 = vmatprep.subr.mxu0 0.0
      %5820 = vmatpush1.msra.mxu0 0.0
      %5821 = vmatprep.subr.mxu0 0.0
      %5822 = vmatpush1.msra.mxu0 0.0
      %5823 = vmatprep.subr.mxu0 0.0
      %5824 = vmatpush1.msra.mxu0 0.0
      %5825 = vmatprep.subr.mxu0 0.0
      %5826 = vmatpush1.msra.mxu0 0.0
      %5827 = vmatprep.subr.mxu0 0.0
      %5828 = vmatpush1.msra.mxu0 0.0
      %5829 = vmatprep.subr.mxu0 0.0
      %5830 = vmatpush1.msra.mxu0 0.0
      %5831 = vmatprep.subr.mxu0 0.0
      %5832 = vmatpush1.msra.mxu0 0.0
      %5833 = vmatprep.subr.mxu0 0.0
      %5834 = vmatpush1.msra.mxu0 0.0
      %5835 = vmatprep.subr.mxu0 0.0
      %5836 = vmatpush1.msra.mxu0 0.0
      %5837 = vmatprep.subr.mxu0 0.0
      %5838 = vmatpush1.msra.mxu0 0.0
      %5839 = vmatprep.subr.mxu0 0.0
      %5840 = vmatpush1.msra.mxu0 0.0
      %5841 = vmatprep.subr.mxu0 0.0
      %5842 = vmatpush1.msra.mxu0 0.0
      %5843 = vmatprep.subr.mxu0 0.0
      %5844 = vmatpush1.msra.mxu0 0.0
      %5845 = vmatprep.subr.mxu0 0.0
      %5846 = vmatpush1.msra.mxu0 0.0
      %5847 = vmatprep.subr.mxu0 0.0
      %5848 = vmatpush1.msra.mxu0 0.0
      %5849 = vmatprep.subr.mxu0 0.0
      %5850 = vmatpush1.msra.mxu0 0.0
      %5851 = vmatprep.subr.mxu0 0.0
      %5852 = vmatpush1.msra.mxu0 0.0
      %5853 = vmatprep.subr.mxu0 0.0
      %5854 = vmatpush1.msra.mxu0 0.0
      %5855 = vmatprep.subr.mxu0 0.0
      %5856 = vmatpush1.msra.mxu0 0.0
      %5857 = vmatprep.subr.mxu0 0.0
      %5858 = vmatpush1.msra.mxu0 0.0
      %5859 = vmatprep.subr.mxu0 0.0
      %5860 = vmatpush1.msra.mxu0 0.0
      %5861 = vmatprep.subr.mxu0 0.0
      %5862 = vmatpush1.msra.mxu0 0.0
      %5863 = vmatprep.subr.mxu0 0.0
      %5864 = vmatpush1.msra.mxu0 0.0
      %5865 = vmatprep.subr.mxu0 0.0
      %5866 = vmatpush1.msra.mxu0 0.0
      %5867 = vmatprep.mubr.f32.mxu0 0.0
      %5868 = vmatmul.mubr.f32.gmra.mrb[0].mxu0 %v5798
      %v5869 = vpop.f32.mrb[0].mxu0
      %v5870 = vadd.f32 0.0, %v5869
      %v5871 = vpop.f32.mrb[0].mxu0
      %5872 = vmatprep.mubr.f32.mxu0 0.0
      %5873 = vmatmul.mubr.f32.gmra.mrb[0].mxu0 %v5801
      %v5874 = vpop.f32.mrb[0].mxu0
      %v5875 = vadd.f32 0.0, %v5874
      %v5876 = vpop.f32.mrb[0].mxu0
      %5877 = vdwg.mxu0
      %v5878 = vadd.f32 %v5787, %v5870
      %v5879 = vadd.f32 %v5792, %v5875
      %v5880 = vld [vmem:[%s5369] sm:$0xff]
      %v5881 = vld [vmem:[%s5369 + $0x8] sm:$0xff]
      %v5883 = vsel %vm219, %v5880, 0
      %v5886 = vsel %vm219, %v5881, 0
      %5888 = vmatprep.subr.mxu0 0.0
      %5889 = vmatpush1.msra.mxu0 %v489
      %5890 = vmatprep.subr.mxu0 0.0
      %5891 = vmatpush1.msra.mxu0 0.0
      %5892 = vmatprep.subr.mxu0 0.0
      %5893 = vmatpush1.msra.mxu0 0.0
      %5894 = vmatprep.subr.mxu0 0.0
      %5895 = vmatpush1.msra.mxu0 0.0
      %5896 = vmatprep.subr.mxu0 0.0
      %5897 = vmatpush1.msra.mxu0 0.0
      %5898 = vmatprep.subr.mxu0 0.0
      %5899 = vmatpush1.msra.mxu0 0.0
      %5900 = vmatprep.subr.mxu0 0.0
      %5901 = vmatpush1.msra.mxu0 0.0
      %5902 = vmatprep.subr.mxu0 0.0
      %5903 = vmatpush1.msra.mxu0 0.0
      %5904 = vmatprep.subr.mxu0 0.0
      %5905 = vmatpush1.msra.mxu0 0.0
      %5906 = vmatprep.subr.mxu0 0.0
      %5907 = vmatpush1.msra.mxu0 0.0
      %5908 = vmatprep.subr.mxu0 0.0
      %5909 = vmatpush1.msra.mxu0 0.0
      %5910 = vmatprep.subr.mxu0 0.0
      %5911 = vmatpush1.msra.mxu0 0.0
      %5912 = vmatprep.subr.mxu0 0.0
      %5913 = vmatpush1.msra.mxu0 0.0
      %5914 = vmatprep.subr.mxu0 0.0
      %5915 = vmatpush1.msra.mxu0 0.0
      %5916 = vmatprep.subr.mxu0 0.0
      %5917 = vmatpush1.msra.mxu0 0.0
      %5918 = vmatprep.subr.mxu0 0.0
      %5919 = vmatpush1.msra.mxu0 0.0
      %5920 = vmatprep.subr.mxu0 0.0
      %5921 = vmatpush1.msra.mxu0 0.0
      %5922 = vmatprep.subr.mxu0 0.0
      %5923 = vmatpush1.msra.mxu0 0.0
      %5924 = vmatprep.subr.mxu0 0.0
      %5925 = vmatpush1.msra.mxu0 0.0
      %5926 = vmatprep.subr.mxu0 0.0
      %5927 = vmatpush1.msra.mxu0 0.0
      %5928 = vmatprep.subr.mxu0 0.0
      %5929 = vmatpush1.msra.mxu0 0.0
      %5930 = vmatprep.subr.mxu0 0.0
      %5931 = vmatpush1.msra.mxu0 0.0
      %5932 = vmatprep.subr.mxu0 0.0
      %5933 = vmatpush1.msra.mxu0 0.0
      %5934 = vmatprep.subr.mxu0 0.0
      %5935 = vmatpush1.msra.mxu0 0.0
      %5936 = vmatprep.subr.mxu0 0.0
      %5937 = vmatpush1.msra.mxu0 0.0
      %5938 = vmatprep.subr.mxu0 0.0
      %5939 = vmatpush1.msra.mxu0 0.0
      %5940 = vmatprep.subr.mxu0 0.0
      %5941 = vmatpush1.msra.mxu0 0.0
      %5942 = vmatprep.subr.mxu0 0.0
      %5943 = vmatpush1.msra.mxu0 0.0
      %5944 = vmatprep.subr.mxu0 0.0
      %5945 = vmatpush1.msra.mxu0 0.0
      %5946 = vmatprep.subr.mxu0 0.0
      %5947 = vmatpush1.msra.mxu0 0.0
      %5948 = vmatprep.subr.mxu0 0.0
      %5949 = vmatpush1.msra.mxu0 0.0
      %5950 = vmatprep.subr.mxu0 0.0
      %5951 = vmatpush1.msra.mxu0 0.0
      %5952 = vmatprep.mubr.f32.mxu0 0.0
      %5953 = vmatmul.mubr.f32.gmra.mrb[0].mxu0 %v5883
      %v5954 = vpop.f32.mrb[0].mxu0
      %v5955 = vadd.f32 0.0, %v5954
      %v5956 = vpop.f32.mrb[0].mxu0
      %5957 = vmatprep.mubr.f32.mxu0 0.0
      %5958 = vmatmul.mubr.f32.gmra.mrb[0].mxu0 %v5886
      %v5959 = vpop.f32.mrb[0].mxu0
      %v5960 = vadd.f32 0.0, %v5959
      %v5961 = vpop.f32.mrb[0].mxu0
      %5962 = vdwg.mxu0
      %v5963 = vadd.f32 %v5878, %v5955
      %v5964 = vadd.f32 %v5879, %v5960
      %v5965 = vld [vmem:[%s5369 + $0x1] sm:$0xff]
      %v5966 = vld [vmem:[%s5369 + $0x9] sm:$0xff]
      %v5968 = vsel %vm219, %v5965, 0
      %v5971 = vsel %vm219, %v5966, 0
      %5973 = vmatprep.subr.mxu0 0.0
      %5974 = vmatpush1.msra.mxu0 %v577
      %5975 = vmatprep.subr.mxu0 0.0
      %5976 = vmatpush1.msra.mxu0 0.0
      %5977 = vmatprep.subr.mxu0 0.0
      %5978 = vmatpush1.msra.mxu0 0.0
      %5979 = vmatprep.subr.mxu0 0.0
      %5980 = vmatpush1.msra.mxu0 0.0
      %5981 = vmatprep.subr.mxu0 0.0
      %5982 = vmatpush1.msra.mxu0 0.0
      %5983 = vmatprep.subr.mxu0 0.0
      %5984 = vmatpush1.msra.mxu0 0.0
      %5985 = vmatprep.subr.mxu0 0.0
      %5986 = vmatpush1.msra.mxu0 0.0
      %5987 = vmatprep.subr.mxu0 0.0
      %5988 = vmatpush1.msra.mxu0 0.0
      %5989 = vmatprep.subr.mxu0 0.0
      %5990 = vmatpush1.msra.mxu0 0.0
      %5991 = vmatprep.subr.mxu0 0.0
      %5992 = vmatpush1.msra.mxu0 0.0
      %5993 = vmatprep.subr.mxu0 0.0
      %5994 = vmatpush1.msra.mxu0 0.0
      %5995 = vmatprep.subr.mxu0 0.0
      %5996 = vmatpush1.msra.mxu0 0.0
      %5997 = vmatprep.subr.mxu0 0.0
      %5998 = vmatpush1.msra.mxu0 0.0
      %5999 = vmatprep.subr.mxu0 0.0
      %6000 = vmatpush1.msra.mxu0 0.0
      %6001 = vmatprep.subr.mxu0 0.0
      %6002 = vmatpush1.msra.mxu0 0.0
      %6003 = vmatprep.subr.mxu0 0.0
      %6004 = vmatpush1.msra.mxu0 0.0
      %6005 = vmatprep.subr.mxu0 0.0
      %6006 = vmatpush1.msra.mxu0 0.0
      %6007 = vmatprep.subr.mxu0 0.0
      %6008 = vmatpush1.msra.mxu0 0.0
      %6009 = vmatprep.subr.mxu0 0.0
      %6010 = vmatpush1.msra.mxu0 0.0
      %6011 = vmatprep.subr.mxu0 0.0
      %6012 = vmatpush1.msra.mxu0 0.0
      %6013 = vmatprep.subr.mxu0 0.0
      %6014 = vmatpush1.msra.mxu0 0.0
      %6015 = vmatprep.subr.mxu0 0.0
      %6016 = vmatpush1.msra.mxu0 0.0
      %6017 = vmatprep.subr.mxu0 0.0
      %6018 = vmatpush1.msra.mxu0 0.0
      %6019 = vmatprep.subr.mxu0 0.0
      %6020 = vmatpush1.msra.mxu0 0.0
      %6021 = vmatprep.subr.mxu0 0.0
      %6022 = vmatpush1.msra.mxu0 0.0
      %6023 = vmatprep.subr.mxu0 0.0
      %6024 = vmatpush1.msra.mxu0 0.0
      %6025 = vmatprep.subr.mxu0 0.0
      %6026 = vmatpush1.msra.mxu0 0.0
      %6027 = vmatprep.subr.mxu0 0.0
      %6028 = vmatpush1.msra.mxu0 0.0
      %6029 = vmatprep.subr.mxu0 0.0
      %6030 = vmatpush1.msra.mxu0 0.0
      %6031 = vmatprep.subr.mxu0 0.0
      %6032 = vmatpush1.msra.mxu0 0.0
      %6033 = vmatprep.subr.mxu0 0.0
      %6034 = vmatpush1.msra.mxu0 0.0
      %6035 = vmatprep.subr.mxu0 0.0
      %6036 = vmatpush1.msra.mxu0 0.0
      %6037 = vmatprep.mubr.f32.mxu0 0.0
      %6038 = vmatmul.mubr.f32.gmra.mrb[0].mxu0 %v5968
      %v6039 = vpop.f32.mrb[0].mxu0
      %v6040 = vadd.f32 0.0, %v6039
      %v6041 = vpop.f32.mrb[0].mxu0
      %6042 = vmatprep.mubr.f32.mxu0 0.0
      %6043 = vmatmul.mubr.f32.gmra.mrb[0].mxu0 %v5971
      %v6044 = vpop.f32.mrb[0].mxu0
      %v6045 = vadd.f32 0.0, %v6044
      %v6046 = vpop.f32.mrb[0].mxu0
      %6047 = vdwg.mxu0
      %v6048 = vadd.f32 %v5963, %v6040
      %v6049 = vadd.f32 %v5964, %v6045
      %v6050 = vld [vmem:[%s5369 + $0x2] sm:$0xff]
      %v6051 = vld [vmem:[%s5369 + $0xa] sm:$0xff]
      %v6053 = vsel %vm219, %v6050, 0
      %v6056 = vsel %vm219, %v6051, 0
      %6058 = vmatprep.subr.mxu0 0.0
      %6059 = vmatpush1.msra.mxu0 %v665
      %6060 = vmatprep.subr.mxu0 0.0
      %6061 = vmatpush1.msra.mxu0 0.0
      %6062 = vmatprep.subr.mxu0 0.0
      %6063 = vmatpush1.msra.mxu0 0.0
      %6064 = vmatprep.subr.mxu0 0.0
      %6065 = vmatpush1.msra.mxu0 0.0
      %6066 = vmatprep.subr.mxu0 0.0
      %6067 = vmatpush1.msra.mxu0 0.0
      %6068 = vmatprep.subr.mxu0 0.0
      %6069 = vmatpush1.msra.mxu0 0.0
      %6070 = vmatprep.subr.mxu0 0.0
      %6071 = vmatpush1.msra.mxu0 0.0
      %6072 = vmatprep.subr.mxu0 0.0
      %6073 = vmatpush1.msra.mxu0 0.0
      %6074 = vmatprep.subr.mxu0 0.0
      %6075 = vmatpush1.msra.mxu0 0.0
      %6076 = vmatprep.subr.mxu0 0.0
      %6077 = vmatpush1.msra.mxu0 0.0
      %6078 = vmatprep.subr.mxu0 0.0
      %6079 = vmatpush1.msra.mxu0 0.0
      %6080 = vmatprep.subr.mxu0 0.0
      %6081 = vmatpush1.msra.mxu0 0.0
      %6082 = vmatprep.subr.mxu0 0.0
      %6083 = vmatpush1.msra.mxu0 0.0
      %6084 = vmatprep.subr.mxu0 0.0
      %6085 = vmatpush1.msra.mxu0 0.0
      %6086 = vmatprep.subr.mxu0 0.0
      %6087 = vmatpush1.msra.mxu0 0.0
      %6088 = vmatprep.subr.mxu0 0.0
      %6089 = vmatpush1.msra.mxu0 0.0
      %6090 = vmatprep.subr.mxu0 0.0
      %6091 = vmatpush1.msra.mxu0 0.0
      %6092 = vmatprep.subr.mxu0 0.0
      %6093 = vmatpush1.msra.mxu0 0.0
      %6094 = vmatprep.subr.mxu0 0.0
      %6095 = vmatpush1.msra.mxu0 0.0
      %6096 = vmatprep.subr.mxu0 0.0
      %6097 = vmatpush1.msra.mxu0 0.0
      %6098 = vmatprep.subr.mxu0 0.0
      %6099 = vmatpush1.msra.mxu0 0.0
      %6100 = vmatprep.subr.mxu0 0.0
      %6101 = vmatpush1.msra.mxu0 0.0
      %6102 = vmatprep.subr.mxu0 0.0
      %6103 = vmatpush1.msra.mxu0 0.0
      %6104 = vmatprep.subr.mxu0 0.0
      %6105 = vmatpush1.msra.mxu0 0.0
      %6106 = vmatprep.subr.mxu0 0.0
      %6107 = vmatpush1.msra.mxu0 0.0
      %6108 = vmatprep.subr.mxu0 0.0
      %6109 = vmatpush1.msra.mxu0 0.0
      %6110 = vmatprep.subr.mxu0 0.0
      %6111 = vmatpush1.msra.mxu0 0.0
      %6112 = vmatprep.subr.mxu0 0.0
      %6113 = vmatpush1.msra.mxu0 0.0
      %6114 = vmatprep.subr.mxu0 0.0
      %6115 = vmatpush1.msra.mxu0 0.0
      %6116 = vmatprep.subr.mxu0 0.0
      %6117 = vmatpush1.msra.mxu0 0.0
      %6118 = vmatprep.subr.mxu0 0.0
      %6119 = vmatpush1.msra.mxu0 0.0
      %6120 = vmatprep.subr.mxu0 0.0
      %6121 = vmatpush1.msra.mxu0 0.0
      %6122 = vmatprep.mubr.f32.mxu0 0.0
      %6123 = vmatmul.mubr.f32.gmra.mrb[0].mxu0 %v6053
      %v6124 = vpop.f32.mrb[0].mxu0
      %v6125 = vadd.f32 0.0, %v6124
      %v6126 = vpop.f32.mrb[0].mxu0
      %6127 = vmatprep.mubr.f32.mxu0 0.0
      %6128 = vmatmul.mubr.f32.gmra.mrb[0].mxu0 %v6056
      %v6129 = vpop.f32.mrb[0].mxu0
      %v6130 = vadd.f32 0.0, %v6129
      %v6131 = vpop.f32.mrb[0].mxu0
      %6132 = vdwg.mxu0
      %v6133 = vadd.f32 %v6048, %v6125
      %v6134 = vadd.f32 %v6049, %v6130
      %s6135 = sadd.s32 %s212, 9
      %s6136 = smul.u32 %s6135, 24
      %s6137 = scalar_lea.vmem %s183, %s6136
      %v6138 = vld [vmem:[%s6137] sm:$0xff]
      %v6139 = vld [vmem:[%s6137 + $0x8] sm:$0xff]
      %v6141 = vsel %vm219, %v6138, 0
      %v6144 = vsel %vm219, %v6139, 0
      %6146 = vmatprep.subr.mxu0 0.0
      %6147 = vmatpush1.msra.mxu0 %v756
      %6148 = vmatprep.subr.mxu0 0.0
      %6149 = vmatpush1.msra.mxu0 0.0
      %6150 = vmatprep.subr.mxu0 0.0
      %6151 = vmatpush1.msra.mxu0 0.0
      %6152 = vmatprep.subr.mxu0 0.0
      %6153 = vmatpush1.msra.mxu0 0.0
      %6154 = vmatprep.subr.mxu0 0.0
      %6155 = vmatpush1.msra.mxu0 0.0
      %6156 = vmatprep.subr.mxu0 0.0
      %6157 = vmatpush1.msra.mxu0 0.0
      %6158 = vmatprep.subr.mxu0 0.0
      %6159 = vmatpush1.msra.mxu0 0.0
      %6160 = vmatprep.subr.mxu0 0.0
      %6161 = vmatpush1.msra.mxu0 0.0
      %6162 = vmatprep.subr.mxu0 0.0
      %6163 = vmatpush1.msra.mxu0 0.0
      %6164 = vmatprep.subr.mxu0 0.0
      %6165 = vmatpush1.msra.mxu0 0.0
      %6166 = vmatprep.subr.mxu0 0.0
      %6167 = vmatpush1.msra.mxu0 0.0
      %6168 = vmatprep.subr.mxu0 0.0
      %6169 = vmatpush1.msra.mxu0 0.0
      %6170 = vmatprep.subr.mxu0 0.0
      %6171 = vmatpush1.msra.mxu0 0.0
      %6172 = vmatprep.subr.mxu0 0.0
      %6173 = vmatpush1.msra.mxu0 0.0
      %6174 = vmatprep.subr.mxu0 0.0
      %6175 = vmatpush1.msra.mxu0 0.0
      %6176 = vmatprep.subr.mxu0 0.0
      %6177 = vmatpush1.msra.mxu0 0.0
      %6178 = vmatprep.subr.mxu0 0.0
      %6179 = vmatpush1.msra.mxu0 0.0
      %6180 = vmatprep.subr.mxu0 0.0
      %6181 = vmatpush1.msra.mxu0 0.0
      %6182 = vmatprep.subr.mxu0 0.0
      %6183 = vmatpush1.msra.mxu0 0.0
      %6184 = vmatprep.subr.mxu0 0.0
      %6185 = vmatpush1.msra.mxu0 0.0
      %6186 = vmatprep.subr.mxu0 0.0
      %6187 = vmatpush1.msra.mxu0 0.0
      %6188 = vmatprep.subr.mxu0 0.0
      %6189 = vmatpush1.msra.mxu0 0.0
      %6190 = vmatprep.subr.mxu0 0.0
      %6191 = vmatpush1.msra.mxu0 0.0
      %6192 = vmatprep.subr.mxu0 0.0
      %6193 = vmatpush1.msra.mxu0 0.0
      %6194 = vmatprep.subr.mxu0 0.0
      %6195 = vmatpush1.msra.mxu0 0.0
      %6196 = vmatprep.subr.mxu0 0.0
      %6197 = vmatpush1.msra.mxu0 0.0
      %6198 = vmatprep.subr.mxu0 0.0
      %6199 = vmatpush1.msra.mxu0 0.0
      %6200 = vmatprep.subr.mxu0 0.0
      %6201 = vmatpush1.msra.mxu0 0.0
      %6202 = vmatprep.subr.mxu0 0.0
      %6203 = vmatpush1.msra.mxu0 0.0
      %6204 = vmatprep.subr.mxu0 0.0
      %6205 = vmatpush1.msra.mxu0 0.0
      %6206 = vmatprep.subr.mxu0 0.0
      %6207 = vmatpush1.msra.mxu0 0.0
      %6208 = vmatprep.subr.mxu0 0.0
      %6209 = vmatpush1.msra.mxu0 0.0
      %6210 = vmatprep.mubr.f32.mxu0 0.0
      %6211 = vmatmul.mubr.f32.gmra.mrb[0].mxu0 %v6141
      %v6212 = vpop.f32.mrb[0].mxu0
      %v6213 = vadd.f32 0.0, %v6212
      %v6214 = vpop.f32.mrb[0].mxu0
      %6215 = vmatprep.mubr.f32.mxu0 0.0
      %6216 = vmatmul.mubr.f32.gmra.mrb[0].mxu0 %v6144
      %v6217 = vpop.f32.mrb[0].mxu0
      %v6218 = vadd.f32 0.0, %v6217
      %v6219 = vpop.f32.mrb[0].mxu0
      %6220 = vdwg.mxu0
      %v6221 = vadd.f32 %v6133, %v6213
      %v6222 = vadd.f32 %v6134, %v6218
      %v6223 = vld [vmem:[%s6137 + $0x1] sm:$0xff]
      %v6224 = vld [vmem:[%s6137 + $0x9] sm:$0xff]
      %v6226 = vsel %vm219, %v6223, 0
      %v6229 = vsel %vm219, %v6224, 0
      %6231 = vmatprep.subr.mxu0 0.0
      %6232 = vmatpush1.msra.mxu0 %v844
      %6233 = vmatprep.subr.mxu0 0.0
      %6234 = vmatpush1.msra.mxu0 0.0
      %6235 = vmatprep.subr.mxu0 0.0
      %6236 = vmatpush1.msra.mxu0 0.0
      %6237 = vmatprep.subr.mxu0 0.0
      %6238 = vmatpush1.msra.mxu0 0.0
      %6239 = vmatprep.subr.mxu0 0.0
      %6240 = vmatpush1.msra.mxu0 0.0
      %6241 = vmatprep.subr.mxu0 0.0
      %6242 = vmatpush1.msra.mxu0 0.0
      %6243 = vmatprep.subr.mxu0 0.0
      %6244 = vmatpush1.msra.mxu0 0.0
      %6245 = vmatprep.subr.mxu0 0.0
      %6246 = vmatpush1.msra.mxu0 0.0
      %6247 = vmatprep.subr.mxu0 0.0
      %6248 = vmatpush1.msra.mxu0 0.0
      %6249 = vmatprep.subr.mxu0 0.0
      %6250 = vmatpush1.msra.mxu0 0.0
      %6251 = vmatprep.subr.mxu0 0.0
      %6252 = vmatpush1.msra.mxu0 0.0
      %6253 = vmatprep.subr.mxu0 0.0
      %6254 = vmatpush1.msra.mxu0 0.0
      %6255 = vmatprep.subr.mxu0 0.0
      %6256 = vmatpush1.msra.mxu0 0.0
      %6257 = vmatprep.subr.mxu0 0.0
      %6258 = vmatpush1.msra.mxu0 0.0
      %6259 = vmatprep.subr.mxu0 0.0
      %6260 = vmatpush1.msra.mxu0 0.0
      %6261 = vmatprep.subr.mxu0 0.0
      %6262 = vmatpush1.msra.mxu0 0.0
      %6263 = vmatprep.subr.mxu0 0.0
      %6264 = vmatpush1.msra.mxu0 0.0
      %6265 = vmatprep.subr.mxu0 0.0
      %6266 = vmatpush1.msra.mxu0 0.0
      %6267 = vmatprep.subr.mxu0 0.0
      %6268 = vmatpush1.msra.mxu0 0.0
      %6269 = vmatprep.subr.mxu0 0.0
      %6270 = vmatpush1.msra.mxu0 0.0
      %6271 = vmatprep.subr.mxu0 0.0
      %6272 = vmatpush1.msra.mxu0 0.0
      %6273 = vmatprep.subr.mxu0 0.0
      %6274 = vmatpush1.msra.mxu0 0.0
      %6275 = vmatprep.subr.mxu0 0.0
      %6276 = vmatpush1.msra.mxu0 0.0
      %6277 = vmatprep.subr.mxu0 0.0
      %6278 = vmatpush1.msra.mxu0 0.0
      %6279 = vmatprep.subr.mxu0 0.0
      %6280 = vmatpush1.msra.mxu0 0.0
      %6281 = vmatprep.subr.mxu0 0.0
      %6282 = vmatpush1.msra.mxu0 0.0
      %6283 = vmatprep.subr.mxu0 0.0
      %6284 = vmatpush1.msra.mxu0 0.0
      %6285 = vmatprep.subr.mxu0 0.0
      %6286 = vmatpush1.msra.mxu0 0.0
      %6287 = vmatprep.subr.mxu0 0.0
      %6288 = vmatpush1.msra.mxu0 0.0
      %6289 = vmatprep.subr.mxu0 0.0
      %6290 = vmatpush1.msra.mxu0 0.0
      %6291 = vmatprep.subr.mxu0 0.0
      %6292 = vmatpush1.msra.mxu0 0.0
      %6293 = vmatprep.subr.mxu0 0.0
      %6294 = vmatpush1.msra.mxu0 0.0
      %6295 = vmatprep.mubr.f32.mxu0 0.0
      %6296 = vmatmul.mubr.f32.gmra.mrb[0].mxu0 %v6226
      %v6297 = vpop.f32.mrb[0].mxu0
      %v6298 = vadd.f32 0.0, %v6297
      %v6299 = vpop.f32.mrb[0].mxu0
      %6300 = vmatprep.mubr.f32.mxu0 0.0
      %6301 = vmatmul.mubr.f32.gmra.mrb[0].mxu0 %v6229
      %v6302 = vpop.f32.mrb[0].mxu0
      %v6303 = vadd.f32 0.0, %v6302
      %v6304 = vpop.f32.mrb[0].mxu0
      %6305 = vdwg.mxu0
      %v6306 = vadd.f32 %v6221, %v6298
      %v6307 = vadd.f32 %v6222, %v6303
      %v6308 = vld [vmem:[%s6137 + $0x2] sm:$0xff]
      %v6309 = vld [vmem:[%s6137 + $0xa] sm:$0xff]
      %v6311 = vsel %vm219, %v6308, 0
      %v6314 = vsel %vm219, %v6309, 0
      %6316 = vmatprep.subr.mxu0 0.0
      %6317 = vmatpush1.msra.mxu0 %v932
      %6318 = vmatprep.subr.mxu0 0.0
      %6319 = vmatpush1.msra.mxu0 0.0
      %6320 = vmatprep.subr.mxu0 0.0
      %6321 = vmatpush1.msra.mxu0 0.0
      %6322 = vmatprep.subr.mxu0 0.0
      %6323 = vmatpush1.msra.mxu0 0.0
      %6324 = vmatprep.subr.mxu0 0.0
      %6325 = vmatpush1.msra.mxu0 0.0
      %6326 = vmatprep.subr.mxu0 0.0
      %6327 = vmatpush1.msra.mxu0 0.0
      %6328 = vmatprep.subr.mxu0 0.0
      %6329 = vmatpush1.msra.mxu0 0.0
      %6330 = vmatprep.subr.mxu0 0.0
      %6331 = vmatpush1.msra.mxu0 0.0
      %6332 = vmatprep.subr.mxu0 0.0
      %6333 = vmatpush1.msra.mxu0 0.0
      %6334 = vmatprep.subr.mxu0 0.0
      %6335 = vmatpush1.msra.mxu0 0.0
      %6336 = vmatprep.subr.mxu0 0.0
      %6337 = vmatpush1.msra.mxu0 0.0
      %6338 = vmatprep.subr.mxu0 0.0
      %6339 = vmatpush1.msra.mxu0 0.0
      %6340 = vmatprep.subr.mxu0 0.0
      %6341 = vmatpush1.msra.mxu0 0.0
      %6342 = vmatprep.subr.mxu0 0.0
      %6343 = vmatpush1.msra.mxu0 0.0
      %6344 = vmatprep.subr.mxu0 0.0
      %6345 = vmatpush1.msra.mxu0 0.0
      %6346 = vmatprep.subr.mxu0 0.0
      %6347 = vmatpush1.msra.mxu0 0.0
      %6348 = vmatprep.subr.mxu0 0.0
      %6349 = vmatpush1.msra.mxu0 0.0
      %6350 = vmatprep.subr.mxu0 0.0
      %6351 = vmatpush1.msra.mxu0 0.0
      %6352 = vmatprep.subr.mxu0 0.0
      %6353 = vmatpush1.msra.mxu0 0.0
      %6354 = vmatprep.subr.mxu0 0.0
      %6355 = vmatpush1.msra.mxu0 0.0
      %6356 = vmatprep.subr.mxu0 0.0
      %6357 = vmatpush1.msra.mxu0 0.0
      %6358 = vmatprep.subr.mxu0 0.0
      %6359 = vmatpush1.msra.mxu0 0.0
      %6360 = vmatprep.subr.mxu0 0.0
      %6361 = vmatpush1.msra.mxu0 0.0
      %6362 = vmatprep.subr.mxu0 0.0
      %6363 = vmatpush1.msra.mxu0 0.0
      %6364 = vmatprep.subr.mxu0 0.0
      %6365 = vmatpush1.msra.mxu0 0.0
      %6366 = vmatprep.subr.mxu0 0.0
      %6367 = vmatpush1.msra.mxu0 0.0
      %6368 = vmatprep.subr.mxu0 0.0
      %6369 = vmatpush1.msra.mxu0 0.0
      %6370 = vmatprep.subr.mxu0 0.0
      %6371 = vmatpush1.msra.mxu0 0.0
      %6372 = vmatprep.subr.mxu0 0.0
      %6373 = vmatpush1.msra.mxu0 0.0
      %6374 = vmatprep.subr.mxu0 0.0
      %6375 = vmatpush1.msra.mxu0 0.0
      %6376 = vmatprep.subr.mxu0 0.0
      %6377 = vmatpush1.msra.mxu0 0.0
      %6378 = vmatprep.subr.mxu0 0.0
      %6379 = vmatpush1.msra.mxu0 0.0
      %6380 = vmatprep.mubr.f32.mxu0 0.0
      %6381 = vmatmul.mubr.f32.gmra.mrb[0].mxu0 %v6311
      %v6382 = vpop.f32.mrb[0].mxu0
      %v6383 = vadd.f32 0.0, %v6382
      %v6384 = vpop.f32.mrb[0].mxu0
      %6385 = vmatprep.mubr.f32.mxu0 0.0
      %6386 = vmatmul.mubr.f32.gmra.mrb[0].mxu0 %v6314
      %v6387 = vpop.f32.mrb[0].mxu0
      %v6388 = vadd.f32 0.0, %v6387
      %v6389 = vpop.f32.mrb[0].mxu0
      %6390 = vdwg.mxu0
      %v6391 = vadd.f32 %v6306, %v6383
      %v6392 = vadd.f32 %v6307, %v6388
      %v6393 = vadd.f32 %v6391, %v1015
      %v6394 = vadd.f32 %v6392, %v1015
      %6395 = vst [vmem:[%s192 + $0x70] sm:$0xff] %v6393
      %6396 = vst [vmem:[%s192 + $0x78] sm:$0xff] %v6394
      %s6397 = smul.u32 16, %s19
      %p6398 = scmp.lt.s32.totalorder %s18, 1
      %s6399 = scalar_select %p6398, %s18, 1
      %p6400 = scmp.lt.s32.totalorder %s6397, 31
      %s6401 = scalar_select %p6400, %s6397, 31
      %s6402 = smul.addr %s6399, 32
      %s6403 = sadd.s32 %s6401, %s6402
      %s6404 = smul.addr %s6403, 8
      %s6405 = scalar_lea.vmem %s3, %s6404
      // Predicated region
      $region33: #{conv2d_pallas.1} parent=31 // pred_check
        %p6406 = pneg %p114
      $region34: #{conv2d_pallas.1} parent=31 // pred_check_branch
        %6408 = sbr.rel (%p6406) target = $region36
      $region35: #{conv2d_pallas.1} parent=31 // pred_region
        %s6409 = smul.u32 16, %s19
      $region36: #{conv2d_pallas.1} parent=31 // pred_fallthru
        _
    $region32: #{conv2d_pallas.1} parent=5 // pred_fallthru
      _
    %p6410 = scmp.le.s32.totalorder 2, %s9
    // Predicated region
    $region37: #{conv2d_pallas.1} parent=5 // pred_check
      %p6411 = pneg %p6410
    $region38: #{conv2d_pallas.1} parent=5 // pred_check_branch
      %6413 = sbr.rel (%p6411) target = $region40
    $region39: #{conv2d_pallas.1} parent=5 // pred_region
      %s6414 = ssub.s32 %s9, 2
      // Predicated region
      $region41: #{conv2d_pallas.1} parent=39 // pred_check
        %p6415 = pneg %p120
      $region42: #{conv2d_pallas.1} parent=39 // pred_check_branch
        %6417 = sbr.rel (%p6415) target = $region44
      $region43: #{conv2d_pallas.1} parent=39 // pred_region
        %s6418 = smul.u32 16, %s21
        %p6419 = scmp.lt.s32.totalorder %s20, 1
        %s6420 = scalar_select %p6419, %s20, 1
        %p6421 = scmp.lt.s32.totalorder %s6418, 31
        %s6422 = scalar_select %p6421, %s6418, 31
        %s6423 = smul.addr %s6420, 32
        %s6424 = sadd.s32 %s6422, %s6423
        %s6425 = smul.addr %s6424, 8
        %s6426 = scalar_lea.vmem %s3, %s6425
      $region44: #{conv2d_pallas.1} parent=39 // pred_fallthru
        _
    $region40: #{conv2d_pallas.1} parent=5 // pred_fallthru
      _
  $region6: #{conv2d_pallas.1} parent=0 // loop_footer
    %s13 = sadd.s32 1, %s9
  $region7: #{conv2d_pallas.1} parent=0 // loop_footer_branch
    %8 = sbr.rel target = $region3
  $region8: #{conv2d_pallas.1} parent=0 // loop_exit
    _

</llo_original>
